<compile_context>
chip_gen: v6e
topology: v6e:2x2x1
jax: 0.10.0
libtpu: 0.0.40
codegen_flags: <defaults>
</compile_context>

<pallas_src>
import functools

import jax
import jax.numpy as jnp
import numpy as np
from jax import lax
from jax.experimental import pallas as pl
from jax.experimental.pallas import tpu as pltpu

BN_EPS = 1e-5
LANE = 128
SUBLANE = 8


def _round_up(x, m):
    return ((x + m - 1) // m) * m


def _resident_spec(shape, index_map):
    """Blocks that are constant (or per-batch constant) across the row-tile
    axis: request single buffering to halve their VMEM footprint.  The only
    cost is an exposed DMA at batch boundaries, amortized over the row tiles.
    Falls back to a plain BlockSpec if pipeline_mode is unavailable."""
    if hasattr(pl, "Buffered"):
        try:
            return pl.BlockSpec(shape, index_map, pipeline_mode=pl.Buffered(1))
        except (TypeError, ValueError):
            pass
    return pl.BlockSpec(shape, index_map)


# ----------------------------------------------------------------------------
# Pallas kernel: 3x3 conv (+BN [+residual] [+ReLU]) and optional fused 1x1 skip
# ----------------------------------------------------------------------------
def _conv_block_kernel(*refs, stride, th, wo, relu, has_res, has_skip, valid_hw):
    """3x3 conv as 9 accumulated (th*wo, Cin) x (Cin, Cout) MXU matmuls over
    stride-parity slabs, fused folded-BN epilogue, optional bf16 residual add,
    optional ReLU, and an optional fused 1x1 skip projection (second output)
    computed from the center tap (== the stride-subsampled input x)."""
    it = iter(refs)
    xs_ref = next(it)
    w9_ref = next(it)
    scale_ref = next(it)
    shift_ref = next(it)
    wskip_ref = sskip_ref = bskip_ref = res_ref = skip_ref = None
    if has_skip:
        wskip_ref, sskip_ref, bskip_ref = next(it), next(it), next(it)
    if has_res:
        res_ref = next(it)
    o_ref = next(it)
    if has_skip:
        skip_ref = next(it)

    r = pl.program_id(1)
    cin = xs_ref.shape[-1]
    cout = w9_ref.shape[-1]
    rbase = r * th

    acc = jnp.zeros((th * wo, cout), jnp.float32)
    center_lhs = None
    for dy in range(3):
        for dx in range(3):
            pslab = (dy % stride) * stride + (dx % stride)   # parity slab index
            roff = rbase + dy // stride                       # row offset (major dim)
            coff = dx // stride                               # static sublane shift 0/1/2
            lhs = xs_ref[pslab, pl.ds(roff, th), pl.ds(coff, wo), :]
            lhs = lhs.reshape(th * wo, cin)                   # wo % 8 == 0 -> no relayout
            if dy == 1 and dx == 1:
                center_lhs = lhs                              # == x sampled at output grid
            acc = acc + jnp.dot(lhs, w9_ref[dy * 3 + dx],
                                preferred_element_type=jnp.float32)

    y = acc * scale_ref[...] + shift_ref[...]                 # folded BN (fp32)
    if has_res:
        y = y + res_ref[...].reshape(th * wo, cout).astype(jnp.float32)
    if relu:
        y = jnp.maximum(y, 0.0)
    y = y.reshape(th, wo, cout)
    if valid_hw is not None:
        # Zero the rows/cols beyond the true (ho, wo) so the padded region of
        # this output behaves like the reference's zero padding when it is
        # consumed as the next conv's halo.
        vh, vw = valid_hw
        row_ok = (lax.broadcasted_iota(jnp.int32, (th, wo, 1), 0) + rbase) < vh
        col_ok = lax.broadcasted_iota(jnp.int32, (th, wo, 1), 1) < vw
        y = jnp.where(row_ok & col_ok, y, 0.0)
    o_ref[...] = y.reshape(1, th, wo, cout).astype(o_ref.dtype)

    if has_skip:
        s = jnp.dot(center_lhs, wskip_ref[...], preferred_element_type=jnp.float32)
        s = s * sskip_ref[...] + bskip_ref[...]
        skip_ref[...] = s.reshape(1, th, wo, cout).astype(skip_ref.dtype)


# ----------------------------------------------------------------------------
# pallas_call wrapper
# ----------------------------------------------------------------------------
def conv3x3_block(xs, w9, scale, shift, out_hw, *, stride, th,
                  residual=None, skip_w=None, skip_scale=None, skip_shift=None,
                  relu=True, out_dtype=jnp.bfloat16, skip_dtype=jnp.bfloat16,
                  valid_hw=None):
    """xs: (B*stride^2, Hs, Ws, Cin_p) bf16 parity slabs; w9: (9, Cin_p, Cout_p).
    Returns a tuple: (out,) or (out, skip)."""
    s2 = stride * stride
    bs2, hs, ws, cin = xs.shape
    b = bs2 // s2
    ho, wo = out_hw                       # padded: ho % th == 0, wo % 8 == 0
    cout = w9.shape[-1]
    grid = (b, ho // th)
    has_res = residual is not None
    has_skip = skip_w is not None

    in_specs = [
        _resident_spec((s2, hs, ws, cin), lambda bi, ri: (bi, 0, 0, 0)),
        _resident_spec((9, cin, cout), lambda bi, ri: (0, 0, 0)),
        _resident_spec((1, cout), lambda bi, ri: (0, 0)),
        _resident_spec((1, cout), lambda bi, ri: (0, 0)),
    ]
    args = [xs.astype(jnp.bfloat16), w9.astype(jnp.bfloat16),
            scale.reshape(1, cout).astype(jnp.float32),
            shift.reshape(1, cout).astype(jnp.float32)]
    if has_skip:
        in_specs += [
            _resident_spec((cin, cout), lambda bi, ri: (0, 0)),
            _resident_spec((1, cout), lambda bi, ri: (0, 0)),
            _resident_spec((1, cout), lambda bi, ri: (0, 0)),
        ]
        args += [skip_w.astype(jnp.bfloat16),
                 skip_scale.reshape(1, cout).astype(jnp.float32),
                 skip_shift.reshape(1, cout).astype(jnp.float32)]
    if has_res:
        in_specs.append(pl.BlockSpec((1, th, wo, cout),
                                     lambda bi, ri: (bi, ri, 0, 0)))
        args.append(residual.astype(jnp.bfloat16))            # bf16 residual stream

    out_shapes = [jax.ShapeDtypeStruct((b, ho, wo, cout), out_dtype)]
    out_specs = [pl.BlockSpec((1, th, wo, cout), lambda bi, ri: (bi, ri, 0, 0))]
    if has_skip:
        out_shapes.append(jax.ShapeDtypeStruct((b, ho, wo, cout), skip_dtype))
        out_specs.append(pl.BlockSpec((1, th, wo, cout),
                                      lambda bi, ri: (bi, ri, 0, 0)))

    kernel = functools.partial(_conv_block_kernel, stride=stride, th=th, wo=wo,
                               relu=relu, has_res=has_res, has_skip=has_skip,
                               valid_hw=valid_hw)

    # VMEM budget (conservative: assume double buffering everywhere).
    isz = lambda d: jnp.dtype(d).itemsize
    vmem = 2 * (s2 * hs * ws * cin * 2)                        # input slab (bf16)
    vmem += 2 * (9 * cin * cout * 2 + 2 * cout * 4)            # weights + BN vectors
    if has_skip:
        vmem += 2 * (cin * cout * 2 + 2 * cout * 4)
    if has_res:
        vmem += 2 * (th * wo * cout * 2)
    vmem += 2 * (th * wo * cout * isz(out_dtype))
    if has_skip:
        vmem += 2 * (th * wo * cout * isz(skip_dtype))
    vmem += 8 * th * wo * max(cin, cout) * 4                   # acc / tap-slice headroom
    vmem_limit = int(min(max(vmem, 32 << 20), 100 << 20))

    flops = 2 * b * ho * wo * 9 * cin * cout
    if has_skip:
        flops += 2 * b * ho * wo * cin * cout
    bytes_accessed = (xs.size * 2 + 9 * cin * cout * 2 + 2 * cout * 4
                      + b * ho * wo * cout * isz(out_dtype)
                      + (b * ho * wo * cout * isz(skip_dtype) if has_skip else 0)
                      + (residual.size * 2 if has_res else 0))

    outs = pl.pallas_call(
        kernel,
        out_shape=tuple(out_shapes),
        grid=grid,
        in_specs=in_specs,
        out_specs=tuple(out_specs),
        compiler_params=pltpu.CompilerParams(
            dimension_semantics=("parallel", "parallel"),   # row tiles have no carry
            vmem_limit_bytes=vmem_limit),
        cost_estimate=pl.CostEstimate(flops=flops, transcendentals=0,
                                      bytes_accessed=bytes_accessed),
    )(*args)
    return outs


# ----------------------------------------------------------------------------
# JAX glue: channel padding, parity slabs, weight / BN folding, tiling
# ----------------------------------------------------------------------------
def _pad_channels(x, cp):
    c = x.shape[-1]
    if c == cp:
        return x
    return jnp.pad(x, [(0, 0)] * (x.ndim - 1) + [(0, cp - c)])


def _conv_out_hw(h, w, stride):
    return (h + 2 - 3) // stride + 1, (w + 2 - 3) // stride + 1


def _pick_row_tile(ho, wo_p, cap_rows=1024):
    """Largest row tile with th*wo_p <= cap_rows; pad ho so it tiles evenly
    (avoids the th=1 degenerate grid for awkward/prime ho).
    NOTE: keep cap_rows <= 512 on v7x if the full slab stays VMEM-resident."""
    th = max(1, min(ho, cap_rows // max(wo_p, 1)))
    return th, _round_up(ho, th)


def _make_slabs(x_nhwc, stride, ho_p, wo_p):
    """Spatial pad=1 then stride-parity decomposition (no HBM zero-inflation).

    Conv tap (dy, dx) at output (i, j) reads
    slab[(dy % s) * s + dx % s][i + dy // s, j + dx // s, :].
    The slab grid is sized for the padded output (ho_p, wo_p) and its width is
    rounded up to a sublane multiple so every in-kernel slice stays tile-dense."""
    b, h, w, c = x_nhwc.shape
    xp = jnp.pad(x_nhwc, ((0, 0), (1, 1), (1, 1), (0, 0)))
    ext = 2 // stride
    hs = ho_p + ext
    ws = _round_up(wo_p + ext, SUBLANE)
    slabs = []
    for qr in range(stride):
        for qc in range(stride):
            s = xp[:, qr::stride, qc::stride, :]
            s = s[:, :hs, :ws, :]
            ph, pw = hs - s.shape[1], ws - s.shape[2]
            if ph or pw:
                s = jnp.pad(s, ((0, 0), (0, ph), (0, pw), (0, 0)))
            slabs.append(s)
    xs = jnp.stack(slabs, axis=1).reshape(b * stride * stride, hs, ws, c)
    return xs.astype(jnp.bfloat16)


def _w3x3_taps(w, cin_p, cout_p):   # torch (Co, Ci, 3, 3) -> (9, Ci_p, Co_p)
    cout, cin = w.shape[0], w.shape[1]
    wt = jnp.transpose(w, (2, 3, 1, 0)).reshape(9, cin, cout)
    return jnp.zeros((9, cin_p, cout_p), jnp.float32).at[:, :cin, :cout].set(wt)


def _w1x1_mat(w, cin_p, cout_p):    # torch (Co, Ci, 1, 1) -> (Ci_p, Co_p)
    cout, cin = w.shape[0], w.shape[1]
    wm = jnp.transpose(w[:, :, 0, 0], (1, 0))
    return jnp.zeros((cin_p, cout_p), jnp.float32).at[:cin, :cout].set(wm)


def _bn_fold(bn, cout_p):
    scale = bn["gamma"] / jnp.sqrt(bn["var"] + BN_EPS)
    shift = bn["beta"] - bn["mean"] * scale
    c = scale.shape[0]
    scale_p = jnp.zeros((cout_p,), jnp.float32).at[:c].set(scale)
    shift_p = jnp.zeros((cout_p,), jnp.float32).at[:c].set(shift)
    return scale_p, shift_p


# ----------------------------------------------------------------------------
# residual block (eval-mode BatchNorm folded into scale/shift)
# ----------------------------------------------------------------------------
def _init_bn(key, dim):
    k1, k2, k3, k4 = jax.random.split(key, 4)
    return dict(
        gamma=1.0 + 0.1 * jax.random.normal(k1, (dim,), jnp.float32),
        beta=0.1 * jax.random.normal(k2, (dim,), jnp.float32),
        mean=0.1 * jax.random.normal(k3, (dim,), jnp.float32),
        var=0.5 + jax.random.uniform(k4, (dim,), jnp.float32),
    )


def init_residual(key, inp_dim, out_dim, stride=1):
    ks = jax.random.split(key, 5)
    p = dict(stride=stride, inp_dim=inp_dim, out_dim=out_dim)
    p["conv1_w"] = 0.2 * jax.random.normal(ks[0], (out_dim, inp_dim, 3, 3), jnp.float32)
    p["bn1"] = _init_bn(ks[1], out_dim)
    p["conv2_w"] = 0.2 * jax.random.normal(ks[2], (out_dim, out_dim, 3, 3), jnp.float32)
    p["bn2"] = _init_bn(ks[3], out_dim)
    if stride != 1 or inp_dim != out_dim:
        kk = jax.random.split(ks[4], 2)
        p["skip_w"] = 0.2 * jax.random.normal(kk[0], (out_dim, inp_dim, 1, 1), jnp.float32)
        p["skip_bn"] = _init_bn(kk[1], out_dim)
    return p


def residual_forward_nhwc(p, x, *, cap_rows=1024):
    """x: (B, H, W, Cin) float32 NHWC -> (B, Ho, Wo, Cout) float32 NHWC."""
    stride = p["stride"]
    cin, cout = p["inp_dim"], p["out_dim"]
    cin_p, cout_p = _round_up(cin, LANE), _round_up(cout, LANE)
    b, h, w, _ = x.shape

    ho, wo = _conv_out_hw(h, w, stride)
    wo_p = _round_up(wo, SUBLANE)
    th, ho_p = _pick_row_tile(ho, wo_p, cap_rows)
    padded = (ho_p > ho) or (wo_p > wo)

    xp = _pad_channels(x.astype(jnp.float32), cin_p)           # (B, H, W, Cin_p)
    has_skip = "skip_w" in p

    # conv1 (+ fused 1x1 skip projection) -> bn1 -> relu : one kernel.
    xs1 = _make_slabs(xp, stride, ho_p, wo_p)
    sc1, sh1 = _bn_fold(p["bn1"], cout_p)
    if has_skip:
        ssc, ssh = _bn_fold(p["skip_bn"], cout_p)
        relu1, skip = conv3x3_block(
            xs1, _w3x3_taps(p["conv1_w"], cin_p, cout_p), sc1, sh1, (ho_p, wo_p),
            stride=stride, th=th,
            skip_w=_w1x1_mat(p["skip_w"], cin_p, cout_p),
            skip_scale=ssc, skip_shift=ssh,
            relu=True, out_dtype=jnp.bfloat16, skip_dtype=jnp.bfloat16,
            valid_hw=(ho, wo) if padded else None)
    else:
        (relu1,) = conv3x3_block(
            xs1, _w3x3_taps(p["conv1_w"], cin_p, cout_p), sc1, sh1, (ho_p, wo_p),
            stride=stride, th=th, relu=True, out_dtype=jnp.bfloat16,
            valid_hw=(ho, wo) if padded else None)
        # identity skip (stride == 1, cin == cout): residual is x itself,
        # streamed to conv2 as bf16 (halves the residual HBM read).
        skip = jnp.pad(xp, ((0, 0), (0, ho_p - h), (0, wo_p - w), (0, 0))
                       ).astype(jnp.bfloat16)

    # conv2 -> bn2 -> (+skip) -> relu : second kernel (stride 1, fp32 out).
    xs2 = _make_slabs(relu1, 1, ho_p, wo_p)
    sc2, sh2 = _bn_fold(p["bn2"], cout_p)
    (out,) = conv3x3_block(
        xs2, _w3x3_taps(p["conv2_w"], cout_p, cout_p), sc2, sh2, (ho_p, wo_p),
        stride=1, th=th, residual=skip, relu=True, out_dtype=jnp.float32)
    return out[:, :ho, :wo, :cout]


def residual_module_forward(p, x_nchw):
    x = jnp.transpose(x_nchw, (0, 2, 3, 1)).astype(jnp.float32)    # NCHW -> NHWC
    y = residual_forward_nhwc(p, x)
    return jnp.transpose(y, (0, 3, 1, 2))                           # NHWC -> NCHW


# ----------------------------------------------------------------------------
# pure-JAX reference (mirrors the PyTorch graph, NCHW, fp32)
# ----------------------------------------------------------------------------
def _ref_conv(x, w, stride, pad):
    return lax.conv_general_dilated(
        x, w, (stride, stride), [(pad, pad), (pad, pad)],
        dimension_numbers=("NCHW", "OIHW", "NCHW"),
        precision=lax.Precision.HIGHEST)


def _ref_bn(x, bn):
    s = bn["gamma"] / jnp.sqrt(bn["var"] + BN_EPS)
    b = bn["beta"] - bn["mean"] * s
    return x * s.reshape(1, -1, 1, 1) + b.reshape(1, -1, 1, 1)


def _ref_residual(p, x):
    y = jax.nn.relu(_ref_bn(_ref_conv(x, p["conv1_w"], p["stride"], 1), p["bn1"]))
    y = _ref_bn(_ref_conv(y, p["conv2_w"], 1, 1), p["bn2"])
    if "skip_w" in p:
        skip = _ref_bn(_ref_conv(x, p["skip_w"], p["stride"], 0), p["skip_bn"])
    else:
        skip = x
    return jax.nn.relu(y + skip)


# ----------------------------------------------------------------------------
if __name__ == "__main__":
    key = jax.random.PRNGKey(0)
    x_key, k1, k2, k3 = jax.random.split(key, 4)
    x = jax.random.normal(x_key, (2, 4, 16, 16), jnp.float32)    # NCHW

    cases = [
        (init_residual(k1, 4, 4, stride=1), (2, 4, 16, 16)),     # identity skip
        (init_residual(k2, 4, 8, stride=1), (2, 8, 16, 16)),     # 1x1-conv skip (fused)
        (init_residual(k3, 4, 8, stride=2), (2, 8, 8, 8)),       # stride-2 + skip
    ]
    for params, expect_shape in cases:
        fwd = jax.jit(functools.partial(residual_module_forward, params))
        out = jax.block_until_ready(fwd(x))
        assert out.shape == expect_shape, (out.shape, expect_shape)
        ref = jax.block_until_ready(_ref_residual(params, x))
        # bf16 MXU operands + bf16 intermediates with fp32 accumulation vs. a
        # fully-fp32 reference: observed max abs error ~3e-2 over two conv
        # layers, so validate at 5e-2.
        np.testing.assert_allclose(np.asarray(out), np.asarray(ref),
                                   rtol=5e-2, atol=5e-2)
    print("KERNEL_OK")
</pallas_src>

<mosaic_0001>
module attributes {stable_mosaic.version = 11 : i64} {
  func.func @_conv_block_kernel(%arg0: i32, %arg1: i32, %arg2: memref<1x18x24x128xbf16, #tpu.memory_space<vmem>>, %arg3: memref<9x128x128xbf16, #tpu.memory_space<vmem>>, %arg4: memref<1x128xf32, #tpu.memory_space<vmem>>, %arg5: memref<1x128xf32, #tpu.memory_space<vmem>>, %arg6: memref<1x16x16x128xbf16, #tpu.memory_space<vmem>>) attributes {dimension_semantics = [#tpu.dimension_semantics<parallel>, #tpu.dimension_semantics<parallel>], iteration_bounds = array<i64: 2, 1>, scalar_prefetch = 0 : i64, scratch_operands = 0 : i64, tpu.core_type = #tpu.core_type<tc>, window_params = [{pipeline_mode = #tpu.pipeline_mode<synchronous>, transform_indices = @transform_0, window_bounds = array<i64: 1, 18, 24, 128>}, {pipeline_mode = #tpu.pipeline_mode<synchronous>, transform_indices = @transform_1, window_bounds = array<i64: 9, 128, 128>}, {pipeline_mode = #tpu.pipeline_mode<synchronous>, transform_indices = @transform_2, window_bounds = array<i64: 1, 128>}, {pipeline_mode = #tpu.pipeline_mode<synchronous>, transform_indices = @transform_3, window_bounds = array<i64: 1, 128>}, {transform_indices = @transform_4, window_bounds = array<i64: 1, 16, 16, 128>}]} {
    %c16_i32 = arith.constant 16 : i32
    %0 = arith.muli %arg1, %c16_i32 : i32
    %cst = arith.constant 0.000000e+00 : f32
    %1 = vector.broadcast %cst : f32 to vector<256x128xf32>
    %c0_i32 = arith.constant 0 : i32
    %2 = arith.addi %0, %c0_i32 : i32
    %c0 = arith.constant 0 : index
    %3 = arith.index_cast %2 : i32 to index
    %c0_0 = arith.constant 0 : index
    %c0_1 = arith.constant 0 : index
    %4 = vector.load %arg2[%c0, %3, %c0_0, %c0_1] : memref<1x18x24x128xbf16, #tpu.memory_space<vmem>>, vector<1x16x16x128xbf16>
    %5 = vector.shape_cast %4 : vector<1x16x16x128xbf16> to vector<16x16x128xbf16>
    %6 = vector.shape_cast %5 : vector<16x16x128xbf16> to vector<256x128xbf16>
    %c0_2 = arith.constant 0 : index
    %c0_3 = arith.constant 0 : index
    %c0_4 = arith.constant 0 : index
    %7 = vector.load %arg3[%c0_2, %c0_3, %c0_4] : memref<9x128x128xbf16, #tpu.memory_space<vmem>>, vector<1x128x128xbf16>
    %8 = vector.shape_cast %7 : vector<1x128x128xbf16> to vector<128x128xbf16>
    %cst_5 = arith.constant dense<0.000000e+00> : vector<256x128xf32>
    %9 = tpu.matmul %6, %8, %cst_5 {dimension_numbers = #tpu.dot_dimension_numbers<[1], [0], [0], [1], [0, 0, 1, 1], [], []>} : vector<256x128xbf16>, vector<128x128xbf16>, vector<256x128xf32> -> vector<256x128xf32>
    %10 = arith.addf %1, %9 : vector<256x128xf32>
    %c0_i32_6 = arith.constant 0 : i32
    %11 = arith.addi %0, %c0_i32_6 : i32
    %c0_7 = arith.constant 0 : index
    %12 = arith.index_cast %11 : i32 to index
    %c1 = arith.constant 1 : index
    %c0_8 = arith.constant 0 : index
    %13 = vector.load %arg2[%c0_7, %12, %c1, %c0_8] : memref<1x18x24x128xbf16, #tpu.memory_space<vmem>>, vector<1x16x16x128xbf16>
    %14 = vector.shape_cast %13 : vector<1x16x16x128xbf16> to vector<16x16x128xbf16>
    %15 = vector.shape_cast %14 : vector<16x16x128xbf16> to vector<256x128xbf16>
    %c1_9 = arith.constant 1 : index
    %c0_10 = arith.constant 0 : index
    %c0_11 = arith.constant 0 : index
    %16 = vector.load %arg3[%c1_9, %c0_10, %c0_11] : memref<9x128x128xbf16, #tpu.memory_space<vmem>>, vector<1x128x128xbf16>
    %17 = vector.shape_cast %16 : vector<1x128x128xbf16> to vector<128x128xbf16>
    %cst_12 = arith.constant dense<0.000000e+00> : vector<256x128xf32>
    %18 = tpu.matmul %15, %17, %cst_12 {dimension_numbers = #tpu.dot_dimension_numbers<[1], [0], [0], [1], [0, 0, 1, 1], [], []>} : vector<256x128xbf16>, vector<128x128xbf16>, vector<256x128xf32> -> vector<256x128xf32>
    %19 = arith.addf %10, %18 : vector<256x128xf32>
    %c0_i32_13 = arith.constant 0 : i32
    %20 = arith.addi %0, %c0_i32_13 : i32
    %c0_14 = arith.constant 0 : index
    %21 = arith.index_cast %20 : i32 to index
    %c2 = arith.constant 2 : index
    %c0_15 = arith.constant 0 : index
    %22 = vector.load %arg2[%c0_14, %21, %c2, %c0_15] : memref<1x18x24x128xbf16, #tpu.memory_space<vmem>>, vector<1x16x16x128xbf16>
    %23 = vector.shape_cast %22 : vector<1x16x16x128xbf16> to vector<16x16x128xbf16>
    %24 = vector.shape_cast %23 : vector<16x16x128xbf16> to vector<256x128xbf16>
    %c2_16 = arith.constant 2 : index
    %c0_17 = arith.constant 0 : index
    %c0_18 = arith.constant 0 : index
    %25 = vector.load %arg3[%c2_16, %c0_17, %c0_18] : memref<9x128x128xbf16, #tpu.memory_space<vmem>>, vector<1x128x128xbf16>
    %26 = vector.shape_cast %25 : vector<1x128x128xbf16> to vector<128x128xbf16>
    %cst_19 = arith.constant dense<0.000000e+00> : vector<256x128xf32>
    %27 = tpu.matmul %24, %26, %cst_19 {dimension_numbers = #tpu.dot_dimension_numbers<[1], [0], [0], [1], [0, 0, 1, 1], [], []>} : vector<256x128xbf16>, vector<128x128xbf16>, vector<256x128xf32> -> vector<256x128xf32>
    %28 = arith.addf %19, %27 : vector<256x128xf32>
    %c1_i32 = arith.constant 1 : i32
    %29 = arith.addi %0, %c1_i32 : i32
    %c0_20 = arith.constant 0 : index
    %30 = arith.index_cast %29 : i32 to index
    %c0_21 = arith.constant 0 : index
    %c0_22 = arith.constant 0 : index
    %31 = vector.load %arg2[%c0_20, %30, %c0_21, %c0_22] : memref<1x18x24x128xbf16, #tpu.memory_space<vmem>>, vector<1x16x16x128xbf16>
    %32 = vector.shape_cast %31 : vector<1x16x16x128xbf16> to vector<16x16x128xbf16>
    %33 = vector.shape_cast %32 : vector<16x16x128xbf16> to vector<256x128xbf16>
    %c3 = arith.constant 3 : index
    %c0_23 = arith.constant 0 : index
    %c0_24 = arith.constant 0 : index
    %34 = vector.load %arg3[%c3, %c0_23, %c0_24] : memref<9x128x128xbf16, #tpu.memory_space<vmem>>, vector<1x128x128xbf16>
    %35 = vector.shape_cast %34 : vector<1x128x128xbf16> to vector<128x128xbf16>
    %cst_25 = arith.constant dense<0.000000e+00> : vector<256x128xf32>
    %36 = tpu.matmul %33, %35, %cst_25 {dimension_numbers = #tpu.dot_dimension_numbers<[1], [0], [0], [1], [0, 0, 1, 1], [], []>} : vector<256x128xbf16>, vector<128x128xbf16>, vector<256x128xf32> -> vector<256x128xf32>
    %37 = arith.addf %28, %36 : vector<256x128xf32>
    %c1_i32_26 = arith.constant 1 : i32
    %38 = arith.addi %0, %c1_i32_26 : i32
    %c0_27 = arith.constant 0 : index
    %39 = arith.index_cast %38 : i32 to index
    %c1_28 = arith.constant 1 : index
    %c0_29 = arith.constant 0 : index
    %40 = vector.load %arg2[%c0_27, %39, %c1_28, %c0_29] : memref<1x18x24x128xbf16, #tpu.memory_space<vmem>>, vector<1x16x16x128xbf16>
    %41 = vector.shape_cast %40 : vector<1x16x16x128xbf16> to vector<16x16x128xbf16>
    %42 = vector.shape_cast %41 : vector<16x16x128xbf16> to vector<256x128xbf16>
    %c4 = arith.constant 4 : index
    %c0_30 = arith.constant 0 : index
    %c0_31 = arith.constant 0 : index
    %43 = vector.load %arg3[%c4, %c0_30, %c0_31] : memref<9x128x128xbf16, #tpu.memory_space<vmem>>, vector<1x128x128xbf16>
    %44 = vector.shape_cast %43 : vector<1x128x128xbf16> to vector<128x128xbf16>
    %cst_32 = arith.constant dense<0.000000e+00> : vector<256x128xf32>
    %45 = tpu.matmul %42, %44, %cst_32 {dimension_numbers = #tpu.dot_dimension_numbers<[1], [0], [0], [1], [0, 0, 1, 1], [], []>} : vector<256x128xbf16>, vector<128x128xbf16>, vector<256x128xf32> -> vector<256x128xf32>
    %46 = arith.addf %37, %45 : vector<256x128xf32>
    %c1_i32_33 = arith.constant 1 : i32
    %47 = arith.addi %0, %c1_i32_33 : i32
    %c0_34 = arith.constant 0 : index
    %48 = arith.index_cast %47 : i32 to index
    %c2_35 = arith.constant 2 : index
    %c0_36 = arith.constant 0 : index
    %49 = vector.load %arg2[%c0_34, %48, %c2_35, %c0_36] : memref<1x18x24x128xbf16, #tpu.memory_space<vmem>>, vector<1x16x16x128xbf16>
    %50 = vector.shape_cast %49 : vector<1x16x16x128xbf16> to vector<16x16x128xbf16>
    %51 = vector.shape_cast %50 : vector<16x16x128xbf16> to vector<256x128xbf16>
    %c5 = arith.constant 5 : index
    %c0_37 = arith.constant 0 : index
    %c0_38 = arith.constant 0 : index
    %52 = vector.load %arg3[%c5, %c0_37, %c0_38] : memref<9x128x128xbf16, #tpu.memory_space<vmem>>, vector<1x128x128xbf16>
    %53 = vector.shape_cast %52 : vector<1x128x128xbf16> to vector<128x128xbf16>
    %cst_39 = arith.constant dense<0.000000e+00> : vector<256x128xf32>
    %54 = tpu.matmul %51, %53, %cst_39 {dimension_numbers = #tpu.dot_dimension_numbers<[1], [0], [0], [1], [0, 0, 1, 1], [], []>} : vector<256x128xbf16>, vector<128x128xbf16>, vector<256x128xf32> -> vector<256x128xf32>
    %55 = arith.addf %46, %54 : vector<256x128xf32>
    %c2_i32 = arith.constant 2 : i32
    %56 = arith.addi %0, %c2_i32 : i32
    %c0_40 = arith.constant 0 : index
    %57 = arith.index_cast %56 : i32 to index
    %c0_41 = arith.constant 0 : index
    %c0_42 = arith.constant 0 : index
    %58 = vector.load %arg2[%c0_40, %57, %c0_41, %c0_42] : memref<1x18x24x128xbf16, #tpu.memory_space<vmem>>, vector<1x16x16x128xbf16>
    %59 = vector.shape_cast %58 : vector<1x16x16x128xbf16> to vector<16x16x128xbf16>
    %60 = vector.shape_cast %59 : vector<16x16x128xbf16> to vector<256x128xbf16>
    %c6 = arith.constant 6 : index
    %c0_43 = arith.constant 0 : index
    %c0_44 = arith.constant 0 : index
    %61 = vector.load %arg3[%c6, %c0_43, %c0_44] : memref<9x128x128xbf16, #tpu.memory_space<vmem>>, vector<1x128x128xbf16>
    %62 = vector.shape_cast %61 : vector<1x128x128xbf16> to vector<128x128xbf16>
    %cst_45 = arith.constant dense<0.000000e+00> : vector<256x128xf32>
    %63 = tpu.matmul %60, %62, %cst_45 {dimension_numbers = #tpu.dot_dimension_numbers<[1], [0], [0], [1], [0, 0, 1, 1], [], []>} : vector<256x128xbf16>, vector<128x128xbf16>, vector<256x128xf32> -> vector<256x128xf32>
    %64 = arith.addf %55, %63 : vector<256x128xf32>
    %c2_i32_46 = arith.constant 2 : i32
    %65 = arith.addi %0, %c2_i32_46 : i32
    %c0_47 = arith.constant 0 : index
    %66 = arith.index_cast %65 : i32 to index
    %c1_48 = arith.constant 1 : index
    %c0_49 = arith.constant 0 : index
    %67 = vector.load %arg2[%c0_47, %66, %c1_48, %c0_49] : memref<1x18x24x128xbf16, #tpu.memory_space<vmem>>, vector<1x16x16x128xbf16>
    %68 = vector.shape_cast %67 : vector<1x16x16x128xbf16> to vector<16x16x128xbf16>
    %69 = vector.shape_cast %68 : vector<16x16x128xbf16> to vector<256x128xbf16>
    %c7 = arith.constant 7 : index
    %c0_50 = arith.constant 0 : index
    %c0_51 = arith.constant 0 : index
    %70 = vector.load %arg3[%c7, %c0_50, %c0_51] : memref<9x128x128xbf16, #tpu.memory_space<vmem>>, vector<1x128x128xbf16>
    %71 = vector.shape_cast %70 : vector<1x128x128xbf16> to vector<128x128xbf16>
    %cst_52 = arith.constant dense<0.000000e+00> : vector<256x128xf32>
    %72 = tpu.matmul %69, %71, %cst_52 {dimension_numbers = #tpu.dot_dimension_numbers<[1], [0], [0], [1], [0, 0, 1, 1], [], []>} : vector<256x128xbf16>, vector<128x128xbf16>, vector<256x128xf32> -> vector<256x128xf32>
    %73 = arith.addf %64, %72 : vector<256x128xf32>
    %c2_i32_53 = arith.constant 2 : i32
    %74 = arith.addi %0, %c2_i32_53 : i32
    %c0_54 = arith.constant 0 : index
    %75 = arith.index_cast %74 : i32 to index
    %c2_55 = arith.constant 2 : index
    %c0_56 = arith.constant 0 : index
    %76 = vector.load %arg2[%c0_54, %75, %c2_55, %c0_56] : memref<1x18x24x128xbf16, #tpu.memory_space<vmem>>, vector<1x16x16x128xbf16>
    %77 = vector.shape_cast %76 : vector<1x16x16x128xbf16> to vector<16x16x128xbf16>
    %78 = vector.shape_cast %77 : vector<16x16x128xbf16> to vector<256x128xbf16>
    %c8 = arith.constant 8 : index
    %c0_57 = arith.constant 0 : index
    %c0_58 = arith.constant 0 : index
    %79 = vector.load %arg3[%c8, %c0_57, %c0_58] : memref<9x128x128xbf16, #tpu.memory_space<vmem>>, vector<1x128x128xbf16>
    %80 = vector.shape_cast %79 : vector<1x128x128xbf16> to vector<128x128xbf16>
    %cst_59 = arith.constant dense<0.000000e+00> : vector<256x128xf32>
    %81 = tpu.matmul %78, %80, %cst_59 {dimension_numbers = #tpu.dot_dimension_numbers<[1], [0], [0], [1], [0, 0, 1, 1], [], []>} : vector<256x128xbf16>, vector<128x128xbf16>, vector<256x128xf32> -> vector<256x128xf32>
    %82 = arith.addf %73, %81 : vector<256x128xf32>
    %c0_60 = arith.constant 0 : index
    %c0_61 = arith.constant 0 : index
    %83 = vector.load %arg4[%c0_60, %c0_61] : memref<1x128xf32, #tpu.memory_space<vmem>>, vector<1x128xf32>
    %84 = vector.broadcast %83 : vector<1x128xf32> to vector<256x128xf32>
    %85 = arith.mulf %82, %84 : vector<256x128xf32>
    %c0_62 = arith.constant 0 : index
    %c0_63 = arith.constant 0 : index
    %86 = vector.load %arg5[%c0_62, %c0_63] : memref<1x128xf32, #tpu.memory_space<vmem>>, vector<1x128xf32>
    %87 = vector.broadcast %86 : vector<1x128xf32> to vector<256x128xf32>
    %88 = arith.addf %85, %87 : vector<256x128xf32>
    %cst_64 = arith.constant 0.000000e+00 : f32
    %89 = vector.broadcast %cst_64 : f32 to vector<256x128xf32>
    %90 = arith.maximumf %88, %89 : vector<256x128xf32>
    %91 = vector.shape_cast %90 : vector<256x128xf32> to vector<16x16x128xf32>
    %92 = vector.shape_cast %91 : vector<16x16x128xf32> to vector<1x16x16x128xf32>
    %93 = arith.truncf %92 : vector<1x16x16x128xf32> to vector<1x16x16x128xbf16>
    %c0_65 = arith.constant 0 : index
    %c0_66 = arith.constant 0 : index
    %c0_67 = arith.constant 0 : index
    %c0_68 = arith.constant 0 : index
    %94 = vector.load %arg6[%c0_65, %c0_66, %c0_67, %c0_68] : memref<1x16x16x128xbf16, #tpu.memory_space<vmem>>, vector<1x16x16x128xbf16>
    tpu.vector_store %arg6[%c0_65, %c0_66, %c0_67, %c0_68], %93 {strides = array<i32>} : memref<1x16x16x128xbf16, #tpu.memory_space<vmem>>, vector<1x16x16x128xbf16>,
    return
  }
  func.func @transform_0(%arg0: i32, %arg1: i32) -> (i32, i32, i32, i32) {
    %c0_i32 = arith.constant 0 : i32
    %c0_i32_0 = arith.constant 0 : i32
    %c0_i32_1 = arith.constant 0 : i32
    %c0_i32_2 = arith.constant 0 : i32
    return %arg0, %c0_i32, %c0_i32_0, %c0_i32_1 : i32, i32, i32, i32
  }
  func.func @transform_1(%arg0: i32, %arg1: i32) -> (i32, i32, i32) {
    %c0_i32 = arith.constant 0 : i32
    %c0_i32_0 = arith.constant 0 : i32
    %c0_i32_1 = arith.constant 0 : i32
    %c0_i32_2 = arith.constant 0 : i32
    return %c0_i32, %c0_i32_0, %c0_i32_1 : i32, i32, i32
  }
  func.func @transform_2(%arg0: i32, %arg1: i32) -> (i32, i32) {
    %c0_i32 = arith.constant 0 : i32
    %c0_i32_0 = arith.constant 0 : i32
    %c0_i32_1 = arith.constant 0 : i32
    return %c0_i32, %c0_i32_0 : i32, i32
  }
  func.func @transform_3(%arg0: i32, %arg1: i32) -> (i32, i32) {
    %c0_i32 = arith.constant 0 : i32
    %c0_i32_0 = arith.constant 0 : i32
    %c0_i32_1 = arith.constant 0 : i32
    return %c0_i32, %c0_i32_0 : i32, i32
  }
  func.func @transform_4(%arg0: i32, %arg1: i32) -> (i32, i32, i32, i32) {
    %c0_i32 = arith.constant 0 : i32
    %c0_i32_0 = arith.constant 0 : i32
    %c0_i32_1 = arith.constant 0 : i32
    return %arg0, %arg1, %c0_i32, %c0_i32_0 : i32, i32, i32, i32
  }
}

module attributes {stable_mosaic.version = 11 : i64} {
  func.func @_conv_block_kernel(%arg0: i32, %arg1: i32, %arg2: memref<1x18x24x128xbf16, #tpu.memory_space<vmem>>, %arg3: memref<9x128x128xbf16, #tpu.memory_space<vmem>>, %arg4: memref<1x128xf32, #tpu.memory_space<vmem>>, %arg5: memref<1x128xf32, #tpu.memory_space<vmem>>, %arg6: memref<1x16x16x128xbf16, #tpu.memory_space<vmem>>, %arg7: memref<1x16x16x128xf32, #tpu.memory_space<vmem>>) attributes {dimension_semantics = [#tpu.dimension_semantics<parallel>, #tpu.dimension_semantics<parallel>], iteration_bounds = array<i64: 2, 1>, scalar_prefetch = 0 : i64, scratch_operands = 0 : i64, tpu.core_type = #tpu.core_type<tc>, window_params = [{pipeline_mode = #tpu.pipeline_mode<synchronous>, transform_indices = @transform_0, window_bounds = array<i64: 1, 18, 24, 128>}, {pipeline_mode = #tpu.pipeline_mode<synchronous>, transform_indices = @transform_1, window_bounds = array<i64: 9, 128, 128>}, {pipeline_mode = #tpu.pipeline_mode<synchronous>, transform_indices = @transform_2, window_bounds = array<i64: 1, 128>}, {pipeline_mode = #tpu.pipeline_mode<synchronous>, transform_indices = @transform_3, window_bounds = array<i64: 1, 128>}, {transform_indices = @transform_4, window_bounds = array<i64: 1, 16, 16, 128>}, {transform_indices = @transform_5, window_bounds = array<i64: 1, 16, 16, 128>}]} {
    %c16_i32 = arith.constant 16 : i32
    %0 = arith.muli %arg1, %c16_i32 : i32
    %cst = arith.constant 0.000000e+00 : f32
    %1 = vector.broadcast %cst : f32 to vector<256x128xf32>
    %c0_i32 = arith.constant 0 : i32
    %2 = arith.addi %0, %c0_i32 : i32
    %c0 = arith.constant 0 : index
    %3 = arith.index_cast %2 : i32 to index
    %c0_0 = arith.constant 0 : index
    %c0_1 = arith.constant 0 : index
    %4 = vector.load %arg2[%c0, %3, %c0_0, %c0_1] : memref<1x18x24x128xbf16, #tpu.memory_space<vmem>>, vector<1x16x16x128xbf16>
    %5 = vector.shape_cast %4 : vector<1x16x16x128xbf16> to vector<16x16x128xbf16>
    %6 = vector.shape_cast %5 : vector<16x16x128xbf16> to vector<256x128xbf16>
    %c0_2 = arith.constant 0 : index
    %c0_3 = arith.constant 0 : index
    %c0_4 = arith.constant 0 : index
    %7 = vector.load %arg3[%c0_2, %c0_3, %c0_4] : memref<9x128x128xbf16, #tpu.memory_space<vmem>>, vector<1x128x128xbf16>
    %8 = vector.shape_cast %7 : vector<1x128x128xbf16> to vector<128x128xbf16>
    %cst_5 = arith.constant dense<0.000000e+00> : vector<256x128xf32>
    %9 = tpu.matmul %6, %8, %cst_5 {dimension_numbers = #tpu.dot_dimension_numbers<[1], [0], [0], [1], [0, 0, 1, 1], [], []>} : vector<256x128xbf16>, vector<128x128xbf16>, vector<256x128xf32> -> vector<256x128xf32>
    %10 = arith.addf %1, %9 : vector<256x128xf32>
    %c0_i32_6 = arith.constant 0 : i32
    %11 = arith.addi %0, %c0_i32_6 : i32
    %c0_7 = arith.constant 0 : index
    %12 = arith.index_cast %11 : i32 to index
    %c1 = arith.constant 1 : index
    %c0_8 = arith.constant 0 : index
    %13 = vector.load %arg2[%c0_7, %12, %c1, %c0_8] : memref<1x18x24x128xbf16, #tpu.memory_space<vmem>>, vector<1x16x16x128xbf16>
    %14 = vector.shape_cast %13 : vector<1x16x16x128xbf16> to vector<16x16x128xbf16>
    %15 = vector.shape_cast %14 : vector<16x16x128xbf16> to vector<256x128xbf16>
    %c1_9 = arith.constant 1 : index
    %c0_10 = arith.constant 0 : index
    %c0_11 = arith.constant 0 : index
    %16 = vector.load %arg3[%c1_9, %c0_10, %c0_11] : memref<9x128x128xbf16, #tpu.memory_space<vmem>>, vector<1x128x128xbf16>
    %17 = vector.shape_cast %16 : vector<1x128x128xbf16> to vector<128x128xbf16>
    %cst_12 = arith.constant dense<0.000000e+00> : vector<256x128xf32>
    %18 = tpu.matmul %15, %17, %cst_12 {dimension_numbers = #tpu.dot_dimension_numbers<[1], [0], [0], [1], [0, 0, 1, 1], [], []>} : vector<256x128xbf16>, vector<128x128xbf16>, vector<256x128xf32> -> vector<256x128xf32>
    %19 = arith.addf %10, %18 : vector<256x128xf32>
    %c0_i32_13 = arith.constant 0 : i32
    %20 = arith.addi %0, %c0_i32_13 : i32
    %c0_14 = arith.constant 0 : index
    %21 = arith.index_cast %20 : i32 to index
    %c2 = arith.constant 2 : index
    %c0_15 = arith.constant 0 : index
    %22 = vector.load %arg2[%c0_14, %21, %c2, %c0_15] : memref<1x18x24x128xbf16, #tpu.memory_space<vmem>>, vector<1x16x16x128xbf16>
    %23 = vector.shape_cast %22 : vector<1x16x16x128xbf16> to vector<16x16x128xbf16>
    %24 = vector.shape_cast %23 : vector<16x16x128xbf16> to vector<256x128xbf16>
    %c2_16 = arith.constant 2 : index
    %c0_17 = arith.constant 0 : index
    %c0_18 = arith.constant 0 : index
    %25 = vector.load %arg3[%c2_16, %c0_17, %c0_18] : memref<9x128x128xbf16, #tpu.memory_space<vmem>>, vector<1x128x128xbf16>
    %26 = vector.shape_cast %25 : vector<1x128x128xbf16> to vector<128x128xbf16>
    %cst_19 = arith.constant dense<0.000000e+00> : vector<256x128xf32>
    %27 = tpu.matmul %24, %26, %cst_19 {dimension_numbers = #tpu.dot_dimension_numbers<[1], [0], [0], [1], [0, 0, 1, 1], [], []>} : vector<256x128xbf16>, vector<128x128xbf16>, vector<256x128xf32> -> vector<256x128xf32>
    %28 = arith.addf %19, %27 : vector<256x128xf32>
    %c1_i32 = arith.constant 1 : i32
    %29 = arith.addi %0, %c1_i32 : i32
    %c0_20 = arith.constant 0 : index
    %30 = arith.index_cast %29 : i32 to index
    %c0_21 = arith.constant 0 : index
    %c0_22 = arith.constant 0 : index
    %31 = vector.load %arg2[%c0_20, %30, %c0_21, %c0_22] : memref<1x18x24x128xbf16, #tpu.memory_space<vmem>>, vector<1x16x16x128xbf16>
    %32 = vector.shape_cast %31 : vector<1x16x16x128xbf16> to vector<16x16x128xbf16>
    %33 = vector.shape_cast %32 : vector<16x16x128xbf16> to vector<256x128xbf16>
    %c3 = arith.constant 3 : index
    %c0_23 = arith.constant 0 : index
    %c0_24 = arith.constant 0 : index
    %34 = vector.load %arg3[%c3, %c0_23, %c0_24] : memref<9x128x128xbf16, #tpu.memory_space<vmem>>, vector<1x128x128xbf16>
    %35 = vector.shape_cast %34 : vector<1x128x128xbf16> to vector<128x128xbf16>
    %cst_25 = arith.constant dense<0.000000e+00> : vector<256x128xf32>
    %36 = tpu.matmul %33, %35, %cst_25 {dimension_numbers = #tpu.dot_dimension_numbers<[1], [0], [0], [1], [0, 0, 1, 1], [], []>} : vector<256x128xbf16>, vector<128x128xbf16>, vector<256x128xf32> -> vector<256x128xf32>
    %37 = arith.addf %28, %36 : vector<256x128xf32>
    %c1_i32_26 = arith.constant 1 : i32
    %38 = arith.addi %0, %c1_i32_26 : i32
    %c0_27 = arith.constant 0 : index
    %39 = arith.index_cast %38 : i32 to index
    %c1_28 = arith.constant 1 : index
    %c0_29 = arith.constant 0 : index
    %40 = vector.load %arg2[%c0_27, %39, %c1_28, %c0_29] : memref<1x18x24x128xbf16, #tpu.memory_space<vmem>>, vector<1x16x16x128xbf16>
    %41 = vector.shape_cast %40 : vector<1x16x16x128xbf16> to vector<16x16x128xbf16>
    %42 = vector.shape_cast %41 : vector<16x16x128xbf16> to vector<256x128xbf16>
    %c4 = arith.constant 4 : index
    %c0_30 = arith.constant 0 : index
    %c0_31 = arith.constant 0 : index
    %43 = vector.load %arg3[%c4, %c0_30, %c0_31] : memref<9x128x128xbf16, #tpu.memory_space<vmem>>, vector<1x128x128xbf16>
    %44 = vector.shape_cast %43 : vector<1x128x128xbf16> to vector<128x128xbf16>
    %cst_32 = arith.constant dense<0.000000e+00> : vector<256x128xf32>
    %45 = tpu.matmul %42, %44, %cst_32 {dimension_numbers = #tpu.dot_dimension_numbers<[1], [0], [0], [1], [0, 0, 1, 1], [], []>} : vector<256x128xbf16>, vector<128x128xbf16>, vector<256x128xf32> -> vector<256x128xf32>
    %46 = arith.addf %37, %45 : vector<256x128xf32>
    %c1_i32_33 = arith.constant 1 : i32
    %47 = arith.addi %0, %c1_i32_33 : i32
    %c0_34 = arith.constant 0 : index
    %48 = arith.index_cast %47 : i32 to index
    %c2_35 = arith.constant 2 : index
    %c0_36 = arith.constant 0 : index
    %49 = vector.load %arg2[%c0_34, %48, %c2_35, %c0_36] : memref<1x18x24x128xbf16, #tpu.memory_space<vmem>>, vector<1x16x16x128xbf16>
    %50 = vector.shape_cast %49 : vector<1x16x16x128xbf16> to vector<16x16x128xbf16>
    %51 = vector.shape_cast %50 : vector<16x16x128xbf16> to vector<256x128xbf16>
    %c5 = arith.constant 5 : index
    %c0_37 = arith.constant 0 : index
    %c0_38 = arith.constant 0 : index
    %52 = vector.load %arg3[%c5, %c0_37, %c0_38] : memref<9x128x128xbf16, #tpu.memory_space<vmem>>, vector<1x128x128xbf16>
    %53 = vector.shape_cast %52 : vector<1x128x128xbf16> to vector<128x128xbf16>
    %cst_39 = arith.constant dense<0.000000e+00> : vector<256x128xf32>
    %54 = tpu.matmul %51, %53, %cst_39 {dimension_numbers = #tpu.dot_dimension_numbers<[1], [0], [0], [1], [0, 0, 1, 1], [], []>} : vector<256x128xbf16>, vector<128x128xbf16>, vector<256x128xf32> -> vector<256x128xf32>
    %55 = arith.addf %46, %54 : vector<256x128xf32>
    %c2_i32 = arith.constant 2 : i32
    %56 = arith.addi %0, %c2_i32 : i32
    %c0_40 = arith.constant 0 : index
    %57 = arith.index_cast %56 : i32 to index
    %c0_41 = arith.constant 0 : index
    %c0_42 = arith.constant 0 : index
    %58 = vector.load %arg2[%c0_40, %57, %c0_41, %c0_42] : memref<1x18x24x128xbf16, #tpu.memory_space<vmem>>, vector<1x16x16x128xbf16>
    %59 = vector.shape_cast %58 : vector<1x16x16x128xbf16> to vector<16x16x128xbf16>
    %60 = vector.shape_cast %59 : vector<16x16x128xbf16> to vector<256x128xbf16>
    %c6 = arith.constant 6 : index
    %c0_43 = arith.constant 0 : index
    %c0_44 = arith.constant 0 : index
    %61 = vector.load %arg3[%c6, %c0_43, %c0_44] : memref<9x128x128xbf16, #tpu.memory_space<vmem>>, vector<1x128x128xbf16>
    %62 = vector.shape_cast %61 : vector<1x128x128xbf16> to vector<128x128xbf16>
    %cst_45 = arith.constant dense<0.000000e+00> : vector<256x128xf32>
    %63 = tpu.matmul %60, %62, %cst_45 {dimension_numbers = #tpu.dot_dimension_numbers<[1], [0], [0], [1], [0, 0, 1, 1], [], []>} : vector<256x128xbf16>, vector<128x128xbf16>, vector<256x128xf32> -> vector<256x128xf32>
    %64 = arith.addf %55, %63 : vector<256x128xf32>
    %c2_i32_46 = arith.constant 2 : i32
    %65 = arith.addi %0, %c2_i32_46 : i32
    %c0_47 = arith.constant 0 : index
    %66 = arith.index_cast %65 : i32 to index
    %c1_48 = arith.constant 1 : index
    %c0_49 = arith.constant 0 : index
    %67 = vector.load %arg2[%c0_47, %66, %c1_48, %c0_49] : memref<1x18x24x128xbf16, #tpu.memory_space<vmem>>, vector<1x16x16x128xbf16>
    %68 = vector.shape_cast %67 : vector<1x16x16x128xbf16> to vector<16x16x128xbf16>
    %69 = vector.shape_cast %68 : vector<16x16x128xbf16> to vector<256x128xbf16>
    %c7 = arith.constant 7 : index
    %c0_50 = arith.constant 0 : index
    %c0_51 = arith.constant 0 : index
    %70 = vector.load %arg3[%c7, %c0_50, %c0_51] : memref<9x128x128xbf16, #tpu.memory_space<vmem>>, vector<1x128x128xbf16>
    %71 = vector.shape_cast %70 : vector<1x128x128xbf16> to vector<128x128xbf16>
    %cst_52 = arith.constant dense<0.000000e+00> : vector<256x128xf32>
    %72 = tpu.matmul %69, %71, %cst_52 {dimension_numbers = #tpu.dot_dimension_numbers<[1], [0], [0], [1], [0, 0, 1, 1], [], []>} : vector<256x128xbf16>, vector<128x128xbf16>, vector<256x128xf32> -> vector<256x128xf32>
    %73 = arith.addf %64, %72 : vector<256x128xf32>
    %c2_i32_53 = arith.constant 2 : i32
    %74 = arith.addi %0, %c2_i32_53 : i32
    %c0_54 = arith.constant 0 : index
    %75 = arith.index_cast %74 : i32 to index
    %c2_55 = arith.constant 2 : index
    %c0_56 = arith.constant 0 : index
    %76 = vector.load %arg2[%c0_54, %75, %c2_55, %c0_56] : memref<1x18x24x128xbf16, #tpu.memory_space<vmem>>, vector<1x16x16x128xbf16>
    %77 = vector.shape_cast %76 : vector<1x16x16x128xbf16> to vector<16x16x128xbf16>
    %78 = vector.shape_cast %77 : vector<16x16x128xbf16> to vector<256x128xbf16>
    %c8 = arith.constant 8 : index
    %c0_57 = arith.constant 0 : index
    %c0_58 = arith.constant 0 : index
    %79 = vector.load %arg3[%c8, %c0_57, %c0_58] : memref<9x128x128xbf16, #tpu.memory_space<vmem>>, vector<1x128x128xbf16>
    %80 = vector.shape_cast %79 : vector<1x128x128xbf16> to vector<128x128xbf16>
    %cst_59 = arith.constant dense<0.000000e+00> : vector<256x128xf32>
    %81 = tpu.matmul %78, %80, %cst_59 {dimension_numbers = #tpu.dot_dimension_numbers<[1], [0], [0], [1], [0, 0, 1, 1], [], []>} : vector<256x128xbf16>, vector<128x128xbf16>, vector<256x128xf32> -> vector<256x128xf32>
    %82 = arith.addf %73, %81 : vector<256x128xf32>
    %c0_60 = arith.constant 0 : index
    %c0_61 = arith.constant 0 : index
    %83 = vector.load %arg4[%c0_60, %c0_61] : memref<1x128xf32, #tpu.memory_space<vmem>>, vector<1x128xf32>
    %84 = vector.broadcast %83 : vector<1x128xf32> to vector<256x128xf32>
    %85 = arith.mulf %82, %84 : vector<256x128xf32>
    %c0_62 = arith.constant 0 : index
    %c0_63 = arith.constant 0 : index
    %86 = vector.load %arg5[%c0_62, %c0_63] : memref<1x128xf32, #tpu.memory_space<vmem>>, vector<1x128xf32>
    %87 = vector.broadcast %86 : vector<1x128xf32> to vector<256x128xf32>
    %88 = arith.addf %85, %87 : vector<256x128xf32>
    %c0_64 = arith.constant 0 : index
    %c0_65 = arith.constant 0 : index
    %c0_66 = arith.constant 0 : index
    %c0_67 = arith.constant 0 : index
    %89 = vector.load %arg6[%c0_64, %c0_65, %c0_66, %c0_67] : memref<1x16x16x128xbf16, #tpu.memory_space<vmem>>, vector<1x16x16x128xbf16>
    %90 = vector.shape_cast %89 : vector<1x16x16x128xbf16> to vector<256x128xbf16>
    %91 = arith.extf %90 : vector<256x128xbf16> to vector<256x128xf32>
    %92 = arith.addf %88, %91 : vector<256x128xf32>
    %cst_68 = arith.constant 0.000000e+00 : f32
    %93 = vector.broadcast %cst_68 : f32 to vector<256x128xf32>
    %94 = arith.maximumf %92, %93 : vector<256x128xf32>
    %95 = vector.shape_cast %94 : vector<256x128xf32> to vector<16x16x128xf32>
    %96 = vector.shape_cast %95 : vector<16x16x128xf32> to vector<1x16x16x128xf32>
    %c0_69 = arith.constant 0 : index
    %c0_70 = arith.constant 0 : index
    %c0_71 = arith.constant 0 : index
    %c0_72 = arith.constant 0 : index
    %97 = vector.load %arg7[%c0_69, %c0_70, %c0_71, %c0_72] : memref<1x16x16x128xf32, #tpu.memory_space<vmem>>, vector<1x16x16x128xf32>
    tpu.vector_store %arg7[%c0_69, %c0_70, %c0_71, %c0_72], %96 {strides = array<i32>} : memref<1x16x16x128xf32, #tpu.memory_space<vmem>>, vector<1x16x16x128xf32>,
    return
  }
  func.func @transform_0(%arg0: i32, %arg1: i32) -> (i32, i32, i32, i32) {
    %c0_i32 = arith.constant 0 : i32
    %c0_i32_0 = arith.constant 0 : i32
    %c0_i32_1 = arith.constant 0 : i32
    %c0_i32_2 = arith.constant 0 : i32
    return %arg0, %c0_i32, %c0_i32_0, %c0_i32_1 : i32, i32, i32, i32
  }
  func.func @transform_1(%arg0: i32, %arg1: i32) -> (i32, i32, i32) {
    %c0_i32 = arith.constant 0 : i32
    %c0_i32_0 = arith.constant 0 : i32
    %c0_i32_1 = arith.constant 0 : i32
    %c0_i32_2 = arith.constant 0 : i32
    return %c0_i32, %c0_i32_0, %c0_i32_1 : i32, i32, i32
  }
  func.func @transform_2(%arg0: i32, %arg1: i32) -> (i32, i32) {
    %c0_i32 = arith.constant 0 : i32
    %c0_i32_0 = arith.constant 0 : i32
    %c0_i32_1 = arith.constant 0 : i32
    return %c0_i32, %c0_i32_0 : i32, i32
  }
  func.func @transform_3(%arg0: i32, %arg1: i32) -> (i32, i32) {
    %c0_i32 = arith.constant 0 : i32
    %c0_i32_0 = arith.constant 0 : i32
    %c0_i32_1 = arith.constant 0 : i32
    return %c0_i32, %c0_i32_0 : i32, i32
  }
  func.func @transform_4(%arg0: i32, %arg1: i32) -> (i32, i32, i32, i32) {
    %c0_i32 = arith.constant 0 : i32
    %c0_i32_0 = arith.constant 0 : i32
    %c0_i32_1 = arith.constant 0 : i32
    return %arg0, %arg1, %c0_i32, %c0_i32_0 : i32, i32, i32, i32
  }
  func.func @transform_5(%arg0: i32, %arg1: i32) -> (i32, i32, i32, i32) {
    %c0_i32 = arith.constant 0 : i32
    %c0_i32_0 = arith.constant 0 : i32
    %c0_i32_1 = arith.constant 0 : i32
    return %arg0, %arg1, %c0_i32, %c0_i32_0 : i32, i32, i32, i32
  }
}

</mosaic_0001>

<llo_original>
// kernel: residual_module_forward.2
$region0: #{residual_module_forward.2}
  #allocation0 [shape = 'u32[]', space=smem, size = 0x4, offset = 0x4, fixed_abs, tag = 'smem constant byte address 0x4 - core index']
  #allocation1 [shape = 'u32[144,128]{1,0:T(1,128)}', space=vmem, size = 0x12000, scoped, tag = 'internal scratch']
  %s0 = inlined_call_operand.vmem [shape: bf16[2,18,24,128], index: 0, kind: input, shape index: {}]
  %s1 = inlined_call_operand.vmem [shape: bf16[9,128,128], index: 1, kind: input, shape index: {}]
  %s2 = inlined_call_operand.vmem [shape: f32[1,128], index: 2, kind: input, shape index: {}]
  %s3 = inlined_call_operand.vmem [shape: f32[1,128], index: 3, kind: input, shape index: {}]
  %s4 = inlined_call_operand.vmem [shape: bf16[2,16,16,128], index: 4, kind: output, shape index: {}]
  %s5 = sld [smem:[#allocation0]]
  $region49: #{residual_module_forward.2} parent=0
    _
  %s7 = ssub.s32 1, %s5
  %s8 = scalar_select 0, %s7, %s5
  loop: start=0, step=1, limit=4
  $region2: #{residual_module_forward.2} parent=0 // loop_pre_header
    _
  $region3: #{residual_module_forward.2} parent=0 // loop_header
    %s10 = sphi 0, %s14
    %p11 = scmp.ge.s32.totalorder %s10, 4
    %s17 = sphi 0, %s29
    %s18 = sphi 0, %s25
    %s19 = sphi 0, %s17
    %s20 = sphi 0, %s18
    %s21 = sphi 0, %s19
    %s22 = sphi 0, %s20
    %s32 = sphi 0, %s34
    %s35 = sphi 0, %s32
    %s36 = sphi 0, %s35
    %s52 = sphi 0, %s36
    %s56 = sphi 0, %s56
    %s58 = sphi 0, %s56
    %s59 = sphi 0, %s58
    %s73 = sphi 0, %s59
    %s77 = sphi 0, %s77
    %s79 = sphi 0, %s77
    %s80 = sphi 0, %s79
    %s94 = sphi 0, %s80
    %s98 = sphi 0, %s98
    %s100 = sphi 0, %s98
    %s101 = sphi 0, %s100
    %s115 = sphi 0, %s101
    %s123 = sphi 0, %s125
    %s126 = sphi 0, %s123
    %s127 = sphi 0, %s126
    %s143 = sphi 0, %s127
  $region4: #{residual_module_forward.2} parent=0 // loop_header_branch
    %13 = sbr.rel (%p11) target = $region8
  $region5: #{residual_module_forward.2} parent=0 // loop_body
    %s15 = ssub.s32 %s10, 1
    %s16 = ssub.s32 %s10, 2
    %s23 = sadd.s32 1, %s18
    %p24 = scmp.ge.s32.totalorder %s23, 1
    %s25 = scalar_select %p24, 0, %s23
    %s26 = sadd.s32 1, %s17
    %s27 = scalar_select %p24, %s26, %s17
    %p28 = scmp.ge.s32.totalorder %s27, 2
    %s29 = scalar_select %p28, 0, %s27
    %s30 = ssub.s32 %s17, %s29
    %p31 = scmp.eq.s32.totalorder %s30, 0
    %s33 = sadd.s32 %s32, 1
    %s34 = scalar_select %p31, %s32, %s33
    %p37 = pneg %p31
    %p38 = scmp.eq.s32.totalorder %s10, 1
    %p39 = por %p37, %p38
    %p40 = scmp.ne.s32.totalorder %s32, %s35
    %p41 = scmp.eq.s32.totalorder %s10, 0
    %p42 = por %p40, %p41
    %p43 = scmp.ne.s32.totalorder %s32, %s35
    %p44 = scmp.eq.s32.totalorder %s15, 1
    %p45 = por %p43, %p44
    %p46 = scmp.ne.s32.totalorder %s35, %s36
    %p47 = scmp.eq.s32.totalorder %s15, 0
    %p48 = por %p46, %p47
    %p49 = scmp.ne.s32.totalorder %s35, %s36
    %p50 = scmp.eq.s32.totalorder %s16, 1
    %p51 = por %p49, %p50
    %p53 = scmp.ne.s32.totalorder %s36, %s52
    %p54 = scmp.eq.s32.totalorder %s16, 0
    %p55 = por %p53, %p54
    %s57 = sadd.s32 %s56, 1
    %p60 = scmp.eq.s32.totalorder %s10, 1
    %p61 = scmp.ne.s32.totalorder %s56, %s58
    %p62 = scmp.eq.s32.totalorder %s10, 0
    %p63 = por %p61, %p62
    %p64 = scmp.ne.s32.totalorder %s56, %s58
    %p65 = scmp.eq.s32.totalorder %s15, 1
    %p66 = por %p64, %p65
    %p67 = scmp.ne.s32.totalorder %s58, %s59
    %p68 = scmp.eq.s32.totalorder %s15, 0
    %p69 = por %p67, %p68
    %p70 = scmp.ne.s32.totalorder %s58, %s59
    %p71 = scmp.eq.s32.totalorder %s16, 1
    %p72 = por %p70, %p71
    %p74 = scmp.ne.s32.totalorder %s59, %s73
    %p75 = scmp.eq.s32.totalorder %s16, 0
    %p76 = por %p74, %p75
    %s78 = sadd.s32 %s77, 1
    %p81 = scmp.eq.s32.totalorder %s10, 1
    %p82 = scmp.ne.s32.totalorder %s77, %s79
    %p83 = scmp.eq.s32.totalorder %s10, 0
    %p84 = por %p82, %p83
    %p85 = scmp.ne.s32.totalorder %s77, %s79
    %p86 = scmp.eq.s32.totalorder %s15, 1
    %p87 = por %p85, %p86
    %p88 = scmp.ne.s32.totalorder %s79, %s80
    %p89 = scmp.eq.s32.totalorder %s15, 0
    %p90 = por %p88, %p89
    %p91 = scmp.ne.s32.totalorder %s79, %s80
    %p92 = scmp.eq.s32.totalorder %s16, 1
    %p93 = por %p91, %p92
    %p95 = scmp.ne.s32.totalorder %s80, %s94
    %p96 = scmp.eq.s32.totalorder %s16, 0
    %p97 = por %p95, %p96
    %s99 = sadd.s32 %s98, 1
    %p102 = scmp.eq.s32.totalorder %s10, 1
    %p103 = scmp.ne.s32.totalorder %s98, %s100
    %p104 = scmp.eq.s32.totalorder %s10, 0
    %p105 = por %p103, %p104
    %p106 = scmp.ne.s32.totalorder %s98, %s100
    %p107 = scmp.eq.s32.totalorder %s15, 1
    %p108 = por %p106, %p107
    %p109 = scmp.ne.s32.totalorder %s100, %s101
    %p110 = scmp.eq.s32.totalorder %s15, 0
    %p111 = por %p109, %p110
    %p112 = scmp.ne.s32.totalorder %s100, %s101
    %p113 = scmp.eq.s32.totalorder %s16, 1
    %p114 = por %p112, %p113
    %p116 = scmp.ne.s32.totalorder %s101, %s115
    %p117 = scmp.eq.s32.totalorder %s16, 0
    %p118 = por %p116, %p117
    %s119 = ssub.s32 %s17, %s29
    %s120 = ssub.s32 %s18, %s25
    %s121 = sor.u32 %s119, %s120
    %p122 = scmp.eq.s32.totalorder %s121, 0
    %s124 = sadd.s32 %s123, 1
    %s125 = scalar_select %p122, %s123, %s124
    %p128 = pneg %p122
    %p129 = scmp.eq.s32.totalorder %s10, 1
    %p130 = por %p128, %p129
    %p131 = scmp.ne.s32.totalorder %s123, %s126
    %p132 = scmp.eq.s32.totalorder %s10, 0
    %p133 = por %p131, %p132
    %p134 = scmp.ne.s32.totalorder %s123, %s126
    %p135 = scmp.eq.s32.totalorder %s15, 1
    %p136 = por %p134, %p135
    %p137 = scmp.ne.s32.totalorder %s126, %s127
    %p138 = scmp.eq.s32.totalorder %s15, 0
    %p139 = por %p137, %p138
    %p140 = scmp.ne.s32.totalorder %s126, %s127
    %p141 = scmp.eq.s32.totalorder %s16, 1
    %p142 = por %p140, %p141
    %p144 = scmp.ne.s32.totalorder %s127, %s143
    %p145 = scmp.eq.s32.totalorder %s16, 0
    %p146 = por %p144, %p145
    %p147 = scmp.le.s32.totalorder 1, %s10
    %p148 = scmp.lt.s32.totalorder %s10, 3
    %p149 = pnand %p147, %p148
    %p150 = pneg %p149
    // Predicated region
    $region9: #{residual_module_forward.2} parent=5 // pred_check
      _
    $region10: #{residual_module_forward.2} parent=5 // pred_check_branch
      %152 = sbr.rel (%p149) target = $region12
    $region11: #{residual_module_forward.2} parent=5 // pred_region
      %s153 = ssub.s32 %s10, 1
      // Predicated region
      $region13: #{residual_module_forward.2} parent=11 // pred_check
        %p154 = pneg %p48
      $region14: #{residual_module_forward.2} parent=11 // pred_check_branch
        %156 = sbr.rel (%p154) target = $region16
      $region15: #{residual_module_forward.2} parent=11 // pred_region
        %p157 = scmp.lt.s32.totalorder %s19, 1
        %s158 = scalar_select %p157, %s19, 1
        %s159 = smul.addr %s158, 54
        %s160 = smul.addr %s159, 4
        %s161 = scalar_lea.vmem %s0, %s160
      $region16: #{residual_module_forward.2} parent=11 // pred_fallthru
        _
      // Predicated region
      $region17: #{residual_module_forward.2} parent=11 // pred_check
        %p162 = pneg %p69
      $region18: #{residual_module_forward.2} parent=11 // pred_check_branch
        %164 = sbr.rel (%p162) target = $region20
      $region19: #{residual_module_forward.2} parent=11 // pred_region
        _
      $region20: #{residual_module_forward.2} parent=11 // pred_fallthru
        _
      // Predicated region
      $region21: #{residual_module_forward.2} parent=11 // pred_check
        %p165 = pneg %p90
      $region22: #{residual_module_forward.2} parent=11 // pred_check_branch
        %167 = sbr.rel (%p165) target = $region24
      $region23: #{residual_module_forward.2} parent=11 // pred_region
        _
      $region24: #{residual_module_forward.2} parent=11 // pred_fallthru
        _
      // Predicated region
      $region25: #{residual_module_forward.2} parent=11 // pred_check
        %p168 = pneg %p111
      $region26: #{residual_module_forward.2} parent=11 // pred_check_branch
        %170 = sbr.rel (%p168) target = $region28
      $region27: #{residual_module_forward.2} parent=11 // pred_region
        _
      $region28: #{residual_module_forward.2} parent=11 // pred_fallthru
        _
    $region12: #{residual_module_forward.2} parent=5 // pred_fallthru
      _
    %p171 = scmp.lt.s32.totalorder %s10, 2
    // Predicated region
    $region29: #{residual_module_forward.2} parent=5 // pred_check
      %p172 = pneg %p171
    $region30: #{residual_module_forward.2} parent=5 // pred_check_branch
      %174 = sbr.rel (%p172) target = $region32
    $region31: #{residual_module_forward.2} parent=5 // pred_region
      _
    $region32: #{residual_module_forward.2} parent=5 // pred_fallthru
      _
    %p175 = scmp.le.s32.totalorder 1, %s10
    %p176 = scmp.lt.s32.totalorder %s10, 3
    %p177 = pnand %p175, %p176
    %p178 = pneg %p177
    // Predicated region
    $region33: #{residual_module_forward.2} parent=5 // pred_check
      _
    $region34: #{residual_module_forward.2} parent=5 // pred_check_branch
      %180 = sbr.rel (%p177) target = $region36
    $region35: #{residual_module_forward.2} parent=5 // pred_region
      %s181 = ssub.s32 %s10, 1
      %p182 = scmp.lt.s32.totalorder %s19, 1
      %s183 = scalar_select %p182, %s19, 1
      %s184 = smul.addr %s183, 54
      %s185 = smul.addr %s184, 4
      %s186 = scalar_lea.vmem %s0, %s185
      %p187 = pneg %p48
      %p188 = pneg %p45
      %p189 = pneg %p69
      %p190 = pneg %p66
      %p191 = pneg %p90
      %p192 = pneg %p87
      %p193 = pneg %p111
      %p194 = pneg %p108
      %p195 = pneg %p139
      %p196 = pneg %p136
      %s197 = smul.u32 16, %s20
      %p198 = scmp.lt.s32.totalorder %s19, 1
      %s199 = scalar_select %p198, %s19, 1
      %p200 = scmp.lt.s32.totalorder %s197, 15
      %s201 = scalar_select %p200, %s197, 15
      %s202 = smul.addr %s201, 2
      %s203 = smul.addr %s199, 32
      %s204 = sadd.s32 %s202, %s203
      %s205 = smul.addr %s204, 4
      %s206 = scalar_lea.vmem %s4, %s205
      %p207 = scmp.lt.s32.totalorder %s19, 1
      %s208 = scalar_select %p207, %s19, 1
      %s209 = smul.addr %s208, 54
      %s210 = smul.addr %s209, 4
      %s211 = scalar_lea.vmem %s0, %s210
      %s212 = smul.u32 16, %s20
      %p213 = scmp.lt.s32.totalorder %s19, 1
      %s214 = scalar_select %p213, %s19, 1
      %p215 = scmp.lt.s32.totalorder %s212, 15
      %s216 = scalar_select %p215, %s212, 15
      %s217 = smul.addr %s216, 2
      %s218 = smul.addr %s214, 32
      %s219 = sadd.s32 %s217, %s218
      %s220 = smul.addr %s219, 4
      %s221 = scalar_lea.vmem %s4, %s220
      %s222 = smul.u32 16, %s20
      %s224 = smul.u32 %s20, 16
      %s225 = smul.u32 %s224, 3
      %s226 = smul.addr %s225, 4
      %s227 = scalar_lea.vmem %s211, %s226
      %v228 = vld [vmem:[%s227] sm:$0xf]
      %v229 = vld [vmem:[%s227 + $0x4] sm:$0xf]
      %v230 = vld [vmem:[%s227 + $0xc] sm:$0xf]
      %v231 = vld [vmem:[%s227 + $0x10] sm:$0xf]
      %v232 = vld [vmem:[%s227 + $0x18] sm:$0xf]
      %v233 = vld [vmem:[%s227 + $0x1c] sm:$0xf]
      %v234 = vld [vmem:[%s227 + $0x24] sm:$0xf]
      %v235 = vld [vmem:[%s227 + $0x28] sm:$0xf]
      %v236 = vld [vmem:[%s227 + $0x30] sm:$0xf]
      %v237 = vld [vmem:[%s227 + $0x34] sm:$0xf]
      %v238 = vld [vmem:[%s227 + $0x3c] sm:$0xf]
      %v239 = vld [vmem:[%s227 + $0x40] sm:$0xf]
      %v240 = vld [vmem:[%s227 + $0x48] sm:$0xf]
      %v241 = vld [vmem:[%s227 + $0x4c] sm:$0xf]
      %v242 = vld [vmem:[%s227 + $0x54] sm:$0xf]
      %v243 = vld [vmem:[%s227 + $0x58] sm:$0xf]
      %v244 = vld [vmem:[%s227 + $0x60] sm:$0xf]
      %v245 = vld [vmem:[%s227 + $0x64] sm:$0xf]
      %v246 = vld [vmem:[%s227 + $0x6c] sm:$0xf]
      %v247 = vld [vmem:[%s227 + $0x70] sm:$0xf]
      %v248 = vld [vmem:[%s227 + $0x78] sm:$0xf]
      %v249 = vld [vmem:[%s227 + $0x7c] sm:$0xf]
      %v250 = vld [vmem:[%s227 + $0x84] sm:$0xf]
      %v251 = vld [vmem:[%s227 + $0x88] sm:$0xf]
      %v252 = vld [vmem:[%s227 + $0x90] sm:$0xf]
      %v253 = vld [vmem:[%s227 + $0x94] sm:$0xf]
      %v254 = vld [vmem:[%s227 + $0x9c] sm:$0xf]
      %v255 = vld [vmem:[%s227 + $0xa0] sm:$0xf]
      %v256 = vld [vmem:[%s227 + $0xa8] sm:$0xf]
      %v257 = vld [vmem:[%s227 + $0xac] sm:$0xf]
      %v258 = vld [vmem:[%s227 + $0xb4] sm:$0xf]
      %v259 = vld [vmem:[%s227 + $0xb8] sm:$0xf]
      %v260 = vld [vmem:[%s1] sm:$0xf]
      %v261 = vld [vmem:[%s1 + $0x4] sm:$0xf]
      %v262 = vld [vmem:[%s1 + $0x8] sm:$0xf]
      %v263 = vld [vmem:[%s1 + $0xc] sm:$0xf]
      %v264 = vld [vmem:[%s1 + $0x10] sm:$0xf]
      %v265 = vld [vmem:[%s1 + $0x14] sm:$0xf]
      %v266 = vld [vmem:[%s1 + $0x18] sm:$0xf]
      %v267 = vld [vmem:[%s1 + $0x1c] sm:$0xf]
      %v268 = vld [vmem:[%s1 + $0x20] sm:$0xf]
      %v269 = vld [vmem:[%s1 + $0x24] sm:$0xf]
      %v270 = vld [vmem:[%s1 + $0x28] sm:$0xf]
      %v271 = vld [vmem:[%s1 + $0x2c] sm:$0xf]
      %v272 = vld [vmem:[%s1 + $0x30] sm:$0xf]
      %v273 = vld [vmem:[%s1 + $0x34] sm:$0xf]
      %v274 = vld [vmem:[%s1 + $0x38] sm:$0xf]
      %v275 = vld [vmem:[%s1 + $0x3c] sm:$0xf]
      %v276 = vld [vmem:[%s227 + $0x8] sm:$0x1]
      %v277 = vld [vmem:[%s227 + $0x14] sm:$0x1]
      %v278 = vld [vmem:[%s227 + $0x20] sm:$0x1]
      %v279 = vld [vmem:[%s227 + $0x2c] sm:$0x1]
      %v280 = vld [vmem:[%s227 + $0x38] sm:$0x1]
      %v281 = vld [vmem:[%s227 + $0x44] sm:$0x1]
      %v282 = vld [vmem:[%s227 + $0x50] sm:$0x1]
      %v283 = vld [vmem:[%s227 + $0x5c] sm:$0x1]
      %v284 = vld [vmem:[%s227 + $0x68] sm:$0x1]
      %v285 = vld [vmem:[%s227 + $0x74] sm:$0x1]
      %v286 = vld [vmem:[%s227 + $0x80] sm:$0x1]
      %v287 = vld [vmem:[%s227 + $0x8c] sm:$0x1]
      %v288 = vld [vmem:[%s227 + $0x98] sm:$0x1]
      %v289 = vld [vmem:[%s227 + $0xa4] sm:$0x1]
      %v290 = vld [vmem:[%s227 + $0xb0] sm:$0x1]
      %v291 = vld [vmem:[%s227 + $0xbc] sm:$0x1]
      %vm292 = vsmask.f32 3328
      %vm293 = vsmask.f32 7440
      %vm294 = vmor %vm292, %vm293
      %v296 = vshrl.u32 %v228, 16
      %v298 = vrot.slane %v296, 4
      %v299 = vshll.u32 %v228, 16
      %v301 = vrot.slane %v299, 5
      %v302 = vor.u32 %v298, %v301
      %v303 = vrot.slane %v302, 4
      %v305 = vshll.u32 %v229, 16
      %v307 = vrot.slane %v305, 5
      %v308 = vsel %vm294, %v303, %v307
      %v309 = vshrl.u32 %v229, 16
      %v311 = vrot.slane %v309, 4
      %v312 = vor.u32 %v311, %v307
      %v313 = vrot.slane %v312, 4
      %v315 = vshll.u32 %v276, 16
      %v317 = vrot.slane %v315, 5
      %v318 = vsel %vm294, %v313, %v317
      %v320 = vshrl.u32 %v230, 16
      %v322 = vrot.slane %v320, 4
      %v323 = vshll.u32 %v230, 16
      %v325 = vrot.slane %v323, 5
      %v326 = vor.u32 %v322, %v325
      %v327 = vrot.slane %v326, 4
      %v329 = vshll.u32 %v231, 16
      %v331 = vrot.slane %v329, 5
      %v332 = vsel %vm294, %v327, %v331
      %v333 = vshrl.u32 %v231, 16
      %v335 = vrot.slane %v333, 4
      %v336 = vor.u32 %v335, %v331
      %v337 = vrot.slane %v336, 4
      %v339 = vshll.u32 %v277, 16
      %v341 = vrot.slane %v339, 5
      %v342 = vsel %vm294, %v337, %v341
      %v344 = vshrl.u32 %v232, 16
      %v346 = vrot.slane %v344, 4
      %v347 = vshll.u32 %v232, 16
      %v349 = vrot.slane %v347, 5
      %v350 = vor.u32 %v346, %v349
      %v351 = vrot.slane %v350, 4
      %v353 = vshll.u32 %v233, 16
      %v355 = vrot.slane %v353, 5
      %v356 = vsel %vm294, %v351, %v355
      %v357 = vshrl.u32 %v233, 16
      %v359 = vrot.slane %v357, 4
      %v360 = vor.u32 %v359, %v355
      %v361 = vrot.slane %v360, 4
      %v363 = vshll.u32 %v278, 16
      %v365 = vrot.slane %v363, 5
      %v366 = vsel %vm294, %v361, %v365
      %v368 = vshrl.u32 %v234, 16
      %v370 = vrot.slane %v368, 4
      %v371 = vshll.u32 %v234, 16
      %v373 = vrot.slane %v371, 5
      %v374 = vor.u32 %v370, %v373
      %v375 = vrot.slane %v374, 4
      %v377 = vshll.u32 %v235, 16
      %v379 = vrot.slane %v377, 5
      %v380 = vsel %vm294, %v375, %v379
      %v381 = vshrl.u32 %v235, 16
      %v383 = vrot.slane %v381, 4
      %v384 = vor.u32 %v383, %v379
      %v385 = vrot.slane %v384, 4
      %v387 = vshll.u32 %v279, 16
      %v389 = vrot.slane %v387, 5
      %v390 = vsel %vm294, %v385, %v389
      %v392 = vshrl.u32 %v236, 16
      %v394 = vrot.slane %v392, 4
      %v395 = vshll.u32 %v236, 16
      %v397 = vrot.slane %v395, 5
      %v398 = vor.u32 %v394, %v397
      %v399 = vrot.slane %v398, 4
      %v401 = vshll.u32 %v237, 16
      %v403 = vrot.slane %v401, 5
      %v404 = vsel %vm294, %v399, %v403
      %v405 = vshrl.u32 %v237, 16
      %v407 = vrot.slane %v405, 4
      %v408 = vor.u32 %v407, %v403
      %v409 = vrot.slane %v408, 4
      %v411 = vshll.u32 %v280, 16
      %v413 = vrot.slane %v411, 5
      %v414 = vsel %vm294, %v409, %v413
      %v416 = vshrl.u32 %v238, 16
      %v418 = vrot.slane %v416, 4
      %v419 = vshll.u32 %v238, 16
      %v421 = vrot.slane %v419, 5
      %v422 = vor.u32 %v418, %v421
      %v423 = vrot.slane %v422, 4
      %v425 = vshll.u32 %v239, 16
      %v427 = vrot.slane %v425, 5
      %v428 = vsel %vm294, %v423, %v427
      %v429 = vshrl.u32 %v239, 16
      %v431 = vrot.slane %v429, 4
      %v432 = vor.u32 %v431, %v427
      %v433 = vrot.slane %v432, 4
      %v435 = vshll.u32 %v281, 16
      %v437 = vrot.slane %v435, 5
      %v438 = vsel %vm294, %v433, %v437
      %v440 = vshrl.u32 %v240, 16
      %v442 = vrot.slane %v440, 4
      %v443 = vshll.u32 %v240, 16
      %v445 = vrot.slane %v443, 5
      %v446 = vor.u32 %v442, %v445
      %v447 = vrot.slane %v446, 4
      %v449 = vshll.u32 %v241, 16
      %v451 = vrot.slane %v449, 5
      %v452 = vsel %vm294, %v447, %v451
      %v453 = vshrl.u32 %v241, 16
      %v455 = vrot.slane %v453, 4
      %v456 = vor.u32 %v455, %v451
      %v457 = vrot.slane %v456, 4
      %v459 = vshll.u32 %v282, 16
      %v461 = vrot.slane %v459, 5
      %v462 = vsel %vm294, %v457, %v461
      %v464 = vshrl.u32 %v242, 16
      %v466 = vrot.slane %v464, 4
      %v467 = vshll.u32 %v242, 16
      %v469 = vrot.slane %v467, 5
      %v470 = vor.u32 %v466, %v469
      %v471 = vrot.slane %v470, 4
      %v473 = vshll.u32 %v243, 16
      %v475 = vrot.slane %v473, 5
      %v476 = vsel %vm294, %v471, %v475
      %v477 = vshrl.u32 %v243, 16
      %v479 = vrot.slane %v477, 4
      %v480 = vor.u32 %v479, %v475
      %v481 = vrot.slane %v480, 4
      %v483 = vshll.u32 %v283, 16
      %v485 = vrot.slane %v483, 5
      %v486 = vsel %vm294, %v481, %v485
      %v488 = vshrl.u32 %v244, 16
      %v490 = vrot.slane %v488, 4
      %v491 = vshll.u32 %v244, 16
      %v493 = vrot.slane %v491, 5
      %v494 = vor.u32 %v490, %v493
      %v495 = vrot.slane %v494, 4
      %v497 = vshll.u32 %v245, 16
      %v499 = vrot.slane %v497, 5
      %v500 = vsel %vm294, %v495, %v499
      %v501 = vshrl.u32 %v245, 16
      %v503 = vrot.slane %v501, 4
      %v504 = vor.u32 %v503, %v499
      %v505 = vrot.slane %v504, 4
      %v507 = vshll.u32 %v284, 16
      %v509 = vrot.slane %v507, 5
      %v510 = vsel %vm294, %v505, %v509
      %v512 = vshrl.u32 %v246, 16
      %v514 = vrot.slane %v512, 4
      %v515 = vshll.u32 %v246, 16
      %v517 = vrot.slane %v515, 5
      %v518 = vor.u32 %v514, %v517
      %v519 = vrot.slane %v518, 4
      %v521 = vshll.u32 %v247, 16
      %v523 = vrot.slane %v521, 5
      %v524 = vsel %vm294, %v519, %v523
      %v525 = vshrl.u32 %v247, 16
      %v527 = vrot.slane %v525, 4
      %v528 = vor.u32 %v527, %v523
      %v529 = vrot.slane %v528, 4
      %v531 = vshll.u32 %v285, 16
      %v533 = vrot.slane %v531, 5
      %v534 = vsel %vm294, %v529, %v533
      %v536 = vshrl.u32 %v248, 16
      %v538 = vrot.slane %v536, 4
      %v539 = vshll.u32 %v248, 16
      %v541 = vrot.slane %v539, 5
      %v542 = vor.u32 %v538, %v541
      %v543 = vrot.slane %v542, 4
      %v545 = vshll.u32 %v249, 16
      %v547 = vrot.slane %v545, 5
      %v548 = vsel %vm294, %v543, %v547
      %v549 = vshrl.u32 %v249, 16
      %v551 = vrot.slane %v549, 4
      %v552 = vor.u32 %v551, %v547
      %v553 = vrot.slane %v552, 4
      %v555 = vshll.u32 %v286, 16
      %v557 = vrot.slane %v555, 5
      %v558 = vsel %vm294, %v553, %v557
      %v560 = vshrl.u32 %v250, 16
      %v562 = vrot.slane %v560, 4
      %v563 = vshll.u32 %v250, 16
      %v565 = vrot.slane %v563, 5
      %v566 = vor.u32 %v562, %v565
      %v567 = vrot.slane %v566, 4
      %v569 = vshll.u32 %v251, 16
      %v571 = vrot.slane %v569, 5
      %v572 = vsel %vm294, %v567, %v571
      %v573 = vshrl.u32 %v251, 16
      %v575 = vrot.slane %v573, 4
      %v576 = vor.u32 %v575, %v571
      %v577 = vrot.slane %v576, 4
      %v579 = vshll.u32 %v287, 16
      %v581 = vrot.slane %v579, 5
      %v582 = vsel %vm294, %v577, %v581
      %v584 = vshrl.u32 %v252, 16
      %v586 = vrot.slane %v584, 4
      %v587 = vshll.u32 %v252, 16
      %v589 = vrot.slane %v587, 5
      %v590 = vor.u32 %v586, %v589
      %v591 = vrot.slane %v590, 4
      %v593 = vshll.u32 %v253, 16
      %v595 = vrot.slane %v593, 5
      %v596 = vsel %vm294, %v591, %v595
      %v597 = vshrl.u32 %v253, 16
      %v599 = vrot.slane %v597, 4
      %v600 = vor.u32 %v599, %v595
      %v601 = vrot.slane %v600, 4
      %v603 = vshll.u32 %v288, 16
      %v605 = vrot.slane %v603, 5
      %v606 = vsel %vm294, %v601, %v605
      %v608 = vshrl.u32 %v254, 16
      %v610 = vrot.slane %v608, 4
      %v611 = vshll.u32 %v254, 16
      %v613 = vrot.slane %v611, 5
      %v614 = vor.u32 %v610, %v613
      %v615 = vrot.slane %v614, 4
      %v617 = vshll.u32 %v255, 16
      %v619 = vrot.slane %v617, 5
      %v620 = vsel %vm294, %v615, %v619
      %v621 = vshrl.u32 %v255, 16
      %v623 = vrot.slane %v621, 4
      %v624 = vor.u32 %v623, %v619
      %v625 = vrot.slane %v624, 4
      %v627 = vshll.u32 %v289, 16
      %v629 = vrot.slane %v627, 5
      %v630 = vsel %vm294, %v625, %v629
      %v632 = vshrl.u32 %v256, 16
      %v634 = vrot.slane %v632, 4
      %v635 = vshll.u32 %v256, 16
      %v637 = vrot.slane %v635, 5
      %v638 = vor.u32 %v634, %v637
      %v639 = vrot.slane %v638, 4
      %v641 = vshll.u32 %v257, 16
      %v643 = vrot.slane %v641, 5
      %v644 = vsel %vm294, %v639, %v643
      %v645 = vshrl.u32 %v257, 16
      %v647 = vrot.slane %v645, 4
      %v648 = vor.u32 %v647, %v643
      %v649 = vrot.slane %v648, 4
      %v651 = vshll.u32 %v290, 16
      %v653 = vrot.slane %v651, 5
      %v654 = vsel %vm294, %v649, %v653
      %v656 = vshrl.u32 %v258, 16
      %v658 = vrot.slane %v656, 4
      %v659 = vshll.u32 %v258, 16
      %v661 = vrot.slane %v659, 5
      %v662 = vor.u32 %v658, %v661
      %v663 = vrot.slane %v662, 4
      %v665 = vshll.u32 %v259, 16
      %v667 = vrot.slane %v665, 5
      %v668 = vsel %vm294, %v663, %v667
      %v669 = vshrl.u32 %v259, 16
      %v671 = vrot.slane %v669, 4
      %v672 = vor.u32 %v671, %v667
      %v673 = vrot.slane %v672, 4
      %v675 = vshll.u32 %v291, 16
      %v677 = vrot.slane %v675, 5
      %v678 = vsel %vm294, %v673, %v677
      %s679 = scalar_lea.vmem %s1, 64
      %v680 = vld [vmem:[%s679] sm:$0xf]
      %v681 = vld [vmem:[%s679 + $0x4] sm:$0xf]
      %v682 = vld [vmem:[%s679 + $0x8] sm:$0xf]
      %v683 = vld [vmem:[%s679 + $0xc] sm:$0xf]
      %v684 = vld [vmem:[%s679 + $0x10] sm:$0xf]
      %v685 = vld [vmem:[%s679 + $0x14] sm:$0xf]
      %v686 = vld [vmem:[%s679 + $0x18] sm:$0xf]
      %v687 = vld [vmem:[%s679 + $0x1c] sm:$0xf]
      %v688 = vld [vmem:[%s679 + $0x20] sm:$0xf]
      %v689 = vld [vmem:[%s679 + $0x24] sm:$0xf]
      %v690 = vld [vmem:[%s679 + $0x28] sm:$0xf]
      %v691 = vld [vmem:[%s679 + $0x2c] sm:$0xf]
      %v692 = vld [vmem:[%s679 + $0x30] sm:$0xf]
      %v693 = vld [vmem:[%s679 + $0x34] sm:$0xf]
      %v694 = vld [vmem:[%s679 + $0x38] sm:$0xf]
      %v695 = vld [vmem:[%s679 + $0x3c] sm:$0xf]
      %v696 = vunpack.c.l.b16 %v308
      %v697 = vunpack.c.l.b16 %v318
      %v698 = vunpack.c.l.b16 %v332
      %v699 = vunpack.c.l.b16 %v342
      %v700 = vunpack.c.l.b16 %v356
      %v701 = vunpack.c.l.b16 %v366
      %v702 = vunpack.c.l.b16 %v380
      %v703 = vunpack.c.l.b16 %v390
      %v704 = vunpack.c.l.b16 %v404
      %v705 = vunpack.c.l.b16 %v414
      %v706 = vunpack.c.l.b16 %v428
      %v707 = vunpack.c.l.b16 %v438
      %v708 = vunpack.c.l.b16 %v452
      %v709 = vunpack.c.l.b16 %v462
      %v710 = vunpack.c.l.b16 %v476
      %v711 = vunpack.c.l.b16 %v486
      %v712 = vunpack.c.l.b16 %v500
      %v713 = vunpack.c.l.b16 %v510
      %v714 = vunpack.c.l.b16 %v524
      %v715 = vunpack.c.l.b16 %v534
      %v716 = vunpack.c.l.b16 %v548
      %v717 = vunpack.c.l.b16 %v558
      %v718 = vunpack.c.l.b16 %v572
      %v719 = vunpack.c.l.b16 %v582
      %v720 = vunpack.c.l.b16 %v596
      %v721 = vunpack.c.l.b16 %v606
      %v722 = vunpack.c.l.b16 %v620
      %v723 = vunpack.c.l.b16 %v630
      %v724 = vunpack.c.l.b16 %v644
      %v725 = vunpack.c.l.b16 %v654
      %v726 = vunpack.c.l.b16 %v668
      %v727 = vunpack.c.l.b16 %v678
      %v728 = vpack.c.b16 %v697, %v696
      %v729 = vpack.c.b16 %v699, %v698
      %v730 = vpack.c.b16 %v701, %v700
      %v731 = vpack.c.b16 %v703, %v702
      %v732 = vpack.c.b16 %v705, %v704
      %v733 = vpack.c.b16 %v707, %v706
      %v734 = vpack.c.b16 %v709, %v708
      %v735 = vpack.c.b16 %v711, %v710
      %v736 = vpack.c.b16 %v713, %v712
      %v737 = vpack.c.b16 %v715, %v714
      %v738 = vpack.c.b16 %v717, %v716
      %v739 = vpack.c.b16 %v719, %v718
      %v740 = vpack.c.b16 %v721, %v720
      %v741 = vpack.c.b16 %v723, %v722
      %v742 = vpack.c.b16 %v725, %v724
      %v743 = vpack.c.b16 %v727, %v726
      %v776 = vunpack.c.l.b16 %v680
      %v777 = vunpack.c.l.b16 %v681
      %v778 = vunpack.c.l.b16 %v682
      %v779 = vunpack.c.l.b16 %v683
      %v780 = vunpack.c.l.b16 %v684
      %v781 = vunpack.c.l.b16 %v685
      %v782 = vunpack.c.l.b16 %v686
      %v783 = vunpack.c.l.b16 %v687
      %v784 = vunpack.c.l.b16 %v688
      %v785 = vunpack.c.l.b16 %v689
      %v786 = vunpack.c.l.b16 %v690
      %v787 = vunpack.c.l.b16 %v691
      %v788 = vunpack.c.l.b16 %v692
      %v789 = vunpack.c.l.b16 %v693
      %v790 = vunpack.c.l.b16 %v694
      %v791 = vunpack.c.l.b16 %v695
      %v792 = vpack.c.b16 %v777, %v776
      %v793 = vpack.c.b16 %v779, %v778
      %v794 = vpack.c.b16 %v781, %v780
      %v795 = vpack.c.b16 %v783, %v782
      %v796 = vpack.c.b16 %v785, %v784
      %v797 = vpack.c.b16 %v787, %v786
      %v798 = vpack.c.b16 %v789, %v788
      %v799 = vpack.c.b16 %v791, %v790
      %808 = vmatprep.subr.bf16.mxu0 0
      %809 = vmatpush1.bf16.msra.mxu0 %v799
      %810 = vmatprep.subr.bf16.mxu0 0
      %811 = vmatpush1.bf16.msra.mxu0 %v798
      %812 = vmatprep.subr.bf16.mxu0 0
      %813 = vmatpush1.bf16.msra.mxu0 %v797
      %814 = vmatprep.subr.bf16.mxu0 0
      %815 = vmatpush1.bf16.msra.mxu0 %v796
      %816 = vmatprep.subr.bf16.mxu0 0
      %817 = vmatpush1.bf16.msra.mxu0 %v795
      %818 = vmatprep.subr.bf16.mxu0 0
      %819 = vmatpush1.bf16.msra.mxu0 %v794
      %820 = vmatprep.subr.bf16.mxu0 0
      %821 = vmatpush1.bf16.msra.mxu0 %v793
      %822 = vmatprep.subr.bf16.mxu0 0
      %823 = vmatpush1.bf16.msra.mxu0 %v792
      %824 = vmatprep.subr.bf16.mxu0 0
      %825 = vmatpush2.bf16.msra.mxu0 0
      %826 = vmatprep.subr.bf16.mxu0 0
      %827 = vmatpush2.bf16.msra.mxu0 0
      %828 = vmatprep.subr.bf16.mxu0 0
      %829 = vmatpush2.bf16.msra.mxu0 0
      %830 = vmatprep.subr.bf16.mxu0 0
      %831 = vmatpush2.bf16.msra.mxu0 0
      %832 = vmatprep.subr.bf16.mxu0 0
      %833 = vmatpush2.bf16.msra.mxu0 0
      %834 = vmatprep.subr.bf16.mxu0 0
      %835 = vmatpush2.bf16.msra.mxu0 0
      %836 = vmatprep.subr.bf16.mxu0 0
      %837 = vmatpush2.bf16.msra.mxu0 0
      %838 = vmatprep.subr.bf16.mxu0 0
      %839 = vmatpush2.bf16.msra.mxu0 0
      %840 = vmatprep.mubr.bf16.mxu0 0
      %841 = vmatmul.mubr.bf16.gmra.mxu0 %v728
      %v842 = vpop.f32.mrf.mxu0
      %v843 = vadd.f32 0.0, %v842
      %v844 = vpop.f32.mrf.mxu0
      %v845 = vpop.f32.mrf.mxu0
      %v846 = vadd.f32 0.0, %v845
      %v847 = vpop.f32.mrf.mxu0
      %848 = vmatprep.mubr.bf16.mxu0 0
      %849 = vmatmul.mubr.bf16.gmra.mxu0 %v729
      %v850 = vpop.f32.mrf.mxu0
      %v851 = vadd.f32 0.0, %v850
      %v852 = vpop.f32.mrf.mxu0
      %v853 = vpop.f32.mrf.mxu0
      %v854 = vadd.f32 0.0, %v853
      %v855 = vpop.f32.mrf.mxu0
      %856 = vmatprep.mubr.bf16.mxu0 0
      %857 = vmatmul.mubr.bf16.gmra.mxu0 %v730
      %v858 = vpop.f32.mrf.mxu0
      %v859 = vadd.f32 0.0, %v858
      %v860 = vpop.f32.mrf.mxu0
      %v861 = vpop.f32.mrf.mxu0
      %v862 = vadd.f32 0.0, %v861
      %v863 = vpop.f32.mrf.mxu0
      %864 = vmatprep.mubr.bf16.mxu0 0
      %865 = vmatmul.mubr.bf16.gmra.mxu0 %v731
      %v866 = vpop.f32.mrf.mxu0
      %v867 = vadd.f32 0.0, %v866
      %v868 = vpop.f32.mrf.mxu0
      %v869 = vpop.f32.mrf.mxu0
      %v870 = vadd.f32 0.0, %v869
      %v871 = vpop.f32.mrf.mxu0
      %872 = vmatprep.mubr.bf16.mxu0 0
      %873 = vmatmul.mubr.bf16.gmra.mxu0 %v732
      %v874 = vpop.f32.mrf.mxu0
      %v875 = vadd.f32 0.0, %v874
      %v876 = vpop.f32.mrf.mxu0
      %v877 = vpop.f32.mrf.mxu0
      %v878 = vadd.f32 0.0, %v877
      %v879 = vpop.f32.mrf.mxu0
      %880 = vmatprep.mubr.bf16.mxu0 0
      %881 = vmatmul.mubr.bf16.gmra.mxu0 %v733
      %v882 = vpop.f32.mrf.mxu0
      %v883 = vadd.f32 0.0, %v882
      %v884 = vpop.f32.mrf.mxu0
      %v885 = vpop.f32.mrf.mxu0
      %v886 = vadd.f32 0.0, %v885
      %v887 = vpop.f32.mrf.mxu0
      %888 = vmatprep.mubr.bf16.mxu0 0
      %889 = vmatmul.mubr.bf16.gmra.mxu0 %v734
      %v890 = vpop.f32.mrf.mxu0
      %v891 = vadd.f32 0.0, %v890
      %v892 = vpop.f32.mrf.mxu0
      %v893 = vpop.f32.mrf.mxu0
      %v894 = vadd.f32 0.0, %v893
      %v895 = vpop.f32.mrf.mxu0
      %896 = vmatprep.mubr.bf16.mxu0 0
      %897 = vmatmul.mubr.bf16.gmra.mxu0 %v735
      %v898 = vpop.f32.mrf.mxu0
      %v899 = vadd.f32 0.0, %v898
      %v900 = vpop.f32.mrf.mxu0
      %v901 = vpop.f32.mrf.mxu0
      %v902 = vadd.f32 0.0, %v901
      %v903 = vpop.f32.mrf.mxu0
      %904 = vmatprep.mubr.bf16.mxu0 0
      %905 = vmatmul.mubr.bf16.gmra.mxu0 %v736
      %v906 = vpop.f32.mrf.mxu0
      %v907 = vadd.f32 0.0, %v906
      %v908 = vpop.f32.mrf.mxu0
      %v909 = vpop.f32.mrf.mxu0
      %v910 = vadd.f32 0.0, %v909
      %v911 = vpop.f32.mrf.mxu0
      %912 = vmatprep.mubr.bf16.mxu0 0
      %913 = vmatmul.mubr.bf16.gmra.mxu0 %v737
      %v914 = vpop.f32.mrf.mxu0
      %v915 = vadd.f32 0.0, %v914
      %v916 = vpop.f32.mrf.mxu0
      %v917 = vpop.f32.mrf.mxu0
      %v918 = vadd.f32 0.0, %v917
      %v919 = vpop.f32.mrf.mxu0
      %920 = vmatprep.mubr.bf16.mxu0 0
      %921 = vmatmul.mubr.bf16.gmra.mxu0 %v738
      %v922 = vpop.f32.mrf.mxu0
      %v923 = vadd.f32 0.0, %v922
      %v924 = vpop.f32.mrf.mxu0
      %v925 = vpop.f32.mrf.mxu0
      %v926 = vadd.f32 0.0, %v925
      %v927 = vpop.f32.mrf.mxu0
      %928 = vmatprep.mubr.bf16.mxu0 0
      %929 = vmatmul.mubr.bf16.gmra.mxu0 %v739
      %v930 = vpop.f32.mrf.mxu0
      %v931 = vadd.f32 0.0, %v930
      %v932 = vpop.f32.mrf.mxu0
      %v933 = vpop.f32.mrf.mxu0
      %v934 = vadd.f32 0.0, %v933
      %v935 = vpop.f32.mrf.mxu0
      %936 = vmatprep.mubr.bf16.mxu0 0
      %937 = vmatmul.mubr.bf16.gmra.mxu0 %v740
      %v938 = vpop.f32.mrf.mxu0
      %v939 = vadd.f32 0.0, %v938
      %v940 = vpop.f32.mrf.mxu0
      %v941 = vpop.f32.mrf.mxu0
      %v942 = vadd.f32 0.0, %v941
      %v943 = vpop.f32.mrf.mxu0
      %944 = vmatprep.mubr.bf16.mxu0 0
      %945 = vmatmul.mubr.bf16.gmra.mxu0 %v741
      %v946 = vpop.f32.mrf.mxu0
      %v947 = vadd.f32 0.0, %v946
      %v948 = vpop.f32.mrf.mxu0
      %v949 = vpop.f32.mrf.mxu0
      %v950 = vadd.f32 0.0, %v949
      %v951 = vpop.f32.mrf.mxu0
      %952 = vmatprep.mubr.bf16.mxu0 0
      %953 = vmatmul.mubr.bf16.gmra.mxu0 %v742
      %v954 = vpop.f32.mrf.mxu0
      %v955 = vadd.f32 0.0, %v954
      %v956 = vpop.f32.mrf.mxu0
      %v957 = vpop.f32.mrf.mxu0
      %v958 = vadd.f32 0.0, %v957
      %v959 = vpop.f32.mrf.mxu0
      %960 = vmatprep.mubr.bf16.mxu0 0
      %961 = vmatmul.mubr.bf16.gmra.mxu0 %v743
      %v962 = vpop.f32.mrf.mxu0
      %v963 = vadd.f32 0.0, %v962
      %v964 = vpop.f32.mrf.mxu0
      %v965 = vpop.f32.mrf.mxu0
      %v966 = vadd.f32 0.0, %v965
      %v967 = vpop.f32.mrf.mxu0
      %968 = vdwg.mxu0
      %v1001 = vunpack.c.l.b16 %v228
      %v1002 = vunpack.c.l.b16 %v229
      %v1003 = vunpack.c.l.b16 %v230
      %v1004 = vunpack.c.l.b16 %v231
      %v1005 = vunpack.c.l.b16 %v232
      %v1006 = vunpack.c.l.b16 %v233
      %v1007 = vunpack.c.l.b16 %v234
      %v1008 = vunpack.c.l.b16 %v235
      %v1009 = vunpack.c.l.b16 %v236
      %v1010 = vunpack.c.l.b16 %v237
      %v1011 = vunpack.c.l.b16 %v238
      %v1012 = vunpack.c.l.b16 %v239
      %v1013 = vunpack.c.l.b16 %v240
      %v1014 = vunpack.c.l.b16 %v241
      %v1015 = vunpack.c.l.b16 %v242
      %v1016 = vunpack.c.l.b16 %v243
      %v1017 = vunpack.c.l.b16 %v244
      %v1018 = vunpack.c.l.b16 %v245
      %v1019 = vunpack.c.l.b16 %v246
      %v1020 = vunpack.c.l.b16 %v247
      %v1021 = vunpack.c.l.b16 %v248
      %v1022 = vunpack.c.l.b16 %v249
      %v1023 = vunpack.c.l.b16 %v250
      %v1024 = vunpack.c.l.b16 %v251
      %v1025 = vunpack.c.l.b16 %v252
      %v1026 = vunpack.c.l.b16 %v253
      %v1027 = vunpack.c.l.b16 %v254
      %v1028 = vunpack.c.l.b16 %v255
      %v1029 = vunpack.c.l.b16 %v256
      %v1030 = vunpack.c.l.b16 %v257
      %v1031 = vunpack.c.l.b16 %v258
      %v1032 = vunpack.c.l.b16 %v259
      %v1033 = vpack.c.b16 %v1002, %v1001
      %v1034 = vpack.c.b16 %v1004, %v1003
      %v1035 = vpack.c.b16 %v1006, %v1005
      %v1036 = vpack.c.b16 %v1008, %v1007
      %v1037 = vpack.c.b16 %v1010, %v1009
      %v1038 = vpack.c.b16 %v1012, %v1011
      %v1039 = vpack.c.b16 %v1014, %v1013
      %v1040 = vpack.c.b16 %v1016, %v1015
      %v1041 = vpack.c.b16 %v1018, %v1017
      %v1042 = vpack.c.b16 %v1020, %v1019
      %v1043 = vpack.c.b16 %v1022, %v1021
      %v1044 = vpack.c.b16 %v1024, %v1023
      %v1045 = vpack.c.b16 %v1026, %v1025
      %v1046 = vpack.c.b16 %v1028, %v1027
      %v1047 = vpack.c.b16 %v1030, %v1029
      %v1048 = vpack.c.b16 %v1032, %v1031
      %v1081 = vunpack.c.l.b16 %v260
      %v1082 = vunpack.c.l.b16 %v261
      %v1083 = vunpack.c.l.b16 %v262
      %v1084 = vunpack.c.l.b16 %v263
      %v1085 = vunpack.c.l.b16 %v264
      %v1086 = vunpack.c.l.b16 %v265
      %v1087 = vunpack.c.l.b16 %v266
      %v1088 = vunpack.c.l.b16 %v267
      %v1089 = vunpack.c.l.b16 %v268
      %v1090 = vunpack.c.l.b16 %v269
      %v1091 = vunpack.c.l.b16 %v270
      %v1092 = vunpack.c.l.b16 %v271
      %v1093 = vunpack.c.l.b16 %v272
      %v1094 = vunpack.c.l.b16 %v273
      %v1095 = vunpack.c.l.b16 %v274
      %v1096 = vunpack.c.l.b16 %v275
      %v1097 = vpack.c.b16 %v1082, %v1081
      %v1098 = vpack.c.b16 %v1084, %v1083
      %v1099 = vpack.c.b16 %v1086, %v1085
      %v1100 = vpack.c.b16 %v1088, %v1087
      %v1101 = vpack.c.b16 %v1090, %v1089
      %v1102 = vpack.c.b16 %v1092, %v1091
      %v1103 = vpack.c.b16 %v1094, %v1093
      %v1104 = vpack.c.b16 %v1096, %v1095
      %1113 = vmatprep.subr.bf16.mxu0 0
      %1114 = vmatpush1.bf16.msra.mxu0 %v1104
      %1115 = vmatprep.subr.bf16.mxu0 0
      %1116 = vmatpush1.bf16.msra.mxu0 %v1103
      %1117 = vmatprep.subr.bf16.mxu0 0
      %1118 = vmatpush1.bf16.msra.mxu0 %v1102
      %1119 = vmatprep.subr.bf16.mxu0 0
      %1120 = vmatpush1.bf16.msra.mxu0 %v1101
      %1121 = vmatprep.subr.bf16.mxu0 0
      %1122 = vmatpush1.bf16.msra.mxu0 %v1100
      %1123 = vmatprep.subr.bf16.mxu0 0
      %1124 = vmatpush1.bf16.msra.mxu0 %v1099
      %1125 = vmatprep.subr.bf16.mxu0 0
      %1126 = vmatpush1.bf16.msra.mxu0 %v1098
      %1127 = vmatprep.subr.bf16.mxu0 0
      %1128 = vmatpush1.bf16.msra.mxu0 %v1097
      %1129 = vmatprep.subr.bf16.mxu0 0
      %1130 = vmatpush2.bf16.msra.mxu0 0
      %1131 = vmatprep.subr.bf16.mxu0 0
      %1132 = vmatpush2.bf16.msra.mxu0 0
      %1133 = vmatprep.subr.bf16.mxu0 0
      %1134 = vmatpush2.bf16.msra.mxu0 0
      %1135 = vmatprep.subr.bf16.mxu0 0
      %1136 = vmatpush2.bf16.msra.mxu0 0
      %1137 = vmatprep.subr.bf16.mxu0 0
      %1138 = vmatpush2.bf16.msra.mxu0 0
      %1139 = vmatprep.subr.bf16.mxu0 0
      %1140 = vmatpush2.bf16.msra.mxu0 0
      %1141 = vmatprep.subr.bf16.mxu0 0
      %1142 = vmatpush2.bf16.msra.mxu0 0
      %1143 = vmatprep.subr.bf16.mxu0 0
      %1144 = vmatpush2.bf16.msra.mxu0 0
      %1145 = vmatprep.mubr.bf16.mxu0 0
      %1146 = vmatmul.mubr.bf16.gmra.mxu0 %v1033
      %v1147 = vpop.f32.mrf.mxu0
      %v1148 = vadd.f32 %v843, %v1147
      %v1149 = vpop.f32.mrf.mxu0
      %v1150 = vpop.f32.mrf.mxu0
      %v1151 = vadd.f32 %v846, %v1150
      %v1152 = vpop.f32.mrf.mxu0
      %1153 = vmatprep.mubr.bf16.mxu0 0
      %1154 = vmatmul.mubr.bf16.gmra.mxu0 %v1034
      %v1155 = vpop.f32.mrf.mxu0
      %v1156 = vadd.f32 %v851, %v1155
      %v1157 = vpop.f32.mrf.mxu0
      %v1158 = vpop.f32.mrf.mxu0
      %v1159 = vadd.f32 %v854, %v1158
      %v1160 = vpop.f32.mrf.mxu0
      %1161 = vmatprep.mubr.bf16.mxu0 0
      %1162 = vmatmul.mubr.bf16.gmra.mxu0 %v1035
      %v1163 = vpop.f32.mrf.mxu0
      %v1164 = vadd.f32 %v859, %v1163
      %v1165 = vpop.f32.mrf.mxu0
      %v1166 = vpop.f32.mrf.mxu0
      %v1167 = vadd.f32 %v862, %v1166
      %v1168 = vpop.f32.mrf.mxu0
      %1169 = vmatprep.mubr.bf16.mxu0 0
      %1170 = vmatmul.mubr.bf16.gmra.mxu0 %v1036
      %v1171 = vpop.f32.mrf.mxu0
      %v1172 = vadd.f32 %v867, %v1171
      %v1173 = vpop.f32.mrf.mxu0
      %v1174 = vpop.f32.mrf.mxu0
      %v1175 = vadd.f32 %v870, %v1174
      %v1176 = vpop.f32.mrf.mxu0
      %1177 = vmatprep.mubr.bf16.mxu0 0
      %1178 = vmatmul.mubr.bf16.gmra.mxu0 %v1037
      %v1179 = vpop.f32.mrf.mxu0
      %v1180 = vadd.f32 %v875, %v1179
      %v1181 = vpop.f32.mrf.mxu0
      %v1182 = vpop.f32.mrf.mxu0
      %v1183 = vadd.f32 %v878, %v1182
      %v1184 = vpop.f32.mrf.mxu0
      %1185 = vmatprep.mubr.bf16.mxu0 0
      %1186 = vmatmul.mubr.bf16.gmra.mxu0 %v1038
      %v1187 = vpop.f32.mrf.mxu0
      %v1188 = vadd.f32 %v883, %v1187
      %v1189 = vpop.f32.mrf.mxu0
      %v1190 = vpop.f32.mrf.mxu0
      %v1191 = vadd.f32 %v886, %v1190
      %v1192 = vpop.f32.mrf.mxu0
      %1193 = vmatprep.mubr.bf16.mxu0 0
      %1194 = vmatmul.mubr.bf16.gmra.mxu0 %v1039
      %v1195 = vpop.f32.mrf.mxu0
      %v1196 = vadd.f32 %v891, %v1195
      %v1197 = vpop.f32.mrf.mxu0
      %v1198 = vpop.f32.mrf.mxu0
      %v1199 = vadd.f32 %v894, %v1198
      %v1200 = vpop.f32.mrf.mxu0
      %1201 = vmatprep.mubr.bf16.mxu0 0
      %1202 = vmatmul.mubr.bf16.gmra.mxu0 %v1040
      %v1203 = vpop.f32.mrf.mxu0
      %v1204 = vadd.f32 %v899, %v1203
      %v1205 = vpop.f32.mrf.mxu0
      %v1206 = vpop.f32.mrf.mxu0
      %v1207 = vadd.f32 %v902, %v1206
      %v1208 = vpop.f32.mrf.mxu0
      %1209 = vmatprep.mubr.bf16.mxu0 0
      %1210 = vmatmul.mubr.bf16.gmra.mxu0 %v1041
      %v1211 = vpop.f32.mrf.mxu0
      %v1212 = vadd.f32 %v907, %v1211
      %v1213 = vpop.f32.mrf.mxu0
      %v1214 = vpop.f32.mrf.mxu0
      %v1215 = vadd.f32 %v910, %v1214
      %v1216 = vpop.f32.mrf.mxu0
      %1217 = vmatprep.mubr.bf16.mxu0 0
      %1218 = vmatmul.mubr.bf16.gmra.mxu0 %v1042
      %v1219 = vpop.f32.mrf.mxu0
      %v1220 = vadd.f32 %v915, %v1219
      %v1221 = vpop.f32.mrf.mxu0
      %v1222 = vpop.f32.mrf.mxu0
      %v1223 = vadd.f32 %v918, %v1222
      %v1224 = vpop.f32.mrf.mxu0
      %1225 = vmatprep.mubr.bf16.mxu0 0
      %1226 = vmatmul.mubr.bf16.gmra.mxu0 %v1043
      %v1227 = vpop.f32.mrf.mxu0
      %v1228 = vadd.f32 %v923, %v1227
      %v1229 = vpop.f32.mrf.mxu0
      %v1230 = vpop.f32.mrf.mxu0
      %v1231 = vadd.f32 %v926, %v1230
      %v1232 = vpop.f32.mrf.mxu0
      %1233 = vmatprep.mubr.bf16.mxu0 0
      %1234 = vmatmul.mubr.bf16.gmra.mxu0 %v1044
      %v1235 = vpop.f32.mrf.mxu0
      %v1236 = vadd.f32 %v931, %v1235
      %v1237 = vpop.f32.mrf.mxu0
      %v1238 = vpop.f32.mrf.mxu0
      %v1239 = vadd.f32 %v934, %v1238
      %v1240 = vpop.f32.mrf.mxu0
      %1241 = vmatprep.mubr.bf16.mxu0 0
      %1242 = vmatmul.mubr.bf16.gmra.mxu0 %v1045
      %v1243 = vpop.f32.mrf.mxu0
      %v1244 = vadd.f32 %v939, %v1243
      %v1245 = vpop.f32.mrf.mxu0
      %v1246 = vpop.f32.mrf.mxu0
      %v1247 = vadd.f32 %v942, %v1246
      %v1248 = vpop.f32.mrf.mxu0
      %1249 = vmatprep.mubr.bf16.mxu0 0
      %1250 = vmatmul.mubr.bf16.gmra.mxu0 %v1046
      %v1251 = vpop.f32.mrf.mxu0
      %v1252 = vadd.f32 %v947, %v1251
      %v1253 = vpop.f32.mrf.mxu0
      %v1254 = vpop.f32.mrf.mxu0
      %v1255 = vadd.f32 %v950, %v1254
      %v1256 = vpop.f32.mrf.mxu0
      %1257 = vmatprep.mubr.bf16.mxu0 0
      %1258 = vmatmul.mubr.bf16.gmra.mxu0 %v1047
      %v1259 = vpop.f32.mrf.mxu0
      %v1260 = vadd.f32 %v955, %v1259
      %v1261 = vpop.f32.mrf.mxu0
      %v1262 = vpop.f32.mrf.mxu0
      %v1263 = vadd.f32 %v958, %v1262
      %v1264 = vpop.f32.mrf.mxu0
      %1265 = vmatprep.mubr.bf16.mxu0 0
      %1266 = vmatmul.mubr.bf16.gmra.mxu0 %v1048
      %v1267 = vpop.f32.mrf.mxu0
      %v1268 = vadd.f32 %v963, %v1267
      %v1269 = vpop.f32.mrf.mxu0
      %v1270 = vpop.f32.mrf.mxu0
      %v1271 = vadd.f32 %v966, %v1270
      %v1272 = vpop.f32.mrf.mxu0
      %1273 = vdwg.mxu0
      %v1274 = vld [vmem:[%s227] sm:$0xe]
      %v1275 = vld [vmem:[%s227 + $0xc] sm:$0xe]
      %v1276 = vld [vmem:[%s227 + $0x18] sm:$0xe]
      %v1277 = vld [vmem:[%s227 + $0x24] sm:$0xe]
      %v1278 = vld [vmem:[%s227 + $0x30] sm:$0xe]
      %v1279 = vld [vmem:[%s227 + $0x3c] sm:$0xe]
      %v1280 = vld [vmem:[%s227 + $0x48] sm:$0xe]
      %v1281 = vld [vmem:[%s227 + $0x54] sm:$0xe]
      %v1282 = vld [vmem:[%s227 + $0x60] sm:$0xe]
      %v1283 = vld [vmem:[%s227 + $0x6c] sm:$0xe]
      %v1284 = vld [vmem:[%s227 + $0x78] sm:$0xe]
      %v1285 = vld [vmem:[%s227 + $0x84] sm:$0xe]
      %v1286 = vld [vmem:[%s227 + $0x90] sm:$0xe]
      %v1287 = vld [vmem:[%s227 + $0x9c] sm:$0xe]
      %v1288 = vld [vmem:[%s227 + $0xa8] sm:$0xe]
      %v1289 = vld [vmem:[%s227 + $0xb4] sm:$0xe]
      %vm1322 = vcmask 1042432
      %vm1323 = vcmask 1046532
      %vm1324 = vmor %vm1322, %vm1323
      %v1325 = vrot.slane %v1274, 5
      %v1326 = vrot.slane %v1325, 4
      %v1327 = vrot.slane %v229, 5
      %v1328 = vsel %vm1324, %v1326, %v1327
      %v1329 = vrot.slane %v1327, 4
      %v1330 = vrot.slane %v276, 5
      %v1331 = vsel %vm1324, %v1329, %v1330
      %v1332 = vrot.slane %v1275, 5
      %v1333 = vrot.slane %v1332, 4
      %v1334 = vrot.slane %v231, 5
      %v1335 = vsel %vm1324, %v1333, %v1334
      %v1336 = vrot.slane %v1334, 4
      %v1337 = vrot.slane %v277, 5
      %v1338 = vsel %vm1324, %v1336, %v1337
      %v1339 = vrot.slane %v1276, 5
      %v1340 = vrot.slane %v1339, 4
      %v1341 = vrot.slane %v233, 5
      %v1342 = vsel %vm1324, %v1340, %v1341
      %v1343 = vrot.slane %v1341, 4
      %v1344 = vrot.slane %v278, 5
      %v1345 = vsel %vm1324, %v1343, %v1344
      %v1346 = vrot.slane %v1277, 5
      %v1347 = vrot.slane %v1346, 4
      %v1348 = vrot.slane %v235, 5
      %v1349 = vsel %vm1324, %v1347, %v1348
      %v1350 = vrot.slane %v1348, 4
      %v1351 = vrot.slane %v279, 5
      %v1352 = vsel %vm1324, %v1350, %v1351
      %v1353 = vrot.slane %v1278, 5
      %v1354 = vrot.slane %v1353, 4
      %v1355 = vrot.slane %v237, 5
      %v1356 = vsel %vm1324, %v1354, %v1355
      %v1357 = vrot.slane %v1355, 4
      %v1358 = vrot.slane %v280, 5
      %v1359 = vsel %vm1324, %v1357, %v1358
      %v1360 = vrot.slane %v1279, 5
      %v1361 = vrot.slane %v1360, 4
      %v1362 = vrot.slane %v239, 5
      %v1363 = vsel %vm1324, %v1361, %v1362
      %v1364 = vrot.slane %v1362, 4
      %v1365 = vrot.slane %v281, 5
      %v1366 = vsel %vm1324, %v1364, %v1365
      %v1367 = vrot.slane %v1280, 5
      %v1368 = vrot.slane %v1367, 4
      %v1369 = vrot.slane %v241, 5
      %v1370 = vsel %vm1324, %v1368, %v1369
      %v1371 = vrot.slane %v1369, 4
      %v1372 = vrot.slane %v282, 5
      %v1373 = vsel %vm1324, %v1371, %v1372
      %v1374 = vrot.slane %v1281, 5
      %v1375 = vrot.slane %v1374, 4
      %v1376 = vrot.slane %v243, 5
      %v1377 = vsel %vm1324, %v1375, %v1376
      %v1378 = vrot.slane %v1376, 4
      %v1379 = vrot.slane %v283, 5
      %v1380 = vsel %vm1324, %v1378, %v1379
      %v1381 = vrot.slane %v1282, 5
      %v1382 = vrot.slane %v1381, 4
      %v1383 = vrot.slane %v245, 5
      %v1384 = vsel %vm1324, %v1382, %v1383
      %v1385 = vrot.slane %v1383, 4
      %v1386 = vrot.slane %v284, 5
      %v1387 = vsel %vm1324, %v1385, %v1386
      %v1388 = vrot.slane %v1283, 5
      %v1389 = vrot.slane %v1388, 4
      %v1390 = vrot.slane %v247, 5
      %v1391 = vsel %vm1324, %v1389, %v1390
      %v1392 = vrot.slane %v1390, 4
      %v1393 = vrot.slane %v285, 5
      %v1394 = vsel %vm1324, %v1392, %v1393
      %v1395 = vrot.slane %v1284, 5
      %v1396 = vrot.slane %v1395, 4
      %v1397 = vrot.slane %v249, 5
      %v1398 = vsel %vm1324, %v1396, %v1397
      %v1399 = vrot.slane %v1397, 4
      %v1400 = vrot.slane %v286, 5
      %v1401 = vsel %vm1324, %v1399, %v1400
      %v1402 = vrot.slane %v1285, 5
      %v1403 = vrot.slane %v1402, 4
      %v1404 = vrot.slane %v251, 5
      %v1405 = vsel %vm1324, %v1403, %v1404
      %v1406 = vrot.slane %v1404, 4
      %v1407 = vrot.slane %v287, 5
      %v1408 = vsel %vm1324, %v1406, %v1407
      %v1409 = vrot.slane %v1286, 5
      %v1410 = vrot.slane %v1409, 4
      %v1411 = vrot.slane %v253, 5
      %v1412 = vsel %vm1324, %v1410, %v1411
      %v1413 = vrot.slane %v1411, 4
      %v1414 = vrot.slane %v288, 5
      %v1415 = vsel %vm1324, %v1413, %v1414
      %v1416 = vrot.slane %v1287, 5
      %v1417 = vrot.slane %v1416, 4
      %v1418 = vrot.slane %v255, 5
      %v1419 = vsel %vm1324, %v1417, %v1418
      %v1420 = vrot.slane %v1418, 4
      %v1421 = vrot.slane %v289, 5
      %v1422 = vsel %vm1324, %v1420, %v1421
      %v1423 = vrot.slane %v1288, 5
      %v1424 = vrot.slane %v1423, 4
      %v1425 = vrot.slane %v257, 5
      %v1426 = vsel %vm1324, %v1424, %v1425
      %v1427 = vrot.slane %v1425, 4
      %v1428 = vrot.slane %v290, 5
      %v1429 = vsel %vm1324, %v1427, %v1428
      %v1430 = vrot.slane %v1289, 5
      %v1431 = vrot.slane %v1430, 4
      %v1432 = vrot.slane %v259, 5
      %v1433 = vsel %vm1324, %v1431, %v1432
      %v1434 = vrot.slane %v1432, 4
      %v1435 = vrot.slane %v291, 5
      %v1436 = vsel %vm1324, %v1434, %v1435
      %s1437 = scalar_lea.vmem %s1, 128
      %v1438 = vld [vmem:[%s1437] sm:$0xf]
      %v1439 = vld [vmem:[%s1437 + $0x4] sm:$0xf]
      %v1440 = vld [vmem:[%s1437 + $0x8] sm:$0xf]
      %v1441 = vld [vmem:[%s1437 + $0xc] sm:$0xf]
      %v1442 = vld [vmem:[%s1437 + $0x10] sm:$0xf]
      %v1443 = vld [vmem:[%s1437 + $0x14] sm:$0xf]
      %v1444 = vld [vmem:[%s1437 + $0x18] sm:$0xf]
      %v1445 = vld [vmem:[%s1437 + $0x1c] sm:$0xf]
      %v1446 = vld [vmem:[%s1437 + $0x20] sm:$0xf]
      %v1447 = vld [vmem:[%s1437 + $0x24] sm:$0xf]
      %v1448 = vld [vmem:[%s1437 + $0x28] sm:$0xf]
      %v1449 = vld [vmem:[%s1437 + $0x2c] sm:$0xf]
      %v1450 = vld [vmem:[%s1437 + $0x30] sm:$0xf]
      %v1451 = vld [vmem:[%s1437 + $0x34] sm:$0xf]
      %v1452 = vld [vmem:[%s1437 + $0x38] sm:$0xf]
      %v1453 = vld [vmem:[%s1437 + $0x3c] sm:$0xf]
      %v1454 = vunpack.c.l.b16 %v1328
      %v1455 = vunpack.c.l.b16 %v1331
      %v1456 = vunpack.c.l.b16 %v1335
      %v1457 = vunpack.c.l.b16 %v1338
      %v1458 = vunpack.c.l.b16 %v1342
      %v1459 = vunpack.c.l.b16 %v1345
      %v1460 = vunpack.c.l.b16 %v1349
      %v1461 = vunpack.c.l.b16 %v1352
      %v1462 = vunpack.c.l.b16 %v1356
      %v1463 = vunpack.c.l.b16 %v1359
      %v1464 = vunpack.c.l.b16 %v1363
      %v1465 = vunpack.c.l.b16 %v1366
      %v1466 = vunpack.c.l.b16 %v1370
      %v1467 = vunpack.c.l.b16 %v1373
      %v1468 = vunpack.c.l.b16 %v1377
      %v1469 = vunpack.c.l.b16 %v1380
      %v1470 = vunpack.c.l.b16 %v1384
      %v1471 = vunpack.c.l.b16 %v1387
      %v1472 = vunpack.c.l.b16 %v1391
      %v1473 = vunpack.c.l.b16 %v1394
      %v1474 = vunpack.c.l.b16 %v1398
      %v1475 = vunpack.c.l.b16 %v1401
      %v1476 = vunpack.c.l.b16 %v1405
      %v1477 = vunpack.c.l.b16 %v1408
      %v1478 = vunpack.c.l.b16 %v1412
      %v1479 = vunpack.c.l.b16 %v1415
      %v1480 = vunpack.c.l.b16 %v1419
      %v1481 = vunpack.c.l.b16 %v1422
      %v1482 = vunpack.c.l.b16 %v1426
      %v1483 = vunpack.c.l.b16 %v1429
      %v1484 = vunpack.c.l.b16 %v1433
      %v1485 = vunpack.c.l.b16 %v1436
      %v1486 = vpack.c.b16 %v1455, %v1454
      %v1487 = vpack.c.b16 %v1457, %v1456
      %v1488 = vpack.c.b16 %v1459, %v1458
      %v1489 = vpack.c.b16 %v1461, %v1460
      %v1490 = vpack.c.b16 %v1463, %v1462
      %v1491 = vpack.c.b16 %v1465, %v1464
      %v1492 = vpack.c.b16 %v1467, %v1466
      %v1493 = vpack.c.b16 %v1469, %v1468
      %v1494 = vpack.c.b16 %v1471, %v1470
      %v1495 = vpack.c.b16 %v1473, %v1472
      %v1496 = vpack.c.b16 %v1475, %v1474
      %v1497 = vpack.c.b16 %v1477, %v1476
      %v1498 = vpack.c.b16 %v1479, %v1478
      %v1499 = vpack.c.b16 %v1481, %v1480
      %v1500 = vpack.c.b16 %v1483, %v1482
      %v1501 = vpack.c.b16 %v1485, %v1484
      %v1534 = vunpack.c.l.b16 %v1438
      %v1535 = vunpack.c.l.b16 %v1439
      %v1536 = vunpack.c.l.b16 %v1440
      %v1537 = vunpack.c.l.b16 %v1441
      %v1538 = vunpack.c.l.b16 %v1442
      %v1539 = vunpack.c.l.b16 %v1443
      %v1540 = vunpack.c.l.b16 %v1444
      %v1541 = vunpack.c.l.b16 %v1445
      %v1542 = vunpack.c.l.b16 %v1446
      %v1543 = vunpack.c.l.b16 %v1447
      %v1544 = vunpack.c.l.b16 %v1448
      %v1545 = vunpack.c.l.b16 %v1449
      %v1546 = vunpack.c.l.b16 %v1450
      %v1547 = vunpack.c.l.b16 %v1451
      %v1548 = vunpack.c.l.b16 %v1452
      %v1549 = vunpack.c.l.b16 %v1453
      %v1550 = vpack.c.b16 %v1535, %v1534
      %v1551 = vpack.c.b16 %v1537, %v1536
      %v1552 = vpack.c.b16 %v1539, %v1538
      %v1553 = vpack.c.b16 %v1541, %v1540
      %v1554 = vpack.c.b16 %v1543, %v1542
      %v1555 = vpack.c.b16 %v1545, %v1544
      %v1556 = vpack.c.b16 %v1547, %v1546
      %v1557 = vpack.c.b16 %v1549, %v1548
      %1566 = vmatprep.subr.bf16.mxu0 0
      %1567 = vmatpush1.bf16.msra.mxu0 %v1557
      %1568 = vmatprep.subr.bf16.mxu0 0
      %1569 = vmatpush1.bf16.msra.mxu0 %v1556
      %1570 = vmatprep.subr.bf16.mxu0 0
      %1571 = vmatpush1.bf16.msra.mxu0 %v1555
      %1572 = vmatprep.subr.bf16.mxu0 0
      %1573 = vmatpush1.bf16.msra.mxu0 %v1554
      %1574 = vmatprep.subr.bf16.mxu0 0
      %1575 = vmatpush1.bf16.msra.mxu0 %v1553
      %1576 = vmatprep.subr.bf16.mxu0 0
      %1577 = vmatpush1.bf16.msra.mxu0 %v1552
      %1578 = vmatprep.subr.bf16.mxu0 0
      %1579 = vmatpush1.bf16.msra.mxu0 %v1551
      %1580 = vmatprep.subr.bf16.mxu0 0
      %1581 = vmatpush1.bf16.msra.mxu0 %v1550
      %1582 = vmatprep.subr.bf16.mxu0 0
      %1583 = vmatpush2.bf16.msra.mxu0 0
      %1584 = vmatprep.subr.bf16.mxu0 0
      %1585 = vmatpush2.bf16.msra.mxu0 0
      %1586 = vmatprep.subr.bf16.mxu0 0
      %1587 = vmatpush2.bf16.msra.mxu0 0
      %1588 = vmatprep.subr.bf16.mxu0 0
      %1589 = vmatpush2.bf16.msra.mxu0 0
      %1590 = vmatprep.subr.bf16.mxu0 0
      %1591 = vmatpush2.bf16.msra.mxu0 0
      %1592 = vmatprep.subr.bf16.mxu0 0
      %1593 = vmatpush2.bf16.msra.mxu0 0
      %1594 = vmatprep.subr.bf16.mxu0 0
      %1595 = vmatpush2.bf16.msra.mxu0 0
      %1596 = vmatprep.subr.bf16.mxu0 0
      %1597 = vmatpush2.bf16.msra.mxu0 0
      %1598 = vmatprep.mubr.bf16.mxu0 0
      %1599 = vmatmul.mubr.bf16.gmra.mxu0 %v1486
      %v1600 = vpop.f32.mrf.mxu0
      %v1601 = vadd.f32 0.0, %v1600
      %v1602 = vpop.f32.mrf.mxu0
      %v1603 = vpop.f32.mrf.mxu0
      %v1604 = vadd.f32 0.0, %v1603
      %v1605 = vpop.f32.mrf.mxu0
      %1606 = vmatprep.mubr.bf16.mxu0 0
      %1607 = vmatmul.mubr.bf16.gmra.mxu0 %v1487
      %v1608 = vpop.f32.mrf.mxu0
      %v1609 = vadd.f32 0.0, %v1608
      %v1610 = vpop.f32.mrf.mxu0
      %v1611 = vpop.f32.mrf.mxu0
      %v1612 = vadd.f32 0.0, %v1611
      %v1613 = vpop.f32.mrf.mxu0
      %1614 = vmatprep.mubr.bf16.mxu0 0
      %1615 = vmatmul.mubr.bf16.gmra.mxu0 %v1488
      %v1616 = vpop.f32.mrf.mxu0
      %v1617 = vadd.f32 0.0, %v1616
      %v1618 = vpop.f32.mrf.mxu0
      %v1619 = vpop.f32.mrf.mxu0
      %v1620 = vadd.f32 0.0, %v1619
      %v1621 = vpop.f32.mrf.mxu0
      %1622 = vmatprep.mubr.bf16.mxu0 0
      %1623 = vmatmul.mubr.bf16.gmra.mxu0 %v1489
      %v1624 = vpop.f32.mrf.mxu0
      %v1625 = vadd.f32 0.0, %v1624
      %v1626 = vpop.f32.mrf.mxu0
      %v1627 = vpop.f32.mrf.mxu0
      %v1628 = vadd.f32 0.0, %v1627
      %v1629 = vpop.f32.mrf.mxu0
      %1630 = vmatprep.mubr.bf16.mxu0 0
      %1631 = vmatmul.mubr.bf16.gmra.mxu0 %v1490
      %v1632 = vpop.f32.mrf.mxu0
      %v1633 = vadd.f32 0.0, %v1632
      %v1634 = vpop.f32.mrf.mxu0
      %v1635 = vpop.f32.mrf.mxu0
      %v1636 = vadd.f32 0.0, %v1635
      %v1637 = vpop.f32.mrf.mxu0
      %1638 = vmatprep.mubr.bf16.mxu0 0
      %1639 = vmatmul.mubr.bf16.gmra.mxu0 %v1491
      %v1640 = vpop.f32.mrf.mxu0
      %v1641 = vadd.f32 0.0, %v1640
      %v1642 = vpop.f32.mrf.mxu0
      %v1643 = vpop.f32.mrf.mxu0
      %v1644 = vadd.f32 0.0, %v1643
      %v1645 = vpop.f32.mrf.mxu0
      %1646 = vmatprep.mubr.bf16.mxu0 0
      %1647 = vmatmul.mubr.bf16.gmra.mxu0 %v1492
      %v1648 = vpop.f32.mrf.mxu0
      %v1649 = vadd.f32 0.0, %v1648
      %v1650 = vpop.f32.mrf.mxu0
      %v1651 = vpop.f32.mrf.mxu0
      %v1652 = vadd.f32 0.0, %v1651
      %v1653 = vpop.f32.mrf.mxu0
      %1654 = vmatprep.mubr.bf16.mxu0 0
      %1655 = vmatmul.mubr.bf16.gmra.mxu0 %v1493
      %v1656 = vpop.f32.mrf.mxu0
      %v1657 = vadd.f32 0.0, %v1656
      %v1658 = vpop.f32.mrf.mxu0
      %v1659 = vpop.f32.mrf.mxu0
      %v1660 = vadd.f32 0.0, %v1659
      %v1661 = vpop.f32.mrf.mxu0
      %1662 = vmatprep.mubr.bf16.mxu0 0
      %1663 = vmatmul.mubr.bf16.gmra.mxu0 %v1494
      %v1664 = vpop.f32.mrf.mxu0
      %v1665 = vadd.f32 0.0, %v1664
      %v1666 = vpop.f32.mrf.mxu0
      %v1667 = vpop.f32.mrf.mxu0
      %v1668 = vadd.f32 0.0, %v1667
      %v1669 = vpop.f32.mrf.mxu0
      %1670 = vmatprep.mubr.bf16.mxu0 0
      %1671 = vmatmul.mubr.bf16.gmra.mxu0 %v1495
      %v1672 = vpop.f32.mrf.mxu0
      %v1673 = vadd.f32 0.0, %v1672
      %v1674 = vpop.f32.mrf.mxu0
      %v1675 = vpop.f32.mrf.mxu0
      %v1676 = vadd.f32 0.0, %v1675
      %v1677 = vpop.f32.mrf.mxu0
      %1678 = vmatprep.mubr.bf16.mxu0 0
      %1679 = vmatmul.mubr.bf16.gmra.mxu0 %v1496
      %v1680 = vpop.f32.mrf.mxu0
      %v1681 = vadd.f32 0.0, %v1680
      %v1682 = vpop.f32.mrf.mxu0
      %v1683 = vpop.f32.mrf.mxu0
      %v1684 = vadd.f32 0.0, %v1683
      %v1685 = vpop.f32.mrf.mxu0
      %1686 = vmatprep.mubr.bf16.mxu0 0
      %1687 = vmatmul.mubr.bf16.gmra.mxu0 %v1497
      %v1688 = vpop.f32.mrf.mxu0
      %v1689 = vadd.f32 0.0, %v1688
      %v1690 = vpop.f32.mrf.mxu0
      %v1691 = vpop.f32.mrf.mxu0
      %v1692 = vadd.f32 0.0, %v1691
      %v1693 = vpop.f32.mrf.mxu0
      %1694 = vmatprep.mubr.bf16.mxu0 0
      %1695 = vmatmul.mubr.bf16.gmra.mxu0 %v1498
      %v1696 = vpop.f32.mrf.mxu0
      %v1697 = vadd.f32 0.0, %v1696
      %v1698 = vpop.f32.mrf.mxu0
      %v1699 = vpop.f32.mrf.mxu0
      %v1700 = vadd.f32 0.0, %v1699
      %v1701 = vpop.f32.mrf.mxu0
      %1702 = vmatprep.mubr.bf16.mxu0 0
      %1703 = vmatmul.mubr.bf16.gmra.mxu0 %v1499
      %v1704 = vpop.f32.mrf.mxu0
      %v1705 = vadd.f32 0.0, %v1704
      %v1706 = vpop.f32.mrf.mxu0
      %v1707 = vpop.f32.mrf.mxu0
      %v1708 = vadd.f32 0.0, %v1707
      %v1709 = vpop.f32.mrf.mxu0
      %1710 = vmatprep.mubr.bf16.mxu0 0
      %1711 = vmatmul.mubr.bf16.gmra.mxu0 %v1500
      %v1712 = vpop.f32.mrf.mxu0
      %v1713 = vadd.f32 0.0, %v1712
      %v1714 = vpop.f32.mrf.mxu0
      %v1715 = vpop.f32.mrf.mxu0
      %v1716 = vadd.f32 0.0, %v1715
      %v1717 = vpop.f32.mrf.mxu0
      %1718 = vmatprep.mubr.bf16.mxu0 0
      %1719 = vmatmul.mubr.bf16.gmra.mxu0 %v1501
      %v1720 = vpop.f32.mrf.mxu0
      %v1721 = vadd.f32 0.0, %v1720
      %v1722 = vpop.f32.mrf.mxu0
      %v1723 = vpop.f32.mrf.mxu0
      %v1724 = vadd.f32 0.0, %v1723
      %v1725 = vpop.f32.mrf.mxu0
      %1726 = vdwg.mxu0
      %v1727 = vadd.f32 %v1148, %v1601
      %v1728 = vadd.f32 %v1151, %v1604
      %v1729 = vadd.f32 %v1156, %v1609
      %v1730 = vadd.f32 %v1159, %v1612
      %v1731 = vadd.f32 %v1164, %v1617
      %v1732 = vadd.f32 %v1167, %v1620
      %v1733 = vadd.f32 %v1172, %v1625
      %v1734 = vadd.f32 %v1175, %v1628
      %v1735 = vadd.f32 %v1180, %v1633
      %v1736 = vadd.f32 %v1183, %v1636
      %v1737 = vadd.f32 %v1188, %v1641
      %v1738 = vadd.f32 %v1191, %v1644
      %v1739 = vadd.f32 %v1196, %v1649
      %v1740 = vadd.f32 %v1199, %v1652
      %v1741 = vadd.f32 %v1204, %v1657
      %v1742 = vadd.f32 %v1207, %v1660
      %v1743 = vadd.f32 %v1212, %v1665
      %v1744 = vadd.f32 %v1215, %v1668
      %v1745 = vadd.f32 %v1220, %v1673
      %v1746 = vadd.f32 %v1223, %v1676
      %v1747 = vadd.f32 %v1228, %v1681
      %v1748 = vadd.f32 %v1231, %v1684
      %v1749 = vadd.f32 %v1236, %v1689
      %v1750 = vadd.f32 %v1239, %v1692
      %v1751 = vadd.f32 %v1244, %v1697
      %v1752 = vadd.f32 %v1247, %v1700
      %v1753 = vadd.f32 %v1252, %v1705
      %v1754 = vadd.f32 %v1255, %v1708
      %v1755 = vadd.f32 %v1260, %v1713
      %v1756 = vadd.f32 %v1263, %v1716
      %v1757 = vadd.f32 %v1268, %v1721
      %v1758 = vadd.f32 %v1271, %v1724
      %s1759 = sadd.s32 %s224, 1
      %s1760 = smul.u32 %s1759, 3
      %s1761 = smul.addr %s1760, 4
      %s1762 = scalar_lea.vmem %s211, %s1761
      %v1763 = vld [vmem:[%s1762] sm:$0xf]
      %v1764 = vld [vmem:[%s1762 + $0x4] sm:$0xf]
      %v1765 = vld [vmem:[%s1762 + $0xc] sm:$0xf]
      %v1766 = vld [vmem:[%s1762 + $0x10] sm:$0xf]
      %v1767 = vld [vmem:[%s1762 + $0x18] sm:$0xf]
      %v1768 = vld [vmem:[%s1762 + $0x1c] sm:$0xf]
      %v1769 = vld [vmem:[%s1762 + $0x24] sm:$0xf]
      %v1770 = vld [vmem:[%s1762 + $0x28] sm:$0xf]
      %v1771 = vld [vmem:[%s1762 + $0x30] sm:$0xf]
      %v1772 = vld [vmem:[%s1762 + $0x34] sm:$0xf]
      %v1773 = vld [vmem:[%s1762 + $0x3c] sm:$0xf]
      %v1774 = vld [vmem:[%s1762 + $0x40] sm:$0xf]
      %v1775 = vld [vmem:[%s1762 + $0x48] sm:$0xf]
      %v1776 = vld [vmem:[%s1762 + $0x4c] sm:$0xf]
      %v1777 = vld [vmem:[%s1762 + $0x54] sm:$0xf]
      %v1778 = vld [vmem:[%s1762 + $0x58] sm:$0xf]
      %v1779 = vld [vmem:[%s1762 + $0x60] sm:$0xf]
      %v1780 = vld [vmem:[%s1762 + $0x64] sm:$0xf]
      %v1781 = vld [vmem:[%s1762 + $0x6c] sm:$0xf]
      %v1782 = vld [vmem:[%s1762 + $0x70] sm:$0xf]
      %v1783 = vld [vmem:[%s1762 + $0x78] sm:$0xf]
      %v1784 = vld [vmem:[%s1762 + $0x7c] sm:$0xf]
      %v1785 = vld [vmem:[%s1762 + $0x84] sm:$0xf]
      %v1786 = vld [vmem:[%s1762 + $0x88] sm:$0xf]
      %v1787 = vld [vmem:[%s1762 + $0x90] sm:$0xf]
      %v1788 = vld [vmem:[%s1762 + $0x94] sm:$0xf]
      %v1789 = vld [vmem:[%s1762 + $0x9c] sm:$0xf]
      %v1790 = vld [vmem:[%s1762 + $0xa0] sm:$0xf]
      %v1791 = vld [vmem:[%s1762 + $0xa8] sm:$0xf]
      %v1792 = vld [vmem:[%s1762 + $0xac] sm:$0xf]
      %v1793 = vld [vmem:[%s1762 + $0xb4] sm:$0xf]
      %v1794 = vld [vmem:[%s1762 + $0xb8] sm:$0xf]
      %s1795 = scalar_lea.vmem %s1, 192
      %v1796 = vld [vmem:[%s1795] sm:$0xf]
      %v1797 = vld [vmem:[%s1795 + $0x4] sm:$0xf]
      %v1798 = vld [vmem:[%s1795 + $0x8] sm:$0xf]
      %v1799 = vld [vmem:[%s1795 + $0xc] sm:$0xf]
      %v1800 = vld [vmem:[%s1795 + $0x10] sm:$0xf]
      %v1801 = vld [vmem:[%s1795 + $0x14] sm:$0xf]
      %v1802 = vld [vmem:[%s1795 + $0x18] sm:$0xf]
      %v1803 = vld [vmem:[%s1795 + $0x1c] sm:$0xf]
      %v1804 = vld [vmem:[%s1795 + $0x20] sm:$0xf]
      %v1805 = vld [vmem:[%s1795 + $0x24] sm:$0xf]
      %v1806 = vld [vmem:[%s1795 + $0x28] sm:$0xf]
      %v1807 = vld [vmem:[%s1795 + $0x2c] sm:$0xf]
      %v1808 = vld [vmem:[%s1795 + $0x30] sm:$0xf]
      %v1809 = vld [vmem:[%s1795 + $0x34] sm:$0xf]
      %v1810 = vld [vmem:[%s1795 + $0x38] sm:$0xf]
      %v1811 = vld [vmem:[%s1795 + $0x3c] sm:$0xf]
      %v1844 = vunpack.c.l.b16 %v1763
      %v1845 = vunpack.c.l.b16 %v1764
      %v1846 = vunpack.c.l.b16 %v1765
      %v1847 = vunpack.c.l.b16 %v1766
      %v1848 = vunpack.c.l.b16 %v1767
      %v1849 = vunpack.c.l.b16 %v1768
      %v1850 = vunpack.c.l.b16 %v1769
      %v1851 = vunpack.c.l.b16 %v1770
      %v1852 = vunpack.c.l.b16 %v1771
      %v1853 = vunpack.c.l.b16 %v1772
      %v1854 = vunpack.c.l.b16 %v1773
      %v1855 = vunpack.c.l.b16 %v1774
      %v1856 = vunpack.c.l.b16 %v1775
      %v1857 = vunpack.c.l.b16 %v1776
      %v1858 = vunpack.c.l.b16 %v1777
      %v1859 = vunpack.c.l.b16 %v1778
      %v1860 = vunpack.c.l.b16 %v1779
      %v1861 = vunpack.c.l.b16 %v1780
      %v1862 = vunpack.c.l.b16 %v1781
      %v1863 = vunpack.c.l.b16 %v1782
      %v1864 = vunpack.c.l.b16 %v1783
      %v1865 = vunpack.c.l.b16 %v1784
      %v1866 = vunpack.c.l.b16 %v1785
      %v1867 = vunpack.c.l.b16 %v1786
      %v1868 = vunpack.c.l.b16 %v1787
      %v1869 = vunpack.c.l.b16 %v1788
      %v1870 = vunpack.c.l.b16 %v1789
      %v1871 = vunpack.c.l.b16 %v1790
      %v1872 = vunpack.c.l.b16 %v1791
      %v1873 = vunpack.c.l.b16 %v1792
      %v1874 = vunpack.c.l.b16 %v1793
      %v1875 = vunpack.c.l.b16 %v1794
      %v1876 = vpack.c.b16 %v1845, %v1844
      %v1877 = vpack.c.b16 %v1847, %v1846
      %v1878 = vpack.c.b16 %v1849, %v1848
      %v1879 = vpack.c.b16 %v1851, %v1850
      %v1880 = vpack.c.b16 %v1853, %v1852
      %v1881 = vpack.c.b16 %v1855, %v1854
      %v1882 = vpack.c.b16 %v1857, %v1856
      %v1883 = vpack.c.b16 %v1859, %v1858
      %v1884 = vpack.c.b16 %v1861, %v1860
      %v1885 = vpack.c.b16 %v1863, %v1862
      %v1886 = vpack.c.b16 %v1865, %v1864
      %v1887 = vpack.c.b16 %v1867, %v1866
      %v1888 = vpack.c.b16 %v1869, %v1868
      %v1889 = vpack.c.b16 %v1871, %v1870
      %v1890 = vpack.c.b16 %v1873, %v1872
      %v1891 = vpack.c.b16 %v1875, %v1874
      %v1924 = vunpack.c.l.b16 %v1796
      %v1925 = vunpack.c.l.b16 %v1797
      %v1926 = vunpack.c.l.b16 %v1798
      %v1927 = vunpack.c.l.b16 %v1799
      %v1928 = vunpack.c.l.b16 %v1800
      %v1929 = vunpack.c.l.b16 %v1801
      %v1930 = vunpack.c.l.b16 %v1802
      %v1931 = vunpack.c.l.b16 %v1803
      %v1932 = vunpack.c.l.b16 %v1804
      %v1933 = vunpack.c.l.b16 %v1805
      %v1934 = vunpack.c.l.b16 %v1806
      %v1935 = vunpack.c.l.b16 %v1807
      %v1936 = vunpack.c.l.b16 %v1808
      %v1937 = vunpack.c.l.b16 %v1809
      %v1938 = vunpack.c.l.b16 %v1810
      %v1939 = vunpack.c.l.b16 %v1811
      %v1940 = vpack.c.b16 %v1925, %v1924
      %v1941 = vpack.c.b16 %v1927, %v1926
      %v1942 = vpack.c.b16 %v1929, %v1928
      %v1943 = vpack.c.b16 %v1931, %v1930
      %v1944 = vpack.c.b16 %v1933, %v1932
      %v1945 = vpack.c.b16 %v1935, %v1934
      %v1946 = vpack.c.b16 %v1937, %v1936
      %v1947 = vpack.c.b16 %v1939, %v1938
      %1956 = vmatprep.subr.bf16.mxu0 0
      %1957 = vmatpush1.bf16.msra.mxu0 %v1947
      %1958 = vmatprep.subr.bf16.mxu0 0
      %1959 = vmatpush1.bf16.msra.mxu0 %v1946
      %1960 = vmatprep.subr.bf16.mxu0 0
      %1961 = vmatpush1.bf16.msra.mxu0 %v1945
      %1962 = vmatprep.subr.bf16.mxu0 0
      %1963 = vmatpush1.bf16.msra.mxu0 %v1944
      %1964 = vmatprep.subr.bf16.mxu0 0
      %1965 = vmatpush1.bf16.msra.mxu0 %v1943
      %1966 = vmatprep.subr.bf16.mxu0 0
      %1967 = vmatpush1.bf16.msra.mxu0 %v1942
      %1968 = vmatprep.subr.bf16.mxu0 0
      %1969 = vmatpush1.bf16.msra.mxu0 %v1941
      %1970 = vmatprep.subr.bf16.mxu0 0
      %1971 = vmatpush1.bf16.msra.mxu0 %v1940
      %1972 = vmatprep.subr.bf16.mxu0 0
      %1973 = vmatpush2.bf16.msra.mxu0 0
      %1974 = vmatprep.subr.bf16.mxu0 0
      %1975 = vmatpush2.bf16.msra.mxu0 0
      %1976 = vmatprep.subr.bf16.mxu0 0
      %1977 = vmatpush2.bf16.msra.mxu0 0
      %1978 = vmatprep.subr.bf16.mxu0 0
      %1979 = vmatpush2.bf16.msra.mxu0 0
      %1980 = vmatprep.subr.bf16.mxu0 0
      %1981 = vmatpush2.bf16.msra.mxu0 0
      %1982 = vmatprep.subr.bf16.mxu0 0
      %1983 = vmatpush2.bf16.msra.mxu0 0
      %1984 = vmatprep.subr.bf16.mxu0 0
      %1985 = vmatpush2.bf16.msra.mxu0 0
      %1986 = vmatprep.subr.bf16.mxu0 0
      %1987 = vmatpush2.bf16.msra.mxu0 0
      %1988 = vmatprep.mubr.bf16.mxu0 0
      %1989 = vmatmul.mubr.bf16.gmra.mxu0 %v1876
      %v1990 = vpop.f32.mrf.mxu0
      %v1991 = vadd.f32 0.0, %v1990
      %v1992 = vpop.f32.mrf.mxu0
      %v1993 = vpop.f32.mrf.mxu0
      %v1994 = vadd.f32 0.0, %v1993
      %v1995 = vpop.f32.mrf.mxu0
      %1996 = vmatprep.mubr.bf16.mxu0 0
      %1997 = vmatmul.mubr.bf16.gmra.mxu0 %v1877
      %v1998 = vpop.f32.mrf.mxu0
      %v1999 = vadd.f32 0.0, %v1998
      %v2000 = vpop.f32.mrf.mxu0
      %v2001 = vpop.f32.mrf.mxu0
      %v2002 = vadd.f32 0.0, %v2001
      %v2003 = vpop.f32.mrf.mxu0
      %2004 = vmatprep.mubr.bf16.mxu0 0
      %2005 = vmatmul.mubr.bf16.gmra.mxu0 %v1878
      %v2006 = vpop.f32.mrf.mxu0
      %v2007 = vadd.f32 0.0, %v2006
      %v2008 = vpop.f32.mrf.mxu0
      %v2009 = vpop.f32.mrf.mxu0
      %v2010 = vadd.f32 0.0, %v2009
      %v2011 = vpop.f32.mrf.mxu0
      %2012 = vmatprep.mubr.bf16.mxu0 0
      %2013 = vmatmul.mubr.bf16.gmra.mxu0 %v1879
      %v2014 = vpop.f32.mrf.mxu0
      %v2015 = vadd.f32 0.0, %v2014
      %v2016 = vpop.f32.mrf.mxu0
      %v2017 = vpop.f32.mrf.mxu0
      %v2018 = vadd.f32 0.0, %v2017
      %v2019 = vpop.f32.mrf.mxu0
      %2020 = vmatprep.mubr.bf16.mxu0 0
      %2021 = vmatmul.mubr.bf16.gmra.mxu0 %v1880
      %v2022 = vpop.f32.mrf.mxu0
      %v2023 = vadd.f32 0.0, %v2022
      %v2024 = vpop.f32.mrf.mxu0
      %v2025 = vpop.f32.mrf.mxu0
      %v2026 = vadd.f32 0.0, %v2025
      %v2027 = vpop.f32.mrf.mxu0
      %2028 = vmatprep.mubr.bf16.mxu0 0
      %2029 = vmatmul.mubr.bf16.gmra.mxu0 %v1881
      %v2030 = vpop.f32.mrf.mxu0
      %v2031 = vadd.f32 0.0, %v2030
      %v2032 = vpop.f32.mrf.mxu0
      %v2033 = vpop.f32.mrf.mxu0
      %v2034 = vadd.f32 0.0, %v2033
      %v2035 = vpop.f32.mrf.mxu0
      %2036 = vmatprep.mubr.bf16.mxu0 0
      %2037 = vmatmul.mubr.bf16.gmra.mxu0 %v1882
      %v2038 = vpop.f32.mrf.mxu0
      %v2039 = vadd.f32 0.0, %v2038
      %v2040 = vpop.f32.mrf.mxu0
      %v2041 = vpop.f32.mrf.mxu0
      %v2042 = vadd.f32 0.0, %v2041
      %v2043 = vpop.f32.mrf.mxu0
      %2044 = vmatprep.mubr.bf16.mxu0 0
      %2045 = vmatmul.mubr.bf16.gmra.mxu0 %v1883
      %v2046 = vpop.f32.mrf.mxu0
      %v2047 = vadd.f32 0.0, %v2046
      %v2048 = vpop.f32.mrf.mxu0
      %v2049 = vpop.f32.mrf.mxu0
      %v2050 = vadd.f32 0.0, %v2049
      %v2051 = vpop.f32.mrf.mxu0
      %2052 = vmatprep.mubr.bf16.mxu0 0
      %2053 = vmatmul.mubr.bf16.gmra.mxu0 %v1884
      %v2054 = vpop.f32.mrf.mxu0
      %v2055 = vadd.f32 0.0, %v2054
      %v2056 = vpop.f32.mrf.mxu0
      %v2057 = vpop.f32.mrf.mxu0
      %v2058 = vadd.f32 0.0, %v2057
      %v2059 = vpop.f32.mrf.mxu0
      %2060 = vmatprep.mubr.bf16.mxu0 0
      %2061 = vmatmul.mubr.bf16.gmra.mxu0 %v1885
      %v2062 = vpop.f32.mrf.mxu0
      %v2063 = vadd.f32 0.0, %v2062
      %v2064 = vpop.f32.mrf.mxu0
      %v2065 = vpop.f32.mrf.mxu0
      %v2066 = vadd.f32 0.0, %v2065
      %v2067 = vpop.f32.mrf.mxu0
      %2068 = vmatprep.mubr.bf16.mxu0 0
      %2069 = vmatmul.mubr.bf16.gmra.mxu0 %v1886
      %v2070 = vpop.f32.mrf.mxu0
      %v2071 = vadd.f32 0.0, %v2070
      %v2072 = vpop.f32.mrf.mxu0
      %v2073 = vpop.f32.mrf.mxu0
      %v2074 = vadd.f32 0.0, %v2073
      %v2075 = vpop.f32.mrf.mxu0
      %2076 = vmatprep.mubr.bf16.mxu0 0
      %2077 = vmatmul.mubr.bf16.gmra.mxu0 %v1887
      %v2078 = vpop.f32.mrf.mxu0
      %v2079 = vadd.f32 0.0, %v2078
      %v2080 = vpop.f32.mrf.mxu0
      %v2081 = vpop.f32.mrf.mxu0
      %v2082 = vadd.f32 0.0, %v2081
      %v2083 = vpop.f32.mrf.mxu0
      %2084 = vmatprep.mubr.bf16.mxu0 0
      %2085 = vmatmul.mubr.bf16.gmra.mxu0 %v1888
      %v2086 = vpop.f32.mrf.mxu0
      %v2087 = vadd.f32 0.0, %v2086
      %v2088 = vpop.f32.mrf.mxu0
      %v2089 = vpop.f32.mrf.mxu0
      %v2090 = vadd.f32 0.0, %v2089
      %v2091 = vpop.f32.mrf.mxu0
      %2092 = vmatprep.mubr.bf16.mxu0 0
      %2093 = vmatmul.mubr.bf16.gmra.mxu0 %v1889
      %v2094 = vpop.f32.mrf.mxu0
      %v2095 = vadd.f32 0.0, %v2094
      %v2096 = vpop.f32.mrf.mxu0
      %v2097 = vpop.f32.mrf.mxu0
      %v2098 = vadd.f32 0.0, %v2097
      %v2099 = vpop.f32.mrf.mxu0
      %2100 = vmatprep.mubr.bf16.mxu0 0
      %2101 = vmatmul.mubr.bf16.gmra.mxu0 %v1890
      %v2102 = vpop.f32.mrf.mxu0
      %v2103 = vadd.f32 0.0, %v2102
      %v2104 = vpop.f32.mrf.mxu0
      %v2105 = vpop.f32.mrf.mxu0
      %v2106 = vadd.f32 0.0, %v2105
      %v2107 = vpop.f32.mrf.mxu0
      %2108 = vmatprep.mubr.bf16.mxu0 0
      %2109 = vmatmul.mubr.bf16.gmra.mxu0 %v1891
      %v2110 = vpop.f32.mrf.mxu0
      %v2111 = vadd.f32 0.0, %v2110
      %v2112 = vpop.f32.mrf.mxu0
      %v2113 = vpop.f32.mrf.mxu0
      %v2114 = vadd.f32 0.0, %v2113
      %v2115 = vpop.f32.mrf.mxu0
      %2116 = vdwg.mxu0
      %v2117 = vadd.f32 %v1727, %v1991
      %v2118 = vadd.f32 %v1728, %v1994
      %v2119 = vadd.f32 %v1729, %v1999
      %v2120 = vadd.f32 %v1730, %v2002
      %v2121 = vadd.f32 %v1731, %v2007
      %v2122 = vadd.f32 %v1732, %v2010
      %v2123 = vadd.f32 %v1733, %v2015
      %v2124 = vadd.f32 %v1734, %v2018
      %v2125 = vadd.f32 %v1735, %v2023
      %v2126 = vadd.f32 %v1736, %v2026
      %v2127 = vadd.f32 %v1737, %v2031
      %v2128 = vadd.f32 %v1738, %v2034
      %v2129 = vadd.f32 %v1739, %v2039
      %v2130 = vadd.f32 %v1740, %v2042
      %v2131 = vadd.f32 %v1741, %v2047
      %v2132 = vadd.f32 %v1742, %v2050
      %v2133 = vadd.f32 %v1743, %v2055
      %v2134 = vadd.f32 %v1744, %v2058
      %v2135 = vadd.f32 %v1745, %v2063
      %v2136 = vadd.f32 %v1746, %v2066
      %v2137 = vadd.f32 %v1747, %v2071
      %v2138 = vadd.f32 %v1748, %v2074
      %v2139 = vadd.f32 %v1749, %v2079
      %v2140 = vadd.f32 %v1750, %v2082
      %v2141 = vadd.f32 %v1751, %v2087
      %v2142 = vadd.f32 %v1752, %v2090
      %v2143 = vadd.f32 %v1753, %v2095
      %v2144 = vadd.f32 %v1754, %v2098
      %v2145 = vadd.f32 %v1755, %v2103
      %v2146 = vadd.f32 %v1756, %v2106
      %v2147 = vadd.f32 %v1757, %v2111
      %v2148 = vadd.f32 %v1758, %v2114
      %v2149 = vld [vmem:[%s1762] sm:$0xf]
      %v2150 = vld [vmem:[%s1762 + $0x4] sm:$0xf]
      %v2151 = vld [vmem:[%s1762 + $0x8] sm:$0x1]
      %v2152 = vld [vmem:[%s1762 + $0xc] sm:$0xf]
      %v2153 = vld [vmem:[%s1762 + $0x10] sm:$0xf]
      %v2154 = vld [vmem:[%s1762 + $0x14] sm:$0x1]
      %v2155 = vld [vmem:[%s1762 + $0x18] sm:$0xf]
      %v2156 = vld [vmem:[%s1762 + $0x1c] sm:$0xf]
      %v2157 = vld [vmem:[%s1762 + $0x20] sm:$0x1]
      %v2158 = vld [vmem:[%s1762 + $0x24] sm:$0xf]
      %v2159 = vld [vmem:[%s1762 + $0x28] sm:$0xf]
      %v2160 = vld [vmem:[%s1762 + $0x2c] sm:$0x1]
      %v2161 = vld [vmem:[%s1762 + $0x30] sm:$0xf]
      %v2162 = vld [vmem:[%s1762 + $0x34] sm:$0xf]
      %v2163 = vld [vmem:[%s1762 + $0x38] sm:$0x1]
      %v2164 = vld [vmem:[%s1762 + $0x3c] sm:$0xf]
      %v2165 = vld [vmem:[%s1762 + $0x40] sm:$0xf]
      %v2166 = vld [vmem:[%s1762 + $0x44] sm:$0x1]
      %v2167 = vld [vmem:[%s1762 + $0x48] sm:$0xf]
      %v2168 = vld [vmem:[%s1762 + $0x4c] sm:$0xf]
      %v2169 = vld [vmem:[%s1762 + $0x50] sm:$0x1]
      %v2170 = vld [vmem:[%s1762 + $0x54] sm:$0xf]
      %v2171 = vld [vmem:[%s1762 + $0x58] sm:$0xf]
      %v2172 = vld [vmem:[%s1762 + $0x5c] sm:$0x1]
      %v2173 = vld [vmem:[%s1762 + $0x60] sm:$0xf]
      %v2174 = vld [vmem:[%s1762 + $0x64] sm:$0xf]
      %v2175 = vld [vmem:[%s1762 + $0x68] sm:$0x1]
      %v2176 = vld [vmem:[%s1762 + $0x6c] sm:$0xf]
      %v2177 = vld [vmem:[%s1762 + $0x70] sm:$0xf]
      %v2178 = vld [vmem:[%s1762 + $0x74] sm:$0x1]
      %v2179 = vld [vmem:[%s1762 + $0x78] sm:$0xf]
      %v2180 = vld [vmem:[%s1762 + $0x7c] sm:$0xf]
      %v2181 = vld [vmem:[%s1762 + $0x80] sm:$0x1]
      %v2182 = vld [vmem:[%s1762 + $0x84] sm:$0xf]
      %v2183 = vld [vmem:[%s1762 + $0x88] sm:$0xf]
      %v2184 = vld [vmem:[%s1762 + $0x8c] sm:$0x1]
      %v2185 = vld [vmem:[%s1762 + $0x90] sm:$0xf]
      %v2186 = vld [vmem:[%s1762 + $0x94] sm:$0xf]
      %v2187 = vld [vmem:[%s1762 + $0x98] sm:$0x1]
      %v2188 = vld [vmem:[%s1762 + $0x9c] sm:$0xf]
      %v2189 = vld [vmem:[%s1762 + $0xa0] sm:$0xf]
      %v2190 = vld [vmem:[%s1762 + $0xa4] sm:$0x1]
      %v2191 = vld [vmem:[%s1762 + $0xa8] sm:$0xf]
      %v2192 = vld [vmem:[%s1762 + $0xac] sm:$0xf]
      %v2193 = vld [vmem:[%s1762 + $0xb0] sm:$0x1]
      %v2194 = vld [vmem:[%s1762 + $0xb4] sm:$0xf]
      %v2195 = vld [vmem:[%s1762 + $0xb8] sm:$0xf]
      %v2196 = vld [vmem:[%s1762 + $0xbc] sm:$0x1]
      %v2198 = vshrl.u32 %v2149, 16
      %v2200 = vrot.slane %v2198, 4
      %v2201 = vshll.u32 %v2149, 16
      %v2203 = vrot.slane %v2201, 5
      %v2204 = vor.u32 %v2200, %v2203
      %v2205 = vrot.slane %v2204, 4
      %v2207 = vshll.u32 %v2150, 16
      %v2209 = vrot.slane %v2207, 5
      %v2210 = vsel %vm294, %v2205, %v2209
      %v2211 = vshrl.u32 %v2150, 16
      %v2213 = vrot.slane %v2211, 4
      %v2214 = vor.u32 %v2213, %v2209
      %v2215 = vrot.slane %v2214, 4
      %v2217 = vshll.u32 %v2151, 16
      %v2219 = vrot.slane %v2217, 5
      %v2220 = vsel %vm294, %v2215, %v2219
      %v2222 = vshrl.u32 %v2152, 16
      %v2224 = vrot.slane %v2222, 4
      %v2225 = vshll.u32 %v2152, 16
      %v2227 = vrot.slane %v2225, 5
      %v2228 = vor.u32 %v2224, %v2227
      %v2229 = vrot.slane %v2228, 4
      %v2231 = vshll.u32 %v2153, 16
      %v2233 = vrot.slane %v2231, 5
      %v2234 = vsel %vm294, %v2229, %v2233
      %v2235 = vshrl.u32 %v2153, 16
      %v2237 = vrot.slane %v2235, 4
      %v2238 = vor.u32 %v2237, %v2233
      %v2239 = vrot.slane %v2238, 4
      %v2241 = vshll.u32 %v2154, 16
      %v2243 = vrot.slane %v2241, 5
      %v2244 = vsel %vm294, %v2239, %v2243
      %v2246 = vshrl.u32 %v2155, 16
      %v2248 = vrot.slane %v2246, 4
      %v2249 = vshll.u32 %v2155, 16
      %v2251 = vrot.slane %v2249, 5
      %v2252 = vor.u32 %v2248, %v2251
      %v2253 = vrot.slane %v2252, 4
      %v2255 = vshll.u32 %v2156, 16
      %v2257 = vrot.slane %v2255, 5
      %v2258 = vsel %vm294, %v2253, %v2257
      %v2259 = vshrl.u32 %v2156, 16
      %v2261 = vrot.slane %v2259, 4
      %v2262 = vor.u32 %v2261, %v2257
      %v2263 = vrot.slane %v2262, 4
      %v2265 = vshll.u32 %v2157, 16
      %v2267 = vrot.slane %v2265, 5
      %v2268 = vsel %vm294, %v2263, %v2267
      %v2270 = vshrl.u32 %v2158, 16
      %v2272 = vrot.slane %v2270, 4
      %v2273 = vshll.u32 %v2158, 16
      %v2275 = vrot.slane %v2273, 5
      %v2276 = vor.u32 %v2272, %v2275
      %v2277 = vrot.slane %v2276, 4
      %v2279 = vshll.u32 %v2159, 16
      %v2281 = vrot.slane %v2279, 5
      %v2282 = vsel %vm294, %v2277, %v2281
      %v2283 = vshrl.u32 %v2159, 16
      %v2285 = vrot.slane %v2283, 4
      %v2286 = vor.u32 %v2285, %v2281
      %v2287 = vrot.slane %v2286, 4
      %v2289 = vshll.u32 %v2160, 16
      %v2291 = vrot.slane %v2289, 5
      %v2292 = vsel %vm294, %v2287, %v2291
      %v2294 = vshrl.u32 %v2161, 16
      %v2296 = vrot.slane %v2294, 4
      %v2297 = vshll.u32 %v2161, 16
      %v2299 = vrot.slane %v2297, 5
      %v2300 = vor.u32 %v2296, %v2299
      %v2301 = vrot.slane %v2300, 4
      %v2303 = vshll.u32 %v2162, 16
      %v2305 = vrot.slane %v2303, 5
      %v2306 = vsel %vm294, %v2301, %v2305
      %v2307 = vshrl.u32 %v2162, 16
      %v2309 = vrot.slane %v2307, 4
      %v2310 = vor.u32 %v2309, %v2305
      %v2311 = vrot.slane %v2310, 4
      %v2313 = vshll.u32 %v2163, 16
      %v2315 = vrot.slane %v2313, 5
      %v2316 = vsel %vm294, %v2311, %v2315
      %v2318 = vshrl.u32 %v2164, 16
      %v2320 = vrot.slane %v2318, 4
      %v2321 = vshll.u32 %v2164, 16
      %v2323 = vrot.slane %v2321, 5
      %v2324 = vor.u32 %v2320, %v2323
      %v2325 = vrot.slane %v2324, 4
      %v2327 = vshll.u32 %v2165, 16
      %v2329 = vrot.slane %v2327, 5
      %v2330 = vsel %vm294, %v2325, %v2329
      %v2331 = vshrl.u32 %v2165, 16
      %v2333 = vrot.slane %v2331, 4
      %v2334 = vor.u32 %v2333, %v2329
      %v2335 = vrot.slane %v2334, 4
      %v2337 = vshll.u32 %v2166, 16
      %v2339 = vrot.slane %v2337, 5
      %v2340 = vsel %vm294, %v2335, %v2339
      %v2342 = vshrl.u32 %v2167, 16
      %v2344 = vrot.slane %v2342, 4
      %v2345 = vshll.u32 %v2167, 16
      %v2347 = vrot.slane %v2345, 5
      %v2348 = vor.u32 %v2344, %v2347
      %v2349 = vrot.slane %v2348, 4
      %v2351 = vshll.u32 %v2168, 16
      %v2353 = vrot.slane %v2351, 5
      %v2354 = vsel %vm294, %v2349, %v2353
      %v2355 = vshrl.u32 %v2168, 16
      %v2357 = vrot.slane %v2355, 4
      %v2358 = vor.u32 %v2357, %v2353
      %v2359 = vrot.slane %v2358, 4
      %v2361 = vshll.u32 %v2169, 16
      %v2363 = vrot.slane %v2361, 5
      %v2364 = vsel %vm294, %v2359, %v2363
      %v2366 = vshrl.u32 %v2170, 16
      %v2368 = vrot.slane %v2366, 4
      %v2369 = vshll.u32 %v2170, 16
      %v2371 = vrot.slane %v2369, 5
      %v2372 = vor.u32 %v2368, %v2371
      %v2373 = vrot.slane %v2372, 4
      %v2375 = vshll.u32 %v2171, 16
      %v2377 = vrot.slane %v2375, 5
      %v2378 = vsel %vm294, %v2373, %v2377
      %v2379 = vshrl.u32 %v2171, 16
      %v2381 = vrot.slane %v2379, 4
      %v2382 = vor.u32 %v2381, %v2377
      %v2383 = vrot.slane %v2382, 4
      %v2385 = vshll.u32 %v2172, 16
      %v2387 = vrot.slane %v2385, 5
      %v2388 = vsel %vm294, %v2383, %v2387
      %v2390 = vshrl.u32 %v2173, 16
      %v2392 = vrot.slane %v2390, 4
      %v2393 = vshll.u32 %v2173, 16
      %v2395 = vrot.slane %v2393, 5
      %v2396 = vor.u32 %v2392, %v2395
      %v2397 = vrot.slane %v2396, 4
      %v2399 = vshll.u32 %v2174, 16
      %v2401 = vrot.slane %v2399, 5
      %v2402 = vsel %vm294, %v2397, %v2401
      %v2403 = vshrl.u32 %v2174, 16
      %v2405 = vrot.slane %v2403, 4
      %v2406 = vor.u32 %v2405, %v2401
      %v2407 = vrot.slane %v2406, 4
      %v2409 = vshll.u32 %v2175, 16
      %v2411 = vrot.slane %v2409, 5
      %v2412 = vsel %vm294, %v2407, %v2411
      %v2414 = vshrl.u32 %v2176, 16
      %v2416 = vrot.slane %v2414, 4
      %v2417 = vshll.u32 %v2176, 16
      %v2419 = vrot.slane %v2417, 5
      %v2420 = vor.u32 %v2416, %v2419
      %v2421 = vrot.slane %v2420, 4
      %v2423 = vshll.u32 %v2177, 16
      %v2425 = vrot.slane %v2423, 5
      %v2426 = vsel %vm294, %v2421, %v2425
      %v2427 = vshrl.u32 %v2177, 16
      %v2429 = vrot.slane %v2427, 4
      %v2430 = vor.u32 %v2429, %v2425
      %v2431 = vrot.slane %v2430, 4
      %v2433 = vshll.u32 %v2178, 16
      %v2435 = vrot.slane %v2433, 5
      %v2436 = vsel %vm294, %v2431, %v2435
      %v2438 = vshrl.u32 %v2179, 16
      %v2440 = vrot.slane %v2438, 4
      %v2441 = vshll.u32 %v2179, 16
      %v2443 = vrot.slane %v2441, 5
      %v2444 = vor.u32 %v2440, %v2443
      %v2445 = vrot.slane %v2444, 4
      %v2447 = vshll.u32 %v2180, 16
      %v2449 = vrot.slane %v2447, 5
      %v2450 = vsel %vm294, %v2445, %v2449
      %v2451 = vshrl.u32 %v2180, 16
      %v2453 = vrot.slane %v2451, 4
      %v2454 = vor.u32 %v2453, %v2449
      %v2455 = vrot.slane %v2454, 4
      %v2457 = vshll.u32 %v2181, 16
      %v2459 = vrot.slane %v2457, 5
      %v2460 = vsel %vm294, %v2455, %v2459
      %v2462 = vshrl.u32 %v2182, 16
      %v2464 = vrot.slane %v2462, 4
      %v2465 = vshll.u32 %v2182, 16
      %v2467 = vrot.slane %v2465, 5
      %v2468 = vor.u32 %v2464, %v2467
      %v2469 = vrot.slane %v2468, 4
      %v2471 = vshll.u32 %v2183, 16
      %v2473 = vrot.slane %v2471, 5
      %v2474 = vsel %vm294, %v2469, %v2473
      %v2475 = vshrl.u32 %v2183, 16
      %v2477 = vrot.slane %v2475, 4
      %v2478 = vor.u32 %v2477, %v2473
      %v2479 = vrot.slane %v2478, 4
      %v2481 = vshll.u32 %v2184, 16
      %v2483 = vrot.slane %v2481, 5
      %v2484 = vsel %vm294, %v2479, %v2483
      %v2486 = vshrl.u32 %v2185, 16
      %v2488 = vrot.slane %v2486, 4
      %v2489 = vshll.u32 %v2185, 16
      %v2491 = vrot.slane %v2489, 5
      %v2492 = vor.u32 %v2488, %v2491
      %v2493 = vrot.slane %v2492, 4
      %v2495 = vshll.u32 %v2186, 16
      %v2497 = vrot.slane %v2495, 5
      %v2498 = vsel %vm294, %v2493, %v2497
      %v2499 = vshrl.u32 %v2186, 16
      %v2501 = vrot.slane %v2499, 4
      %v2502 = vor.u32 %v2501, %v2497
      %v2503 = vrot.slane %v2502, 4
      %v2505 = vshll.u32 %v2187, 16
      %v2507 = vrot.slane %v2505, 5
      %v2508 = vsel %vm294, %v2503, %v2507
      %v2510 = vshrl.u32 %v2188, 16
      %v2512 = vrot.slane %v2510, 4
      %v2513 = vshll.u32 %v2188, 16
      %v2515 = vrot.slane %v2513, 5
      %v2516 = vor.u32 %v2512, %v2515
      %v2517 = vrot.slane %v2516, 4
      %v2519 = vshll.u32 %v2189, 16
      %v2521 = vrot.slane %v2519, 5
      %v2522 = vsel %vm294, %v2517, %v2521
      %v2523 = vshrl.u32 %v2189, 16
      %v2525 = vrot.slane %v2523, 4
      %v2526 = vor.u32 %v2525, %v2521
      %v2527 = vrot.slane %v2526, 4
      %v2529 = vshll.u32 %v2190, 16
      %v2531 = vrot.slane %v2529, 5
      %v2532 = vsel %vm294, %v2527, %v2531
      %v2534 = vshrl.u32 %v2191, 16
      %v2536 = vrot.slane %v2534, 4
      %v2537 = vshll.u32 %v2191, 16
      %v2539 = vrot.slane %v2537, 5
      %v2540 = vor.u32 %v2536, %v2539
      %v2541 = vrot.slane %v2540, 4
      %v2543 = vshll.u32 %v2192, 16
      %v2545 = vrot.slane %v2543, 5
      %v2546 = vsel %vm294, %v2541, %v2545
      %v2547 = vshrl.u32 %v2192, 16
      %v2549 = vrot.slane %v2547, 4
      %v2550 = vor.u32 %v2549, %v2545
      %v2551 = vrot.slane %v2550, 4
      %v2553 = vshll.u32 %v2193, 16
      %v2555 = vrot.slane %v2553, 5
      %v2556 = vsel %vm294, %v2551, %v2555
      %v2558 = vshrl.u32 %v2194, 16
      %v2560 = vrot.slane %v2558, 4
      %v2561 = vshll.u32 %v2194, 16
      %v2563 = vrot.slane %v2561, 5
      %v2564 = vor.u32 %v2560, %v2563
      %v2565 = vrot.slane %v2564, 4
      %v2567 = vshll.u32 %v2195, 16
      %v2569 = vrot.slane %v2567, 5
      %v2570 = vsel %vm294, %v2565, %v2569
      %v2571 = vshrl.u32 %v2195, 16
      %v2573 = vrot.slane %v2571, 4
      %v2574 = vor.u32 %v2573, %v2569
      %v2575 = vrot.slane %v2574, 4
      %v2577 = vshll.u32 %v2196, 16
      %v2579 = vrot.slane %v2577, 5
      %v2580 = vsel %vm294, %v2575, %v2579
      %s2581 = scalar_lea.vmem %s1, 256
      %v2582 = vld [vmem:[%s2581] sm:$0xf]
      %v2583 = vld [vmem:[%s2581 + $0x4] sm:$0xf]
      %v2584 = vld [vmem:[%s2581 + $0x8] sm:$0xf]
      %v2585 = vld [vmem:[%s2581 + $0xc] sm:$0xf]
      %v2586 = vld [vmem:[%s2581 + $0x10] sm:$0xf]
      %v2587 = vld [vmem:[%s2581 + $0x14] sm:$0xf]
      %v2588 = vld [vmem:[%s2581 + $0x18] sm:$0xf]
      %v2589 = vld [vmem:[%s2581 + $0x1c] sm:$0xf]
      %v2590 = vld [vmem:[%s2581 + $0x20] sm:$0xf]
      %v2591 = vld [vmem:[%s2581 + $0x24] sm:$0xf]
      %v2592 = vld [vmem:[%s2581 + $0x28] sm:$0xf]
      %v2593 = vld [vmem:[%s2581 + $0x2c] sm:$0xf]
      %v2594 = vld [vmem:[%s2581 + $0x30] sm:$0xf]
      %v2595 = vld [vmem:[%s2581 + $0x34] sm:$0xf]
      %v2596 = vld [vmem:[%s2581 + $0x38] sm:$0xf]
      %v2597 = vld [vmem:[%s2581 + $0x3c] sm:$0xf]
      %v2598 = vunpack.c.l.b16 %v2210
      %v2599 = vunpack.c.l.b16 %v2220
      %v2600 = vunpack.c.l.b16 %v2234
      %v2601 = vunpack.c.l.b16 %v2244
      %v2602 = vunpack.c.l.b16 %v2258
      %v2603 = vunpack.c.l.b16 %v2268
      %v2604 = vunpack.c.l.b16 %v2282
      %v2605 = vunpack.c.l.b16 %v2292
      %v2606 = vunpack.c.l.b16 %v2306
      %v2607 = vunpack.c.l.b16 %v2316
      %v2608 = vunpack.c.l.b16 %v2330
      %v2609 = vunpack.c.l.b16 %v2340
      %v2610 = vunpack.c.l.b16 %v2354
      %v2611 = vunpack.c.l.b16 %v2364
      %v2612 = vunpack.c.l.b16 %v2378
      %v2613 = vunpack.c.l.b16 %v2388
      %v2614 = vunpack.c.l.b16 %v2402
      %v2615 = vunpack.c.l.b16 %v2412
      %v2616 = vunpack.c.l.b16 %v2426
      %v2617 = vunpack.c.l.b16 %v2436
      %v2618 = vunpack.c.l.b16 %v2450
      %v2619 = vunpack.c.l.b16 %v2460
      %v2620 = vunpack.c.l.b16 %v2474
      %v2621 = vunpack.c.l.b16 %v2484
      %v2622 = vunpack.c.l.b16 %v2498
      %v2623 = vunpack.c.l.b16 %v2508
      %v2624 = vunpack.c.l.b16 %v2522
      %v2625 = vunpack.c.l.b16 %v2532
      %v2626 = vunpack.c.l.b16 %v2546
      %v2627 = vunpack.c.l.b16 %v2556
      %v2628 = vunpack.c.l.b16 %v2570
      %v2629 = vunpack.c.l.b16 %v2580
      %v2630 = vpack.c.b16 %v2599, %v2598
      %v2631 = vpack.c.b16 %v2601, %v2600
      %v2632 = vpack.c.b16 %v2603, %v2602
      %v2633 = vpack.c.b16 %v2605, %v2604
      %v2634 = vpack.c.b16 %v2607, %v2606
      %v2635 = vpack.c.b16 %v2609, %v2608
      %v2636 = vpack.c.b16 %v2611, %v2610
      %v2637 = vpack.c.b16 %v2613, %v2612
      %v2638 = vpack.c.b16 %v2615, %v2614
      %v2639 = vpack.c.b16 %v2617, %v2616
      %v2640 = vpack.c.b16 %v2619, %v2618
      %v2641 = vpack.c.b16 %v2621, %v2620
      %v2642 = vpack.c.b16 %v2623, %v2622
      %v2643 = vpack.c.b16 %v2625, %v2624
      %v2644 = vpack.c.b16 %v2627, %v2626
      %v2645 = vpack.c.b16 %v2629, %v2628
      %v2678 = vunpack.c.l.b16 %v2582
      %v2679 = vunpack.c.l.b16 %v2583
      %v2680 = vunpack.c.l.b16 %v2584
      %v2681 = vunpack.c.l.b16 %v2585
      %v2682 = vunpack.c.l.b16 %v2586
      %v2683 = vunpack.c.l.b16 %v2587
      %v2684 = vunpack.c.l.b16 %v2588
      %v2685 = vunpack.c.l.b16 %v2589
      %v2686 = vunpack.c.l.b16 %v2590
      %v2687 = vunpack.c.l.b16 %v2591
      %v2688 = vunpack.c.l.b16 %v2592
      %v2689 = vunpack.c.l.b16 %v2593
      %v2690 = vunpack.c.l.b16 %v2594
      %v2691 = vunpack.c.l.b16 %v2595
      %v2692 = vunpack.c.l.b16 %v2596
      %v2693 = vunpack.c.l.b16 %v2597
      %v2694 = vpack.c.b16 %v2679, %v2678
      %v2695 = vpack.c.b16 %v2681, %v2680
      %v2696 = vpack.c.b16 %v2683, %v2682
      %v2697 = vpack.c.b16 %v2685, %v2684
      %v2698 = vpack.c.b16 %v2687, %v2686
      %v2699 = vpack.c.b16 %v2689, %v2688
      %v2700 = vpack.c.b16 %v2691, %v2690
      %v2701 = vpack.c.b16 %v2693, %v2692
      %2710 = vmatprep.subr.bf16.mxu0 0
      %2711 = vmatpush1.bf16.msra.mxu0 %v2701
      %2712 = vmatprep.subr.bf16.mxu0 0
      %2713 = vmatpush1.bf16.msra.mxu0 %v2700
      %2714 = vmatprep.subr.bf16.mxu0 0
      %2715 = vmatpush1.bf16.msra.mxu0 %v2699
      %2716 = vmatprep.subr.bf16.mxu0 0
      %2717 = vmatpush1.bf16.msra.mxu0 %v2698
      %2718 = vmatprep.subr.bf16.mxu0 0
      %2719 = vmatpush1.bf16.msra.mxu0 %v2697
      %2720 = vmatprep.subr.bf16.mxu0 0
      %2721 = vmatpush1.bf16.msra.mxu0 %v2696
      %2722 = vmatprep.subr.bf16.mxu0 0
      %2723 = vmatpush1.bf16.msra.mxu0 %v2695
      %2724 = vmatprep.subr.bf16.mxu0 0
      %2725 = vmatpush1.bf16.msra.mxu0 %v2694
      %2726 = vmatprep.subr.bf16.mxu0 0
      %2727 = vmatpush2.bf16.msra.mxu0 0
      %2728 = vmatprep.subr.bf16.mxu0 0
      %2729 = vmatpush2.bf16.msra.mxu0 0
      %2730 = vmatprep.subr.bf16.mxu0 0
      %2731 = vmatpush2.bf16.msra.mxu0 0
      %2732 = vmatprep.subr.bf16.mxu0 0
      %2733 = vmatpush2.bf16.msra.mxu0 0
      %2734 = vmatprep.subr.bf16.mxu0 0
      %2735 = vmatpush2.bf16.msra.mxu0 0
      %2736 = vmatprep.subr.bf16.mxu0 0
      %2737 = vmatpush2.bf16.msra.mxu0 0
      %2738 = vmatprep.subr.bf16.mxu0 0
      %2739 = vmatpush2.bf16.msra.mxu0 0
      %2740 = vmatprep.subr.bf16.mxu0 0
      %2741 = vmatpush2.bf16.msra.mxu0 0
      %2742 = vmatprep.mubr.bf16.mxu0 0
      %2743 = vmatmul.mubr.bf16.gmra.mxu0 %v2630
      %v2744 = vpop.f32.mrf.mxu0
      %v2745 = vadd.f32 0.0, %v2744
      %v2746 = vpop.f32.mrf.mxu0
      %v2747 = vpop.f32.mrf.mxu0
      %v2748 = vadd.f32 0.0, %v2747
      %v2749 = vpop.f32.mrf.mxu0
      %2750 = vmatprep.mubr.bf16.mxu0 0
      %2751 = vmatmul.mubr.bf16.gmra.mxu0 %v2631
      %v2752 = vpop.f32.mrf.mxu0
      %v2753 = vadd.f32 0.0, %v2752
      %v2754 = vpop.f32.mrf.mxu0
      %v2755 = vpop.f32.mrf.mxu0
      %v2756 = vadd.f32 0.0, %v2755
      %v2757 = vpop.f32.mrf.mxu0
      %2758 = vmatprep.mubr.bf16.mxu0 0
      %2759 = vmatmul.mubr.bf16.gmra.mxu0 %v2632
      %v2760 = vpop.f32.mrf.mxu0
      %v2761 = vadd.f32 0.0, %v2760
      %v2762 = vpop.f32.mrf.mxu0
      %v2763 = vpop.f32.mrf.mxu0
      %v2764 = vadd.f32 0.0, %v2763
      %v2765 = vpop.f32.mrf.mxu0
      %2766 = vmatprep.mubr.bf16.mxu0 0
      %2767 = vmatmul.mubr.bf16.gmra.mxu0 %v2633
      %v2768 = vpop.f32.mrf.mxu0
      %v2769 = vadd.f32 0.0, %v2768
      %v2770 = vpop.f32.mrf.mxu0
      %v2771 = vpop.f32.mrf.mxu0
      %v2772 = vadd.f32 0.0, %v2771
      %v2773 = vpop.f32.mrf.mxu0
      %2774 = vmatprep.mubr.bf16.mxu0 0
      %2775 = vmatmul.mubr.bf16.gmra.mxu0 %v2634
      %v2776 = vpop.f32.mrf.mxu0
      %v2777 = vadd.f32 0.0, %v2776
      %v2778 = vpop.f32.mrf.mxu0
      %v2779 = vpop.f32.mrf.mxu0
      %v2780 = vadd.f32 0.0, %v2779
      %v2781 = vpop.f32.mrf.mxu0
      %2782 = vmatprep.mubr.bf16.mxu0 0
      %2783 = vmatmul.mubr.bf16.gmra.mxu0 %v2635
      %v2784 = vpop.f32.mrf.mxu0
      %v2785 = vadd.f32 0.0, %v2784
      %v2786 = vpop.f32.mrf.mxu0
      %v2787 = vpop.f32.mrf.mxu0
      %v2788 = vadd.f32 0.0, %v2787
      %v2789 = vpop.f32.mrf.mxu0
      %2790 = vmatprep.mubr.bf16.mxu0 0
      %2791 = vmatmul.mubr.bf16.gmra.mxu0 %v2636
      %v2792 = vpop.f32.mrf.mxu0
      %v2793 = vadd.f32 0.0, %v2792
      %v2794 = vpop.f32.mrf.mxu0
      %v2795 = vpop.f32.mrf.mxu0
      %v2796 = vadd.f32 0.0, %v2795
      %v2797 = vpop.f32.mrf.mxu0
      %2798 = vmatprep.mubr.bf16.mxu0 0
      %2799 = vmatmul.mubr.bf16.gmra.mxu0 %v2637
      %v2800 = vpop.f32.mrf.mxu0
      %v2801 = vadd.f32 0.0, %v2800
      %v2802 = vpop.f32.mrf.mxu0
      %v2803 = vpop.f32.mrf.mxu0
      %v2804 = vadd.f32 0.0, %v2803
      %v2805 = vpop.f32.mrf.mxu0
      %2806 = vmatprep.mubr.bf16.mxu0 0
      %2807 = vmatmul.mubr.bf16.gmra.mxu0 %v2638
      %v2808 = vpop.f32.mrf.mxu0
      %v2809 = vadd.f32 0.0, %v2808
      %v2810 = vpop.f32.mrf.mxu0
      %v2811 = vpop.f32.mrf.mxu0
      %v2812 = vadd.f32 0.0, %v2811
      %v2813 = vpop.f32.mrf.mxu0
      %2814 = vmatprep.mubr.bf16.mxu0 0
      %2815 = vmatmul.mubr.bf16.gmra.mxu0 %v2639
      %v2816 = vpop.f32.mrf.mxu0
      %v2817 = vadd.f32 0.0, %v2816
      %v2818 = vpop.f32.mrf.mxu0
      %v2819 = vpop.f32.mrf.mxu0
      %v2820 = vadd.f32 0.0, %v2819
      %v2821 = vpop.f32.mrf.mxu0
      %2822 = vmatprep.mubr.bf16.mxu0 0
      %2823 = vmatmul.mubr.bf16.gmra.mxu0 %v2640
      %v2824 = vpop.f32.mrf.mxu0
      %v2825 = vadd.f32 0.0, %v2824
      %v2826 = vpop.f32.mrf.mxu0
      %v2827 = vpop.f32.mrf.mxu0
      %v2828 = vadd.f32 0.0, %v2827
      %v2829 = vpop.f32.mrf.mxu0
      %2830 = vmatprep.mubr.bf16.mxu0 0
      %2831 = vmatmul.mubr.bf16.gmra.mxu0 %v2641
      %v2832 = vpop.f32.mrf.mxu0
      %v2833 = vadd.f32 0.0, %v2832
      %v2834 = vpop.f32.mrf.mxu0
      %v2835 = vpop.f32.mrf.mxu0
      %v2836 = vadd.f32 0.0, %v2835
      %v2837 = vpop.f32.mrf.mxu0
      %2838 = vmatprep.mubr.bf16.mxu0 0
      %2839 = vmatmul.mubr.bf16.gmra.mxu0 %v2642
      %v2840 = vpop.f32.mrf.mxu0
      %v2841 = vadd.f32 0.0, %v2840
      %v2842 = vpop.f32.mrf.mxu0
      %v2843 = vpop.f32.mrf.mxu0
      %v2844 = vadd.f32 0.0, %v2843
      %v2845 = vpop.f32.mrf.mxu0
      %2846 = vmatprep.mubr.bf16.mxu0 0
      %2847 = vmatmul.mubr.bf16.gmra.mxu0 %v2643
      %v2848 = vpop.f32.mrf.mxu0
      %v2849 = vadd.f32 0.0, %v2848
      %v2850 = vpop.f32.mrf.mxu0
      %v2851 = vpop.f32.mrf.mxu0
      %v2852 = vadd.f32 0.0, %v2851
      %v2853 = vpop.f32.mrf.mxu0
      %2854 = vmatprep.mubr.bf16.mxu0 0
      %2855 = vmatmul.mubr.bf16.gmra.mxu0 %v2644
      %v2856 = vpop.f32.mrf.mxu0
      %v2857 = vadd.f32 0.0, %v2856
      %v2858 = vpop.f32.mrf.mxu0
      %v2859 = vpop.f32.mrf.mxu0
      %v2860 = vadd.f32 0.0, %v2859
      %v2861 = vpop.f32.mrf.mxu0
      %2862 = vmatprep.mubr.bf16.mxu0 0
      %2863 = vmatmul.mubr.bf16.gmra.mxu0 %v2645
      %v2864 = vpop.f32.mrf.mxu0
      %v2865 = vadd.f32 0.0, %v2864
      %v2866 = vpop.f32.mrf.mxu0
      %v2867 = vpop.f32.mrf.mxu0
      %v2868 = vadd.f32 0.0, %v2867
      %v2869 = vpop.f32.mrf.mxu0
      %2870 = vdwg.mxu0
      %v2871 = vadd.f32 %v2117, %v2745
      %v2872 = vadd.f32 %v2118, %v2748
      %v2873 = vadd.f32 %v2119, %v2753
      %v2874 = vadd.f32 %v2120, %v2756
      %v2875 = vadd.f32 %v2121, %v2761
      %v2876 = vadd.f32 %v2122, %v2764
      %v2877 = vadd.f32 %v2123, %v2769
      %v2878 = vadd.f32 %v2124, %v2772
      %v2879 = vadd.f32 %v2125, %v2777
      %v2880 = vadd.f32 %v2126, %v2780
      %v2881 = vadd.f32 %v2127, %v2785
      %v2882 = vadd.f32 %v2128, %v2788
      %v2883 = vadd.f32 %v2129, %v2793
      %v2884 = vadd.f32 %v2130, %v2796
      %v2885 = vadd.f32 %v2131, %v2801
      %v2886 = vadd.f32 %v2132, %v2804
      %v2887 = vadd.f32 %v2133, %v2809
      %v2888 = vadd.f32 %v2134, %v2812
      %v2889 = vadd.f32 %v2135, %v2817
      %v2890 = vadd.f32 %v2136, %v2820
      %v2891 = vadd.f32 %v2137, %v2825
      %v2892 = vadd.f32 %v2138, %v2828
      %v2893 = vadd.f32 %v2139, %v2833
      %v2894 = vadd.f32 %v2140, %v2836
      %v2895 = vadd.f32 %v2141, %v2841
      %v2896 = vadd.f32 %v2142, %v2844
      %v2897 = vadd.f32 %v2143, %v2849
      %v2898 = vadd.f32 %v2144, %v2852
      %v2899 = vadd.f32 %v2145, %v2857
      %v2900 = vadd.f32 %v2146, %v2860
      %v2901 = vadd.f32 %v2147, %v2865
      %v2902 = vadd.f32 %v2148, %v2868
      %v2903 = vld [vmem:[%s1762] sm:$0xe]
      %v2904 = vld [vmem:[%s1762 + $0xc] sm:$0xe]
      %v2905 = vld [vmem:[%s1762 + $0x18] sm:$0xe]
      %v2906 = vld [vmem:[%s1762 + $0x24] sm:$0xe]
      %v2907 = vld [vmem:[%s1762 + $0x30] sm:$0xe]
      %v2908 = vld [vmem:[%s1762 + $0x3c] sm:$0xe]
      %v2909 = vld [vmem:[%s1762 + $0x48] sm:$0xe]
      %v2910 = vld [vmem:[%s1762 + $0x54] sm:$0xe]
      %v2911 = vld [vmem:[%s1762 + $0x60] sm:$0xe]
      %v2912 = vld [vmem:[%s1762 + $0x6c] sm:$0xe]
      %v2913 = vld [vmem:[%s1762 + $0x78] sm:$0xe]
      %v2914 = vld [vmem:[%s1762 + $0x84] sm:$0xe]
      %v2915 = vld [vmem:[%s1762 + $0x90] sm:$0xe]
      %v2916 = vld [vmem:[%s1762 + $0x9c] sm:$0xe]
      %v2917 = vld [vmem:[%s1762 + $0xa8] sm:$0xe]
      %v2918 = vld [vmem:[%s1762 + $0xb4] sm:$0xe]
      %v2967 = vrot.slane %v2903, 5
      %v2968 = vrot.slane %v2967, 4
      %v2969 = vrot.slane %v2150, 5
      %v2970 = vsel %vm1324, %v2968, %v2969
      %v2971 = vrot.slane %v2969, 4
      %v2972 = vrot.slane %v2151, 5
      %v2973 = vsel %vm1324, %v2971, %v2972
      %v2974 = vrot.slane %v2904, 5
      %v2975 = vrot.slane %v2974, 4
      %v2976 = vrot.slane %v2153, 5
      %v2977 = vsel %vm1324, %v2975, %v2976
      %v2978 = vrot.slane %v2976, 4
      %v2979 = vrot.slane %v2154, 5
      %v2980 = vsel %vm1324, %v2978, %v2979
      %v2981 = vrot.slane %v2905, 5
      %v2982 = vrot.slane %v2981, 4
      %v2983 = vrot.slane %v2156, 5
      %v2984 = vsel %vm1324, %v2982, %v2983
      %v2985 = vrot.slane %v2983, 4
      %v2986 = vrot.slane %v2157, 5
      %v2987 = vsel %vm1324, %v2985, %v2986
      %v2988 = vrot.slane %v2906, 5
      %v2989 = vrot.slane %v2988, 4
      %v2990 = vrot.slane %v2159, 5
      %v2991 = vsel %vm1324, %v2989, %v2990
      %v2992 = vrot.slane %v2990, 4
      %v2993 = vrot.slane %v2160, 5
      %v2994 = vsel %vm1324, %v2992, %v2993
      %v2995 = vrot.slane %v2907, 5
      %v2996 = vrot.slane %v2995, 4
      %v2997 = vrot.slane %v2162, 5
      %v2998 = vsel %vm1324, %v2996, %v2997
      %v2999 = vrot.slane %v2997, 4
      %v3000 = vrot.slane %v2163, 5
      %v3001 = vsel %vm1324, %v2999, %v3000
      %v3002 = vrot.slane %v2908, 5
      %v3003 = vrot.slane %v3002, 4
      %v3004 = vrot.slane %v2165, 5
      %v3005 = vsel %vm1324, %v3003, %v3004
      %v3006 = vrot.slane %v3004, 4
      %v3007 = vrot.slane %v2166, 5
      %v3008 = vsel %vm1324, %v3006, %v3007
      %v3009 = vrot.slane %v2909, 5
      %v3010 = vrot.slane %v3009, 4
      %v3011 = vrot.slane %v2168, 5
      %v3012 = vsel %vm1324, %v3010, %v3011
      %v3013 = vrot.slane %v3011, 4
      %v3014 = vrot.slane %v2169, 5
      %v3015 = vsel %vm1324, %v3013, %v3014
      %v3016 = vrot.slane %v2910, 5
      %v3017 = vrot.slane %v3016, 4
      %v3018 = vrot.slane %v2171, 5
      %v3019 = vsel %vm1324, %v3017, %v3018
      %v3020 = vrot.slane %v3018, 4
      %v3021 = vrot.slane %v2172, 5
      %v3022 = vsel %vm1324, %v3020, %v3021
      %v3023 = vrot.slane %v2911, 5
      %v3024 = vrot.slane %v3023, 4
      %v3025 = vrot.slane %v2174, 5
      %v3026 = vsel %vm1324, %v3024, %v3025
      %v3027 = vrot.slane %v3025, 4
      %v3028 = vrot.slane %v2175, 5
      %v3029 = vsel %vm1324, %v3027, %v3028
      %v3030 = vrot.slane %v2912, 5
      %v3031 = vrot.slane %v3030, 4
      %v3032 = vrot.slane %v2177, 5
      %v3033 = vsel %vm1324, %v3031, %v3032
      %v3034 = vrot.slane %v3032, 4
      %v3035 = vrot.slane %v2178, 5
      %v3036 = vsel %vm1324, %v3034, %v3035
      %v3037 = vrot.slane %v2913, 5
      %v3038 = vrot.slane %v3037, 4
      %v3039 = vrot.slane %v2180, 5
      %v3040 = vsel %vm1324, %v3038, %v3039
      %v3041 = vrot.slane %v3039, 4
      %v3042 = vrot.slane %v2181, 5
      %v3043 = vsel %vm1324, %v3041, %v3042
      %v3044 = vrot.slane %v2914, 5
      %v3045 = vrot.slane %v3044, 4
      %v3046 = vrot.slane %v2183, 5
      %v3047 = vsel %vm1324, %v3045, %v3046
      %v3048 = vrot.slane %v3046, 4
      %v3049 = vrot.slane %v2184, 5
      %v3050 = vsel %vm1324, %v3048, %v3049
      %v3051 = vrot.slane %v2915, 5
      %v3052 = vrot.slane %v3051, 4
      %v3053 = vrot.slane %v2186, 5
      %v3054 = vsel %vm1324, %v3052, %v3053
      %v3055 = vrot.slane %v3053, 4
      %v3056 = vrot.slane %v2187, 5
      %v3057 = vsel %vm1324, %v3055, %v3056
      %v3058 = vrot.slane %v2916, 5
      %v3059 = vrot.slane %v3058, 4
      %v3060 = vrot.slane %v2189, 5
      %v3061 = vsel %vm1324, %v3059, %v3060
      %v3062 = vrot.slane %v3060, 4
      %v3063 = vrot.slane %v2190, 5
      %v3064 = vsel %vm1324, %v3062, %v3063
      %v3065 = vrot.slane %v2917, 5
      %v3066 = vrot.slane %v3065, 4
      %v3067 = vrot.slane %v2192, 5
      %v3068 = vsel %vm1324, %v3066, %v3067
      %v3069 = vrot.slane %v3067, 4
      %v3070 = vrot.slane %v2193, 5
      %v3071 = vsel %vm1324, %v3069, %v3070
      %v3072 = vrot.slane %v2918, 5
      %v3073 = vrot.slane %v3072, 4
      %v3074 = vrot.slane %v2195, 5
      %v3075 = vsel %vm1324, %v3073, %v3074
      %v3076 = vrot.slane %v3074, 4
      %v3077 = vrot.slane %v2196, 5
      %v3078 = vsel %vm1324, %v3076, %v3077
      %s3079 = scalar_lea.vmem %s1, 320
      %v3080 = vld [vmem:[%s3079] sm:$0xf]
      %v3081 = vld [vmem:[%s3079 + $0x4] sm:$0xf]
      %v3082 = vld [vmem:[%s3079 + $0x8] sm:$0xf]
      %v3083 = vld [vmem:[%s3079 + $0xc] sm:$0xf]
      %v3084 = vld [vmem:[%s3079 + $0x10] sm:$0xf]
      %v3085 = vld [vmem:[%s3079 + $0x14] sm:$0xf]
      %v3086 = vld [vmem:[%s3079 + $0x18] sm:$0xf]
      %v3087 = vld [vmem:[%s3079 + $0x1c] sm:$0xf]
      %v3088 = vld [vmem:[%s3079 + $0x20] sm:$0xf]
      %v3089 = vld [vmem:[%s3079 + $0x24] sm:$0xf]
      %v3090 = vld [vmem:[%s3079 + $0x28] sm:$0xf]
      %v3091 = vld [vmem:[%s3079 + $0x2c] sm:$0xf]
      %v3092 = vld [vmem:[%s3079 + $0x30] sm:$0xf]
      %v3093 = vld [vmem:[%s3079 + $0x34] sm:$0xf]
      %v3094 = vld [vmem:[%s3079 + $0x38] sm:$0xf]
      %v3095 = vld [vmem:[%s3079 + $0x3c] sm:$0xf]
      %v3096 = vunpack.c.l.b16 %v2970
      %v3097 = vunpack.c.l.b16 %v2973
      %v3098 = vunpack.c.l.b16 %v2977
      %v3099 = vunpack.c.l.b16 %v2980
      %v3100 = vunpack.c.l.b16 %v2984
      %v3101 = vunpack.c.l.b16 %v2987
      %v3102 = vunpack.c.l.b16 %v2991
      %v3103 = vunpack.c.l.b16 %v2994
      %v3104 = vunpack.c.l.b16 %v2998
      %v3105 = vunpack.c.l.b16 %v3001
      %v3106 = vunpack.c.l.b16 %v3005
      %v3107 = vunpack.c.l.b16 %v3008
      %v3108 = vunpack.c.l.b16 %v3012
      %v3109 = vunpack.c.l.b16 %v3015
      %v3110 = vunpack.c.l.b16 %v3019
      %v3111 = vunpack.c.l.b16 %v3022
      %v3112 = vunpack.c.l.b16 %v3026
      %v3113 = vunpack.c.l.b16 %v3029
      %v3114 = vunpack.c.l.b16 %v3033
      %v3115 = vunpack.c.l.b16 %v3036
      %v3116 = vunpack.c.l.b16 %v3040
      %v3117 = vunpack.c.l.b16 %v3043
      %v3118 = vunpack.c.l.b16 %v3047
      %v3119 = vunpack.c.l.b16 %v3050
      %v3120 = vunpack.c.l.b16 %v3054
      %v3121 = vunpack.c.l.b16 %v3057
      %v3122 = vunpack.c.l.b16 %v3061
      %v3123 = vunpack.c.l.b16 %v3064
      %v3124 = vunpack.c.l.b16 %v3068
      %v3125 = vunpack.c.l.b16 %v3071
      %v3126 = vunpack.c.l.b16 %v3075
      %v3127 = vunpack.c.l.b16 %v3078
      %v3128 = vpack.c.b16 %v3097, %v3096
      %v3129 = vpack.c.b16 %v3099, %v3098
      %v3130 = vpack.c.b16 %v3101, %v3100
      %v3131 = vpack.c.b16 %v3103, %v3102
      %v3132 = vpack.c.b16 %v3105, %v3104
      %v3133 = vpack.c.b16 %v3107, %v3106
      %v3134 = vpack.c.b16 %v3109, %v3108
      %v3135 = vpack.c.b16 %v3111, %v3110
      %v3136 = vpack.c.b16 %v3113, %v3112
      %v3137 = vpack.c.b16 %v3115, %v3114
      %v3138 = vpack.c.b16 %v3117, %v3116
      %v3139 = vpack.c.b16 %v3119, %v3118
      %v3140 = vpack.c.b16 %v3121, %v3120
      %v3141 = vpack.c.b16 %v3123, %v3122
      %v3142 = vpack.c.b16 %v3125, %v3124
      %v3143 = vpack.c.b16 %v3127, %v3126
      %v3176 = vunpack.c.l.b16 %v3080
      %v3177 = vunpack.c.l.b16 %v3081
      %v3178 = vunpack.c.l.b16 %v3082
      %v3179 = vunpack.c.l.b16 %v3083
      %v3180 = vunpack.c.l.b16 %v3084
      %v3181 = vunpack.c.l.b16 %v3085
      %v3182 = vunpack.c.l.b16 %v3086
      %v3183 = vunpack.c.l.b16 %v3087
      %v3184 = vunpack.c.l.b16 %v3088
      %v3185 = vunpack.c.l.b16 %v3089
      %v3186 = vunpack.c.l.b16 %v3090
      %v3187 = vunpack.c.l.b16 %v3091
      %v3188 = vunpack.c.l.b16 %v3092
      %v3189 = vunpack.c.l.b16 %v3093
      %v3190 = vunpack.c.l.b16 %v3094
      %v3191 = vunpack.c.l.b16 %v3095
      %v3192 = vpack.c.b16 %v3177, %v3176
      %v3193 = vpack.c.b16 %v3179, %v3178
      %v3194 = vpack.c.b16 %v3181, %v3180
      %v3195 = vpack.c.b16 %v3183, %v3182
      %v3196 = vpack.c.b16 %v3185, %v3184
      %v3197 = vpack.c.b16 %v3187, %v3186
      %v3198 = vpack.c.b16 %v3189, %v3188
      %v3199 = vpack.c.b16 %v3191, %v3190
      %3208 = vmatprep.subr.bf16.mxu0 0
      %3209 = vmatpush1.bf16.msra.mxu0 %v3199
      %3210 = vmatprep.subr.bf16.mxu0 0
      %3211 = vmatpush1.bf16.msra.mxu0 %v3198
      %3212 = vmatprep.subr.bf16.mxu0 0
      %3213 = vmatpush1.bf16.msra.mxu0 %v3197
      %3214 = vmatprep.subr.bf16.mxu0 0
      %3215 = vmatpush1.bf16.msra.mxu0 %v3196
      %3216 = vmatprep.subr.bf16.mxu0 0
      %3217 = vmatpush1.bf16.msra.mxu0 %v3195
      %3218 = vmatprep.subr.bf16.mxu0 0
      %3219 = vmatpush1.bf16.msra.mxu0 %v3194
      %3220 = vmatprep.subr.bf16.mxu0 0
      %3221 = vmatpush1.bf16.msra.mxu0 %v3193
      %3222 = vmatprep.subr.bf16.mxu0 0
      %3223 = vmatpush1.bf16.msra.mxu0 %v3192
      %3224 = vmatprep.subr.bf16.mxu0 0
      %3225 = vmatpush2.bf16.msra.mxu0 0
      %3226 = vmatprep.subr.bf16.mxu0 0
      %3227 = vmatpush2.bf16.msra.mxu0 0
      %3228 = vmatprep.subr.bf16.mxu0 0
      %3229 = vmatpush2.bf16.msra.mxu0 0
      %3230 = vmatprep.subr.bf16.mxu0 0
      %3231 = vmatpush2.bf16.msra.mxu0 0
      %3232 = vmatprep.subr.bf16.mxu0 0
      %3233 = vmatpush2.bf16.msra.mxu0 0
      %3234 = vmatprep.subr.bf16.mxu0 0
      %3235 = vmatpush2.bf16.msra.mxu0 0
      %3236 = vmatprep.subr.bf16.mxu0 0
      %3237 = vmatpush2.bf16.msra.mxu0 0
      %3238 = vmatprep.subr.bf16.mxu0 0
      %3239 = vmatpush2.bf16.msra.mxu0 0
      %3240 = vmatprep.mubr.bf16.mxu0 0
      %3241 = vmatmul.mubr.bf16.gmra.mxu0 %v3128
      %v3242 = vpop.f32.mrf.mxu0
      %v3243 = vadd.f32 0.0, %v3242
      %v3244 = vpop.f32.mrf.mxu0
      %v3245 = vpop.f32.mrf.mxu0
      %v3246 = vadd.f32 0.0, %v3245
      %v3247 = vpop.f32.mrf.mxu0
      %3248 = vmatprep.mubr.bf16.mxu0 0
      %3249 = vmatmul.mubr.bf16.gmra.mxu0 %v3129
      %v3250 = vpop.f32.mrf.mxu0
      %v3251 = vadd.f32 0.0, %v3250
      %v3252 = vpop.f32.mrf.mxu0
      %v3253 = vpop.f32.mrf.mxu0
      %v3254 = vadd.f32 0.0, %v3253
      %v3255 = vpop.f32.mrf.mxu0
      %3256 = vmatprep.mubr.bf16.mxu0 0
      %3257 = vmatmul.mubr.bf16.gmra.mxu0 %v3130
      %v3258 = vpop.f32.mrf.mxu0
      %v3259 = vadd.f32 0.0, %v3258
      %v3260 = vpop.f32.mrf.mxu0
      %v3261 = vpop.f32.mrf.mxu0
      %v3262 = vadd.f32 0.0, %v3261
      %v3263 = vpop.f32.mrf.mxu0
      %3264 = vmatprep.mubr.bf16.mxu0 0
      %3265 = vmatmul.mubr.bf16.gmra.mxu0 %v3131
      %v3266 = vpop.f32.mrf.mxu0
      %v3267 = vadd.f32 0.0, %v3266
      %v3268 = vpop.f32.mrf.mxu0
      %v3269 = vpop.f32.mrf.mxu0
      %v3270 = vadd.f32 0.0, %v3269
      %v3271 = vpop.f32.mrf.mxu0
      %3272 = vmatprep.mubr.bf16.mxu0 0
      %3273 = vmatmul.mubr.bf16.gmra.mxu0 %v3132
      %v3274 = vpop.f32.mrf.mxu0
      %v3275 = vadd.f32 0.0, %v3274
      %v3276 = vpop.f32.mrf.mxu0
      %v3277 = vpop.f32.mrf.mxu0
      %v3278 = vadd.f32 0.0, %v3277
      %v3279 = vpop.f32.mrf.mxu0
      %3280 = vmatprep.mubr.bf16.mxu0 0
      %3281 = vmatmul.mubr.bf16.gmra.mxu0 %v3133
      %v3282 = vpop.f32.mrf.mxu0
      %v3283 = vadd.f32 0.0, %v3282
      %v3284 = vpop.f32.mrf.mxu0
      %v3285 = vpop.f32.mrf.mxu0
      %v3286 = vadd.f32 0.0, %v3285
      %v3287 = vpop.f32.mrf.mxu0
      %3288 = vmatprep.mubr.bf16.mxu0 0
      %3289 = vmatmul.mubr.bf16.gmra.mxu0 %v3134
      %v3290 = vpop.f32.mrf.mxu0
      %v3291 = vadd.f32 0.0, %v3290
      %v3292 = vpop.f32.mrf.mxu0
      %v3293 = vpop.f32.mrf.mxu0
      %v3294 = vadd.f32 0.0, %v3293
      %v3295 = vpop.f32.mrf.mxu0
      %3296 = vmatprep.mubr.bf16.mxu0 0
      %3297 = vmatmul.mubr.bf16.gmra.mxu0 %v3135
      %v3298 = vpop.f32.mrf.mxu0
      %v3299 = vadd.f32 0.0, %v3298
      %v3300 = vpop.f32.mrf.mxu0
      %v3301 = vpop.f32.mrf.mxu0
      %v3302 = vadd.f32 0.0, %v3301
      %v3303 = vpop.f32.mrf.mxu0
      %3304 = vmatprep.mubr.bf16.mxu0 0
      %3305 = vmatmul.mubr.bf16.gmra.mxu0 %v3136
      %v3306 = vpop.f32.mrf.mxu0
      %v3307 = vadd.f32 0.0, %v3306
      %v3308 = vpop.f32.mrf.mxu0
      %v3309 = vpop.f32.mrf.mxu0
      %v3310 = vadd.f32 0.0, %v3309
      %v3311 = vpop.f32.mrf.mxu0
      %3312 = vmatprep.mubr.bf16.mxu0 0
      %3313 = vmatmul.mubr.bf16.gmra.mxu0 %v3137
      %v3314 = vpop.f32.mrf.mxu0
      %v3315 = vadd.f32 0.0, %v3314
      %v3316 = vpop.f32.mrf.mxu0
      %v3317 = vpop.f32.mrf.mxu0
      %v3318 = vadd.f32 0.0, %v3317
      %v3319 = vpop.f32.mrf.mxu0
      %3320 = vmatprep.mubr.bf16.mxu0 0
      %3321 = vmatmul.mubr.bf16.gmra.mxu0 %v3138
      %v3322 = vpop.f32.mrf.mxu0
      %v3323 = vadd.f32 0.0, %v3322
      %v3324 = vpop.f32.mrf.mxu0
      %v3325 = vpop.f32.mrf.mxu0
      %v3326 = vadd.f32 0.0, %v3325
      %v3327 = vpop.f32.mrf.mxu0
      %3328 = vmatprep.mubr.bf16.mxu0 0
      %3329 = vmatmul.mubr.bf16.gmra.mxu0 %v3139
      %v3330 = vpop.f32.mrf.mxu0
      %v3331 = vadd.f32 0.0, %v3330
      %v3332 = vpop.f32.mrf.mxu0
      %v3333 = vpop.f32.mrf.mxu0
      %v3334 = vadd.f32 0.0, %v3333
      %v3335 = vpop.f32.mrf.mxu0
      %3336 = vmatprep.mubr.bf16.mxu0 0
      %3337 = vmatmul.mubr.bf16.gmra.mxu0 %v3140
      %v3338 = vpop.f32.mrf.mxu0
      %v3339 = vadd.f32 0.0, %v3338
      %v3340 = vpop.f32.mrf.mxu0
      %v3341 = vpop.f32.mrf.mxu0
      %v3342 = vadd.f32 0.0, %v3341
      %v3343 = vpop.f32.mrf.mxu0
      %3344 = vmatprep.mubr.bf16.mxu0 0
      %3345 = vmatmul.mubr.bf16.gmra.mxu0 %v3141
      %v3346 = vpop.f32.mrf.mxu0
      %v3347 = vadd.f32 0.0, %v3346
      %v3348 = vpop.f32.mrf.mxu0
      %v3349 = vpop.f32.mrf.mxu0
      %v3350 = vadd.f32 0.0, %v3349
      %v3351 = vpop.f32.mrf.mxu0
      %3352 = vmatprep.mubr.bf16.mxu0 0
      %3353 = vmatmul.mubr.bf16.gmra.mxu0 %v3142
      %v3354 = vpop.f32.mrf.mxu0
      %v3355 = vadd.f32 0.0, %v3354
      %v3356 = vpop.f32.mrf.mxu0
      %v3357 = vpop.f32.mrf.mxu0
      %v3358 = vadd.f32 0.0, %v3357
      %v3359 = vpop.f32.mrf.mxu0
      %3360 = vmatprep.mubr.bf16.mxu0 0
      %3361 = vmatmul.mubr.bf16.gmra.mxu0 %v3143
      %v3362 = vpop.f32.mrf.mxu0
      %v3363 = vadd.f32 0.0, %v3362
      %v3364 = vpop.f32.mrf.mxu0
      %v3365 = vpop.f32.mrf.mxu0
      %v3366 = vadd.f32 0.0, %v3365
      %v3367 = vpop.f32.mrf.mxu0
      %3368 = vdwg.mxu0
      %v3369 = vadd.f32 %v2871, %v3243
      %v3370 = vadd.f32 %v2872, %v3246
      %v3371 = vadd.f32 %v2873, %v3251
      %v3372 = vadd.f32 %v2874, %v3254
      %v3373 = vadd.f32 %v2875, %v3259
      %v3374 = vadd.f32 %v2876, %v3262
      %v3375 = vadd.f32 %v2877, %v3267
      %v3376 = vadd.f32 %v2878, %v3270
      %v3377 = vadd.f32 %v2879, %v3275
      %v3378 = vadd.f32 %v2880, %v3278
      %v3379 = vadd.f32 %v2881, %v3283
      %v3380 = vadd.f32 %v2882, %v3286
      %v3381 = vadd.f32 %v2883, %v3291
      %v3382 = vadd.f32 %v2884, %v3294
      %v3383 = vadd.f32 %v2885, %v3299
      %v3384 = vadd.f32 %v2886, %v3302
      %v3385 = vadd.f32 %v2887, %v3307
      %v3386 = vadd.f32 %v2888, %v3310
      %v3387 = vadd.f32 %v2889, %v3315
      %v3388 = vadd.f32 %v2890, %v3318
      %v3389 = vadd.f32 %v2891, %v3323
      %v3390 = vadd.f32 %v2892, %v3326
      %v3391 = vadd.f32 %v2893, %v3331
      %v3392 = vadd.f32 %v2894, %v3334
      %v3393 = vadd.f32 %v2895, %v3339
      %v3394 = vadd.f32 %v2896, %v3342
      %v3395 = vadd.f32 %v2897, %v3347
      %v3396 = vadd.f32 %v2898, %v3350
      %v3397 = vadd.f32 %v2899, %v3355
      %v3398 = vadd.f32 %v2900, %v3358
      %v3399 = vadd.f32 %v2901, %v3363
      %v3400 = vadd.f32 %v2902, %v3366
      %s3401 = sadd.s32 %s224, 2
      %s3402 = smul.u32 %s3401, 3
      %s3403 = smul.addr %s3402, 4
      %s3404 = scalar_lea.vmem %s211, %s3403
      %v3405 = vld [vmem:[%s3404] sm:$0xf]
      %v3406 = vld [vmem:[%s3404 + $0x4] sm:$0xf]
      %v3407 = vld [vmem:[%s3404 + $0xc] sm:$0xf]
      %v3408 = vld [vmem:[%s3404 + $0x10] sm:$0xf]
      %v3409 = vld [vmem:[%s3404 + $0x18] sm:$0xf]
      %v3410 = vld [vmem:[%s3404 + $0x1c] sm:$0xf]
      %v3411 = vld [vmem:[%s3404 + $0x24] sm:$0xf]
      %v3412 = vld [vmem:[%s3404 + $0x28] sm:$0xf]
      %v3413 = vld [vmem:[%s3404 + $0x30] sm:$0xf]
      %v3414 = vld [vmem:[%s3404 + $0x34] sm:$0xf]
      %v3415 = vld [vmem:[%s3404 + $0x3c] sm:$0xf]
      %v3416 = vld [vmem:[%s3404 + $0x40] sm:$0xf]
      %v3417 = vld [vmem:[%s3404 + $0x48] sm:$0xf]
      %v3418 = vld [vmem:[%s3404 + $0x4c] sm:$0xf]
      %v3419 = vld [vmem:[%s3404 + $0x54] sm:$0xf]
      %v3420 = vld [vmem:[%s3404 + $0x58] sm:$0xf]
      %v3421 = vld [vmem:[%s3404 + $0x60] sm:$0xf]
      %v3422 = vld [vmem:[%s3404 + $0x64] sm:$0xf]
      %v3423 = vld [vmem:[%s3404 + $0x6c] sm:$0xf]
      %v3424 = vld [vmem:[%s3404 + $0x70] sm:$0xf]
      %v3425 = vld [vmem:[%s3404 + $0x78] sm:$0xf]
      %v3426 = vld [vmem:[%s3404 + $0x7c] sm:$0xf]
      %v3427 = vld [vmem:[%s3404 + $0x84] sm:$0xf]
      %v3428 = vld [vmem:[%s3404 + $0x88] sm:$0xf]
      %v3429 = vld [vmem:[%s3404 + $0x90] sm:$0xf]
      %v3430 = vld [vmem:[%s3404 + $0x94] sm:$0xf]
      %v3431 = vld [vmem:[%s3404 + $0x9c] sm:$0xf]
      %v3432 = vld [vmem:[%s3404 + $0xa0] sm:$0xf]
      %v3433 = vld [vmem:[%s3404 + $0xa8] sm:$0xf]
      %v3434 = vld [vmem:[%s3404 + $0xac] sm:$0xf]
      %v3435 = vld [vmem:[%s3404 + $0xb4] sm:$0xf]
      %v3436 = vld [vmem:[%s3404 + $0xb8] sm:$0xf]
      %s3437 = scalar_lea.vmem %s1, 384
      %v3438 = vld [vmem:[%s3437] sm:$0xf]
      %v3439 = vld [vmem:[%s3437 + $0x4] sm:$0xf]
      %v3440 = vld [vmem:[%s3437 + $0x8] sm:$0xf]
      %v3441 = vld [vmem:[%s3437 + $0xc] sm:$0xf]
      %v3442 = vld [vmem:[%s3437 + $0x10] sm:$0xf]
      %v3443 = vld [vmem:[%s3437 + $0x14] sm:$0xf]
      %v3444 = vld [vmem:[%s3437 + $0x18] sm:$0xf]
      %v3445 = vld [vmem:[%s3437 + $0x1c] sm:$0xf]
      %v3446 = vld [vmem:[%s3437 + $0x20] sm:$0xf]
      %v3447 = vld [vmem:[%s3437 + $0x24] sm:$0xf]
      %v3448 = vld [vmem:[%s3437 + $0x28] sm:$0xf]
      %v3449 = vld [vmem:[%s3437 + $0x2c] sm:$0xf]
      %v3450 = vld [vmem:[%s3437 + $0x30] sm:$0xf]
      %v3451 = vld [vmem:[%s3437 + $0x34] sm:$0xf]
      %v3452 = vld [vmem:[%s3437 + $0x38] sm:$0xf]
      %v3453 = vld [vmem:[%s3437 + $0x3c] sm:$0xf]
      %v3486 = vunpack.c.l.b16 %v3405
      %v3487 = vunpack.c.l.b16 %v3406
      %v3488 = vunpack.c.l.b16 %v3407
      %v3489 = vunpack.c.l.b16 %v3408
      %v3490 = vunpack.c.l.b16 %v3409
      %v3491 = vunpack.c.l.b16 %v3410
      %v3492 = vunpack.c.l.b16 %v3411
      %v3493 = vunpack.c.l.b16 %v3412
      %v3494 = vunpack.c.l.b16 %v3413
      %v3495 = vunpack.c.l.b16 %v3414
      %v3496 = vunpack.c.l.b16 %v3415
      %v3497 = vunpack.c.l.b16 %v3416
      %v3498 = vunpack.c.l.b16 %v3417
      %v3499 = vunpack.c.l.b16 %v3418
      %v3500 = vunpack.c.l.b16 %v3419
      %v3501 = vunpack.c.l.b16 %v3420
      %v3502 = vunpack.c.l.b16 %v3421
      %v3503 = vunpack.c.l.b16 %v3422
      %v3504 = vunpack.c.l.b16 %v3423
      %v3505 = vunpack.c.l.b16 %v3424
      %v3506 = vunpack.c.l.b16 %v3425
      %v3507 = vunpack.c.l.b16 %v3426
      %v3508 = vunpack.c.l.b16 %v3427
      %v3509 = vunpack.c.l.b16 %v3428
      %v3510 = vunpack.c.l.b16 %v3429
      %v3511 = vunpack.c.l.b16 %v3430
      %v3512 = vunpack.c.l.b16 %v3431
      %v3513 = vunpack.c.l.b16 %v3432
      %v3514 = vunpack.c.l.b16 %v3433
      %v3515 = vunpack.c.l.b16 %v3434
      %v3516 = vunpack.c.l.b16 %v3435
      %v3517 = vunpack.c.l.b16 %v3436
      %v3518 = vpack.c.b16 %v3487, %v3486
      %v3519 = vpack.c.b16 %v3489, %v3488
      %v3520 = vpack.c.b16 %v3491, %v3490
      %v3521 = vpack.c.b16 %v3493, %v3492
      %v3522 = vpack.c.b16 %v3495, %v3494
      %v3523 = vpack.c.b16 %v3497, %v3496
      %v3524 = vpack.c.b16 %v3499, %v3498
      %v3525 = vpack.c.b16 %v3501, %v3500
      %v3526 = vpack.c.b16 %v3503, %v3502
      %v3527 = vpack.c.b16 %v3505, %v3504
      %v3528 = vpack.c.b16 %v3507, %v3506
      %v3529 = vpack.c.b16 %v3509, %v3508
      %v3530 = vpack.c.b16 %v3511, %v3510
      %v3531 = vpack.c.b16 %v3513, %v3512
      %v3532 = vpack.c.b16 %v3515, %v3514
      %v3533 = vpack.c.b16 %v3517, %v3516
      %v3566 = vunpack.c.l.b16 %v3438
      %v3567 = vunpack.c.l.b16 %v3439
      %v3568 = vunpack.c.l.b16 %v3440
      %v3569 = vunpack.c.l.b16 %v3441
      %v3570 = vunpack.c.l.b16 %v3442
      %v3571 = vunpack.c.l.b16 %v3443
      %v3572 = vunpack.c.l.b16 %v3444
      %v3573 = vunpack.c.l.b16 %v3445
      %v3574 = vunpack.c.l.b16 %v3446
      %v3575 = vunpack.c.l.b16 %v3447
      %v3576 = vunpack.c.l.b16 %v3448
      %v3577 = vunpack.c.l.b16 %v3449
      %v3578 = vunpack.c.l.b16 %v3450
      %v3579 = vunpack.c.l.b16 %v3451
      %v3580 = vunpack.c.l.b16 %v3452
      %v3581 = vunpack.c.l.b16 %v3453
      %v3582 = vpack.c.b16 %v3567, %v3566
      %v3583 = vpack.c.b16 %v3569, %v3568
      %v3584 = vpack.c.b16 %v3571, %v3570
      %v3585 = vpack.c.b16 %v3573, %v3572
      %v3586 = vpack.c.b16 %v3575, %v3574
      %v3587 = vpack.c.b16 %v3577, %v3576
      %v3588 = vpack.c.b16 %v3579, %v3578
      %v3589 = vpack.c.b16 %v3581, %v3580
      %3598 = vmatprep.subr.bf16.mxu0 0
      %3599 = vmatpush1.bf16.msra.mxu0 %v3589
      %3600 = vmatprep.subr.bf16.mxu0 0
      %3601 = vmatpush1.bf16.msra.mxu0 %v3588
      %3602 = vmatprep.subr.bf16.mxu0 0
      %3603 = vmatpush1.bf16.msra.mxu0 %v3587
      %3604 = vmatprep.subr.bf16.mxu0 0
      %3605 = vmatpush1.bf16.msra.mxu0 %v3586
      %3606 = vmatprep.subr.bf16.mxu0 0
      %3607 = vmatpush1.bf16.msra.mxu0 %v3585
      %3608 = vmatprep.subr.bf16.mxu0 0
      %3609 = vmatpush1.bf16.msra.mxu0 %v3584
      %3610 = vmatprep.subr.bf16.mxu0 0
      %3611 = vmatpush1.bf16.msra.mxu0 %v3583
      %3612 = vmatprep.subr.bf16.mxu0 0
      %3613 = vmatpush1.bf16.msra.mxu0 %v3582
      %3614 = vmatprep.subr.bf16.mxu0 0
      %3615 = vmatpush2.bf16.msra.mxu0 0
      %3616 = vmatprep.subr.bf16.mxu0 0
      %3617 = vmatpush2.bf16.msra.mxu0 0
      %3618 = vmatprep.subr.bf16.mxu0 0
      %3619 = vmatpush2.bf16.msra.mxu0 0
      %3620 = vmatprep.subr.bf16.mxu0 0
      %3621 = vmatpush2.bf16.msra.mxu0 0
      %3622 = vmatprep.subr.bf16.mxu0 0
      %3623 = vmatpush2.bf16.msra.mxu0 0
      %3624 = vmatprep.subr.bf16.mxu0 0
      %3625 = vmatpush2.bf16.msra.mxu0 0
      %3626 = vmatprep.subr.bf16.mxu0 0
      %3627 = vmatpush2.bf16.msra.mxu0 0
      %3628 = vmatprep.subr.bf16.mxu0 0
      %3629 = vmatpush2.bf16.msra.mxu0 0
      %3630 = vmatprep.mubr.bf16.mxu0 0
      %3631 = vmatmul.mubr.bf16.gmra.mxu0 %v3518
      %v3632 = vpop.f32.mrf.mxu0
      %v3633 = vadd.f32 0.0, %v3632
      %v3634 = vpop.f32.mrf.mxu0
      %v3635 = vpop.f32.mrf.mxu0
      %v3636 = vadd.f32 0.0, %v3635
      %v3637 = vpop.f32.mrf.mxu0
      %3638 = vmatprep.mubr.bf16.mxu0 0
      %3639 = vmatmul.mubr.bf16.gmra.mxu0 %v3519
      %v3640 = vpop.f32.mrf.mxu0
      %v3641 = vadd.f32 0.0, %v3640
      %v3642 = vpop.f32.mrf.mxu0
      %v3643 = vpop.f32.mrf.mxu0
      %v3644 = vadd.f32 0.0, %v3643
      %v3645 = vpop.f32.mrf.mxu0
      %3646 = vmatprep.mubr.bf16.mxu0 0
      %3647 = vmatmul.mubr.bf16.gmra.mxu0 %v3520
      %v3648 = vpop.f32.mrf.mxu0
      %v3649 = vadd.f32 0.0, %v3648
      %v3650 = vpop.f32.mrf.mxu0
      %v3651 = vpop.f32.mrf.mxu0
      %v3652 = vadd.f32 0.0, %v3651
      %v3653 = vpop.f32.mrf.mxu0
      %3654 = vmatprep.mubr.bf16.mxu0 0
      %3655 = vmatmul.mubr.bf16.gmra.mxu0 %v3521
      %v3656 = vpop.f32.mrf.mxu0
      %v3657 = vadd.f32 0.0, %v3656
      %v3658 = vpop.f32.mrf.mxu0
      %v3659 = vpop.f32.mrf.mxu0
      %v3660 = vadd.f32 0.0, %v3659
      %v3661 = vpop.f32.mrf.mxu0
      %3662 = vmatprep.mubr.bf16.mxu0 0
      %3663 = vmatmul.mubr.bf16.gmra.mxu0 %v3522
      %v3664 = vpop.f32.mrf.mxu0
      %v3665 = vadd.f32 0.0, %v3664
      %v3666 = vpop.f32.mrf.mxu0
      %v3667 = vpop.f32.mrf.mxu0
      %v3668 = vadd.f32 0.0, %v3667
      %v3669 = vpop.f32.mrf.mxu0
      %3670 = vmatprep.mubr.bf16.mxu0 0
      %3671 = vmatmul.mubr.bf16.gmra.mxu0 %v3523
      %v3672 = vpop.f32.mrf.mxu0
      %v3673 = vadd.f32 0.0, %v3672
      %v3674 = vpop.f32.mrf.mxu0
      %v3675 = vpop.f32.mrf.mxu0
      %v3676 = vadd.f32 0.0, %v3675
      %v3677 = vpop.f32.mrf.mxu0
      %3678 = vmatprep.mubr.bf16.mxu0 0
      %3679 = vmatmul.mubr.bf16.gmra.mxu0 %v3524
      %v3680 = vpop.f32.mrf.mxu0
      %v3681 = vadd.f32 0.0, %v3680
      %v3682 = vpop.f32.mrf.mxu0
      %v3683 = vpop.f32.mrf.mxu0
      %v3684 = vadd.f32 0.0, %v3683
      %v3685 = vpop.f32.mrf.mxu0
      %3686 = vmatprep.mubr.bf16.mxu0 0
      %3687 = vmatmul.mubr.bf16.gmra.mxu0 %v3525
      %v3688 = vpop.f32.mrf.mxu0
      %v3689 = vadd.f32 0.0, %v3688
      %v3690 = vpop.f32.mrf.mxu0
      %v3691 = vpop.f32.mrf.mxu0
      %v3692 = vadd.f32 0.0, %v3691
      %v3693 = vpop.f32.mrf.mxu0
      %3694 = vmatprep.mubr.bf16.mxu0 0
      %3695 = vmatmul.mubr.bf16.gmra.mxu0 %v3526
      %v3696 = vpop.f32.mrf.mxu0
      %v3697 = vadd.f32 0.0, %v3696
      %v3698 = vpop.f32.mrf.mxu0
      %v3699 = vpop.f32.mrf.mxu0
      %v3700 = vadd.f32 0.0, %v3699
      %v3701 = vpop.f32.mrf.mxu0
      %3702 = vmatprep.mubr.bf16.mxu0 0
      %3703 = vmatmul.mubr.bf16.gmra.mxu0 %v3527
      %v3704 = vpop.f32.mrf.mxu0
      %v3705 = vadd.f32 0.0, %v3704
      %v3706 = vpop.f32.mrf.mxu0
      %v3707 = vpop.f32.mrf.mxu0
      %v3708 = vadd.f32 0.0, %v3707
      %v3709 = vpop.f32.mrf.mxu0
      %3710 = vmatprep.mubr.bf16.mxu0 0
      %3711 = vmatmul.mubr.bf16.gmra.mxu0 %v3528
      %v3712 = vpop.f32.mrf.mxu0
      %v3713 = vadd.f32 0.0, %v3712
      %v3714 = vpop.f32.mrf.mxu0
      %v3715 = vpop.f32.mrf.mxu0
      %v3716 = vadd.f32 0.0, %v3715
      %v3717 = vpop.f32.mrf.mxu0
      %3718 = vmatprep.mubr.bf16.mxu0 0
      %3719 = vmatmul.mubr.bf16.gmra.mxu0 %v3529
      %v3720 = vpop.f32.mrf.mxu0
      %v3721 = vadd.f32 0.0, %v3720
      %v3722 = vpop.f32.mrf.mxu0
      %v3723 = vpop.f32.mrf.mxu0
      %v3724 = vadd.f32 0.0, %v3723
      %v3725 = vpop.f32.mrf.mxu0
      %3726 = vmatprep.mubr.bf16.mxu0 0
      %3727 = vmatmul.mubr.bf16.gmra.mxu0 %v3530
      %v3728 = vpop.f32.mrf.mxu0
      %v3729 = vadd.f32 0.0, %v3728
      %v3730 = vpop.f32.mrf.mxu0
      %v3731 = vpop.f32.mrf.mxu0
      %v3732 = vadd.f32 0.0, %v3731
      %v3733 = vpop.f32.mrf.mxu0
      %3734 = vmatprep.mubr.bf16.mxu0 0
      %3735 = vmatmul.mubr.bf16.gmra.mxu0 %v3531
      %v3736 = vpop.f32.mrf.mxu0
      %v3737 = vadd.f32 0.0, %v3736
      %v3738 = vpop.f32.mrf.mxu0
      %v3739 = vpop.f32.mrf.mxu0
      %v3740 = vadd.f32 0.0, %v3739
      %v3741 = vpop.f32.mrf.mxu0
      %3742 = vmatprep.mubr.bf16.mxu0 0
      %3743 = vmatmul.mubr.bf16.gmra.mxu0 %v3532
      %v3744 = vpop.f32.mrf.mxu0
      %v3745 = vadd.f32 0.0, %v3744
      %v3746 = vpop.f32.mrf.mxu0
      %v3747 = vpop.f32.mrf.mxu0
      %v3748 = vadd.f32 0.0, %v3747
      %v3749 = vpop.f32.mrf.mxu0
      %3750 = vmatprep.mubr.bf16.mxu0 0
      %3751 = vmatmul.mubr.bf16.gmra.mxu0 %v3533
      %v3752 = vpop.f32.mrf.mxu0
      %v3753 = vadd.f32 0.0, %v3752
      %v3754 = vpop.f32.mrf.mxu0
      %v3755 = vpop.f32.mrf.mxu0
      %v3756 = vadd.f32 0.0, %v3755
      %v3757 = vpop.f32.mrf.mxu0
      %3758 = vdwg.mxu0
      %v3759 = vadd.f32 %v3369, %v3633
      %v3760 = vadd.f32 %v3370, %v3636
      %v3761 = vadd.f32 %v3371, %v3641
      %v3762 = vadd.f32 %v3372, %v3644
      %v3763 = vadd.f32 %v3373, %v3649
      %v3764 = vadd.f32 %v3374, %v3652
      %v3765 = vadd.f32 %v3375, %v3657
      %v3766 = vadd.f32 %v3376, %v3660
      %v3767 = vadd.f32 %v3377, %v3665
      %v3768 = vadd.f32 %v3378, %v3668
      %v3769 = vadd.f32 %v3379, %v3673
      %v3770 = vadd.f32 %v3380, %v3676
      %v3771 = vadd.f32 %v3381, %v3681
      %v3772 = vadd.f32 %v3382, %v3684
      %v3773 = vadd.f32 %v3383, %v3689
      %v3774 = vadd.f32 %v3384, %v3692
      %v3775 = vadd.f32 %v3385, %v3697
      %v3776 = vadd.f32 %v3386, %v3700
      %v3777 = vadd.f32 %v3387, %v3705
      %v3778 = vadd.f32 %v3388, %v3708
      %v3779 = vadd.f32 %v3389, %v3713
      %v3780 = vadd.f32 %v3390, %v3716
      %v3781 = vadd.f32 %v3391, %v3721
      %v3782 = vadd.f32 %v3392, %v3724
      %v3783 = vadd.f32 %v3393, %v3729
      %v3784 = vadd.f32 %v3394, %v3732
      %v3785 = vadd.f32 %v3395, %v3737
      %v3786 = vadd.f32 %v3396, %v3740
      %v3787 = vadd.f32 %v3397, %v3745
      %v3788 = vadd.f32 %v3398, %v3748
      %v3789 = vadd.f32 %v3399, %v3753
      %v3790 = vadd.f32 %v3400, %v3756
      %v3791 = vld [vmem:[%s3404] sm:$0xf]
      %v3792 = vld [vmem:[%s3404 + $0x4] sm:$0xf]
      %v3793 = vld [vmem:[%s3404 + $0x8] sm:$0x1]
      %v3794 = vld [vmem:[%s3404 + $0xc] sm:$0xf]
      %v3795 = vld [vmem:[%s3404 + $0x10] sm:$0xf]
      %v3796 = vld [vmem:[%s3404 + $0x14] sm:$0x1]
      %v3797 = vld [vmem:[%s3404 + $0x18] sm:$0xf]
      %v3798 = vld [vmem:[%s3404 + $0x1c] sm:$0xf]
      %v3799 = vld [vmem:[%s3404 + $0x20] sm:$0x1]
      %v3800 = vld [vmem:[%s3404 + $0x24] sm:$0xf]
      %v3801 = vld [vmem:[%s3404 + $0x28] sm:$0xf]
      %v3802 = vld [vmem:[%s3404 + $0x2c] sm:$0x1]
      %v3803 = vld [vmem:[%s3404 + $0x30] sm:$0xf]
      %v3804 = vld [vmem:[%s3404 + $0x34] sm:$0xf]
      %v3805 = vld [vmem:[%s3404 + $0x38] sm:$0x1]
      %v3806 = vld [vmem:[%s3404 + $0x3c] sm:$0xf]
      %v3807 = vld [vmem:[%s3404 + $0x40] sm:$0xf]
      %v3808 = vld [vmem:[%s3404 + $0x44] sm:$0x1]
      %v3809 = vld [vmem:[%s3404 + $0x48] sm:$0xf]
      %v3810 = vld [vmem:[%s3404 + $0x4c] sm:$0xf]
      %v3811 = vld [vmem:[%s3404 + $0x50] sm:$0x1]
      %v3812 = vld [vmem:[%s3404 + $0x54] sm:$0xf]
      %v3813 = vld [vmem:[%s3404 + $0x58] sm:$0xf]
      %v3814 = vld [vmem:[%s3404 + $0x5c] sm:$0x1]
      %v3815 = vld [vmem:[%s3404 + $0x60] sm:$0xf]
      %v3816 = vld [vmem:[%s3404 + $0x64] sm:$0xf]
      %v3817 = vld [vmem:[%s3404 + $0x68] sm:$0x1]
      %v3818 = vld [vmem:[%s3404 + $0x6c] sm:$0xf]
      %v3819 = vld [vmem:[%s3404 + $0x70] sm:$0xf]
      %v3820 = vld [vmem:[%s3404 + $0x74] sm:$0x1]
      %v3821 = vld [vmem:[%s3404 + $0x78] sm:$0xf]
      %v3822 = vld [vmem:[%s3404 + $0x7c] sm:$0xf]
      %v3823 = vld [vmem:[%s3404 + $0x80] sm:$0x1]
      %v3824 = vld [vmem:[%s3404 + $0x84] sm:$0xf]
      %v3825 = vld [vmem:[%s3404 + $0x88] sm:$0xf]
      %v3826 = vld [vmem:[%s3404 + $0x8c] sm:$0x1]
      %v3827 = vld [vmem:[%s3404 + $0x90] sm:$0xf]
      %v3828 = vld [vmem:[%s3404 + $0x94] sm:$0xf]
      %v3829 = vld [vmem:[%s3404 + $0x98] sm:$0x1]
      %v3830 = vld [vmem:[%s3404 + $0x9c] sm:$0xf]
      %v3831 = vld [vmem:[%s3404 + $0xa0] sm:$0xf]
      %v3832 = vld [vmem:[%s3404 + $0xa4] sm:$0x1]
      %v3833 = vld [vmem:[%s3404 + $0xa8] sm:$0xf]
      %v3834 = vld [vmem:[%s3404 + $0xac] sm:$0xf]
      %v3835 = vld [vmem:[%s3404 + $0xb0] sm:$0x1]
      %v3836 = vld [vmem:[%s3404 + $0xb4] sm:$0xf]
      %v3837 = vld [vmem:[%s3404 + $0xb8] sm:$0xf]
      %v3838 = vld [vmem:[%s3404 + $0xbc] sm:$0x1]
      %v3840 = vshrl.u32 %v3791, 16
      %v3842 = vrot.slane %v3840, 4
      %v3843 = vshll.u32 %v3791, 16
      %v3845 = vrot.slane %v3843, 5
      %v3846 = vor.u32 %v3842, %v3845
      %v3847 = vrot.slane %v3846, 4
      %v3849 = vshll.u32 %v3792, 16
      %v3851 = vrot.slane %v3849, 5
      %v3852 = vsel %vm294, %v3847, %v3851
      %v3853 = vshrl.u32 %v3792, 16
      %v3855 = vrot.slane %v3853, 4
      %v3856 = vor.u32 %v3855, %v3851
      %v3857 = vrot.slane %v3856, 4
      %v3859 = vshll.u32 %v3793, 16
      %v3861 = vrot.slane %v3859, 5
      %v3862 = vsel %vm294, %v3857, %v3861
      %v3864 = vshrl.u32 %v3794, 16
      %v3866 = vrot.slane %v3864, 4
      %v3867 = vshll.u32 %v3794, 16
      %v3869 = vrot.slane %v3867, 5
      %v3870 = vor.u32 %v3866, %v3869
      %v3871 = vrot.slane %v3870, 4
      %v3873 = vshll.u32 %v3795, 16
      %v3875 = vrot.slane %v3873, 5
      %v3876 = vsel %vm294, %v3871, %v3875
      %v3877 = vshrl.u32 %v3795, 16
      %v3879 = vrot.slane %v3877, 4
      %v3880 = vor.u32 %v3879, %v3875
      %v3881 = vrot.slane %v3880, 4
      %v3883 = vshll.u32 %v3796, 16
      %v3885 = vrot.slane %v3883, 5
      %v3886 = vsel %vm294, %v3881, %v3885
      %v3888 = vshrl.u32 %v3797, 16
      %v3890 = vrot.slane %v3888, 4
      %v3891 = vshll.u32 %v3797, 16
      %v3893 = vrot.slane %v3891, 5
      %v3894 = vor.u32 %v3890, %v3893
      %v3895 = vrot.slane %v3894, 4
      %v3897 = vshll.u32 %v3798, 16
      %v3899 = vrot.slane %v3897, 5
      %v3900 = vsel %vm294, %v3895, %v3899
      %v3901 = vshrl.u32 %v3798, 16
      %v3903 = vrot.slane %v3901, 4
      %v3904 = vor.u32 %v3903, %v3899
      %v3905 = vrot.slane %v3904, 4
      %v3907 = vshll.u32 %v3799, 16
      %v3909 = vrot.slane %v3907, 5
      %v3910 = vsel %vm294, %v3905, %v3909
      %v3912 = vshrl.u32 %v3800, 16
      %v3914 = vrot.slane %v3912, 4
      %v3915 = vshll.u32 %v3800, 16
      %v3917 = vrot.slane %v3915, 5
      %v3918 = vor.u32 %v3914, %v3917
      %v3919 = vrot.slane %v3918, 4
      %v3921 = vshll.u32 %v3801, 16
      %v3923 = vrot.slane %v3921, 5
      %v3924 = vsel %vm294, %v3919, %v3923
      %v3925 = vshrl.u32 %v3801, 16
      %v3927 = vrot.slane %v3925, 4
      %v3928 = vor.u32 %v3927, %v3923
      %v3929 = vrot.slane %v3928, 4
      %v3931 = vshll.u32 %v3802, 16
      %v3933 = vrot.slane %v3931, 5
      %v3934 = vsel %vm294, %v3929, %v3933
      %v3936 = vshrl.u32 %v3803, 16
      %v3938 = vrot.slane %v3936, 4
      %v3939 = vshll.u32 %v3803, 16
      %v3941 = vrot.slane %v3939, 5
      %v3942 = vor.u32 %v3938, %v3941
      %v3943 = vrot.slane %v3942, 4
      %v3945 = vshll.u32 %v3804, 16
      %v3947 = vrot.slane %v3945, 5
      %v3948 = vsel %vm294, %v3943, %v3947
      %v3949 = vshrl.u32 %v3804, 16
      %v3951 = vrot.slane %v3949, 4
      %v3952 = vor.u32 %v3951, %v3947
      %v3953 = vrot.slane %v3952, 4
      %v3955 = vshll.u32 %v3805, 16
      %v3957 = vrot.slane %v3955, 5
      %v3958 = vsel %vm294, %v3953, %v3957
      %v3960 = vshrl.u32 %v3806, 16
      %v3962 = vrot.slane %v3960, 4
      %v3963 = vshll.u32 %v3806, 16
      %v3965 = vrot.slane %v3963, 5
      %v3966 = vor.u32 %v3962, %v3965
      %v3967 = vrot.slane %v3966, 4
      %v3969 = vshll.u32 %v3807, 16
      %v3971 = vrot.slane %v3969, 5
      %v3972 = vsel %vm294, %v3967, %v3971
      %v3973 = vshrl.u32 %v3807, 16
      %v3975 = vrot.slane %v3973, 4
      %v3976 = vor.u32 %v3975, %v3971
      %v3977 = vrot.slane %v3976, 4
      %v3979 = vshll.u32 %v3808, 16
      %v3981 = vrot.slane %v3979, 5
      %v3982 = vsel %vm294, %v3977, %v3981
      %v3984 = vshrl.u32 %v3809, 16
      %v3986 = vrot.slane %v3984, 4
      %v3987 = vshll.u32 %v3809, 16
      %v3989 = vrot.slane %v3987, 5
      %v3990 = vor.u32 %v3986, %v3989
      %v3991 = vrot.slane %v3990, 4
      %v3993 = vshll.u32 %v3810, 16
      %v3995 = vrot.slane %v3993, 5
      %v3996 = vsel %vm294, %v3991, %v3995
      %v3997 = vshrl.u32 %v3810, 16
      %v3999 = vrot.slane %v3997, 4
      %v4000 = vor.u32 %v3999, %v3995
      %v4001 = vrot.slane %v4000, 4
      %v4003 = vshll.u32 %v3811, 16
      %v4005 = vrot.slane %v4003, 5
      %v4006 = vsel %vm294, %v4001, %v4005
      %v4008 = vshrl.u32 %v3812, 16
      %v4010 = vrot.slane %v4008, 4
      %v4011 = vshll.u32 %v3812, 16
      %v4013 = vrot.slane %v4011, 5
      %v4014 = vor.u32 %v4010, %v4013
      %v4015 = vrot.slane %v4014, 4
      %v4017 = vshll.u32 %v3813, 16
      %v4019 = vrot.slane %v4017, 5
      %v4020 = vsel %vm294, %v4015, %v4019
      %v4021 = vshrl.u32 %v3813, 16
      %v4023 = vrot.slane %v4021, 4
      %v4024 = vor.u32 %v4023, %v4019
      %v4025 = vrot.slane %v4024, 4
      %v4027 = vshll.u32 %v3814, 16
      %v4029 = vrot.slane %v4027, 5
      %v4030 = vsel %vm294, %v4025, %v4029
      %v4032 = vshrl.u32 %v3815, 16
      %v4034 = vrot.slane %v4032, 4
      %v4035 = vshll.u32 %v3815, 16
      %v4037 = vrot.slane %v4035, 5
      %v4038 = vor.u32 %v4034, %v4037
      %v4039 = vrot.slane %v4038, 4
      %v4041 = vshll.u32 %v3816, 16
      %v4043 = vrot.slane %v4041, 5
      %v4044 = vsel %vm294, %v4039, %v4043
      %v4045 = vshrl.u32 %v3816, 16
      %v4047 = vrot.slane %v4045, 4
      %v4048 = vor.u32 %v4047, %v4043
      %v4049 = vrot.slane %v4048, 4
      %v4051 = vshll.u32 %v3817, 16
      %v4053 = vrot.slane %v4051, 5
      %v4054 = vsel %vm294, %v4049, %v4053
      %v4056 = vshrl.u32 %v3818, 16
      %v4058 = vrot.slane %v4056, 4
      %v4059 = vshll.u32 %v3818, 16
      %v4061 = vrot.slane %v4059, 5
      %v4062 = vor.u32 %v4058, %v4061
      %v4063 = vrot.slane %v4062, 4
      %v4065 = vshll.u32 %v3819, 16
      %v4067 = vrot.slane %v4065, 5
      %v4068 = vsel %vm294, %v4063, %v4067
      %v4069 = vshrl.u32 %v3819, 16
      %v4071 = vrot.slane %v4069, 4
      %v4072 = vor.u32 %v4071, %v4067
      %v4073 = vrot.slane %v4072, 4
      %v4075 = vshll.u32 %v3820, 16
      %v4077 = vrot.slane %v4075, 5
      %v4078 = vsel %vm294, %v4073, %v4077
      %v4080 = vshrl.u32 %v3821, 16
      %v4082 = vrot.slane %v4080, 4
      %v4083 = vshll.u32 %v3821, 16
      %v4085 = vrot.slane %v4083, 5
      %v4086 = vor.u32 %v4082, %v4085
      %v4087 = vrot.slane %v4086, 4
      %v4089 = vshll.u32 %v3822, 16
      %v4091 = vrot.slane %v4089, 5
      %v4092 = vsel %vm294, %v4087, %v4091
      %v4093 = vshrl.u32 %v3822, 16
      %v4095 = vrot.slane %v4093, 4
      %v4096 = vor.u32 %v4095, %v4091
      %v4097 = vrot.slane %v4096, 4
      %v4099 = vshll.u32 %v3823, 16
      %v4101 = vrot.slane %v4099, 5
      %v4102 = vsel %vm294, %v4097, %v4101
      %v4104 = vshrl.u32 %v3824, 16
      %v4106 = vrot.slane %v4104, 4
      %v4107 = vshll.u32 %v3824, 16
      %v4109 = vrot.slane %v4107, 5
      %v4110 = vor.u32 %v4106, %v4109
      %v4111 = vrot.slane %v4110, 4
      %v4113 = vshll.u32 %v3825, 16
      %v4115 = vrot.slane %v4113, 5
      %v4116 = vsel %vm294, %v4111, %v4115
      %v4117 = vshrl.u32 %v3825, 16
      %v4119 = vrot.slane %v4117, 4
      %v4120 = vor.u32 %v4119, %v4115
      %v4121 = vrot.slane %v4120, 4
      %v4123 = vshll.u32 %v3826, 16
      %v4125 = vrot.slane %v4123, 5
      %v4126 = vsel %vm294, %v4121, %v4125
      %v4128 = vshrl.u32 %v3827, 16
      %v4130 = vrot.slane %v4128, 4
      %v4131 = vshll.u32 %v3827, 16
      %v4133 = vrot.slane %v4131, 5
      %v4134 = vor.u32 %v4130, %v4133
      %v4135 = vrot.slane %v4134, 4
      %v4137 = vshll.u32 %v3828, 16
      %v4139 = vrot.slane %v4137, 5
      %v4140 = vsel %vm294, %v4135, %v4139
      %v4141 = vshrl.u32 %v3828, 16
      %v4143 = vrot.slane %v4141, 4
      %v4144 = vor.u32 %v4143, %v4139
      %v4145 = vrot.slane %v4144, 4
      %v4147 = vshll.u32 %v3829, 16
      %v4149 = vrot.slane %v4147, 5
      %v4150 = vsel %vm294, %v4145, %v4149
      %v4152 = vshrl.u32 %v3830, 16
      %v4154 = vrot.slane %v4152, 4
      %v4155 = vshll.u32 %v3830, 16
      %v4157 = vrot.slane %v4155, 5
      %v4158 = vor.u32 %v4154, %v4157
      %v4159 = vrot.slane %v4158, 4
      %v4161 = vshll.u32 %v3831, 16
      %v4163 = vrot.slane %v4161, 5
      %v4164 = vsel %vm294, %v4159, %v4163
      %v4165 = vshrl.u32 %v3831, 16
      %v4167 = vrot.slane %v4165, 4
      %v4168 = vor.u32 %v4167, %v4163
      %v4169 = vrot.slane %v4168, 4
      %v4171 = vshll.u32 %v3832, 16
      %v4173 = vrot.slane %v4171, 5
      %v4174 = vsel %vm294, %v4169, %v4173
      %v4176 = vshrl.u32 %v3833, 16
      %v4178 = vrot.slane %v4176, 4
      %v4179 = vshll.u32 %v3833, 16
      %v4181 = vrot.slane %v4179, 5
      %v4182 = vor.u32 %v4178, %v4181
      %v4183 = vrot.slane %v4182, 4
      %v4185 = vshll.u32 %v3834, 16
      %v4187 = vrot.slane %v4185, 5
      %v4188 = vsel %vm294, %v4183, %v4187
      %v4189 = vshrl.u32 %v3834, 16
      %v4191 = vrot.slane %v4189, 4
      %v4192 = vor.u32 %v4191, %v4187
      %v4193 = vrot.slane %v4192, 4
      %v4195 = vshll.u32 %v3835, 16
      %v4197 = vrot.slane %v4195, 5
      %v4198 = vsel %vm294, %v4193, %v4197
      %v4200 = vshrl.u32 %v3836, 16
      %v4202 = vrot.slane %v4200, 4
      %v4203 = vshll.u32 %v3836, 16
      %v4205 = vrot.slane %v4203, 5
      %v4206 = vor.u32 %v4202, %v4205
      %v4207 = vrot.slane %v4206, 4
      %v4209 = vshll.u32 %v3837, 16
      %v4211 = vrot.slane %v4209, 5
      %v4212 = vsel %vm294, %v4207, %v4211
      %v4213 = vshrl.u32 %v3837, 16
      %v4215 = vrot.slane %v4213, 4
      %v4216 = vor.u32 %v4215, %v4211
      %v4217 = vrot.slane %v4216, 4
      %v4219 = vshll.u32 %v3838, 16
      %v4221 = vrot.slane %v4219, 5
      %v4222 = vsel %vm294, %v4217, %v4221
      %s4223 = scalar_lea.vmem %s1, 448
      %v4224 = vld [vmem:[%s4223] sm:$0xf]
      %v4225 = vld [vmem:[%s4223 + $0x4] sm:$0xf]
      %v4226 = vld [vmem:[%s4223 + $0x8] sm:$0xf]
      %v4227 = vld [vmem:[%s4223 + $0xc] sm:$0xf]
      %v4228 = vld [vmem:[%s4223 + $0x10] sm:$0xf]
      %v4229 = vld [vmem:[%s4223 + $0x14] sm:$0xf]
      %v4230 = vld [vmem:[%s4223 + $0x18] sm:$0xf]
      %v4231 = vld [vmem:[%s4223 + $0x1c] sm:$0xf]
      %v4232 = vld [vmem:[%s4223 + $0x20] sm:$0xf]
      %v4233 = vld [vmem:[%s4223 + $0x24] sm:$0xf]
      %v4234 = vld [vmem:[%s4223 + $0x28] sm:$0xf]
      %v4235 = vld [vmem:[%s4223 + $0x2c] sm:$0xf]
      %v4236 = vld [vmem:[%s4223 + $0x30] sm:$0xf]
      %v4237 = vld [vmem:[%s4223 + $0x34] sm:$0xf]
      %v4238 = vld [vmem:[%s4223 + $0x38] sm:$0xf]
      %v4239 = vld [vmem:[%s4223 + $0x3c] sm:$0xf]
      %v4240 = vunpack.c.l.b16 %v3852
      %v4241 = vunpack.c.l.b16 %v3862
      %v4242 = vunpack.c.l.b16 %v3876
      %v4243 = vunpack.c.l.b16 %v3886
      %v4244 = vunpack.c.l.b16 %v3900
      %v4245 = vunpack.c.l.b16 %v3910
      %v4246 = vunpack.c.l.b16 %v3924
      %v4247 = vunpack.c.l.b16 %v3934
      %v4248 = vunpack.c.l.b16 %v3948
      %v4249 = vunpack.c.l.b16 %v3958
      %v4250 = vunpack.c.l.b16 %v3972
      %v4251 = vunpack.c.l.b16 %v3982
      %v4252 = vunpack.c.l.b16 %v3996
      %v4253 = vunpack.c.l.b16 %v4006
      %v4254 = vunpack.c.l.b16 %v4020
      %v4255 = vunpack.c.l.b16 %v4030
      %v4256 = vunpack.c.l.b16 %v4044
      %v4257 = vunpack.c.l.b16 %v4054
      %v4258 = vunpack.c.l.b16 %v4068
      %v4259 = vunpack.c.l.b16 %v4078
      %v4260 = vunpack.c.l.b16 %v4092
      %v4261 = vunpack.c.l.b16 %v4102
      %v4262 = vunpack.c.l.b16 %v4116
      %v4263 = vunpack.c.l.b16 %v4126
      %v4264 = vunpack.c.l.b16 %v4140
      %v4265 = vunpack.c.l.b16 %v4150
      %v4266 = vunpack.c.l.b16 %v4164
      %v4267 = vunpack.c.l.b16 %v4174
      %v4268 = vunpack.c.l.b16 %v4188
      %v4269 = vunpack.c.l.b16 %v4198
      %v4270 = vunpack.c.l.b16 %v4212
      %v4271 = vunpack.c.l.b16 %v4222
      %v4272 = vpack.c.b16 %v4241, %v4240
      %v4273 = vpack.c.b16 %v4243, %v4242
      %v4274 = vpack.c.b16 %v4245, %v4244
      %v4275 = vpack.c.b16 %v4247, %v4246
      %v4276 = vpack.c.b16 %v4249, %v4248
      %v4277 = vpack.c.b16 %v4251, %v4250
      %v4278 = vpack.c.b16 %v4253, %v4252
      %v4279 = vpack.c.b16 %v4255, %v4254
      %v4280 = vpack.c.b16 %v4257, %v4256
      %v4281 = vpack.c.b16 %v4259, %v4258
      %v4282 = vpack.c.b16 %v4261, %v4260
      %v4283 = vpack.c.b16 %v4263, %v4262
      %v4284 = vpack.c.b16 %v4265, %v4264
      %v4285 = vpack.c.b16 %v4267, %v4266
      %v4286 = vpack.c.b16 %v4269, %v4268
      %v4287 = vpack.c.b16 %v4271, %v4270
      %v4320 = vunpack.c.l.b16 %v4224
      %v4321 = vunpack.c.l.b16 %v4225
      %v4322 = vunpack.c.l.b16 %v4226
      %v4323 = vunpack.c.l.b16 %v4227
      %v4324 = vunpack.c.l.b16 %v4228
      %v4325 = vunpack.c.l.b16 %v4229
      %v4326 = vunpack.c.l.b16 %v4230
      %v4327 = vunpack.c.l.b16 %v4231
      %v4328 = vunpack.c.l.b16 %v4232
      %v4329 = vunpack.c.l.b16 %v4233
      %v4330 = vunpack.c.l.b16 %v4234
      %v4331 = vunpack.c.l.b16 %v4235
      %v4332 = vunpack.c.l.b16 %v4236
      %v4333 = vunpack.c.l.b16 %v4237
      %v4334 = vunpack.c.l.b16 %v4238
      %v4335 = vunpack.c.l.b16 %v4239
      %v4336 = vpack.c.b16 %v4321, %v4320
      %v4337 = vpack.c.b16 %v4323, %v4322
      %v4338 = vpack.c.b16 %v4325, %v4324
      %v4339 = vpack.c.b16 %v4327, %v4326
      %v4340 = vpack.c.b16 %v4329, %v4328
      %v4341 = vpack.c.b16 %v4331, %v4330
      %v4342 = vpack.c.b16 %v4333, %v4332
      %v4343 = vpack.c.b16 %v4335, %v4334
      %4352 = vmatprep.subr.bf16.mxu0 0
      %4353 = vmatpush1.bf16.msra.mxu0 %v4343
      %4354 = vmatprep.subr.bf16.mxu0 0
      %4355 = vmatpush1.bf16.msra.mxu0 %v4342
      %4356 = vmatprep.subr.bf16.mxu0 0
      %4357 = vmatpush1.bf16.msra.mxu0 %v4341
      %4358 = vmatprep.subr.bf16.mxu0 0
      %4359 = vmatpush1.bf16.msra.mxu0 %v4340
      %4360 = vmatprep.subr.bf16.mxu0 0
      %4361 = vmatpush1.bf16.msra.mxu0 %v4339
      %4362 = vmatprep.subr.bf16.mxu0 0
      %4363 = vmatpush1.bf16.msra.mxu0 %v4338
      %4364 = vmatprep.subr.bf16.mxu0 0
      %4365 = vmatpush1.bf16.msra.mxu0 %v4337
      %4366 = vmatprep.subr.bf16.mxu0 0
      %4367 = vmatpush1.bf16.msra.mxu0 %v4336
      %4368 = vmatprep.subr.bf16.mxu0 0
      %4369 = vmatpush2.bf16.msra.mxu0 0
      %4370 = vmatprep.subr.bf16.mxu0 0
      %4371 = vmatpush2.bf16.msra.mxu0 0
      %4372 = vmatprep.subr.bf16.mxu0 0
      %4373 = vmatpush2.bf16.msra.mxu0 0
      %4374 = vmatprep.subr.bf16.mxu0 0
      %4375 = vmatpush2.bf16.msra.mxu0 0
      %4376 = vmatprep.subr.bf16.mxu0 0
      %4377 = vmatpush2.bf16.msra.mxu0 0
      %4378 = vmatprep.subr.bf16.mxu0 0
      %4379 = vmatpush2.bf16.msra.mxu0 0
      %4380 = vmatprep.subr.bf16.mxu0 0
      %4381 = vmatpush2.bf16.msra.mxu0 0
      %4382 = vmatprep.subr.bf16.mxu0 0
      %4383 = vmatpush2.bf16.msra.mxu0 0
      %4384 = vmatprep.mubr.bf16.mxu0 0
      %4385 = vmatmul.mubr.bf16.gmra.mxu0 %v4272
      %v4386 = vpop.f32.mrf.mxu0
      %v4387 = vadd.f32 0.0, %v4386
      %v4388 = vpop.f32.mrf.mxu0
      %v4389 = vpop.f32.mrf.mxu0
      %v4390 = vadd.f32 0.0, %v4389
      %v4391 = vpop.f32.mrf.mxu0
      %4392 = vmatprep.mubr.bf16.mxu0 0
      %4393 = vmatmul.mubr.bf16.gmra.mxu0 %v4273
      %v4394 = vpop.f32.mrf.mxu0
      %v4395 = vadd.f32 0.0, %v4394
      %v4396 = vpop.f32.mrf.mxu0
      %v4397 = vpop.f32.mrf.mxu0
      %v4398 = vadd.f32 0.0, %v4397
      %v4399 = vpop.f32.mrf.mxu0
      %4400 = vmatprep.mubr.bf16.mxu0 0
      %4401 = vmatmul.mubr.bf16.gmra.mxu0 %v4274
      %v4402 = vpop.f32.mrf.mxu0
      %v4403 = vadd.f32 0.0, %v4402
      %v4404 = vpop.f32.mrf.mxu0
      %v4405 = vpop.f32.mrf.mxu0
      %v4406 = vadd.f32 0.0, %v4405
      %v4407 = vpop.f32.mrf.mxu0
      %4408 = vmatprep.mubr.bf16.mxu0 0
      %4409 = vmatmul.mubr.bf16.gmra.mxu0 %v4275
      %v4410 = vpop.f32.mrf.mxu0
      %v4411 = vadd.f32 0.0, %v4410
      %v4412 = vpop.f32.mrf.mxu0
      %v4413 = vpop.f32.mrf.mxu0
      %v4414 = vadd.f32 0.0, %v4413
      %v4415 = vpop.f32.mrf.mxu0
      %4416 = vmatprep.mubr.bf16.mxu0 0
      %4417 = vmatmul.mubr.bf16.gmra.mxu0 %v4276
      %v4418 = vpop.f32.mrf.mxu0
      %v4419 = vadd.f32 0.0, %v4418
      %v4420 = vpop.f32.mrf.mxu0
      %v4421 = vpop.f32.mrf.mxu0
      %v4422 = vadd.f32 0.0, %v4421
      %v4423 = vpop.f32.mrf.mxu0
      %4424 = vmatprep.mubr.bf16.mxu0 0
      %4425 = vmatmul.mubr.bf16.gmra.mxu0 %v4277
      %v4426 = vpop.f32.mrf.mxu0
      %v4427 = vadd.f32 0.0, %v4426
      %v4428 = vpop.f32.mrf.mxu0
      %v4429 = vpop.f32.mrf.mxu0
      %v4430 = vadd.f32 0.0, %v4429
      %v4431 = vpop.f32.mrf.mxu0
      %4432 = vmatprep.mubr.bf16.mxu0 0
      %4433 = vmatmul.mubr.bf16.gmra.mxu0 %v4278
      %v4434 = vpop.f32.mrf.mxu0
      %v4435 = vadd.f32 0.0, %v4434
      %v4436 = vpop.f32.mrf.mxu0
      %v4437 = vpop.f32.mrf.mxu0
      %v4438 = vadd.f32 0.0, %v4437
      %v4439 = vpop.f32.mrf.mxu0
      %4440 = vmatprep.mubr.bf16.mxu0 0
      %4441 = vmatmul.mubr.bf16.gmra.mxu0 %v4279
      %v4442 = vpop.f32.mrf.mxu0
      %v4443 = vadd.f32 0.0, %v4442
      %v4444 = vpop.f32.mrf.mxu0
      %v4445 = vpop.f32.mrf.mxu0
      %v4446 = vadd.f32 0.0, %v4445
      %v4447 = vpop.f32.mrf.mxu0
      %4448 = vmatprep.mubr.bf16.mxu0 0
      %4449 = vmatmul.mubr.bf16.gmra.mxu0 %v4280
      %v4450 = vpop.f32.mrf.mxu0
      %v4451 = vadd.f32 0.0, %v4450
      %v4452 = vpop.f32.mrf.mxu0
      %v4453 = vpop.f32.mrf.mxu0
      %v4454 = vadd.f32 0.0, %v4453
      %v4455 = vpop.f32.mrf.mxu0
      %4456 = vmatprep.mubr.bf16.mxu0 0
      %4457 = vmatmul.mubr.bf16.gmra.mxu0 %v4281
      %v4458 = vpop.f32.mrf.mxu0
      %v4459 = vadd.f32 0.0, %v4458
      %v4460 = vpop.f32.mrf.mxu0
      %v4461 = vpop.f32.mrf.mxu0
      %v4462 = vadd.f32 0.0, %v4461
      %v4463 = vpop.f32.mrf.mxu0
      %4464 = vmatprep.mubr.bf16.mxu0 0
      %4465 = vmatmul.mubr.bf16.gmra.mxu0 %v4282
      %v4466 = vpop.f32.mrf.mxu0
      %v4467 = vadd.f32 0.0, %v4466
      %v4468 = vpop.f32.mrf.mxu0
      %v4469 = vpop.f32.mrf.mxu0
      %v4470 = vadd.f32 0.0, %v4469
      %v4471 = vpop.f32.mrf.mxu0
      %4472 = vmatprep.mubr.bf16.mxu0 0
      %4473 = vmatmul.mubr.bf16.gmra.mxu0 %v4283
      %v4474 = vpop.f32.mrf.mxu0
      %v4475 = vadd.f32 0.0, %v4474
      %v4476 = vpop.f32.mrf.mxu0
      %v4477 = vpop.f32.mrf.mxu0
      %v4478 = vadd.f32 0.0, %v4477
      %v4479 = vpop.f32.mrf.mxu0
      %4480 = vmatprep.mubr.bf16.mxu0 0
      %4481 = vmatmul.mubr.bf16.gmra.mxu0 %v4284
      %v4482 = vpop.f32.mrf.mxu0
      %v4483 = vadd.f32 0.0, %v4482
      %v4484 = vpop.f32.mrf.mxu0
      %v4485 = vpop.f32.mrf.mxu0
      %v4486 = vadd.f32 0.0, %v4485
      %v4487 = vpop.f32.mrf.mxu0
      %4488 = vmatprep.mubr.bf16.mxu0 0
      %4489 = vmatmul.mubr.bf16.gmra.mxu0 %v4285
      %v4490 = vpop.f32.mrf.mxu0
      %v4491 = vadd.f32 0.0, %v4490
      %v4492 = vpop.f32.mrf.mxu0
      %v4493 = vpop.f32.mrf.mxu0
      %v4494 = vadd.f32 0.0, %v4493
      %v4495 = vpop.f32.mrf.mxu0
      %4496 = vmatprep.mubr.bf16.mxu0 0
      %4497 = vmatmul.mubr.bf16.gmra.mxu0 %v4286
      %v4498 = vpop.f32.mrf.mxu0
      %v4499 = vadd.f32 0.0, %v4498
      %v4500 = vpop.f32.mrf.mxu0
      %v4501 = vpop.f32.mrf.mxu0
      %v4502 = vadd.f32 0.0, %v4501
      %v4503 = vpop.f32.mrf.mxu0
      %4504 = vmatprep.mubr.bf16.mxu0 0
      %4505 = vmatmul.mubr.bf16.gmra.mxu0 %v4287
      %v4506 = vpop.f32.mrf.mxu0
      %v4507 = vadd.f32 0.0, %v4506
      %v4508 = vpop.f32.mrf.mxu0
      %v4509 = vpop.f32.mrf.mxu0
      %v4510 = vadd.f32 0.0, %v4509
      %v4511 = vpop.f32.mrf.mxu0
      %4512 = vdwg.mxu0
      %v4513 = vadd.f32 %v3759, %v4387
      %v4514 = vadd.f32 %v3760, %v4390
      %v4515 = vadd.f32 %v3761, %v4395
      %v4516 = vadd.f32 %v3762, %v4398
      %v4517 = vadd.f32 %v3763, %v4403
      %v4518 = vadd.f32 %v3764, %v4406
      %v4519 = vadd.f32 %v3765, %v4411
      %v4520 = vadd.f32 %v3766, %v4414
      %v4521 = vadd.f32 %v3767, %v4419
      %v4522 = vadd.f32 %v3768, %v4422
      %v4523 = vadd.f32 %v3769, %v4427
      %v4524 = vadd.f32 %v3770, %v4430
      %v4525 = vadd.f32 %v3771, %v4435
      %v4526 = vadd.f32 %v3772, %v4438
      %v4527 = vadd.f32 %v3773, %v4443
      %v4528 = vadd.f32 %v3774, %v4446
      %v4529 = vadd.f32 %v3775, %v4451
      %v4530 = vadd.f32 %v3776, %v4454
      %v4531 = vadd.f32 %v3777, %v4459
      %v4532 = vadd.f32 %v3778, %v4462
      %v4533 = vadd.f32 %v3779, %v4467
      %v4534 = vadd.f32 %v3780, %v4470
      %v4535 = vadd.f32 %v3781, %v4475
      %v4536 = vadd.f32 %v3782, %v4478
      %v4537 = vadd.f32 %v3783, %v4483
      %v4538 = vadd.f32 %v3784, %v4486
      %v4539 = vadd.f32 %v3785, %v4491
      %v4540 = vadd.f32 %v3786, %v4494
      %v4541 = vadd.f32 %v3787, %v4499
      %v4542 = vadd.f32 %v3788, %v4502
      %v4543 = vadd.f32 %v3789, %v4507
      %v4544 = vadd.f32 %v3790, %v4510
      %v4545 = vld [vmem:[%s3404] sm:$0xe]
      %v4546 = vld [vmem:[%s3404 + $0xc] sm:$0xe]
      %v4547 = vld [vmem:[%s3404 + $0x18] sm:$0xe]
      %v4548 = vld [vmem:[%s3404 + $0x24] sm:$0xe]
      %v4549 = vld [vmem:[%s3404 + $0x30] sm:$0xe]
      %v4550 = vld [vmem:[%s3404 + $0x3c] sm:$0xe]
      %v4551 = vld [vmem:[%s3404 + $0x48] sm:$0xe]
      %v4552 = vld [vmem:[%s3404 + $0x54] sm:$0xe]
      %v4553 = vld [vmem:[%s3404 + $0x60] sm:$0xe]
      %v4554 = vld [vmem:[%s3404 + $0x6c] sm:$0xe]
      %v4555 = vld [vmem:[%s3404 + $0x78] sm:$0xe]
      %v4556 = vld [vmem:[%s3404 + $0x84] sm:$0xe]
      %v4557 = vld [vmem:[%s3404 + $0x90] sm:$0xe]
      %v4558 = vld [vmem:[%s3404 + $0x9c] sm:$0xe]
      %v4559 = vld [vmem:[%s3404 + $0xa8] sm:$0xe]
      %v4560 = vld [vmem:[%s3404 + $0xb4] sm:$0xe]
      %v4609 = vrot.slane %v4545, 5
      %v4610 = vrot.slane %v4609, 4
      %v4611 = vrot.slane %v3792, 5
      %v4612 = vsel %vm1324, %v4610, %v4611
      %v4613 = vrot.slane %v4611, 4
      %v4614 = vrot.slane %v3793, 5
      %v4615 = vsel %vm1324, %v4613, %v4614
      %v4616 = vrot.slane %v4546, 5
      %v4617 = vrot.slane %v4616, 4
      %v4618 = vrot.slane %v3795, 5
      %v4619 = vsel %vm1324, %v4617, %v4618
      %v4620 = vrot.slane %v4618, 4
      %v4621 = vrot.slane %v3796, 5
      %v4622 = vsel %vm1324, %v4620, %v4621
      %v4623 = vrot.slane %v4547, 5
      %v4624 = vrot.slane %v4623, 4
      %v4625 = vrot.slane %v3798, 5
      %v4626 = vsel %vm1324, %v4624, %v4625
      %v4627 = vrot.slane %v4625, 4
      %v4628 = vrot.slane %v3799, 5
      %v4629 = vsel %vm1324, %v4627, %v4628
      %v4630 = vrot.slane %v4548, 5
      %v4631 = vrot.slane %v4630, 4
      %v4632 = vrot.slane %v3801, 5
      %v4633 = vsel %vm1324, %v4631, %v4632
      %v4634 = vrot.slane %v4632, 4
      %v4635 = vrot.slane %v3802, 5
      %v4636 = vsel %vm1324, %v4634, %v4635
      %v4637 = vrot.slane %v4549, 5
      %v4638 = vrot.slane %v4637, 4
      %v4639 = vrot.slane %v3804, 5
      %v4640 = vsel %vm1324, %v4638, %v4639
      %v4641 = vrot.slane %v4639, 4
      %v4642 = vrot.slane %v3805, 5
      %v4643 = vsel %vm1324, %v4641, %v4642
      %v4644 = vrot.slane %v4550, 5
      %v4645 = vrot.slane %v4644, 4
      %v4646 = vrot.slane %v3807, 5
      %v4647 = vsel %vm1324, %v4645, %v4646
      %v4648 = vrot.slane %v4646, 4
      %v4649 = vrot.slane %v3808, 5
      %v4650 = vsel %vm1324, %v4648, %v4649
      %v4651 = vrot.slane %v4551, 5
      %v4652 = vrot.slane %v4651, 4
      %v4653 = vrot.slane %v3810, 5
      %v4654 = vsel %vm1324, %v4652, %v4653
      %v4655 = vrot.slane %v4653, 4
      %v4656 = vrot.slane %v3811, 5
      %v4657 = vsel %vm1324, %v4655, %v4656
      %v4658 = vrot.slane %v4552, 5
      %v4659 = vrot.slane %v4658, 4
      %v4660 = vrot.slane %v3813, 5
      %v4661 = vsel %vm1324, %v4659, %v4660
      %v4662 = vrot.slane %v4660, 4
      %v4663 = vrot.slane %v3814, 5
      %v4664 = vsel %vm1324, %v4662, %v4663
      %v4665 = vrot.slane %v4553, 5
      %v4666 = vrot.slane %v4665, 4
      %v4667 = vrot.slane %v3816, 5
      %v4668 = vsel %vm1324, %v4666, %v4667
      %v4669 = vrot.slane %v4667, 4
      %v4670 = vrot.slane %v3817, 5
      %v4671 = vsel %vm1324, %v4669, %v4670
      %v4672 = vrot.slane %v4554, 5
      %v4673 = vrot.slane %v4672, 4
      %v4674 = vrot.slane %v3819, 5
      %v4675 = vsel %vm1324, %v4673, %v4674
      %v4676 = vrot.slane %v4674, 4
      %v4677 = vrot.slane %v3820, 5
      %v4678 = vsel %vm1324, %v4676, %v4677
      %v4679 = vrot.slane %v4555, 5
      %v4680 = vrot.slane %v4679, 4
      %v4681 = vrot.slane %v3822, 5
      %v4682 = vsel %vm1324, %v4680, %v4681
      %v4683 = vrot.slane %v4681, 4
      %v4684 = vrot.slane %v3823, 5
      %v4685 = vsel %vm1324, %v4683, %v4684
      %v4686 = vrot.slane %v4556, 5
      %v4687 = vrot.slane %v4686, 4
      %v4688 = vrot.slane %v3825, 5
      %v4689 = vsel %vm1324, %v4687, %v4688
      %v4690 = vrot.slane %v4688, 4
      %v4691 = vrot.slane %v3826, 5
      %v4692 = vsel %vm1324, %v4690, %v4691
      %v4693 = vrot.slane %v4557, 5
      %v4694 = vrot.slane %v4693, 4
      %v4695 = vrot.slane %v3828, 5
      %v4696 = vsel %vm1324, %v4694, %v4695
      %v4697 = vrot.slane %v4695, 4
      %v4698 = vrot.slane %v3829, 5
      %v4699 = vsel %vm1324, %v4697, %v4698
      %v4700 = vrot.slane %v4558, 5
      %v4701 = vrot.slane %v4700, 4
      %v4702 = vrot.slane %v3831, 5
      %v4703 = vsel %vm1324, %v4701, %v4702
      %v4704 = vrot.slane %v4702, 4
      %v4705 = vrot.slane %v3832, 5
      %v4706 = vsel %vm1324, %v4704, %v4705
      %v4707 = vrot.slane %v4559, 5
      %v4708 = vrot.slane %v4707, 4
      %v4709 = vrot.slane %v3834, 5
      %v4710 = vsel %vm1324, %v4708, %v4709
      %v4711 = vrot.slane %v4709, 4
      %v4712 = vrot.slane %v3835, 5
      %v4713 = vsel %vm1324, %v4711, %v4712
      %v4714 = vrot.slane %v4560, 5
      %v4715 = vrot.slane %v4714, 4
      %v4716 = vrot.slane %v3837, 5
      %v4717 = vsel %vm1324, %v4715, %v4716
      %v4718 = vrot.slane %v4716, 4
      %v4719 = vrot.slane %v3838, 5
      %v4720 = vsel %vm1324, %v4718, %v4719
      %s4721 = scalar_lea.vmem %s1, 512
      %v4722 = vld [vmem:[%s4721] sm:$0xf]
      %v4723 = vld [vmem:[%s4721 + $0x4] sm:$0xf]
      %v4724 = vld [vmem:[%s4721 + $0x8] sm:$0xf]
      %v4725 = vld [vmem:[%s4721 + $0xc] sm:$0xf]
      %v4726 = vld [vmem:[%s4721 + $0x10] sm:$0xf]
      %v4727 = vld [vmem:[%s4721 + $0x14] sm:$0xf]
      %v4728 = vld [vmem:[%s4721 + $0x18] sm:$0xf]
      %v4729 = vld [vmem:[%s4721 + $0x1c] sm:$0xf]
      %v4730 = vld [vmem:[%s4721 + $0x20] sm:$0xf]
      %v4731 = vld [vmem:[%s4721 + $0x24] sm:$0xf]
      %v4732 = vld [vmem:[%s4721 + $0x28] sm:$0xf]
      %v4733 = vld [vmem:[%s4721 + $0x2c] sm:$0xf]
      %v4734 = vld [vmem:[%s4721 + $0x30] sm:$0xf]
      %v4735 = vld [vmem:[%s4721 + $0x34] sm:$0xf]
      %v4736 = vld [vmem:[%s4721 + $0x38] sm:$0xf]
      %v4737 = vld [vmem:[%s4721 + $0x3c] sm:$0xf]
      %v4738 = vunpack.c.l.b16 %v4612
      %v4739 = vunpack.c.l.b16 %v4615
      %v4740 = vunpack.c.l.b16 %v4619
      %v4741 = vunpack.c.l.b16 %v4622
      %v4742 = vunpack.c.l.b16 %v4626
      %v4743 = vunpack.c.l.b16 %v4629
      %v4744 = vunpack.c.l.b16 %v4633
      %v4745 = vunpack.c.l.b16 %v4636
      %v4746 = vunpack.c.l.b16 %v4640
      %v4747 = vunpack.c.l.b16 %v4643
      %v4748 = vunpack.c.l.b16 %v4647
      %v4749 = vunpack.c.l.b16 %v4650
      %v4750 = vunpack.c.l.b16 %v4654
      %v4751 = vunpack.c.l.b16 %v4657
      %v4752 = vunpack.c.l.b16 %v4661
      %v4753 = vunpack.c.l.b16 %v4664
      %v4754 = vunpack.c.l.b16 %v4668
      %v4755 = vunpack.c.l.b16 %v4671
      %v4756 = vunpack.c.l.b16 %v4675
      %v4757 = vunpack.c.l.b16 %v4678
      %v4758 = vunpack.c.l.b16 %v4682
      %v4759 = vunpack.c.l.b16 %v4685
      %v4760 = vunpack.c.l.b16 %v4689
      %v4761 = vunpack.c.l.b16 %v4692
      %v4762 = vunpack.c.l.b16 %v4696
      %v4763 = vunpack.c.l.b16 %v4699
      %v4764 = vunpack.c.l.b16 %v4703
      %v4765 = vunpack.c.l.b16 %v4706
      %v4766 = vunpack.c.l.b16 %v4710
      %v4767 = vunpack.c.l.b16 %v4713
      %v4768 = vunpack.c.l.b16 %v4717
      %v4769 = vunpack.c.l.b16 %v4720
      %v4770 = vpack.c.b16 %v4739, %v4738
      %v4771 = vpack.c.b16 %v4741, %v4740
      %v4772 = vpack.c.b16 %v4743, %v4742
      %v4773 = vpack.c.b16 %v4745, %v4744
      %v4774 = vpack.c.b16 %v4747, %v4746
      %v4775 = vpack.c.b16 %v4749, %v4748
      %v4776 = vpack.c.b16 %v4751, %v4750
      %v4777 = vpack.c.b16 %v4753, %v4752
      %v4778 = vpack.c.b16 %v4755, %v4754
      %v4779 = vpack.c.b16 %v4757, %v4756
      %v4780 = vpack.c.b16 %v4759, %v4758
      %v4781 = vpack.c.b16 %v4761, %v4760
      %v4782 = vpack.c.b16 %v4763, %v4762
      %v4783 = vpack.c.b16 %v4765, %v4764
      %v4784 = vpack.c.b16 %v4767, %v4766
      %v4785 = vpack.c.b16 %v4769, %v4768
      %v4818 = vunpack.c.l.b16 %v4722
      %v4819 = vunpack.c.l.b16 %v4723
      %v4820 = vunpack.c.l.b16 %v4724
      %v4821 = vunpack.c.l.b16 %v4725
      %v4822 = vunpack.c.l.b16 %v4726
      %v4823 = vunpack.c.l.b16 %v4727
      %v4824 = vunpack.c.l.b16 %v4728
      %v4825 = vunpack.c.l.b16 %v4729
      %v4826 = vunpack.c.l.b16 %v4730
      %v4827 = vunpack.c.l.b16 %v4731
      %v4828 = vunpack.c.l.b16 %v4732
      %v4829 = vunpack.c.l.b16 %v4733
      %v4830 = vunpack.c.l.b16 %v4734
      %v4831 = vunpack.c.l.b16 %v4735
      %v4832 = vunpack.c.l.b16 %v4736
      %v4833 = vunpack.c.l.b16 %v4737
      %v4834 = vpack.c.b16 %v4819, %v4818
      %v4835 = vpack.c.b16 %v4821, %v4820
      %v4836 = vpack.c.b16 %v4823, %v4822
      %v4837 = vpack.c.b16 %v4825, %v4824
      %v4838 = vpack.c.b16 %v4827, %v4826
      %v4839 = vpack.c.b16 %v4829, %v4828
      %v4840 = vpack.c.b16 %v4831, %v4830
      %v4841 = vpack.c.b16 %v4833, %v4832
      %4850 = vmatprep.subr.bf16.mxu0 0
      %4851 = vmatpush1.bf16.msra.mxu0 %v4841
      %4852 = vmatprep.subr.bf16.mxu0 0
      %4853 = vmatpush1.bf16.msra.mxu0 %v4840
      %4854 = vmatprep.subr.bf16.mxu0 0
      %4855 = vmatpush1.bf16.msra.mxu0 %v4839
      %4856 = vmatprep.subr.bf16.mxu0 0
      %4857 = vmatpush1.bf16.msra.mxu0 %v4838
      %4858 = vmatprep.subr.bf16.mxu0 0
      %4859 = vmatpush1.bf16.msra.mxu0 %v4837
      %4860 = vmatprep.subr.bf16.mxu0 0
      %4861 = vmatpush1.bf16.msra.mxu0 %v4836
      %4862 = vmatprep.subr.bf16.mxu0 0
      %4863 = vmatpush1.bf16.msra.mxu0 %v4835
      %4864 = vmatprep.subr.bf16.mxu0 0
      %4865 = vmatpush1.bf16.msra.mxu0 %v4834
      %4866 = vmatprep.subr.bf16.mxu0 0
      %4867 = vmatpush2.bf16.msra.mxu0 0
      %4868 = vmatprep.subr.bf16.mxu0 0
      %4869 = vmatpush2.bf16.msra.mxu0 0
      %4870 = vmatprep.subr.bf16.mxu0 0
      %4871 = vmatpush2.bf16.msra.mxu0 0
      %4872 = vmatprep.subr.bf16.mxu0 0
      %4873 = vmatpush2.bf16.msra.mxu0 0
      %4874 = vmatprep.subr.bf16.mxu0 0
      %4875 = vmatpush2.bf16.msra.mxu0 0
      %4876 = vmatprep.subr.bf16.mxu0 0
      %4877 = vmatpush2.bf16.msra.mxu0 0
      %4878 = vmatprep.subr.bf16.mxu0 0
      %4879 = vmatpush2.bf16.msra.mxu0 0
      %4880 = vmatprep.subr.bf16.mxu0 0
      %4881 = vmatpush2.bf16.msra.mxu0 0
      %4882 = vmatprep.mubr.bf16.mxu0 0
      %4883 = vmatmul.mubr.bf16.gmra.mxu0 %v4770
      %v4884 = vpop.f32.mrf.mxu0
      %v4885 = vadd.f32 0.0, %v4884
      %v4886 = vpop.f32.mrf.mxu0
      %v4887 = vpop.f32.mrf.mxu0
      %v4888 = vadd.f32 0.0, %v4887
      %v4889 = vpop.f32.mrf.mxu0
      %4890 = vmatprep.mubr.bf16.mxu0 0
      %4891 = vmatmul.mubr.bf16.gmra.mxu0 %v4771
      %v4892 = vpop.f32.mrf.mxu0
      %v4893 = vadd.f32 0.0, %v4892
      %v4894 = vpop.f32.mrf.mxu0
      %v4895 = vpop.f32.mrf.mxu0
      %v4896 = vadd.f32 0.0, %v4895
      %v4897 = vpop.f32.mrf.mxu0
      %4898 = vmatprep.mubr.bf16.mxu0 0
      %4899 = vmatmul.mubr.bf16.gmra.mxu0 %v4772
      %v4900 = vpop.f32.mrf.mxu0
      %v4901 = vadd.f32 0.0, %v4900
      %v4902 = vpop.f32.mrf.mxu0
      %v4903 = vpop.f32.mrf.mxu0
      %v4904 = vadd.f32 0.0, %v4903
      %v4905 = vpop.f32.mrf.mxu0
      %4906 = vmatprep.mubr.bf16.mxu0 0
      %4907 = vmatmul.mubr.bf16.gmra.mxu0 %v4773
      %v4908 = vpop.f32.mrf.mxu0
      %v4909 = vadd.f32 0.0, %v4908
      %v4910 = vpop.f32.mrf.mxu0
      %v4911 = vpop.f32.mrf.mxu0
      %v4912 = vadd.f32 0.0, %v4911
      %v4913 = vpop.f32.mrf.mxu0
      %4914 = vmatprep.mubr.bf16.mxu0 0
      %4915 = vmatmul.mubr.bf16.gmra.mxu0 %v4774
      %v4916 = vpop.f32.mrf.mxu0
      %v4917 = vadd.f32 0.0, %v4916
      %v4918 = vpop.f32.mrf.mxu0
      %v4919 = vpop.f32.mrf.mxu0
      %v4920 = vadd.f32 0.0, %v4919
      %v4921 = vpop.f32.mrf.mxu0
      %4922 = vmatprep.mubr.bf16.mxu0 0
      %4923 = vmatmul.mubr.bf16.gmra.mxu0 %v4775
      %v4924 = vpop.f32.mrf.mxu0
      %v4925 = vadd.f32 0.0, %v4924
      %v4926 = vpop.f32.mrf.mxu0
      %v4927 = vpop.f32.mrf.mxu0
      %v4928 = vadd.f32 0.0, %v4927
      %v4929 = vpop.f32.mrf.mxu0
      %4930 = vmatprep.mubr.bf16.mxu0 0
      %4931 = vmatmul.mubr.bf16.gmra.mxu0 %v4776
      %v4932 = vpop.f32.mrf.mxu0
      %v4933 = vadd.f32 0.0, %v4932
      %v4934 = vpop.f32.mrf.mxu0
      %v4935 = vpop.f32.mrf.mxu0
      %v4936 = vadd.f32 0.0, %v4935
      %v4937 = vpop.f32.mrf.mxu0
      %4938 = vmatprep.mubr.bf16.mxu0 0
      %4939 = vmatmul.mubr.bf16.gmra.mxu0 %v4777
      %v4940 = vpop.f32.mrf.mxu0
      %v4941 = vadd.f32 0.0, %v4940
      %v4942 = vpop.f32.mrf.mxu0
      %v4943 = vpop.f32.mrf.mxu0
      %v4944 = vadd.f32 0.0, %v4943
      %v4945 = vpop.f32.mrf.mxu0
      %4946 = vmatprep.mubr.bf16.mxu0 0
      %4947 = vmatmul.mubr.bf16.gmra.mxu0 %v4778
      %v4948 = vpop.f32.mrf.mxu0
      %v4949 = vadd.f32 0.0, %v4948
      %v4950 = vpop.f32.mrf.mxu0
      %v4951 = vpop.f32.mrf.mxu0
      %v4952 = vadd.f32 0.0, %v4951
      %v4953 = vpop.f32.mrf.mxu0
      %4954 = vmatprep.mubr.bf16.mxu0 0
      %4955 = vmatmul.mubr.bf16.gmra.mxu0 %v4779
      %v4956 = vpop.f32.mrf.mxu0
      %v4957 = vadd.f32 0.0, %v4956
      %v4958 = vpop.f32.mrf.mxu0
      %v4959 = vpop.f32.mrf.mxu0
      %v4960 = vadd.f32 0.0, %v4959
      %v4961 = vpop.f32.mrf.mxu0
      %4962 = vmatprep.mubr.bf16.mxu0 0
      %4963 = vmatmul.mubr.bf16.gmra.mxu0 %v4780
      %v4964 = vpop.f32.mrf.mxu0
      %v4965 = vadd.f32 0.0, %v4964
      %v4966 = vpop.f32.mrf.mxu0
      %v4967 = vpop.f32.mrf.mxu0
      %v4968 = vadd.f32 0.0, %v4967
      %v4969 = vpop.f32.mrf.mxu0
      %4970 = vmatprep.mubr.bf16.mxu0 0
      %4971 = vmatmul.mubr.bf16.gmra.mxu0 %v4781
      %v4972 = vpop.f32.mrf.mxu0
      %v4973 = vadd.f32 0.0, %v4972
      %v4974 = vpop.f32.mrf.mxu0
      %v4975 = vpop.f32.mrf.mxu0
      %v4976 = vadd.f32 0.0, %v4975
      %v4977 = vpop.f32.mrf.mxu0
      %4978 = vmatprep.mubr.bf16.mxu0 0
      %4979 = vmatmul.mubr.bf16.gmra.mxu0 %v4782
      %v4980 = vpop.f32.mrf.mxu0
      %v4981 = vadd.f32 0.0, %v4980
      %v4982 = vpop.f32.mrf.mxu0
      %v4983 = vpop.f32.mrf.mxu0
      %v4984 = vadd.f32 0.0, %v4983
      %v4985 = vpop.f32.mrf.mxu0
      %4986 = vmatprep.mubr.bf16.mxu0 0
      %4987 = vmatmul.mubr.bf16.gmra.mxu0 %v4783
      %v4988 = vpop.f32.mrf.mxu0
      %v4989 = vadd.f32 0.0, %v4988
      %v4990 = vpop.f32.mrf.mxu0
      %v4991 = vpop.f32.mrf.mxu0
      %v4992 = vadd.f32 0.0, %v4991
      %v4993 = vpop.f32.mrf.mxu0
      %4994 = vmatprep.mubr.bf16.mxu0 0
      %4995 = vmatmul.mubr.bf16.gmra.mxu0 %v4784
      %v4996 = vpop.f32.mrf.mxu0
      %v4997 = vadd.f32 0.0, %v4996
      %v4998 = vpop.f32.mrf.mxu0
      %v4999 = vpop.f32.mrf.mxu0
      %v5000 = vadd.f32 0.0, %v4999
      %v5001 = vpop.f32.mrf.mxu0
      %5002 = vmatprep.mubr.bf16.mxu0 0
      %5003 = vmatmul.mubr.bf16.gmra.mxu0 %v4785
      %v5004 = vpop.f32.mrf.mxu0
      %v5005 = vadd.f32 0.0, %v5004
      %v5006 = vpop.f32.mrf.mxu0
      %v5007 = vpop.f32.mrf.mxu0
      %v5008 = vadd.f32 0.0, %v5007
      %v5009 = vpop.f32.mrf.mxu0
      %5010 = vdwg.mxu0
      %v5011 = vadd.f32 %v4513, %v4885
      %v5012 = vadd.f32 %v4514, %v4888
      %v5013 = vadd.f32 %v4515, %v4893
      %v5014 = vadd.f32 %v4516, %v4896
      %v5015 = vadd.f32 %v4517, %v4901
      %v5016 = vadd.f32 %v4518, %v4904
      %v5017 = vadd.f32 %v4519, %v4909
      %v5018 = vadd.f32 %v4520, %v4912
      %v5019 = vadd.f32 %v4521, %v4917
      %v5020 = vadd.f32 %v4522, %v4920
      %v5021 = vadd.f32 %v4523, %v4925
      %v5022 = vadd.f32 %v4524, %v4928
      %v5023 = vadd.f32 %v4525, %v4933
      %v5024 = vadd.f32 %v4526, %v4936
      %v5025 = vadd.f32 %v4527, %v4941
      %v5026 = vadd.f32 %v4528, %v4944
      %v5027 = vadd.f32 %v4529, %v4949
      %v5028 = vadd.f32 %v4530, %v4952
      %v5029 = vadd.f32 %v4531, %v4957
      %v5030 = vadd.f32 %v4532, %v4960
      %v5031 = vadd.f32 %v4533, %v4965
      %v5032 = vadd.f32 %v4534, %v4968
      %v5033 = vadd.f32 %v4535, %v4973
      %v5034 = vadd.f32 %v4536, %v4976
      %v5035 = vadd.f32 %v4537, %v4981
      %v5036 = vadd.f32 %v4538, %v4984
      %v5037 = vadd.f32 %v4539, %v4989
      %v5038 = vadd.f32 %v4540, %v4992
      %v5039 = vadd.f32 %v4541, %v4997
      %v5040 = vadd.f32 %v4542, %v5000
      %v5041 = vadd.f32 %v4543, %v5005
      %v5042 = vadd.f32 %v4544, %v5008
      %v5043 = vld [vmem:[%s2] sm:$0x1]
      %v5045 = vlaneseq
      %v5046 = vshrl.u32 %v5045, 7
      %v5047 = vsub.s32 0, %v5046
      %v5048 = vrot.slane %v5043, %v5047
      %v5050 = vmul.f32 %v5011, %v5048
      %v5051 = vmul.f32 %v5012, %v5048
      %v5052 = vmul.f32 %v5013, %v5048
      %v5053 = vmul.f32 %v5014, %v5048
      %v5054 = vmul.f32 %v5015, %v5048
      %v5055 = vmul.f32 %v5016, %v5048
      %v5056 = vmul.f32 %v5017, %v5048
      %v5057 = vmul.f32 %v5018, %v5048
      %v5058 = vmul.f32 %v5019, %v5048
      %v5059 = vmul.f32 %v5020, %v5048
      %v5060 = vmul.f32 %v5021, %v5048
      %v5061 = vmul.f32 %v5022, %v5048
      %v5062 = vmul.f32 %v5023, %v5048
      %v5063 = vmul.f32 %v5024, %v5048
      %v5064 = vmul.f32 %v5025, %v5048
      %v5065 = vmul.f32 %v5026, %v5048
      %v5066 = vmul.f32 %v5027, %v5048
      %v5067 = vmul.f32 %v5028, %v5048
      %v5068 = vmul.f32 %v5029, %v5048
      %v5069 = vmul.f32 %v5030, %v5048
      %v5070 = vmul.f32 %v5031, %v5048
      %v5071 = vmul.f32 %v5032, %v5048
      %v5072 = vmul.f32 %v5033, %v5048
      %v5073 = vmul.f32 %v5034, %v5048
      %v5074 = vmul.f32 %v5035, %v5048
      %v5075 = vmul.f32 %v5036, %v5048
      %v5076 = vmul.f32 %v5037, %v5048
      %v5077 = vmul.f32 %v5038, %v5048
      %v5078 = vmul.f32 %v5039, %v5048
      %v5079 = vmul.f32 %v5040, %v5048
      %v5080 = vmul.f32 %v5041, %v5048
      %v5081 = vmul.f32 %v5042, %v5048
      %v5082 = vld [vmem:[%s3] sm:$0x1]
      %v5084 = vlaneseq
      %v5085 = vshrl.u32 %v5084, 7
      %v5086 = vsub.s32 0, %v5085
      %v5087 = vrot.slane %v5082, %v5086
      %v5089 = vadd.f32 %v5050, %v5087
      %v5090 = vadd.f32 %v5051, %v5087
      %v5091 = vadd.f32 %v5052, %v5087
      %v5092 = vadd.f32 %v5053, %v5087
      %v5093 = vadd.f32 %v5054, %v5087
      %v5094 = vadd.f32 %v5055, %v5087
      %v5095 = vadd.f32 %v5056, %v5087
      %v5096 = vadd.f32 %v5057, %v5087
      %v5097 = vadd.f32 %v5058, %v5087
      %v5098 = vadd.f32 %v5059, %v5087
      %v5099 = vadd.f32 %v5060, %v5087
      %v5100 = vadd.f32 %v5061, %v5087
      %v5101 = vadd.f32 %v5062, %v5087
      %v5102 = vadd.f32 %v5063, %v5087
      %v5103 = vadd.f32 %v5064, %v5087
      %v5104 = vadd.f32 %v5065, %v5087
      %v5105 = vadd.f32 %v5066, %v5087
      %v5106 = vadd.f32 %v5067, %v5087
      %v5107 = vadd.f32 %v5068, %v5087
      %v5108 = vadd.f32 %v5069, %v5087
      %v5109 = vadd.f32 %v5070, %v5087
      %v5110 = vadd.f32 %v5071, %v5087
      %v5111 = vadd.f32 %v5072, %v5087
      %v5112 = vadd.f32 %v5073, %v5087
      %v5113 = vadd.f32 %v5074, %v5087
      %v5114 = vadd.f32 %v5075, %v5087
      %v5115 = vadd.f32 %v5076, %v5087
      %v5116 = vadd.f32 %v5077, %v5087
      %v5117 = vadd.f32 %v5078, %v5087
      %v5118 = vadd.f32 %v5079, %v5087
      %v5119 = vadd.f32 %v5080, %v5087
      %v5120 = vadd.f32 %v5081, %v5087
      %v5121 = vmax.f32 %v5089, 0.0
      %v5122 = vmax.f32 %v5090, 0.0
      %v5123 = vmax.f32 %v5091, 0.0
      %v5124 = vmax.f32 %v5092, 0.0
      %v5125 = vmax.f32 %v5093, 0.0
      %v5126 = vmax.f32 %v5094, 0.0
      %v5127 = vmax.f32 %v5095, 0.0
      %v5128 = vmax.f32 %v5096, 0.0
      %v5129 = vmax.f32 %v5097, 0.0
      %v5130 = vmax.f32 %v5098, 0.0
      %v5131 = vmax.f32 %v5099, 0.0
      %v5132 = vmax.f32 %v5100, 0.0
      %v5133 = vmax.f32 %v5101, 0.0
      %v5134 = vmax.f32 %v5102, 0.0
      %v5135 = vmax.f32 %v5103, 0.0
      %v5136 = vmax.f32 %v5104, 0.0
      %v5137 = vmax.f32 %v5105, 0.0
      %v5138 = vmax.f32 %v5106, 0.0
      %v5139 = vmax.f32 %v5107, 0.0
      %v5140 = vmax.f32 %v5108, 0.0
      %v5141 = vmax.f32 %v5109, 0.0
      %v5142 = vmax.f32 %v5110, 0.0
      %v5143 = vmax.f32 %v5111, 0.0
      %v5144 = vmax.f32 %v5112, 0.0
      %v5145 = vmax.f32 %v5113, 0.0
      %v5146 = vmax.f32 %v5114, 0.0
      %v5147 = vmax.f32 %v5115, 0.0
      %v5148 = vmax.f32 %v5116, 0.0
      %v5149 = vmax.f32 %v5117, 0.0
      %v5150 = vmax.f32 %v5118, 0.0
      %v5151 = vmax.f32 %v5119, 0.0
      %v5152 = vmax.f32 %v5120, 0.0
      %v5153 = vpack.c.bf16 %v5122, %v5121
      %v5154 = vpack.c.bf16 %v5124, %v5123
      %v5155 = vpack.c.bf16 %v5126, %v5125
      %v5156 = vpack.c.bf16 %v5128, %v5127
      %v5157 = vpack.c.bf16 %v5130, %v5129
      %v5158 = vpack.c.bf16 %v5132, %v5131
      %v5159 = vpack.c.bf16 %v5134, %v5133
      %v5160 = vpack.c.bf16 %v5136, %v5135
      %v5161 = vpack.c.bf16 %v5138, %v5137
      %v5162 = vpack.c.bf16 %v5140, %v5139
      %v5163 = vpack.c.bf16 %v5142, %v5141
      %v5164 = vpack.c.bf16 %v5144, %v5143
      %v5165 = vpack.c.bf16 %v5146, %v5145
      %v5166 = vpack.c.bf16 %v5148, %v5147
      %v5167 = vpack.c.bf16 %v5150, %v5149
      %v5168 = vpack.c.bf16 %v5152, %v5151
      %v5185 = vunpack.c.l.b16 %v5153
      %v5186 = vunpack.c.h.b16 %v5153
      %v5187 = vunpack.c.l.b16 %v5154
      %v5188 = vunpack.c.h.b16 %v5154
      %v5189 = vunpack.c.l.b16 %v5155
      %v5190 = vunpack.c.h.b16 %v5155
      %v5191 = vunpack.c.l.b16 %v5156
      %v5192 = vunpack.c.h.b16 %v5156
      %v5193 = vunpack.c.l.b16 %v5157
      %v5194 = vunpack.c.h.b16 %v5157
      %v5195 = vunpack.c.l.b16 %v5158
      %v5196 = vunpack.c.h.b16 %v5158
      %v5197 = vunpack.c.l.b16 %v5159
      %v5198 = vunpack.c.h.b16 %v5159
      %v5199 = vunpack.c.l.b16 %v5160
      %v5200 = vunpack.c.h.b16 %v5160
      %v5201 = vunpack.c.l.b16 %v5161
      %v5202 = vunpack.c.h.b16 %v5161
      %v5203 = vunpack.c.l.b16 %v5162
      %v5204 = vunpack.c.h.b16 %v5162
      %v5205 = vunpack.c.l.b16 %v5163
      %v5206 = vunpack.c.h.b16 %v5163
      %v5207 = vunpack.c.l.b16 %v5164
      %v5208 = vunpack.c.h.b16 %v5164
      %v5209 = vunpack.c.l.b16 %v5165
      %v5210 = vunpack.c.h.b16 %v5165
      %v5211 = vunpack.c.l.b16 %v5166
      %v5212 = vunpack.c.h.b16 %v5166
      %v5213 = vunpack.c.l.b16 %v5167
      %v5214 = vunpack.c.h.b16 %v5167
      %v5215 = vunpack.c.l.b16 %v5168
      %v5216 = vunpack.c.h.b16 %v5168
      %v5217 = vpack.c.b16 %v5185, %v5185
      %v5218 = vpack.c.b16 %v5186, %v5186
      %v5219 = vpack.c.b16 %v5187, %v5187
      %v5220 = vpack.c.b16 %v5188, %v5188
      %v5221 = vpack.c.b16 %v5189, %v5189
      %v5222 = vpack.c.b16 %v5190, %v5190
      %v5223 = vpack.c.b16 %v5191, %v5191
      %v5224 = vpack.c.b16 %v5192, %v5192
      %v5225 = vpack.c.b16 %v5193, %v5193
      %v5226 = vpack.c.b16 %v5194, %v5194
      %v5227 = vpack.c.b16 %v5195, %v5195
      %v5228 = vpack.c.b16 %v5196, %v5196
      %v5229 = vpack.c.b16 %v5197, %v5197
      %v5230 = vpack.c.b16 %v5198, %v5198
      %v5231 = vpack.c.b16 %v5199, %v5199
      %v5232 = vpack.c.b16 %v5200, %v5200
      %v5233 = vpack.c.b16 %v5201, %v5201
      %v5234 = vpack.c.b16 %v5202, %v5202
      %v5235 = vpack.c.b16 %v5203, %v5203
      %v5236 = vpack.c.b16 %v5204, %v5204
      %v5237 = vpack.c.b16 %v5205, %v5205
      %v5238 = vpack.c.b16 %v5206, %v5206
      %v5239 = vpack.c.b16 %v5207, %v5207
      %v5240 = vpack.c.b16 %v5208, %v5208
      %v5241 = vpack.c.b16 %v5209, %v5209
      %v5242 = vpack.c.b16 %v5210, %v5210
      %v5243 = vpack.c.b16 %v5211, %v5211
      %v5244 = vpack.c.b16 %v5212, %v5212
      %v5245 = vpack.c.b16 %v5213, %v5213
      %v5246 = vpack.c.b16 %v5214, %v5214
      %v5247 = vpack.c.b16 %v5215, %v5215
      %v5248 = vpack.c.b16 %v5216, %v5216
      %5281 = vst [vmem:[%s221] sm:$0xf] %v5217
      %5282 = vst [vmem:[%s221 + $0x4] sm:$0xf] %v5218
      %5283 = vst [vmem:[%s221 + $0x8] sm:$0xf] %v5219
      %5284 = vst [vmem:[%s221 + $0xc] sm:$0xf] %v5220
      %5285 = vst [vmem:[%s221 + $0x10] sm:$0xf] %v5221
      %5286 = vst [vmem:[%s221 + $0x14] sm:$0xf] %v5222
      %5287 = vst [vmem:[%s221 + $0x18] sm:$0xf] %v5223
      %5288 = vst [vmem:[%s221 + $0x1c] sm:$0xf] %v5224
      %5289 = vst [vmem:[%s221 + $0x20] sm:$0xf] %v5225
      %5290 = vst [vmem:[%s221 + $0x24] sm:$0xf] %v5226
      %5291 = vst [vmem:[%s221 + $0x28] sm:$0xf] %v5227
      %5292 = vst [vmem:[%s221 + $0x2c] sm:$0xf] %v5228
      %5293 = vst [vmem:[%s221 + $0x30] sm:$0xf] %v5229
      %5294 = vst [vmem:[%s221 + $0x34] sm:$0xf] %v5230
      %5295 = vst [vmem:[%s221 + $0x38] sm:$0xf] %v5231
      %5296 = vst [vmem:[%s221 + $0x3c] sm:$0xf] %v5232
      %5297 = vst [vmem:[%s221 + $0x40] sm:$0xf] %v5233
      %5298 = vst [vmem:[%s221 + $0x44] sm:$0xf] %v5234
      %5299 = vst [vmem:[%s221 + $0x48] sm:$0xf] %v5235
      %5300 = vst [vmem:[%s221 + $0x4c] sm:$0xf] %v5236
      %5301 = vst [vmem:[%s221 + $0x50] sm:$0xf] %v5237
      %5302 = vst [vmem:[%s221 + $0x54] sm:$0xf] %v5238
      %5303 = vst [vmem:[%s221 + $0x58] sm:$0xf] %v5239
      %5304 = vst [vmem:[%s221 + $0x5c] sm:$0xf] %v5240
      %5305 = vst [vmem:[%s221 + $0x60] sm:$0xf] %v5241
      %5306 = vst [vmem:[%s221 + $0x64] sm:$0xf] %v5242
      %5307 = vst [vmem:[%s221 + $0x68] sm:$0xf] %v5243
      %5308 = vst [vmem:[%s221 + $0x6c] sm:$0xf] %v5244
      %5309 = vst [vmem:[%s221 + $0x70] sm:$0xf] %v5245
      %5310 = vst [vmem:[%s221 + $0x74] sm:$0xf] %v5246
      %5311 = vst [vmem:[%s221 + $0x78] sm:$0xf] %v5247
      %5312 = vst [vmem:[%s221 + $0x7c] sm:$0xf] %v5248
      %s5313 = smul.u32 16, %s20
      %p5314 = scmp.lt.s32.totalorder %s19, 1
      %s5315 = scalar_select %p5314, %s19, 1
      %p5316 = scmp.lt.s32.totalorder %s5313, 15
      %s5317 = scalar_select %p5316, %s5313, 15
      %s5318 = smul.addr %s5317, 2
      %s5319 = smul.addr %s5315, 32
      %s5320 = sadd.s32 %s5318, %s5319
      %s5321 = smul.addr %s5320, 4
      %s5322 = scalar_lea.vmem %s4, %s5321
      // Predicated region
      $region37: #{residual_module_forward.2} parent=35 // pred_check
        %p5323 = pneg %p136
      $region38: #{residual_module_forward.2} parent=35 // pred_check_branch
        %5325 = sbr.rel (%p5323) target = $region40
      $region39: #{residual_module_forward.2} parent=35 // pred_region
        %s5326 = smul.u32 16, %s20
      $region40: #{residual_module_forward.2} parent=35 // pred_fallthru
        _
    $region36: #{residual_module_forward.2} parent=5 // pred_fallthru
      _
    %p5327 = scmp.le.s32.totalorder 2, %s10
    // Predicated region
    $region41: #{residual_module_forward.2} parent=5 // pred_check
      %p5328 = pneg %p5327
    $region42: #{residual_module_forward.2} parent=5 // pred_check_branch
      %5330 = sbr.rel (%p5328) target = $region44
    $region43: #{residual_module_forward.2} parent=5 // pred_region
      %s5331 = ssub.s32 %s10, 2
      // Predicated region
      $region45: #{residual_module_forward.2} parent=43 // pred_check
        %p5332 = pneg %p142
      $region46: #{residual_module_forward.2} parent=43 // pred_check_branch
        %5334 = sbr.rel (%p5332) target = $region48
      $region47: #{residual_module_forward.2} parent=43 // pred_region
        %s5335 = smul.u32 16, %s22
        %p5336 = scmp.lt.s32.totalorder %s21, 1
        %s5337 = scalar_select %p5336, %s21, 1
        %p5338 = scmp.lt.s32.totalorder %s5335, 15
        %s5339 = scalar_select %p5338, %s5335, 15
        %s5340 = smul.addr %s5339, 2
        %s5341 = smul.addr %s5337, 32
        %s5342 = sadd.s32 %s5340, %s5341
        %s5343 = smul.addr %s5342, 4
        %s5344 = scalar_lea.vmem %s4, %s5343
      $region48: #{residual_module_forward.2} parent=43 // pred_fallthru
        _
    $region44: #{residual_module_forward.2} parent=5 // pred_fallthru
      _
  $region6: #{residual_module_forward.2} parent=0 // loop_footer
    %s14 = sadd.s32 1, %s10
  $region7: #{residual_module_forward.2} parent=0 // loop_footer_branch
    %9 = sbr.rel target = $region3
  $region8: #{residual_module_forward.2} parent=0 // loop_exit
    _

// kernel: residual_module_forward.3
$region0: #{residual_module_forward.3}
  #allocation0 [shape = 'u32[]', space=smem, size = 0x4, offset = 0x4, fixed_abs, tag = 'smem constant byte address 0x4 - core index']
  #allocation1 [shape = 'u32[144,128]{1,0:T(1,128)}', space=vmem, size = 0x12000, scoped, tag = 'internal scratch']
  %s0 = inlined_call_operand.vmem [shape: bf16[2,18,24,128], index: 0, kind: input, shape index: {}]
  %s1 = inlined_call_operand.vmem [shape: bf16[9,128,128], index: 1, kind: input, shape index: {}]
  %s2 = inlined_call_operand.vmem [shape: f32[1,128], index: 2, kind: input, shape index: {}]
  %s3 = inlined_call_operand.vmem [shape: f32[1,128], index: 3, kind: input, shape index: {}]
  %s4 = inlined_call_operand.vmem [shape: bf16[2,16,16,128], index: 4, kind: input, shape index: {}]
  %s5 = inlined_call_operand.vmem [shape: f32[2,16,16,128], index: 5, kind: output, shape index: {}]
  %s6 = sld [smem:[#allocation0]]
  $region53: #{residual_module_forward.3} parent=0
    _
  %s8 = ssub.s32 1, %s6
  %s9 = scalar_select 0, %s8, %s6
  loop: start=0, step=1, limit=4
  $region2: #{residual_module_forward.3} parent=0 // loop_pre_header
    _
  $region3: #{residual_module_forward.3} parent=0 // loop_header
    %s11 = sphi 0, %s15
    %p12 = scmp.ge.s32.totalorder %s11, 4
    %s18 = sphi 0, %s30
    %s19 = sphi 0, %s26
    %s20 = sphi 0, %s18
    %s21 = sphi 0, %s19
    %s22 = sphi 0, %s20
    %s23 = sphi 0, %s21
    %s33 = sphi 0, %s35
    %s36 = sphi 0, %s33
    %s37 = sphi 0, %s36
    %s53 = sphi 0, %s37
    %s57 = sphi 0, %s57
    %s59 = sphi 0, %s57
    %s60 = sphi 0, %s59
    %s74 = sphi 0, %s60
    %s78 = sphi 0, %s78
    %s80 = sphi 0, %s78
    %s81 = sphi 0, %s80
    %s95 = sphi 0, %s81
    %s99 = sphi 0, %s99
    %s101 = sphi 0, %s99
    %s102 = sphi 0, %s101
    %s116 = sphi 0, %s102
    %s124 = sphi 0, %s126
    %s127 = sphi 0, %s124
    %s128 = sphi 0, %s127
    %s144 = sphi 0, %s128
    %s152 = sphi 0, %s154
    %s155 = sphi 0, %s152
    %s156 = sphi 0, %s155
    %s172 = sphi 0, %s156
  $region4: #{residual_module_forward.3} parent=0 // loop_header_branch
    %14 = sbr.rel (%p12) target = $region8
  $region5: #{residual_module_forward.3} parent=0 // loop_body
    %s16 = ssub.s32 %s11, 1
    %s17 = ssub.s32 %s11, 2
    %s24 = sadd.s32 1, %s19
    %p25 = scmp.ge.s32.totalorder %s24, 1
    %s26 = scalar_select %p25, 0, %s24
    %s27 = sadd.s32 1, %s18
    %s28 = scalar_select %p25, %s27, %s18
    %p29 = scmp.ge.s32.totalorder %s28, 2
    %s30 = scalar_select %p29, 0, %s28
    %s31 = ssub.s32 %s18, %s30
    %p32 = scmp.eq.s32.totalorder %s31, 0
    %s34 = sadd.s32 %s33, 1
    %s35 = scalar_select %p32, %s33, %s34
    %p38 = pneg %p32
    %p39 = scmp.eq.s32.totalorder %s11, 1
    %p40 = por %p38, %p39
    %p41 = scmp.ne.s32.totalorder %s33, %s36
    %p42 = scmp.eq.s32.totalorder %s11, 0
    %p43 = por %p41, %p42
    %p44 = scmp.ne.s32.totalorder %s33, %s36
    %p45 = scmp.eq.s32.totalorder %s16, 1
    %p46 = por %p44, %p45
    %p47 = scmp.ne.s32.totalorder %s36, %s37
    %p48 = scmp.eq.s32.totalorder %s16, 0
    %p49 = por %p47, %p48
    %p50 = scmp.ne.s32.totalorder %s36, %s37
    %p51 = scmp.eq.s32.totalorder %s17, 1
    %p52 = por %p50, %p51
    %p54 = scmp.ne.s32.totalorder %s37, %s53
    %p55 = scmp.eq.s32.totalorder %s17, 0
    %p56 = por %p54, %p55
    %s58 = sadd.s32 %s57, 1
    %p61 = scmp.eq.s32.totalorder %s11, 1
    %p62 = scmp.ne.s32.totalorder %s57, %s59
    %p63 = scmp.eq.s32.totalorder %s11, 0
    %p64 = por %p62, %p63
    %p65 = scmp.ne.s32.totalorder %s57, %s59
    %p66 = scmp.eq.s32.totalorder %s16, 1
    %p67 = por %p65, %p66
    %p68 = scmp.ne.s32.totalorder %s59, %s60
    %p69 = scmp.eq.s32.totalorder %s16, 0
    %p70 = por %p68, %p69
    %p71 = scmp.ne.s32.totalorder %s59, %s60
    %p72 = scmp.eq.s32.totalorder %s17, 1
    %p73 = por %p71, %p72
    %p75 = scmp.ne.s32.totalorder %s60, %s74
    %p76 = scmp.eq.s32.totalorder %s17, 0
    %p77 = por %p75, %p76
    %s79 = sadd.s32 %s78, 1
    %p82 = scmp.eq.s32.totalorder %s11, 1
    %p83 = scmp.ne.s32.totalorder %s78, %s80
    %p84 = scmp.eq.s32.totalorder %s11, 0
    %p85 = por %p83, %p84
    %p86 = scmp.ne.s32.totalorder %s78, %s80
    %p87 = scmp.eq.s32.totalorder %s16, 1
    %p88 = por %p86, %p87
    %p89 = scmp.ne.s32.totalorder %s80, %s81
    %p90 = scmp.eq.s32.totalorder %s16, 0
    %p91 = por %p89, %p90
    %p92 = scmp.ne.s32.totalorder %s80, %s81
    %p93 = scmp.eq.s32.totalorder %s17, 1
    %p94 = por %p92, %p93
    %p96 = scmp.ne.s32.totalorder %s81, %s95
    %p97 = scmp.eq.s32.totalorder %s17, 0
    %p98 = por %p96, %p97
    %s100 = sadd.s32 %s99, 1
    %p103 = scmp.eq.s32.totalorder %s11, 1
    %p104 = scmp.ne.s32.totalorder %s99, %s101
    %p105 = scmp.eq.s32.totalorder %s11, 0
    %p106 = por %p104, %p105
    %p107 = scmp.ne.s32.totalorder %s99, %s101
    %p108 = scmp.eq.s32.totalorder %s16, 1
    %p109 = por %p107, %p108
    %p110 = scmp.ne.s32.totalorder %s101, %s102
    %p111 = scmp.eq.s32.totalorder %s16, 0
    %p112 = por %p110, %p111
    %p113 = scmp.ne.s32.totalorder %s101, %s102
    %p114 = scmp.eq.s32.totalorder %s17, 1
    %p115 = por %p113, %p114
    %p117 = scmp.ne.s32.totalorder %s102, %s116
    %p118 = scmp.eq.s32.totalorder %s17, 0
    %p119 = por %p117, %p118
    %s120 = ssub.s32 %s18, %s30
    %s121 = ssub.s32 %s19, %s26
    %s122 = sor.u32 %s120, %s121
    %p123 = scmp.eq.s32.totalorder %s122, 0
    %s125 = sadd.s32 %s124, 1
    %s126 = scalar_select %p123, %s124, %s125
    %p129 = pneg %p123
    %p130 = scmp.eq.s32.totalorder %s11, 1
    %p131 = por %p129, %p130
    %p132 = scmp.ne.s32.totalorder %s124, %s127
    %p133 = scmp.eq.s32.totalorder %s11, 0
    %p134 = por %p132, %p133
    %p135 = scmp.ne.s32.totalorder %s124, %s127
    %p136 = scmp.eq.s32.totalorder %s16, 1
    %p137 = por %p135, %p136
    %p138 = scmp.ne.s32.totalorder %s127, %s128
    %p139 = scmp.eq.s32.totalorder %s16, 0
    %p140 = por %p138, %p139
    %p141 = scmp.ne.s32.totalorder %s127, %s128
    %p142 = scmp.eq.s32.totalorder %s17, 1
    %p143 = por %p141, %p142
    %p145 = scmp.ne.s32.totalorder %s128, %s144
    %p146 = scmp.eq.s32.totalorder %s17, 0
    %p147 = por %p145, %p146
    %s148 = ssub.s32 %s18, %s30
    %s149 = ssub.s32 %s19, %s26
    %s150 = sor.u32 %s148, %s149
    %p151 = scmp.eq.s32.totalorder %s150, 0
    %s153 = sadd.s32 %s152, 1
    %s154 = scalar_select %p151, %s152, %s153
    %p157 = pneg %p151
    %p158 = scmp.eq.s32.totalorder %s11, 1
    %p159 = por %p157, %p158
    %p160 = scmp.ne.s32.totalorder %s152, %s155
    %p161 = scmp.eq.s32.totalorder %s11, 0
    %p162 = por %p160, %p161
    %p163 = scmp.ne.s32.totalorder %s152, %s155
    %p164 = scmp.eq.s32.totalorder %s16, 1
    %p165 = por %p163, %p164
    %p166 = scmp.ne.s32.totalorder %s155, %s156
    %p167 = scmp.eq.s32.totalorder %s16, 0
    %p168 = por %p166, %p167
    %p169 = scmp.ne.s32.totalorder %s155, %s156
    %p170 = scmp.eq.s32.totalorder %s17, 1
    %p171 = por %p169, %p170
    %p173 = scmp.ne.s32.totalorder %s156, %s172
    %p174 = scmp.eq.s32.totalorder %s17, 0
    %p175 = por %p173, %p174
    %p176 = scmp.le.s32.totalorder 1, %s11
    %p177 = scmp.lt.s32.totalorder %s11, 3
    %p178 = pnand %p176, %p177
    %p179 = pneg %p178
    // Predicated region
    $region9: #{residual_module_forward.3} parent=5 // pred_check
      _
    $region10: #{residual_module_forward.3} parent=5 // pred_check_branch
      %181 = sbr.rel (%p178) target = $region12
    $region11: #{residual_module_forward.3} parent=5 // pred_region
      %s182 = ssub.s32 %s11, 1
      // Predicated region
      $region13: #{residual_module_forward.3} parent=11 // pred_check
        %p183 = pneg %p49
      $region14: #{residual_module_forward.3} parent=11 // pred_check_branch
        %185 = sbr.rel (%p183) target = $region16
      $region15: #{residual_module_forward.3} parent=11 // pred_region
        %p186 = scmp.lt.s32.totalorder %s20, 1
        %s187 = scalar_select %p186, %s20, 1
        %s188 = smul.addr %s187, 54
        %s189 = smul.addr %s188, 4
        %s190 = scalar_lea.vmem %s0, %s189
      $region16: #{residual_module_forward.3} parent=11 // pred_fallthru
        _
      // Predicated region
      $region17: #{residual_module_forward.3} parent=11 // pred_check
        %p191 = pneg %p70
      $region18: #{residual_module_forward.3} parent=11 // pred_check_branch
        %193 = sbr.rel (%p191) target = $region20
      $region19: #{residual_module_forward.3} parent=11 // pred_region
        _
      $region20: #{residual_module_forward.3} parent=11 // pred_fallthru
        _
      // Predicated region
      $region21: #{residual_module_forward.3} parent=11 // pred_check
        %p194 = pneg %p91
      $region22: #{residual_module_forward.3} parent=11 // pred_check_branch
        %196 = sbr.rel (%p194) target = $region24
      $region23: #{residual_module_forward.3} parent=11 // pred_region
        _
      $region24: #{residual_module_forward.3} parent=11 // pred_fallthru
        _
      // Predicated region
      $region25: #{residual_module_forward.3} parent=11 // pred_check
        %p197 = pneg %p112
      $region26: #{residual_module_forward.3} parent=11 // pred_check_branch
        %199 = sbr.rel (%p197) target = $region28
      $region27: #{residual_module_forward.3} parent=11 // pred_region
        _
      $region28: #{residual_module_forward.3} parent=11 // pred_fallthru
        _
    $region12: #{residual_module_forward.3} parent=5 // pred_fallthru
      _
    %p200 = scmp.lt.s32.totalorder %s11, 2
    // Predicated region
    $region29: #{residual_module_forward.3} parent=5 // pred_check
      %p201 = pneg %p200
    $region30: #{residual_module_forward.3} parent=5 // pred_check_branch
      %203 = sbr.rel (%p201) target = $region32
    $region31: #{residual_module_forward.3} parent=5 // pred_region
      // Predicated region
      $region33: #{residual_module_forward.3} parent=31 // pred_check
        %p204 = pneg %p134
      $region34: #{residual_module_forward.3} parent=31 // pred_check_branch
        %206 = sbr.rel (%p204) target = $region36
      $region35: #{residual_module_forward.3} parent=31 // pred_region
        %s207 = smul.u32 16, %s19
        %p208 = scmp.lt.s32.totalorder %s18, 1
        %s209 = scalar_select %p208, %s18, 1
        %p210 = scmp.lt.s32.totalorder %s207, 15
        %s211 = scalar_select %p210, %s207, 15
        %s212 = smul.addr %s211, 2
        %s213 = smul.addr %s209, 32
        %s214 = sadd.s32 %s212, %s213
        %s215 = smul.addr %s214, 4
        %s216 = scalar_lea.vmem %s4, %s215
        %s217 = smul.u32 16, %s19
      $region36: #{residual_module_forward.3} parent=31 // pred_fallthru
        _
    $region32: #{residual_module_forward.3} parent=5 // pred_fallthru
      _
    %p218 = scmp.le.s32.totalorder 1, %s11
    %p219 = scmp.lt.s32.totalorder %s11, 3
    %p220 = pnand %p218, %p219
    %p221 = pneg %p220
    // Predicated region
    $region37: #{residual_module_forward.3} parent=5 // pred_check
      _
    $region38: #{residual_module_forward.3} parent=5 // pred_check_branch
      %223 = sbr.rel (%p220) target = $region40
    $region39: #{residual_module_forward.3} parent=5 // pred_region
      %s224 = ssub.s32 %s11, 1
      %p225 = scmp.lt.s32.totalorder %s20, 1
      %s226 = scalar_select %p225, %s20, 1
      %s227 = smul.addr %s226, 54
      %s228 = smul.addr %s227, 4
      %s229 = scalar_lea.vmem %s0, %s228
      %p230 = pneg %p49
      %p231 = pneg %p46
      %p232 = pneg %p70
      %p233 = pneg %p67
      %p234 = pneg %p91
      %p235 = pneg %p88
      %p236 = pneg %p112
      %p237 = pneg %p109
      %s238 = smul.u32 16, %s21
      %p239 = scmp.lt.s32.totalorder %s20, 1
      %s240 = scalar_select %p239, %s20, 1
      %p241 = scmp.lt.s32.totalorder %s238, 15
      %s242 = scalar_select %p241, %s238, 15
      %s243 = smul.addr %s242, 2
      %s244 = smul.addr %s240, 32
      %s245 = sadd.s32 %s243, %s244
      %s246 = smul.addr %s245, 4
      %s247 = scalar_lea.vmem %s4, %s246
      %p248 = pneg %p140
      %p249 = pneg %p137
      %p250 = pneg %p168
      %p251 = pneg %p165
      %s252 = smul.u32 16, %s21
      %p253 = scmp.lt.s32.totalorder %s20, 1
      %s254 = scalar_select %p253, %s20, 1
      %p255 = scmp.lt.s32.totalorder %s252, 15
      %s256 = scalar_select %p255, %s252, 15
      %s257 = smul.addr %s256, 2
      %s258 = smul.addr %s254, 32
      %s259 = sadd.s32 %s257, %s258
      %s260 = smul.addr %s259, 8
      %s261 = scalar_lea.vmem %s5, %s260
      %p262 = scmp.lt.s32.totalorder %s20, 1
      %s263 = scalar_select %p262, %s20, 1
      %s264 = smul.addr %s263, 54
      %s265 = smul.addr %s264, 4
      %s266 = scalar_lea.vmem %s0, %s265
      %s267 = smul.u32 16, %s21
      %p268 = scmp.lt.s32.totalorder %s20, 1
      %s269 = scalar_select %p268, %s20, 1
      %p270 = scmp.lt.s32.totalorder %s267, 15
      %s271 = scalar_select %p270, %s267, 15
      %s272 = smul.addr %s271, 2
      %s273 = smul.addr %s269, 32
      %s274 = sadd.s32 %s272, %s273
      %s275 = smul.addr %s274, 4
      %s276 = scalar_lea.vmem %s4, %s275
      %s277 = smul.u32 16, %s21
      %s278 = smul.u32 16, %s21
      %p279 = scmp.lt.s32.totalorder %s20, 1
      %s280 = scalar_select %p279, %s20, 1
      %p281 = scmp.lt.s32.totalorder %s278, 15
      %s282 = scalar_select %p281, %s278, 15
      %s283 = smul.addr %s282, 2
      %s284 = smul.addr %s280, 32
      %s285 = sadd.s32 %s283, %s284
      %s286 = smul.addr %s285, 8
      %s287 = scalar_lea.vmem %s5, %s286
      %s288 = smul.u32 16, %s21
      %s290 = smul.u32 %s21, 16
      %s291 = smul.u32 %s290, 3
      %s292 = smul.addr %s291, 4
      %s293 = scalar_lea.vmem %s266, %s292
      %v294 = vld [vmem:[%s293] sm:$0xf]
      %v295 = vld [vmem:[%s293 + $0x4] sm:$0xf]
      %v296 = vld [vmem:[%s293 + $0xc] sm:$0xf]
      %v297 = vld [vmem:[%s293 + $0x10] sm:$0xf]
      %v298 = vld [vmem:[%s293 + $0x18] sm:$0xf]
      %v299 = vld [vmem:[%s293 + $0x1c] sm:$0xf]
      %v300 = vld [vmem:[%s293 + $0x24] sm:$0xf]
      %v301 = vld [vmem:[%s293 + $0x28] sm:$0xf]
      %v302 = vld [vmem:[%s293 + $0x30] sm:$0xf]
      %v303 = vld [vmem:[%s293 + $0x34] sm:$0xf]
      %v304 = vld [vmem:[%s293 + $0x3c] sm:$0xf]
      %v305 = vld [vmem:[%s293 + $0x40] sm:$0xf]
      %v306 = vld [vmem:[%s293 + $0x48] sm:$0xf]
      %v307 = vld [vmem:[%s293 + $0x4c] sm:$0xf]
      %v308 = vld [vmem:[%s293 + $0x54] sm:$0xf]
      %v309 = vld [vmem:[%s293 + $0x58] sm:$0xf]
      %v310 = vld [vmem:[%s293 + $0x60] sm:$0xf]
      %v311 = vld [vmem:[%s293 + $0x64] sm:$0xf]
      %v312 = vld [vmem:[%s293 + $0x6c] sm:$0xf]
      %v313 = vld [vmem:[%s293 + $0x70] sm:$0xf]
      %v314 = vld [vmem:[%s293 + $0x78] sm:$0xf]
      %v315 = vld [vmem:[%s293 + $0x7c] sm:$0xf]
      %v316 = vld [vmem:[%s293 + $0x84] sm:$0xf]
      %v317 = vld [vmem:[%s293 + $0x88] sm:$0xf]
      %v318 = vld [vmem:[%s293 + $0x90] sm:$0xf]
      %v319 = vld [vmem:[%s293 + $0x94] sm:$0xf]
      %v320 = vld [vmem:[%s293 + $0x9c] sm:$0xf]
      %v321 = vld [vmem:[%s293 + $0xa0] sm:$0xf]
      %v322 = vld [vmem:[%s293 + $0xa8] sm:$0xf]
      %v323 = vld [vmem:[%s293 + $0xac] sm:$0xf]
      %v324 = vld [vmem:[%s293 + $0xb4] sm:$0xf]
      %v325 = vld [vmem:[%s293 + $0xb8] sm:$0xf]
      %v326 = vld [vmem:[%s1] sm:$0xf]
      %v327 = vld [vmem:[%s1 + $0x4] sm:$0xf]
      %v328 = vld [vmem:[%s1 + $0x8] sm:$0xf]
      %v329 = vld [vmem:[%s1 + $0xc] sm:$0xf]
      %v330 = vld [vmem:[%s1 + $0x10] sm:$0xf]
      %v331 = vld [vmem:[%s1 + $0x14] sm:$0xf]
      %v332 = vld [vmem:[%s1 + $0x18] sm:$0xf]
      %v333 = vld [vmem:[%s1 + $0x1c] sm:$0xf]
      %v334 = vld [vmem:[%s1 + $0x20] sm:$0xf]
      %v335 = vld [vmem:[%s1 + $0x24] sm:$0xf]
      %v336 = vld [vmem:[%s1 + $0x28] sm:$0xf]
      %v337 = vld [vmem:[%s1 + $0x2c] sm:$0xf]
      %v338 = vld [vmem:[%s1 + $0x30] sm:$0xf]
      %v339 = vld [vmem:[%s1 + $0x34] sm:$0xf]
      %v340 = vld [vmem:[%s1 + $0x38] sm:$0xf]
      %v341 = vld [vmem:[%s1 + $0x3c] sm:$0xf]
      %v342 = vld [vmem:[%s293 + $0x8] sm:$0x1]
      %v343 = vld [vmem:[%s293 + $0x14] sm:$0x1]
      %v344 = vld [vmem:[%s293 + $0x20] sm:$0x1]
      %v345 = vld [vmem:[%s293 + $0x2c] sm:$0x1]
      %v346 = vld [vmem:[%s293 + $0x38] sm:$0x1]
      %v347 = vld [vmem:[%s293 + $0x44] sm:$0x1]
      %v348 = vld [vmem:[%s293 + $0x50] sm:$0x1]
      %v349 = vld [vmem:[%s293 + $0x5c] sm:$0x1]
      %v350 = vld [vmem:[%s293 + $0x68] sm:$0x1]
      %v351 = vld [vmem:[%s293 + $0x74] sm:$0x1]
      %v352 = vld [vmem:[%s293 + $0x80] sm:$0x1]
      %v353 = vld [vmem:[%s293 + $0x8c] sm:$0x1]
      %v354 = vld [vmem:[%s293 + $0x98] sm:$0x1]
      %v355 = vld [vmem:[%s293 + $0xa4] sm:$0x1]
      %v356 = vld [vmem:[%s293 + $0xb0] sm:$0x1]
      %v357 = vld [vmem:[%s293 + $0xbc] sm:$0x1]
      %vm358 = vsmask.f32 3328
      %vm359 = vsmask.f32 7440
      %vm360 = vmor %vm358, %vm359
      %v362 = vshrl.u32 %v294, 16
      %v364 = vrot.slane %v362, 4
      %v365 = vshll.u32 %v294, 16
      %v367 = vrot.slane %v365, 5
      %v368 = vor.u32 %v364, %v367
      %v369 = vrot.slane %v368, 4
      %v371 = vshll.u32 %v295, 16
      %v373 = vrot.slane %v371, 5
      %v374 = vsel %vm360, %v369, %v373
      %v375 = vshrl.u32 %v295, 16
      %v377 = vrot.slane %v375, 4
      %v378 = vor.u32 %v377, %v373
      %v379 = vrot.slane %v378, 4
      %v381 = vshll.u32 %v342, 16
      %v383 = vrot.slane %v381, 5
      %v384 = vsel %vm360, %v379, %v383
      %v386 = vshrl.u32 %v296, 16
      %v388 = vrot.slane %v386, 4
      %v389 = vshll.u32 %v296, 16
      %v391 = vrot.slane %v389, 5
      %v392 = vor.u32 %v388, %v391
      %v393 = vrot.slane %v392, 4
      %v395 = vshll.u32 %v297, 16
      %v397 = vrot.slane %v395, 5
      %v398 = vsel %vm360, %v393, %v397
      %v399 = vshrl.u32 %v297, 16
      %v401 = vrot.slane %v399, 4
      %v402 = vor.u32 %v401, %v397
      %v403 = vrot.slane %v402, 4
      %v405 = vshll.u32 %v343, 16
      %v407 = vrot.slane %v405, 5
      %v408 = vsel %vm360, %v403, %v407
      %v410 = vshrl.u32 %v298, 16
      %v412 = vrot.slane %v410, 4
      %v413 = vshll.u32 %v298, 16
      %v415 = vrot.slane %v413, 5
      %v416 = vor.u32 %v412, %v415
      %v417 = vrot.slane %v416, 4
      %v419 = vshll.u32 %v299, 16
      %v421 = vrot.slane %v419, 5
      %v422 = vsel %vm360, %v417, %v421
      %v423 = vshrl.u32 %v299, 16
      %v425 = vrot.slane %v423, 4
      %v426 = vor.u32 %v425, %v421
      %v427 = vrot.slane %v426, 4
      %v429 = vshll.u32 %v344, 16
      %v431 = vrot.slane %v429, 5
      %v432 = vsel %vm360, %v427, %v431
      %v434 = vshrl.u32 %v300, 16
      %v436 = vrot.slane %v434, 4
      %v437 = vshll.u32 %v300, 16
      %v439 = vrot.slane %v437, 5
      %v440 = vor.u32 %v436, %v439
      %v441 = vrot.slane %v440, 4
      %v443 = vshll.u32 %v301, 16
      %v445 = vrot.slane %v443, 5
      %v446 = vsel %vm360, %v441, %v445
      %v447 = vshrl.u32 %v301, 16
      %v449 = vrot.slane %v447, 4
      %v450 = vor.u32 %v449, %v445
      %v451 = vrot.slane %v450, 4
      %v453 = vshll.u32 %v345, 16
      %v455 = vrot.slane %v453, 5
      %v456 = vsel %vm360, %v451, %v455
      %v458 = vshrl.u32 %v302, 16
      %v460 = vrot.slane %v458, 4
      %v461 = vshll.u32 %v302, 16
      %v463 = vrot.slane %v461, 5
      %v464 = vor.u32 %v460, %v463
      %v465 = vrot.slane %v464, 4
      %v467 = vshll.u32 %v303, 16
      %v469 = vrot.slane %v467, 5
      %v470 = vsel %vm360, %v465, %v469
      %v471 = vshrl.u32 %v303, 16
      %v473 = vrot.slane %v471, 4
      %v474 = vor.u32 %v473, %v469
      %v475 = vrot.slane %v474, 4
      %v477 = vshll.u32 %v346, 16
      %v479 = vrot.slane %v477, 5
      %v480 = vsel %vm360, %v475, %v479
      %v482 = vshrl.u32 %v304, 16
      %v484 = vrot.slane %v482, 4
      %v485 = vshll.u32 %v304, 16
      %v487 = vrot.slane %v485, 5
      %v488 = vor.u32 %v484, %v487
      %v489 = vrot.slane %v488, 4
      %v491 = vshll.u32 %v305, 16
      %v493 = vrot.slane %v491, 5
      %v494 = vsel %vm360, %v489, %v493
      %v495 = vshrl.u32 %v305, 16
      %v497 = vrot.slane %v495, 4
      %v498 = vor.u32 %v497, %v493
      %v499 = vrot.slane %v498, 4
      %v501 = vshll.u32 %v347, 16
      %v503 = vrot.slane %v501, 5
      %v504 = vsel %vm360, %v499, %v503
      %v506 = vshrl.u32 %v306, 16
      %v508 = vrot.slane %v506, 4
      %v509 = vshll.u32 %v306, 16
      %v511 = vrot.slane %v509, 5
      %v512 = vor.u32 %v508, %v511
      %v513 = vrot.slane %v512, 4
      %v515 = vshll.u32 %v307, 16
      %v517 = vrot.slane %v515, 5
      %v518 = vsel %vm360, %v513, %v517
      %v519 = vshrl.u32 %v307, 16
      %v521 = vrot.slane %v519, 4
      %v522 = vor.u32 %v521, %v517
      %v523 = vrot.slane %v522, 4
      %v525 = vshll.u32 %v348, 16
      %v527 = vrot.slane %v525, 5
      %v528 = vsel %vm360, %v523, %v527
      %v530 = vshrl.u32 %v308, 16
      %v532 = vrot.slane %v530, 4
      %v533 = vshll.u32 %v308, 16
      %v535 = vrot.slane %v533, 5
      %v536 = vor.u32 %v532, %v535
      %v537 = vrot.slane %v536, 4
      %v539 = vshll.u32 %v309, 16
      %v541 = vrot.slane %v539, 5
      %v542 = vsel %vm360, %v537, %v541
      %v543 = vshrl.u32 %v309, 16
      %v545 = vrot.slane %v543, 4
      %v546 = vor.u32 %v545, %v541
      %v547 = vrot.slane %v546, 4
      %v549 = vshll.u32 %v349, 16
      %v551 = vrot.slane %v549, 5
      %v552 = vsel %vm360, %v547, %v551
      %v554 = vshrl.u32 %v310, 16
      %v556 = vrot.slane %v554, 4
      %v557 = vshll.u32 %v310, 16
      %v559 = vrot.slane %v557, 5
      %v560 = vor.u32 %v556, %v559
      %v561 = vrot.slane %v560, 4
      %v563 = vshll.u32 %v311, 16
      %v565 = vrot.slane %v563, 5
      %v566 = vsel %vm360, %v561, %v565
      %v567 = vshrl.u32 %v311, 16
      %v569 = vrot.slane %v567, 4
      %v570 = vor.u32 %v569, %v565
      %v571 = vrot.slane %v570, 4
      %v573 = vshll.u32 %v350, 16
      %v575 = vrot.slane %v573, 5
      %v576 = vsel %vm360, %v571, %v575
      %v578 = vshrl.u32 %v312, 16
      %v580 = vrot.slane %v578, 4
      %v581 = vshll.u32 %v312, 16
      %v583 = vrot.slane %v581, 5
      %v584 = vor.u32 %v580, %v583
      %v585 = vrot.slane %v584, 4
      %v587 = vshll.u32 %v313, 16
      %v589 = vrot.slane %v587, 5
      %v590 = vsel %vm360, %v585, %v589
      %v591 = vshrl.u32 %v313, 16
      %v593 = vrot.slane %v591, 4
      %v594 = vor.u32 %v593, %v589
      %v595 = vrot.slane %v594, 4
      %v597 = vshll.u32 %v351, 16
      %v599 = vrot.slane %v597, 5
      %v600 = vsel %vm360, %v595, %v599
      %v602 = vshrl.u32 %v314, 16
      %v604 = vrot.slane %v602, 4
      %v605 = vshll.u32 %v314, 16
      %v607 = vrot.slane %v605, 5
      %v608 = vor.u32 %v604, %v607
      %v609 = vrot.slane %v608, 4
      %v611 = vshll.u32 %v315, 16
      %v613 = vrot.slane %v611, 5
      %v614 = vsel %vm360, %v609, %v613
      %v615 = vshrl.u32 %v315, 16
      %v617 = vrot.slane %v615, 4
      %v618 = vor.u32 %v617, %v613
      %v619 = vrot.slane %v618, 4
      %v621 = vshll.u32 %v352, 16
      %v623 = vrot.slane %v621, 5
      %v624 = vsel %vm360, %v619, %v623
      %v626 = vshrl.u32 %v316, 16
      %v628 = vrot.slane %v626, 4
      %v629 = vshll.u32 %v316, 16
      %v631 = vrot.slane %v629, 5
      %v632 = vor.u32 %v628, %v631
      %v633 = vrot.slane %v632, 4
      %v635 = vshll.u32 %v317, 16
      %v637 = vrot.slane %v635, 5
      %v638 = vsel %vm360, %v633, %v637
      %v639 = vshrl.u32 %v317, 16
      %v641 = vrot.slane %v639, 4
      %v642 = vor.u32 %v641, %v637
      %v643 = vrot.slane %v642, 4
      %v645 = vshll.u32 %v353, 16
      %v647 = vrot.slane %v645, 5
      %v648 = vsel %vm360, %v643, %v647
      %v650 = vshrl.u32 %v318, 16
      %v652 = vrot.slane %v650, 4
      %v653 = vshll.u32 %v318, 16
      %v655 = vrot.slane %v653, 5
      %v656 = vor.u32 %v652, %v655
      %v657 = vrot.slane %v656, 4
      %v659 = vshll.u32 %v319, 16
      %v661 = vrot.slane %v659, 5
      %v662 = vsel %vm360, %v657, %v661
      %v663 = vshrl.u32 %v319, 16
      %v665 = vrot.slane %v663, 4
      %v666 = vor.u32 %v665, %v661
      %v667 = vrot.slane %v666, 4
      %v669 = vshll.u32 %v354, 16
      %v671 = vrot.slane %v669, 5
      %v672 = vsel %vm360, %v667, %v671
      %v674 = vshrl.u32 %v320, 16
      %v676 = vrot.slane %v674, 4
      %v677 = vshll.u32 %v320, 16
      %v679 = vrot.slane %v677, 5
      %v680 = vor.u32 %v676, %v679
      %v681 = vrot.slane %v680, 4
      %v683 = vshll.u32 %v321, 16
      %v685 = vrot.slane %v683, 5
      %v686 = vsel %vm360, %v681, %v685
      %v687 = vshrl.u32 %v321, 16
      %v689 = vrot.slane %v687, 4
      %v690 = vor.u32 %v689, %v685
      %v691 = vrot.slane %v690, 4
      %v693 = vshll.u32 %v355, 16
      %v695 = vrot.slane %v693, 5
      %v696 = vsel %vm360, %v691, %v695
      %v698 = vshrl.u32 %v322, 16
      %v700 = vrot.slane %v698, 4
      %v701 = vshll.u32 %v322, 16
      %v703 = vrot.slane %v701, 5
      %v704 = vor.u32 %v700, %v703
      %v705 = vrot.slane %v704, 4
      %v707 = vshll.u32 %v323, 16
      %v709 = vrot.slane %v707, 5
      %v710 = vsel %vm360, %v705, %v709
      %v711 = vshrl.u32 %v323, 16
      %v713 = vrot.slane %v711, 4
      %v714 = vor.u32 %v713, %v709
      %v715 = vrot.slane %v714, 4
      %v717 = vshll.u32 %v356, 16
      %v719 = vrot.slane %v717, 5
      %v720 = vsel %vm360, %v715, %v719
      %v722 = vshrl.u32 %v324, 16
      %v724 = vrot.slane %v722, 4
      %v725 = vshll.u32 %v324, 16
      %v727 = vrot.slane %v725, 5
      %v728 = vor.u32 %v724, %v727
      %v729 = vrot.slane %v728, 4
      %v731 = vshll.u32 %v325, 16
      %v733 = vrot.slane %v731, 5
      %v734 = vsel %vm360, %v729, %v733
      %v735 = vshrl.u32 %v325, 16
      %v737 = vrot.slane %v735, 4
      %v738 = vor.u32 %v737, %v733
      %v739 = vrot.slane %v738, 4
      %v741 = vshll.u32 %v357, 16
      %v743 = vrot.slane %v741, 5
      %v744 = vsel %vm360, %v739, %v743
      %s745 = scalar_lea.vmem %s1, 64
      %v746 = vld [vmem:[%s745] sm:$0xf]
      %v747 = vld [vmem:[%s745 + $0x4] sm:$0xf]
      %v748 = vld [vmem:[%s745 + $0x8] sm:$0xf]
      %v749 = vld [vmem:[%s745 + $0xc] sm:$0xf]
      %v750 = vld [vmem:[%s745 + $0x10] sm:$0xf]
      %v751 = vld [vmem:[%s745 + $0x14] sm:$0xf]
      %v752 = vld [vmem:[%s745 + $0x18] sm:$0xf]
      %v753 = vld [vmem:[%s745 + $0x1c] sm:$0xf]
      %v754 = vld [vmem:[%s745 + $0x20] sm:$0xf]
      %v755 = vld [vmem:[%s745 + $0x24] sm:$0xf]
      %v756 = vld [vmem:[%s745 + $0x28] sm:$0xf]
      %v757 = vld [vmem:[%s745 + $0x2c] sm:$0xf]
      %v758 = vld [vmem:[%s745 + $0x30] sm:$0xf]
      %v759 = vld [vmem:[%s745 + $0x34] sm:$0xf]
      %v760 = vld [vmem:[%s745 + $0x38] sm:$0xf]
      %v761 = vld [vmem:[%s745 + $0x3c] sm:$0xf]
      %v762 = vunpack.c.l.b16 %v374
      %v763 = vunpack.c.l.b16 %v384
      %v764 = vunpack.c.l.b16 %v398
      %v765 = vunpack.c.l.b16 %v408
      %v766 = vunpack.c.l.b16 %v422
      %v767 = vunpack.c.l.b16 %v432
      %v768 = vunpack.c.l.b16 %v446
      %v769 = vunpack.c.l.b16 %v456
      %v770 = vunpack.c.l.b16 %v470
      %v771 = vunpack.c.l.b16 %v480
      %v772 = vunpack.c.l.b16 %v494
      %v773 = vunpack.c.l.b16 %v504
      %v774 = vunpack.c.l.b16 %v518
      %v775 = vunpack.c.l.b16 %v528
      %v776 = vunpack.c.l.b16 %v542
      %v777 = vunpack.c.l.b16 %v552
      %v778 = vunpack.c.l.b16 %v566
      %v779 = vunpack.c.l.b16 %v576
      %v780 = vunpack.c.l.b16 %v590
      %v781 = vunpack.c.l.b16 %v600
      %v782 = vunpack.c.l.b16 %v614
      %v783 = vunpack.c.l.b16 %v624
      %v784 = vunpack.c.l.b16 %v638
      %v785 = vunpack.c.l.b16 %v648
      %v786 = vunpack.c.l.b16 %v662
      %v787 = vunpack.c.l.b16 %v672
      %v788 = vunpack.c.l.b16 %v686
      %v789 = vunpack.c.l.b16 %v696
      %v790 = vunpack.c.l.b16 %v710
      %v791 = vunpack.c.l.b16 %v720
      %v792 = vunpack.c.l.b16 %v734
      %v793 = vunpack.c.l.b16 %v744
      %v794 = vpack.c.b16 %v763, %v762
      %v795 = vpack.c.b16 %v765, %v764
      %v796 = vpack.c.b16 %v767, %v766
      %v797 = vpack.c.b16 %v769, %v768
      %v798 = vpack.c.b16 %v771, %v770
      %v799 = vpack.c.b16 %v773, %v772
      %v800 = vpack.c.b16 %v775, %v774
      %v801 = vpack.c.b16 %v777, %v776
      %v802 = vpack.c.b16 %v779, %v778
      %v803 = vpack.c.b16 %v781, %v780
      %v804 = vpack.c.b16 %v783, %v782
      %v805 = vpack.c.b16 %v785, %v784
      %v806 = vpack.c.b16 %v787, %v786
      %v807 = vpack.c.b16 %v789, %v788
      %v808 = vpack.c.b16 %v791, %v790
      %v809 = vpack.c.b16 %v793, %v792
      %v842 = vunpack.c.l.b16 %v746
      %v843 = vunpack.c.l.b16 %v747
      %v844 = vunpack.c.l.b16 %v748
      %v845 = vunpack.c.l.b16 %v749
      %v846 = vunpack.c.l.b16 %v750
      %v847 = vunpack.c.l.b16 %v751
      %v848 = vunpack.c.l.b16 %v752
      %v849 = vunpack.c.l.b16 %v753
      %v850 = vunpack.c.l.b16 %v754
      %v851 = vunpack.c.l.b16 %v755
      %v852 = vunpack.c.l.b16 %v756
      %v853 = vunpack.c.l.b16 %v757
      %v854 = vunpack.c.l.b16 %v758
      %v855 = vunpack.c.l.b16 %v759
      %v856 = vunpack.c.l.b16 %v760
      %v857 = vunpack.c.l.b16 %v761
      %v858 = vpack.c.b16 %v843, %v842
      %v859 = vpack.c.b16 %v845, %v844
      %v860 = vpack.c.b16 %v847, %v846
      %v861 = vpack.c.b16 %v849, %v848
      %v862 = vpack.c.b16 %v851, %v850
      %v863 = vpack.c.b16 %v853, %v852
      %v864 = vpack.c.b16 %v855, %v854
      %v865 = vpack.c.b16 %v857, %v856
      %874 = vmatprep.subr.bf16.mxu0 0
      %875 = vmatpush1.bf16.msra.mxu0 %v865
      %876 = vmatprep.subr.bf16.mxu0 0
      %877 = vmatpush1.bf16.msra.mxu0 %v864
      %878 = vmatprep.subr.bf16.mxu0 0
      %879 = vmatpush1.bf16.msra.mxu0 %v863
      %880 = vmatprep.subr.bf16.mxu0 0
      %881 = vmatpush1.bf16.msra.mxu0 %v862
      %882 = vmatprep.subr.bf16.mxu0 0
      %883 = vmatpush1.bf16.msra.mxu0 %v861
      %884 = vmatprep.subr.bf16.mxu0 0
      %885 = vmatpush1.bf16.msra.mxu0 %v860
      %886 = vmatprep.subr.bf16.mxu0 0
      %887 = vmatpush1.bf16.msra.mxu0 %v859
      %888 = vmatprep.subr.bf16.mxu0 0
      %889 = vmatpush1.bf16.msra.mxu0 %v858
      %890 = vmatprep.subr.bf16.mxu0 0
      %891 = vmatpush2.bf16.msra.mxu0 0
      %892 = vmatprep.subr.bf16.mxu0 0
      %893 = vmatpush2.bf16.msra.mxu0 0
      %894 = vmatprep.subr.bf16.mxu0 0
      %895 = vmatpush2.bf16.msra.mxu0 0
      %896 = vmatprep.subr.bf16.mxu0 0
      %897 = vmatpush2.bf16.msra.mxu0 0
      %898 = vmatprep.subr.bf16.mxu0 0
      %899 = vmatpush2.bf16.msra.mxu0 0
      %900 = vmatprep.subr.bf16.mxu0 0
      %901 = vmatpush2.bf16.msra.mxu0 0
      %902 = vmatprep.subr.bf16.mxu0 0
      %903 = vmatpush2.bf16.msra.mxu0 0
      %904 = vmatprep.subr.bf16.mxu0 0
      %905 = vmatpush2.bf16.msra.mxu0 0
      %906 = vmatprep.mubr.bf16.mxu0 0
      %907 = vmatmul.mubr.bf16.gmra.mxu0 %v794
      %v908 = vpop.f32.mrf.mxu0
      %v909 = vadd.f32 0.0, %v908
      %v910 = vpop.f32.mrf.mxu0
      %v911 = vpop.f32.mrf.mxu0
      %v912 = vadd.f32 0.0, %v911
      %v913 = vpop.f32.mrf.mxu0
      %914 = vmatprep.mubr.bf16.mxu0 0
      %915 = vmatmul.mubr.bf16.gmra.mxu0 %v795
      %v916 = vpop.f32.mrf.mxu0
      %v917 = vadd.f32 0.0, %v916
      %v918 = vpop.f32.mrf.mxu0
      %v919 = vpop.f32.mrf.mxu0
      %v920 = vadd.f32 0.0, %v919
      %v921 = vpop.f32.mrf.mxu0
      %922 = vmatprep.mubr.bf16.mxu0 0
      %923 = vmatmul.mubr.bf16.gmra.mxu0 %v796
      %v924 = vpop.f32.mrf.mxu0
      %v925 = vadd.f32 0.0, %v924
      %v926 = vpop.f32.mrf.mxu0
      %v927 = vpop.f32.mrf.mxu0
      %v928 = vadd.f32 0.0, %v927
      %v929 = vpop.f32.mrf.mxu0
      %930 = vmatprep.mubr.bf16.mxu0 0
      %931 = vmatmul.mubr.bf16.gmra.mxu0 %v797
      %v932 = vpop.f32.mrf.mxu0
      %v933 = vadd.f32 0.0, %v932
      %v934 = vpop.f32.mrf.mxu0
      %v935 = vpop.f32.mrf.mxu0
      %v936 = vadd.f32 0.0, %v935
      %v937 = vpop.f32.mrf.mxu0
      %938 = vmatprep.mubr.bf16.mxu0 0
      %939 = vmatmul.mubr.bf16.gmra.mxu0 %v798
      %v940 = vpop.f32.mrf.mxu0
      %v941 = vadd.f32 0.0, %v940
      %v942 = vpop.f32.mrf.mxu0
      %v943 = vpop.f32.mrf.mxu0
      %v944 = vadd.f32 0.0, %v943
      %v945 = vpop.f32.mrf.mxu0
      %946 = vmatprep.mubr.bf16.mxu0 0
      %947 = vmatmul.mubr.bf16.gmra.mxu0 %v799
      %v948 = vpop.f32.mrf.mxu0
      %v949 = vadd.f32 0.0, %v948
      %v950 = vpop.f32.mrf.mxu0
      %v951 = vpop.f32.mrf.mxu0
      %v952 = vadd.f32 0.0, %v951
      %v953 = vpop.f32.mrf.mxu0
      %954 = vmatprep.mubr.bf16.mxu0 0
      %955 = vmatmul.mubr.bf16.gmra.mxu0 %v800
      %v956 = vpop.f32.mrf.mxu0
      %v957 = vadd.f32 0.0, %v956
      %v958 = vpop.f32.mrf.mxu0
      %v959 = vpop.f32.mrf.mxu0
      %v960 = vadd.f32 0.0, %v959
      %v961 = vpop.f32.mrf.mxu0
      %962 = vmatprep.mubr.bf16.mxu0 0
      %963 = vmatmul.mubr.bf16.gmra.mxu0 %v801
      %v964 = vpop.f32.mrf.mxu0
      %v965 = vadd.f32 0.0, %v964
      %v966 = vpop.f32.mrf.mxu0
      %v967 = vpop.f32.mrf.mxu0
      %v968 = vadd.f32 0.0, %v967
      %v969 = vpop.f32.mrf.mxu0
      %970 = vmatprep.mubr.bf16.mxu0 0
      %971 = vmatmul.mubr.bf16.gmra.mxu0 %v802
      %v972 = vpop.f32.mrf.mxu0
      %v973 = vadd.f32 0.0, %v972
      %v974 = vpop.f32.mrf.mxu0
      %v975 = vpop.f32.mrf.mxu0
      %v976 = vadd.f32 0.0, %v975
      %v977 = vpop.f32.mrf.mxu0
      %978 = vmatprep.mubr.bf16.mxu0 0
      %979 = vmatmul.mubr.bf16.gmra.mxu0 %v803
      %v980 = vpop.f32.mrf.mxu0
      %v981 = vadd.f32 0.0, %v980
      %v982 = vpop.f32.mrf.mxu0
      %v983 = vpop.f32.mrf.mxu0
      %v984 = vadd.f32 0.0, %v983
      %v985 = vpop.f32.mrf.mxu0
      %986 = vmatprep.mubr.bf16.mxu0 0
      %987 = vmatmul.mubr.bf16.gmra.mxu0 %v804
      %v988 = vpop.f32.mrf.mxu0
      %v989 = vadd.f32 0.0, %v988
      %v990 = vpop.f32.mrf.mxu0
      %v991 = vpop.f32.mrf.mxu0
      %v992 = vadd.f32 0.0, %v991
      %v993 = vpop.f32.mrf.mxu0
      %994 = vmatprep.mubr.bf16.mxu0 0
      %995 = vmatmul.mubr.bf16.gmra.mxu0 %v805
      %v996 = vpop.f32.mrf.mxu0
      %v997 = vadd.f32 0.0, %v996
      %v998 = vpop.f32.mrf.mxu0
      %v999 = vpop.f32.mrf.mxu0
      %v1000 = vadd.f32 0.0, %v999
      %v1001 = vpop.f32.mrf.mxu0
      %1002 = vmatprep.mubr.bf16.mxu0 0
      %1003 = vmatmul.mubr.bf16.gmra.mxu0 %v806
      %v1004 = vpop.f32.mrf.mxu0
      %v1005 = vadd.f32 0.0, %v1004
      %v1006 = vpop.f32.mrf.mxu0
      %v1007 = vpop.f32.mrf.mxu0
      %v1008 = vadd.f32 0.0, %v1007
      %v1009 = vpop.f32.mrf.mxu0
      %1010 = vmatprep.mubr.bf16.mxu0 0
      %1011 = vmatmul.mubr.bf16.gmra.mxu0 %v807
      %v1012 = vpop.f32.mrf.mxu0
      %v1013 = vadd.f32 0.0, %v1012
      %v1014 = vpop.f32.mrf.mxu0
      %v1015 = vpop.f32.mrf.mxu0
      %v1016 = vadd.f32 0.0, %v1015
      %v1017 = vpop.f32.mrf.mxu0
      %1018 = vmatprep.mubr.bf16.mxu0 0
      %1019 = vmatmul.mubr.bf16.gmra.mxu0 %v808
      %v1020 = vpop.f32.mrf.mxu0
      %v1021 = vadd.f32 0.0, %v1020
      %v1022 = vpop.f32.mrf.mxu0
      %v1023 = vpop.f32.mrf.mxu0
      %v1024 = vadd.f32 0.0, %v1023
      %v1025 = vpop.f32.mrf.mxu0
      %1026 = vmatprep.mubr.bf16.mxu0 0
      %1027 = vmatmul.mubr.bf16.gmra.mxu0 %v809
      %v1028 = vpop.f32.mrf.mxu0
      %v1029 = vadd.f32 0.0, %v1028
      %v1030 = vpop.f32.mrf.mxu0
      %v1031 = vpop.f32.mrf.mxu0
      %v1032 = vadd.f32 0.0, %v1031
      %v1033 = vpop.f32.mrf.mxu0
      %1034 = vdwg.mxu0
      %v1067 = vunpack.c.l.b16 %v294
      %v1068 = vunpack.c.l.b16 %v295
      %v1069 = vunpack.c.l.b16 %v296
      %v1070 = vunpack.c.l.b16 %v297
      %v1071 = vunpack.c.l.b16 %v298
      %v1072 = vunpack.c.l.b16 %v299
      %v1073 = vunpack.c.l.b16 %v300
      %v1074 = vunpack.c.l.b16 %v301
      %v1075 = vunpack.c.l.b16 %v302
      %v1076 = vunpack.c.l.b16 %v303
      %v1077 = vunpack.c.l.b16 %v304
      %v1078 = vunpack.c.l.b16 %v305
      %v1079 = vunpack.c.l.b16 %v306
      %v1080 = vunpack.c.l.b16 %v307
      %v1081 = vunpack.c.l.b16 %v308
      %v1082 = vunpack.c.l.b16 %v309
      %v1083 = vunpack.c.l.b16 %v310
      %v1084 = vunpack.c.l.b16 %v311
      %v1085 = vunpack.c.l.b16 %v312
      %v1086 = vunpack.c.l.b16 %v313
      %v1087 = vunpack.c.l.b16 %v314
      %v1088 = vunpack.c.l.b16 %v315
      %v1089 = vunpack.c.l.b16 %v316
      %v1090 = vunpack.c.l.b16 %v317
      %v1091 = vunpack.c.l.b16 %v318
      %v1092 = vunpack.c.l.b16 %v319
      %v1093 = vunpack.c.l.b16 %v320
      %v1094 = vunpack.c.l.b16 %v321
      %v1095 = vunpack.c.l.b16 %v322
      %v1096 = vunpack.c.l.b16 %v323
      %v1097 = vunpack.c.l.b16 %v324
      %v1098 = vunpack.c.l.b16 %v325
      %v1099 = vpack.c.b16 %v1068, %v1067
      %v1100 = vpack.c.b16 %v1070, %v1069
      %v1101 = vpack.c.b16 %v1072, %v1071
      %v1102 = vpack.c.b16 %v1074, %v1073
      %v1103 = vpack.c.b16 %v1076, %v1075
      %v1104 = vpack.c.b16 %v1078, %v1077
      %v1105 = vpack.c.b16 %v1080, %v1079
      %v1106 = vpack.c.b16 %v1082, %v1081
      %v1107 = vpack.c.b16 %v1084, %v1083
      %v1108 = vpack.c.b16 %v1086, %v1085
      %v1109 = vpack.c.b16 %v1088, %v1087
      %v1110 = vpack.c.b16 %v1090, %v1089
      %v1111 = vpack.c.b16 %v1092, %v1091
      %v1112 = vpack.c.b16 %v1094, %v1093
      %v1113 = vpack.c.b16 %v1096, %v1095
      %v1114 = vpack.c.b16 %v1098, %v1097
      %v1147 = vunpack.c.l.b16 %v326
      %v1148 = vunpack.c.l.b16 %v327
      %v1149 = vunpack.c.l.b16 %v328
      %v1150 = vunpack.c.l.b16 %v329
      %v1151 = vunpack.c.l.b16 %v330
      %v1152 = vunpack.c.l.b16 %v331
      %v1153 = vunpack.c.l.b16 %v332
      %v1154 = vunpack.c.l.b16 %v333
      %v1155 = vunpack.c.l.b16 %v334
      %v1156 = vunpack.c.l.b16 %v335
      %v1157 = vunpack.c.l.b16 %v336
      %v1158 = vunpack.c.l.b16 %v337
      %v1159 = vunpack.c.l.b16 %v338
      %v1160 = vunpack.c.l.b16 %v339
      %v1161 = vunpack.c.l.b16 %v340
      %v1162 = vunpack.c.l.b16 %v341
      %v1163 = vpack.c.b16 %v1148, %v1147
      %v1164 = vpack.c.b16 %v1150, %v1149
      %v1165 = vpack.c.b16 %v1152, %v1151
      %v1166 = vpack.c.b16 %v1154, %v1153
      %v1167 = vpack.c.b16 %v1156, %v1155
      %v1168 = vpack.c.b16 %v1158, %v1157
      %v1169 = vpack.c.b16 %v1160, %v1159
      %v1170 = vpack.c.b16 %v1162, %v1161
      %1179 = vmatprep.subr.bf16.mxu0 0
      %1180 = vmatpush1.bf16.msra.mxu0 %v1170
      %1181 = vmatprep.subr.bf16.mxu0 0
      %1182 = vmatpush1.bf16.msra.mxu0 %v1169
      %1183 = vmatprep.subr.bf16.mxu0 0
      %1184 = vmatpush1.bf16.msra.mxu0 %v1168
      %1185 = vmatprep.subr.bf16.mxu0 0
      %1186 = vmatpush1.bf16.msra.mxu0 %v1167
      %1187 = vmatprep.subr.bf16.mxu0 0
      %1188 = vmatpush1.bf16.msra.mxu0 %v1166
      %1189 = vmatprep.subr.bf16.mxu0 0
      %1190 = vmatpush1.bf16.msra.mxu0 %v1165
      %1191 = vmatprep.subr.bf16.mxu0 0
      %1192 = vmatpush1.bf16.msra.mxu0 %v1164
      %1193 = vmatprep.subr.bf16.mxu0 0
      %1194 = vmatpush1.bf16.msra.mxu0 %v1163
      %1195 = vmatprep.subr.bf16.mxu0 0
      %1196 = vmatpush2.bf16.msra.mxu0 0
      %1197 = vmatprep.subr.bf16.mxu0 0
      %1198 = vmatpush2.bf16.msra.mxu0 0
      %1199 = vmatprep.subr.bf16.mxu0 0
      %1200 = vmatpush2.bf16.msra.mxu0 0
      %1201 = vmatprep.subr.bf16.mxu0 0
      %1202 = vmatpush2.bf16.msra.mxu0 0
      %1203 = vmatprep.subr.bf16.mxu0 0
      %1204 = vmatpush2.bf16.msra.mxu0 0
      %1205 = vmatprep.subr.bf16.mxu0 0
      %1206 = vmatpush2.bf16.msra.mxu0 0
      %1207 = vmatprep.subr.bf16.mxu0 0
      %1208 = vmatpush2.bf16.msra.mxu0 0
      %1209 = vmatprep.subr.bf16.mxu0 0
      %1210 = vmatpush2.bf16.msra.mxu0 0
      %1211 = vmatprep.mubr.bf16.mxu0 0
      %1212 = vmatmul.mubr.bf16.gmra.mxu0 %v1099
      %v1213 = vpop.f32.mrf.mxu0
      %v1214 = vadd.f32 %v909, %v1213
      %v1215 = vpop.f32.mrf.mxu0
      %v1216 = vpop.f32.mrf.mxu0
      %v1217 = vadd.f32 %v912, %v1216
      %v1218 = vpop.f32.mrf.mxu0
      %1219 = vmatprep.mubr.bf16.mxu0 0
      %1220 = vmatmul.mubr.bf16.gmra.mxu0 %v1100
      %v1221 = vpop.f32.mrf.mxu0
      %v1222 = vadd.f32 %v917, %v1221
      %v1223 = vpop.f32.mrf.mxu0
      %v1224 = vpop.f32.mrf.mxu0
      %v1225 = vadd.f32 %v920, %v1224
      %v1226 = vpop.f32.mrf.mxu0
      %1227 = vmatprep.mubr.bf16.mxu0 0
      %1228 = vmatmul.mubr.bf16.gmra.mxu0 %v1101
      %v1229 = vpop.f32.mrf.mxu0
      %v1230 = vadd.f32 %v925, %v1229
      %v1231 = vpop.f32.mrf.mxu0
      %v1232 = vpop.f32.mrf.mxu0
      %v1233 = vadd.f32 %v928, %v1232
      %v1234 = vpop.f32.mrf.mxu0
      %1235 = vmatprep.mubr.bf16.mxu0 0
      %1236 = vmatmul.mubr.bf16.gmra.mxu0 %v1102
      %v1237 = vpop.f32.mrf.mxu0
      %v1238 = vadd.f32 %v933, %v1237
      %v1239 = vpop.f32.mrf.mxu0
      %v1240 = vpop.f32.mrf.mxu0
      %v1241 = vadd.f32 %v936, %v1240
      %v1242 = vpop.f32.mrf.mxu0
      %1243 = vmatprep.mubr.bf16.mxu0 0
      %1244 = vmatmul.mubr.bf16.gmra.mxu0 %v1103
      %v1245 = vpop.f32.mrf.mxu0
      %v1246 = vadd.f32 %v941, %v1245
      %v1247 = vpop.f32.mrf.mxu0
      %v1248 = vpop.f32.mrf.mxu0
      %v1249 = vadd.f32 %v944, %v1248
      %v1250 = vpop.f32.mrf.mxu0
      %1251 = vmatprep.mubr.bf16.mxu0 0
      %1252 = vmatmul.mubr.bf16.gmra.mxu0 %v1104
      %v1253 = vpop.f32.mrf.mxu0
      %v1254 = vadd.f32 %v949, %v1253
      %v1255 = vpop.f32.mrf.mxu0
      %v1256 = vpop.f32.mrf.mxu0
      %v1257 = vadd.f32 %v952, %v1256
      %v1258 = vpop.f32.mrf.mxu0
      %1259 = vmatprep.mubr.bf16.mxu0 0
      %1260 = vmatmul.mubr.bf16.gmra.mxu0 %v1105
      %v1261 = vpop.f32.mrf.mxu0
      %v1262 = vadd.f32 %v957, %v1261
      %v1263 = vpop.f32.mrf.mxu0
      %v1264 = vpop.f32.mrf.mxu0
      %v1265 = vadd.f32 %v960, %v1264
      %v1266 = vpop.f32.mrf.mxu0
      %1267 = vmatprep.mubr.bf16.mxu0 0
      %1268 = vmatmul.mubr.bf16.gmra.mxu0 %v1106
      %v1269 = vpop.f32.mrf.mxu0
      %v1270 = vadd.f32 %v965, %v1269
      %v1271 = vpop.f32.mrf.mxu0
      %v1272 = vpop.f32.mrf.mxu0
      %v1273 = vadd.f32 %v968, %v1272
      %v1274 = vpop.f32.mrf.mxu0
      %1275 = vmatprep.mubr.bf16.mxu0 0
      %1276 = vmatmul.mubr.bf16.gmra.mxu0 %v1107
      %v1277 = vpop.f32.mrf.mxu0
      %v1278 = vadd.f32 %v973, %v1277
      %v1279 = vpop.f32.mrf.mxu0
      %v1280 = vpop.f32.mrf.mxu0
      %v1281 = vadd.f32 %v976, %v1280
      %v1282 = vpop.f32.mrf.mxu0
      %1283 = vmatprep.mubr.bf16.mxu0 0
      %1284 = vmatmul.mubr.bf16.gmra.mxu0 %v1108
      %v1285 = vpop.f32.mrf.mxu0
      %v1286 = vadd.f32 %v981, %v1285
      %v1287 = vpop.f32.mrf.mxu0
      %v1288 = vpop.f32.mrf.mxu0
      %v1289 = vadd.f32 %v984, %v1288
      %v1290 = vpop.f32.mrf.mxu0
      %1291 = vmatprep.mubr.bf16.mxu0 0
      %1292 = vmatmul.mubr.bf16.gmra.mxu0 %v1109
      %v1293 = vpop.f32.mrf.mxu0
      %v1294 = vadd.f32 %v989, %v1293
      %v1295 = vpop.f32.mrf.mxu0
      %v1296 = vpop.f32.mrf.mxu0
      %v1297 = vadd.f32 %v992, %v1296
      %v1298 = vpop.f32.mrf.mxu0
      %1299 = vmatprep.mubr.bf16.mxu0 0
      %1300 = vmatmul.mubr.bf16.gmra.mxu0 %v1110
      %v1301 = vpop.f32.mrf.mxu0
      %v1302 = vadd.f32 %v997, %v1301
      %v1303 = vpop.f32.mrf.mxu0
      %v1304 = vpop.f32.mrf.mxu0
      %v1305 = vadd.f32 %v1000, %v1304
      %v1306 = vpop.f32.mrf.mxu0
      %1307 = vmatprep.mubr.bf16.mxu0 0
      %1308 = vmatmul.mubr.bf16.gmra.mxu0 %v1111
      %v1309 = vpop.f32.mrf.mxu0
      %v1310 = vadd.f32 %v1005, %v1309
      %v1311 = vpop.f32.mrf.mxu0
      %v1312 = vpop.f32.mrf.mxu0
      %v1313 = vadd.f32 %v1008, %v1312
      %v1314 = vpop.f32.mrf.mxu0
      %1315 = vmatprep.mubr.bf16.mxu0 0
      %1316 = vmatmul.mubr.bf16.gmra.mxu0 %v1112
      %v1317 = vpop.f32.mrf.mxu0
      %v1318 = vadd.f32 %v1013, %v1317
      %v1319 = vpop.f32.mrf.mxu0
      %v1320 = vpop.f32.mrf.mxu0
      %v1321 = vadd.f32 %v1016, %v1320
      %v1322 = vpop.f32.mrf.mxu0
      %1323 = vmatprep.mubr.bf16.mxu0 0
      %1324 = vmatmul.mubr.bf16.gmra.mxu0 %v1113
      %v1325 = vpop.f32.mrf.mxu0
      %v1326 = vadd.f32 %v1021, %v1325
      %v1327 = vpop.f32.mrf.mxu0
      %v1328 = vpop.f32.mrf.mxu0
      %v1329 = vadd.f32 %v1024, %v1328
      %v1330 = vpop.f32.mrf.mxu0
      %1331 = vmatprep.mubr.bf16.mxu0 0
      %1332 = vmatmul.mubr.bf16.gmra.mxu0 %v1114
      %v1333 = vpop.f32.mrf.mxu0
      %v1334 = vadd.f32 %v1029, %v1333
      %v1335 = vpop.f32.mrf.mxu0
      %v1336 = vpop.f32.mrf.mxu0
      %v1337 = vadd.f32 %v1032, %v1336
      %v1338 = vpop.f32.mrf.mxu0
      %1339 = vdwg.mxu0
      %v1340 = vld [vmem:[%s293] sm:$0xe]
      %v1341 = vld [vmem:[%s293 + $0xc] sm:$0xe]
      %v1342 = vld [vmem:[%s293 + $0x18] sm:$0xe]
      %v1343 = vld [vmem:[%s293 + $0x24] sm:$0xe]
      %v1344 = vld [vmem:[%s293 + $0x30] sm:$0xe]
      %v1345 = vld [vmem:[%s293 + $0x3c] sm:$0xe]
      %v1346 = vld [vmem:[%s293 + $0x48] sm:$0xe]
      %v1347 = vld [vmem:[%s293 + $0x54] sm:$0xe]
      %v1348 = vld [vmem:[%s293 + $0x60] sm:$0xe]
      %v1349 = vld [vmem:[%s293 + $0x6c] sm:$0xe]
      %v1350 = vld [vmem:[%s293 + $0x78] sm:$0xe]
      %v1351 = vld [vmem:[%s293 + $0x84] sm:$0xe]
      %v1352 = vld [vmem:[%s293 + $0x90] sm:$0xe]
      %v1353 = vld [vmem:[%s293 + $0x9c] sm:$0xe]
      %v1354 = vld [vmem:[%s293 + $0xa8] sm:$0xe]
      %v1355 = vld [vmem:[%s293 + $0xb4] sm:$0xe]
      %vm1388 = vcmask 1042432
      %vm1389 = vcmask 1046532
      %vm1390 = vmor %vm1388, %vm1389
      %v1391 = vrot.slane %v1340, 5
      %v1392 = vrot.slane %v1391, 4
      %v1393 = vrot.slane %v295, 5
      %v1394 = vsel %vm1390, %v1392, %v1393
      %v1395 = vrot.slane %v1393, 4
      %v1396 = vrot.slane %v342, 5
      %v1397 = vsel %vm1390, %v1395, %v1396
      %v1398 = vrot.slane %v1341, 5
      %v1399 = vrot.slane %v1398, 4
      %v1400 = vrot.slane %v297, 5
      %v1401 = vsel %vm1390, %v1399, %v1400
      %v1402 = vrot.slane %v1400, 4
      %v1403 = vrot.slane %v343, 5
      %v1404 = vsel %vm1390, %v1402, %v1403
      %v1405 = vrot.slane %v1342, 5
      %v1406 = vrot.slane %v1405, 4
      %v1407 = vrot.slane %v299, 5
      %v1408 = vsel %vm1390, %v1406, %v1407
      %v1409 = vrot.slane %v1407, 4
      %v1410 = vrot.slane %v344, 5
      %v1411 = vsel %vm1390, %v1409, %v1410
      %v1412 = vrot.slane %v1343, 5
      %v1413 = vrot.slane %v1412, 4
      %v1414 = vrot.slane %v301, 5
      %v1415 = vsel %vm1390, %v1413, %v1414
      %v1416 = vrot.slane %v1414, 4
      %v1417 = vrot.slane %v345, 5
      %v1418 = vsel %vm1390, %v1416, %v1417
      %v1419 = vrot.slane %v1344, 5
      %v1420 = vrot.slane %v1419, 4
      %v1421 = vrot.slane %v303, 5
      %v1422 = vsel %vm1390, %v1420, %v1421
      %v1423 = vrot.slane %v1421, 4
      %v1424 = vrot.slane %v346, 5
      %v1425 = vsel %vm1390, %v1423, %v1424
      %v1426 = vrot.slane %v1345, 5
      %v1427 = vrot.slane %v1426, 4
      %v1428 = vrot.slane %v305, 5
      %v1429 = vsel %vm1390, %v1427, %v1428
      %v1430 = vrot.slane %v1428, 4
      %v1431 = vrot.slane %v347, 5
      %v1432 = vsel %vm1390, %v1430, %v1431
      %v1433 = vrot.slane %v1346, 5
      %v1434 = vrot.slane %v1433, 4
      %v1435 = vrot.slane %v307, 5
      %v1436 = vsel %vm1390, %v1434, %v1435
      %v1437 = vrot.slane %v1435, 4
      %v1438 = vrot.slane %v348, 5
      %v1439 = vsel %vm1390, %v1437, %v1438
      %v1440 = vrot.slane %v1347, 5
      %v1441 = vrot.slane %v1440, 4
      %v1442 = vrot.slane %v309, 5
      %v1443 = vsel %vm1390, %v1441, %v1442
      %v1444 = vrot.slane %v1442, 4
      %v1445 = vrot.slane %v349, 5
      %v1446 = vsel %vm1390, %v1444, %v1445
      %v1447 = vrot.slane %v1348, 5
      %v1448 = vrot.slane %v1447, 4
      %v1449 = vrot.slane %v311, 5
      %v1450 = vsel %vm1390, %v1448, %v1449
      %v1451 = vrot.slane %v1449, 4
      %v1452 = vrot.slane %v350, 5
      %v1453 = vsel %vm1390, %v1451, %v1452
      %v1454 = vrot.slane %v1349, 5
      %v1455 = vrot.slane %v1454, 4
      %v1456 = vrot.slane %v313, 5
      %v1457 = vsel %vm1390, %v1455, %v1456
      %v1458 = vrot.slane %v1456, 4
      %v1459 = vrot.slane %v351, 5
      %v1460 = vsel %vm1390, %v1458, %v1459
      %v1461 = vrot.slane %v1350, 5
      %v1462 = vrot.slane %v1461, 4
      %v1463 = vrot.slane %v315, 5
      %v1464 = vsel %vm1390, %v1462, %v1463
      %v1465 = vrot.slane %v1463, 4
      %v1466 = vrot.slane %v352, 5
      %v1467 = vsel %vm1390, %v1465, %v1466
      %v1468 = vrot.slane %v1351, 5
      %v1469 = vrot.slane %v1468, 4
      %v1470 = vrot.slane %v317, 5
      %v1471 = vsel %vm1390, %v1469, %v1470
      %v1472 = vrot.slane %v1470, 4
      %v1473 = vrot.slane %v353, 5
      %v1474 = vsel %vm1390, %v1472, %v1473
      %v1475 = vrot.slane %v1352, 5
      %v1476 = vrot.slane %v1475, 4
      %v1477 = vrot.slane %v319, 5
      %v1478 = vsel %vm1390, %v1476, %v1477
      %v1479 = vrot.slane %v1477, 4
      %v1480 = vrot.slane %v354, 5
      %v1481 = vsel %vm1390, %v1479, %v1480
      %v1482 = vrot.slane %v1353, 5
      %v1483 = vrot.slane %v1482, 4
      %v1484 = vrot.slane %v321, 5
      %v1485 = vsel %vm1390, %v1483, %v1484
      %v1486 = vrot.slane %v1484, 4
      %v1487 = vrot.slane %v355, 5
      %v1488 = vsel %vm1390, %v1486, %v1487
      %v1489 = vrot.slane %v1354, 5
      %v1490 = vrot.slane %v1489, 4
      %v1491 = vrot.slane %v323, 5
      %v1492 = vsel %vm1390, %v1490, %v1491
      %v1493 = vrot.slane %v1491, 4
      %v1494 = vrot.slane %v356, 5
      %v1495 = vsel %vm1390, %v1493, %v1494
      %v1496 = vrot.slane %v1355, 5
      %v1497 = vrot.slane %v1496, 4
      %v1498 = vrot.slane %v325, 5
      %v1499 = vsel %vm1390, %v1497, %v1498
      %v1500 = vrot.slane %v1498, 4
      %v1501 = vrot.slane %v357, 5
      %v1502 = vsel %vm1390, %v1500, %v1501
      %s1503 = scalar_lea.vmem %s1, 128
      %v1504 = vld [vmem:[%s1503] sm:$0xf]
      %v1505 = vld [vmem:[%s1503 + $0x4] sm:$0xf]
      %v1506 = vld [vmem:[%s1503 + $0x8] sm:$0xf]
      %v1507 = vld [vmem:[%s1503 + $0xc] sm:$0xf]
      %v1508 = vld [vmem:[%s1503 + $0x10] sm:$0xf]
      %v1509 = vld [vmem:[%s1503 + $0x14] sm:$0xf]
      %v1510 = vld [vmem:[%s1503 + $0x18] sm:$0xf]
      %v1511 = vld [vmem:[%s1503 + $0x1c] sm:$0xf]
      %v1512 = vld [vmem:[%s1503 + $0x20] sm:$0xf]
      %v1513 = vld [vmem:[%s1503 + $0x24] sm:$0xf]
      %v1514 = vld [vmem:[%s1503 + $0x28] sm:$0xf]
      %v1515 = vld [vmem:[%s1503 + $0x2c] sm:$0xf]
      %v1516 = vld [vmem:[%s1503 + $0x30] sm:$0xf]
      %v1517 = vld [vmem:[%s1503 + $0x34] sm:$0xf]
      %v1518 = vld [vmem:[%s1503 + $0x38] sm:$0xf]
      %v1519 = vld [vmem:[%s1503 + $0x3c] sm:$0xf]
      %v1520 = vunpack.c.l.b16 %v1394
      %v1521 = vunpack.c.l.b16 %v1397
      %v1522 = vunpack.c.l.b16 %v1401
      %v1523 = vunpack.c.l.b16 %v1404
      %v1524 = vunpack.c.l.b16 %v1408
      %v1525 = vunpack.c.l.b16 %v1411
      %v1526 = vunpack.c.l.b16 %v1415
      %v1527 = vunpack.c.l.b16 %v1418
      %v1528 = vunpack.c.l.b16 %v1422
      %v1529 = vunpack.c.l.b16 %v1425
      %v1530 = vunpack.c.l.b16 %v1429
      %v1531 = vunpack.c.l.b16 %v1432
      %v1532 = vunpack.c.l.b16 %v1436
      %v1533 = vunpack.c.l.b16 %v1439
      %v1534 = vunpack.c.l.b16 %v1443
      %v1535 = vunpack.c.l.b16 %v1446
      %v1536 = vunpack.c.l.b16 %v1450
      %v1537 = vunpack.c.l.b16 %v1453
      %v1538 = vunpack.c.l.b16 %v1457
      %v1539 = vunpack.c.l.b16 %v1460
      %v1540 = vunpack.c.l.b16 %v1464
      %v1541 = vunpack.c.l.b16 %v1467
      %v1542 = vunpack.c.l.b16 %v1471
      %v1543 = vunpack.c.l.b16 %v1474
      %v1544 = vunpack.c.l.b16 %v1478
      %v1545 = vunpack.c.l.b16 %v1481
      %v1546 = vunpack.c.l.b16 %v1485
      %v1547 = vunpack.c.l.b16 %v1488
      %v1548 = vunpack.c.l.b16 %v1492
      %v1549 = vunpack.c.l.b16 %v1495
      %v1550 = vunpack.c.l.b16 %v1499
      %v1551 = vunpack.c.l.b16 %v1502
      %v1552 = vpack.c.b16 %v1521, %v1520
      %v1553 = vpack.c.b16 %v1523, %v1522
      %v1554 = vpack.c.b16 %v1525, %v1524
      %v1555 = vpack.c.b16 %v1527, %v1526
      %v1556 = vpack.c.b16 %v1529, %v1528
      %v1557 = vpack.c.b16 %v1531, %v1530
      %v1558 = vpack.c.b16 %v1533, %v1532
      %v1559 = vpack.c.b16 %v1535, %v1534
      %v1560 = vpack.c.b16 %v1537, %v1536
      %v1561 = vpack.c.b16 %v1539, %v1538
      %v1562 = vpack.c.b16 %v1541, %v1540
      %v1563 = vpack.c.b16 %v1543, %v1542
      %v1564 = vpack.c.b16 %v1545, %v1544
      %v1565 = vpack.c.b16 %v1547, %v1546
      %v1566 = vpack.c.b16 %v1549, %v1548
      %v1567 = vpack.c.b16 %v1551, %v1550
      %v1600 = vunpack.c.l.b16 %v1504
      %v1601 = vunpack.c.l.b16 %v1505
      %v1602 = vunpack.c.l.b16 %v1506
      %v1603 = vunpack.c.l.b16 %v1507
      %v1604 = vunpack.c.l.b16 %v1508
      %v1605 = vunpack.c.l.b16 %v1509
      %v1606 = vunpack.c.l.b16 %v1510
      %v1607 = vunpack.c.l.b16 %v1511
      %v1608 = vunpack.c.l.b16 %v1512
      %v1609 = vunpack.c.l.b16 %v1513
      %v1610 = vunpack.c.l.b16 %v1514
      %v1611 = vunpack.c.l.b16 %v1515
      %v1612 = vunpack.c.l.b16 %v1516
      %v1613 = vunpack.c.l.b16 %v1517
      %v1614 = vunpack.c.l.b16 %v1518
      %v1615 = vunpack.c.l.b16 %v1519
      %v1616 = vpack.c.b16 %v1601, %v1600
      %v1617 = vpack.c.b16 %v1603, %v1602
      %v1618 = vpack.c.b16 %v1605, %v1604
      %v1619 = vpack.c.b16 %v1607, %v1606
      %v1620 = vpack.c.b16 %v1609, %v1608
      %v1621 = vpack.c.b16 %v1611, %v1610
      %v1622 = vpack.c.b16 %v1613, %v1612
      %v1623 = vpack.c.b16 %v1615, %v1614
      %1632 = vmatprep.subr.bf16.mxu0 0
      %1633 = vmatpush1.bf16.msra.mxu0 %v1623
      %1634 = vmatprep.subr.bf16.mxu0 0
      %1635 = vmatpush1.bf16.msra.mxu0 %v1622
      %1636 = vmatprep.subr.bf16.mxu0 0
      %1637 = vmatpush1.bf16.msra.mxu0 %v1621
      %1638 = vmatprep.subr.bf16.mxu0 0
      %1639 = vmatpush1.bf16.msra.mxu0 %v1620
      %1640 = vmatprep.subr.bf16.mxu0 0
      %1641 = vmatpush1.bf16.msra.mxu0 %v1619
      %1642 = vmatprep.subr.bf16.mxu0 0
      %1643 = vmatpush1.bf16.msra.mxu0 %v1618
      %1644 = vmatprep.subr.bf16.mxu0 0
      %1645 = vmatpush1.bf16.msra.mxu0 %v1617
      %1646 = vmatprep.subr.bf16.mxu0 0
      %1647 = vmatpush1.bf16.msra.mxu0 %v1616
      %1648 = vmatprep.subr.bf16.mxu0 0
      %1649 = vmatpush2.bf16.msra.mxu0 0
      %1650 = vmatprep.subr.bf16.mxu0 0
      %1651 = vmatpush2.bf16.msra.mxu0 0
      %1652 = vmatprep.subr.bf16.mxu0 0
      %1653 = vmatpush2.bf16.msra.mxu0 0
      %1654 = vmatprep.subr.bf16.mxu0 0
      %1655 = vmatpush2.bf16.msra.mxu0 0
      %1656 = vmatprep.subr.bf16.mxu0 0
      %1657 = vmatpush2.bf16.msra.mxu0 0
      %1658 = vmatprep.subr.bf16.mxu0 0
      %1659 = vmatpush2.bf16.msra.mxu0 0
      %1660 = vmatprep.subr.bf16.mxu0 0
      %1661 = vmatpush2.bf16.msra.mxu0 0
      %1662 = vmatprep.subr.bf16.mxu0 0
      %1663 = vmatpush2.bf16.msra.mxu0 0
      %1664 = vmatprep.mubr.bf16.mxu0 0
      %1665 = vmatmul.mubr.bf16.gmra.mxu0 %v1552
      %v1666 = vpop.f32.mrf.mxu0
      %v1667 = vadd.f32 0.0, %v1666
      %v1668 = vpop.f32.mrf.mxu0
      %v1669 = vpop.f32.mrf.mxu0
      %v1670 = vadd.f32 0.0, %v1669
      %v1671 = vpop.f32.mrf.mxu0
      %1672 = vmatprep.mubr.bf16.mxu0 0
      %1673 = vmatmul.mubr.bf16.gmra.mxu0 %v1553
      %v1674 = vpop.f32.mrf.mxu0
      %v1675 = vadd.f32 0.0, %v1674
      %v1676 = vpop.f32.mrf.mxu0
      %v1677 = vpop.f32.mrf.mxu0
      %v1678 = vadd.f32 0.0, %v1677
      %v1679 = vpop.f32.mrf.mxu0
      %1680 = vmatprep.mubr.bf16.mxu0 0
      %1681 = vmatmul.mubr.bf16.gmra.mxu0 %v1554
      %v1682 = vpop.f32.mrf.mxu0
      %v1683 = vadd.f32 0.0, %v1682
      %v1684 = vpop.f32.mrf.mxu0
      %v1685 = vpop.f32.mrf.mxu0
      %v1686 = vadd.f32 0.0, %v1685
      %v1687 = vpop.f32.mrf.mxu0
      %1688 = vmatprep.mubr.bf16.mxu0 0
      %1689 = vmatmul.mubr.bf16.gmra.mxu0 %v1555
      %v1690 = vpop.f32.mrf.mxu0
      %v1691 = vadd.f32 0.0, %v1690
      %v1692 = vpop.f32.mrf.mxu0
      %v1693 = vpop.f32.mrf.mxu0
      %v1694 = vadd.f32 0.0, %v1693
      %v1695 = vpop.f32.mrf.mxu0
      %1696 = vmatprep.mubr.bf16.mxu0 0
      %1697 = vmatmul.mubr.bf16.gmra.mxu0 %v1556
      %v1698 = vpop.f32.mrf.mxu0
      %v1699 = vadd.f32 0.0, %v1698
      %v1700 = vpop.f32.mrf.mxu0
      %v1701 = vpop.f32.mrf.mxu0
      %v1702 = vadd.f32 0.0, %v1701
      %v1703 = vpop.f32.mrf.mxu0
      %1704 = vmatprep.mubr.bf16.mxu0 0
      %1705 = vmatmul.mubr.bf16.gmra.mxu0 %v1557
      %v1706 = vpop.f32.mrf.mxu0
      %v1707 = vadd.f32 0.0, %v1706
      %v1708 = vpop.f32.mrf.mxu0
      %v1709 = vpop.f32.mrf.mxu0
      %v1710 = vadd.f32 0.0, %v1709
      %v1711 = vpop.f32.mrf.mxu0
      %1712 = vmatprep.mubr.bf16.mxu0 0
      %1713 = vmatmul.mubr.bf16.gmra.mxu0 %v1558
      %v1714 = vpop.f32.mrf.mxu0
      %v1715 = vadd.f32 0.0, %v1714
      %v1716 = vpop.f32.mrf.mxu0
      %v1717 = vpop.f32.mrf.mxu0
      %v1718 = vadd.f32 0.0, %v1717
      %v1719 = vpop.f32.mrf.mxu0
      %1720 = vmatprep.mubr.bf16.mxu0 0
      %1721 = vmatmul.mubr.bf16.gmra.mxu0 %v1559
      %v1722 = vpop.f32.mrf.mxu0
      %v1723 = vadd.f32 0.0, %v1722
      %v1724 = vpop.f32.mrf.mxu0
      %v1725 = vpop.f32.mrf.mxu0
      %v1726 = vadd.f32 0.0, %v1725
      %v1727 = vpop.f32.mrf.mxu0
      %1728 = vmatprep.mubr.bf16.mxu0 0
      %1729 = vmatmul.mubr.bf16.gmra.mxu0 %v1560
      %v1730 = vpop.f32.mrf.mxu0
      %v1731 = vadd.f32 0.0, %v1730
      %v1732 = vpop.f32.mrf.mxu0
      %v1733 = vpop.f32.mrf.mxu0
      %v1734 = vadd.f32 0.0, %v1733
      %v1735 = vpop.f32.mrf.mxu0
      %1736 = vmatprep.mubr.bf16.mxu0 0
      %1737 = vmatmul.mubr.bf16.gmra.mxu0 %v1561
      %v1738 = vpop.f32.mrf.mxu0
      %v1739 = vadd.f32 0.0, %v1738
      %v1740 = vpop.f32.mrf.mxu0
      %v1741 = vpop.f32.mrf.mxu0
      %v1742 = vadd.f32 0.0, %v1741
      %v1743 = vpop.f32.mrf.mxu0
      %1744 = vmatprep.mubr.bf16.mxu0 0
      %1745 = vmatmul.mubr.bf16.gmra.mxu0 %v1562
      %v1746 = vpop.f32.mrf.mxu0
      %v1747 = vadd.f32 0.0, %v1746
      %v1748 = vpop.f32.mrf.mxu0
      %v1749 = vpop.f32.mrf.mxu0
      %v1750 = vadd.f32 0.0, %v1749
      %v1751 = vpop.f32.mrf.mxu0
      %1752 = vmatprep.mubr.bf16.mxu0 0
      %1753 = vmatmul.mubr.bf16.gmra.mxu0 %v1563
      %v1754 = vpop.f32.mrf.mxu0
      %v1755 = vadd.f32 0.0, %v1754
      %v1756 = vpop.f32.mrf.mxu0
      %v1757 = vpop.f32.mrf.mxu0
      %v1758 = vadd.f32 0.0, %v1757
      %v1759 = vpop.f32.mrf.mxu0
      %1760 = vmatprep.mubr.bf16.mxu0 0
      %1761 = vmatmul.mubr.bf16.gmra.mxu0 %v1564
      %v1762 = vpop.f32.mrf.mxu0
      %v1763 = vadd.f32 0.0, %v1762
      %v1764 = vpop.f32.mrf.mxu0
      %v1765 = vpop.f32.mrf.mxu0
      %v1766 = vadd.f32 0.0, %v1765
      %v1767 = vpop.f32.mrf.mxu0
      %1768 = vmatprep.mubr.bf16.mxu0 0
      %1769 = vmatmul.mubr.bf16.gmra.mxu0 %v1565
      %v1770 = vpop.f32.mrf.mxu0
      %v1771 = vadd.f32 0.0, %v1770
      %v1772 = vpop.f32.mrf.mxu0
      %v1773 = vpop.f32.mrf.mxu0
      %v1774 = vadd.f32 0.0, %v1773
      %v1775 = vpop.f32.mrf.mxu0
      %1776 = vmatprep.mubr.bf16.mxu0 0
      %1777 = vmatmul.mubr.bf16.gmra.mxu0 %v1566
      %v1778 = vpop.f32.mrf.mxu0
      %v1779 = vadd.f32 0.0, %v1778
      %v1780 = vpop.f32.mrf.mxu0
      %v1781 = vpop.f32.mrf.mxu0
      %v1782 = vadd.f32 0.0, %v1781
      %v1783 = vpop.f32.mrf.mxu0
      %1784 = vmatprep.mubr.bf16.mxu0 0
      %1785 = vmatmul.mubr.bf16.gmra.mxu0 %v1567
      %v1786 = vpop.f32.mrf.mxu0
      %v1787 = vadd.f32 0.0, %v1786
      %v1788 = vpop.f32.mrf.mxu0
      %v1789 = vpop.f32.mrf.mxu0
      %v1790 = vadd.f32 0.0, %v1789
      %v1791 = vpop.f32.mrf.mxu0
      %1792 = vdwg.mxu0
      %v1793 = vadd.f32 %v1214, %v1667
      %v1794 = vadd.f32 %v1217, %v1670
      %v1795 = vadd.f32 %v1222, %v1675
      %v1796 = vadd.f32 %v1225, %v1678
      %v1797 = vadd.f32 %v1230, %v1683
      %v1798 = vadd.f32 %v1233, %v1686
      %v1799 = vadd.f32 %v1238, %v1691
      %v1800 = vadd.f32 %v1241, %v1694
      %v1801 = vadd.f32 %v1246, %v1699
      %v1802 = vadd.f32 %v1249, %v1702
      %v1803 = vadd.f32 %v1254, %v1707
      %v1804 = vadd.f32 %v1257, %v1710
      %v1805 = vadd.f32 %v1262, %v1715
      %v1806 = vadd.f32 %v1265, %v1718
      %v1807 = vadd.f32 %v1270, %v1723
      %v1808 = vadd.f32 %v1273, %v1726
      %v1809 = vadd.f32 %v1278, %v1731
      %v1810 = vadd.f32 %v1281, %v1734
      %v1811 = vadd.f32 %v1286, %v1739
      %v1812 = vadd.f32 %v1289, %v1742
      %v1813 = vadd.f32 %v1294, %v1747
      %v1814 = vadd.f32 %v1297, %v1750
      %v1815 = vadd.f32 %v1302, %v1755
      %v1816 = vadd.f32 %v1305, %v1758
      %v1817 = vadd.f32 %v1310, %v1763
      %v1818 = vadd.f32 %v1313, %v1766
      %v1819 = vadd.f32 %v1318, %v1771
      %v1820 = vadd.f32 %v1321, %v1774
      %v1821 = vadd.f32 %v1326, %v1779
      %v1822 = vadd.f32 %v1329, %v1782
      %v1823 = vadd.f32 %v1334, %v1787
      %v1824 = vadd.f32 %v1337, %v1790
      %s1825 = sadd.s32 %s290, 1
      %s1826 = smul.u32 %s1825, 3
      %s1827 = smul.addr %s1826, 4
      %s1828 = scalar_lea.vmem %s266, %s1827
      %v1829 = vld [vmem:[%s1828] sm:$0xf]
      %v1830 = vld [vmem:[%s1828 + $0x4] sm:$0xf]
      %v1831 = vld [vmem:[%s1828 + $0xc] sm:$0xf]
      %v1832 = vld [vmem:[%s1828 + $0x10] sm:$0xf]
      %v1833 = vld [vmem:[%s1828 + $0x18] sm:$0xf]
      %v1834 = vld [vmem:[%s1828 + $0x1c] sm:$0xf]
      %v1835 = vld [vmem:[%s1828 + $0x24] sm:$0xf]
      %v1836 = vld [vmem:[%s1828 + $0x28] sm:$0xf]
      %v1837 = vld [vmem:[%s1828 + $0x30] sm:$0xf]
      %v1838 = vld [vmem:[%s1828 + $0x34] sm:$0xf]
      %v1839 = vld [vmem:[%s1828 + $0x3c] sm:$0xf]
      %v1840 = vld [vmem:[%s1828 + $0x40] sm:$0xf]
      %v1841 = vld [vmem:[%s1828 + $0x48] sm:$0xf]
      %v1842 = vld [vmem:[%s1828 + $0x4c] sm:$0xf]
      %v1843 = vld [vmem:[%s1828 + $0x54] sm:$0xf]
      %v1844 = vld [vmem:[%s1828 + $0x58] sm:$0xf]
      %v1845 = vld [vmem:[%s1828 + $0x60] sm:$0xf]
      %v1846 = vld [vmem:[%s1828 + $0x64] sm:$0xf]
      %v1847 = vld [vmem:[%s1828 + $0x6c] sm:$0xf]
      %v1848 = vld [vmem:[%s1828 + $0x70] sm:$0xf]
      %v1849 = vld [vmem:[%s1828 + $0x78] sm:$0xf]
      %v1850 = vld [vmem:[%s1828 + $0x7c] sm:$0xf]
      %v1851 = vld [vmem:[%s1828 + $0x84] sm:$0xf]
      %v1852 = vld [vmem:[%s1828 + $0x88] sm:$0xf]
      %v1853 = vld [vmem:[%s1828 + $0x90] sm:$0xf]
      %v1854 = vld [vmem:[%s1828 + $0x94] sm:$0xf]
      %v1855 = vld [vmem:[%s1828 + $0x9c] sm:$0xf]
      %v1856 = vld [vmem:[%s1828 + $0xa0] sm:$0xf]
      %v1857 = vld [vmem:[%s1828 + $0xa8] sm:$0xf]
      %v1858 = vld [vmem:[%s1828 + $0xac] sm:$0xf]
      %v1859 = vld [vmem:[%s1828 + $0xb4] sm:$0xf]
      %v1860 = vld [vmem:[%s1828 + $0xb8] sm:$0xf]
      %s1861 = scalar_lea.vmem %s1, 192
      %v1862 = vld [vmem:[%s1861] sm:$0xf]
      %v1863 = vld [vmem:[%s1861 + $0x4] sm:$0xf]
      %v1864 = vld [vmem:[%s1861 + $0x8] sm:$0xf]
      %v1865 = vld [vmem:[%s1861 + $0xc] sm:$0xf]
      %v1866 = vld [vmem:[%s1861 + $0x10] sm:$0xf]
      %v1867 = vld [vmem:[%s1861 + $0x14] sm:$0xf]
      %v1868 = vld [vmem:[%s1861 + $0x18] sm:$0xf]
      %v1869 = vld [vmem:[%s1861 + $0x1c] sm:$0xf]
      %v1870 = vld [vmem:[%s1861 + $0x20] sm:$0xf]
      %v1871 = vld [vmem:[%s1861 + $0x24] sm:$0xf]
      %v1872 = vld [vmem:[%s1861 + $0x28] sm:$0xf]
      %v1873 = vld [vmem:[%s1861 + $0x2c] sm:$0xf]
      %v1874 = vld [vmem:[%s1861 + $0x30] sm:$0xf]
      %v1875 = vld [vmem:[%s1861 + $0x34] sm:$0xf]
      %v1876 = vld [vmem:[%s1861 + $0x38] sm:$0xf]
      %v1877 = vld [vmem:[%s1861 + $0x3c] sm:$0xf]
      %v1910 = vunpack.c.l.b16 %v1829
      %v1911 = vunpack.c.l.b16 %v1830
      %v1912 = vunpack.c.l.b16 %v1831
      %v1913 = vunpack.c.l.b16 %v1832
      %v1914 = vunpack.c.l.b16 %v1833
      %v1915 = vunpack.c.l.b16 %v1834
      %v1916 = vunpack.c.l.b16 %v1835
      %v1917 = vunpack.c.l.b16 %v1836
      %v1918 = vunpack.c.l.b16 %v1837
      %v1919 = vunpack.c.l.b16 %v1838
      %v1920 = vunpack.c.l.b16 %v1839
      %v1921 = vunpack.c.l.b16 %v1840
      %v1922 = vunpack.c.l.b16 %v1841
      %v1923 = vunpack.c.l.b16 %v1842
      %v1924 = vunpack.c.l.b16 %v1843
      %v1925 = vunpack.c.l.b16 %v1844
      %v1926 = vunpack.c.l.b16 %v1845
      %v1927 = vunpack.c.l.b16 %v1846
      %v1928 = vunpack.c.l.b16 %v1847
      %v1929 = vunpack.c.l.b16 %v1848
      %v1930 = vunpack.c.l.b16 %v1849
      %v1931 = vunpack.c.l.b16 %v1850
      %v1932 = vunpack.c.l.b16 %v1851
      %v1933 = vunpack.c.l.b16 %v1852
      %v1934 = vunpack.c.l.b16 %v1853
      %v1935 = vunpack.c.l.b16 %v1854
      %v1936 = vunpack.c.l.b16 %v1855
      %v1937 = vunpack.c.l.b16 %v1856
      %v1938 = vunpack.c.l.b16 %v1857
      %v1939 = vunpack.c.l.b16 %v1858
      %v1940 = vunpack.c.l.b16 %v1859
      %v1941 = vunpack.c.l.b16 %v1860
      %v1942 = vpack.c.b16 %v1911, %v1910
      %v1943 = vpack.c.b16 %v1913, %v1912
      %v1944 = vpack.c.b16 %v1915, %v1914
      %v1945 = vpack.c.b16 %v1917, %v1916
      %v1946 = vpack.c.b16 %v1919, %v1918
      %v1947 = vpack.c.b16 %v1921, %v1920
      %v1948 = vpack.c.b16 %v1923, %v1922
      %v1949 = vpack.c.b16 %v1925, %v1924
      %v1950 = vpack.c.b16 %v1927, %v1926
      %v1951 = vpack.c.b16 %v1929, %v1928
      %v1952 = vpack.c.b16 %v1931, %v1930
      %v1953 = vpack.c.b16 %v1933, %v1932
      %v1954 = vpack.c.b16 %v1935, %v1934
      %v1955 = vpack.c.b16 %v1937, %v1936
      %v1956 = vpack.c.b16 %v1939, %v1938
      %v1957 = vpack.c.b16 %v1941, %v1940
      %v1990 = vunpack.c.l.b16 %v1862
      %v1991 = vunpack.c.l.b16 %v1863
      %v1992 = vunpack.c.l.b16 %v1864
      %v1993 = vunpack.c.l.b16 %v1865
      %v1994 = vunpack.c.l.b16 %v1866
      %v1995 = vunpack.c.l.b16 %v1867
      %v1996 = vunpack.c.l.b16 %v1868
      %v1997 = vunpack.c.l.b16 %v1869
      %v1998 = vunpack.c.l.b16 %v1870
      %v1999 = vunpack.c.l.b16 %v1871
      %v2000 = vunpack.c.l.b16 %v1872
      %v2001 = vunpack.c.l.b16 %v1873
      %v2002 = vunpack.c.l.b16 %v1874
      %v2003 = vunpack.c.l.b16 %v1875
      %v2004 = vunpack.c.l.b16 %v1876
      %v2005 = vunpack.c.l.b16 %v1877
      %v2006 = vpack.c.b16 %v1991, %v1990
      %v2007 = vpack.c.b16 %v1993, %v1992
      %v2008 = vpack.c.b16 %v1995, %v1994
      %v2009 = vpack.c.b16 %v1997, %v1996
      %v2010 = vpack.c.b16 %v1999, %v1998
      %v2011 = vpack.c.b16 %v2001, %v2000
      %v2012 = vpack.c.b16 %v2003, %v2002
      %v2013 = vpack.c.b16 %v2005, %v2004
      %2022 = vmatprep.subr.bf16.mxu0 0
      %2023 = vmatpush1.bf16.msra.mxu0 %v2013
      %2024 = vmatprep.subr.bf16.mxu0 0
      %2025 = vmatpush1.bf16.msra.mxu0 %v2012
      %2026 = vmatprep.subr.bf16.mxu0 0
      %2027 = vmatpush1.bf16.msra.mxu0 %v2011
      %2028 = vmatprep.subr.bf16.mxu0 0
      %2029 = vmatpush1.bf16.msra.mxu0 %v2010
      %2030 = vmatprep.subr.bf16.mxu0 0
      %2031 = vmatpush1.bf16.msra.mxu0 %v2009
      %2032 = vmatprep.subr.bf16.mxu0 0
      %2033 = vmatpush1.bf16.msra.mxu0 %v2008
      %2034 = vmatprep.subr.bf16.mxu0 0
      %2035 = vmatpush1.bf16.msra.mxu0 %v2007
      %2036 = vmatprep.subr.bf16.mxu0 0
      %2037 = vmatpush1.bf16.msra.mxu0 %v2006
      %2038 = vmatprep.subr.bf16.mxu0 0
      %2039 = vmatpush2.bf16.msra.mxu0 0
      %2040 = vmatprep.subr.bf16.mxu0 0
      %2041 = vmatpush2.bf16.msra.mxu0 0
      %2042 = vmatprep.subr.bf16.mxu0 0
      %2043 = vmatpush2.bf16.msra.mxu0 0
      %2044 = vmatprep.subr.bf16.mxu0 0
      %2045 = vmatpush2.bf16.msra.mxu0 0
      %2046 = vmatprep.subr.bf16.mxu0 0
      %2047 = vmatpush2.bf16.msra.mxu0 0
      %2048 = vmatprep.subr.bf16.mxu0 0
      %2049 = vmatpush2.bf16.msra.mxu0 0
      %2050 = vmatprep.subr.bf16.mxu0 0
      %2051 = vmatpush2.bf16.msra.mxu0 0
      %2052 = vmatprep.subr.bf16.mxu0 0
      %2053 = vmatpush2.bf16.msra.mxu0 0
      %2054 = vmatprep.mubr.bf16.mxu0 0
      %2055 = vmatmul.mubr.bf16.gmra.mxu0 %v1942
      %v2056 = vpop.f32.mrf.mxu0
      %v2057 = vadd.f32 0.0, %v2056
      %v2058 = vpop.f32.mrf.mxu0
      %v2059 = vpop.f32.mrf.mxu0
      %v2060 = vadd.f32 0.0, %v2059
      %v2061 = vpop.f32.mrf.mxu0
      %2062 = vmatprep.mubr.bf16.mxu0 0
      %2063 = vmatmul.mubr.bf16.gmra.mxu0 %v1943
      %v2064 = vpop.f32.mrf.mxu0
      %v2065 = vadd.f32 0.0, %v2064
      %v2066 = vpop.f32.mrf.mxu0
      %v2067 = vpop.f32.mrf.mxu0
      %v2068 = vadd.f32 0.0, %v2067
      %v2069 = vpop.f32.mrf.mxu0
      %2070 = vmatprep.mubr.bf16.mxu0 0
      %2071 = vmatmul.mubr.bf16.gmra.mxu0 %v1944
      %v2072 = vpop.f32.mrf.mxu0
      %v2073 = vadd.f32 0.0, %v2072
      %v2074 = vpop.f32.mrf.mxu0
      %v2075 = vpop.f32.mrf.mxu0
      %v2076 = vadd.f32 0.0, %v2075
      %v2077 = vpop.f32.mrf.mxu0
      %2078 = vmatprep.mubr.bf16.mxu0 0
      %2079 = vmatmul.mubr.bf16.gmra.mxu0 %v1945
      %v2080 = vpop.f32.mrf.mxu0
      %v2081 = vadd.f32 0.0, %v2080
      %v2082 = vpop.f32.mrf.mxu0
      %v2083 = vpop.f32.mrf.mxu0
      %v2084 = vadd.f32 0.0, %v2083
      %v2085 = vpop.f32.mrf.mxu0
      %2086 = vmatprep.mubr.bf16.mxu0 0
      %2087 = vmatmul.mubr.bf16.gmra.mxu0 %v1946
      %v2088 = vpop.f32.mrf.mxu0
      %v2089 = vadd.f32 0.0, %v2088
      %v2090 = vpop.f32.mrf.mxu0
      %v2091 = vpop.f32.mrf.mxu0
      %v2092 = vadd.f32 0.0, %v2091
      %v2093 = vpop.f32.mrf.mxu0
      %2094 = vmatprep.mubr.bf16.mxu0 0
      %2095 = vmatmul.mubr.bf16.gmra.mxu0 %v1947
      %v2096 = vpop.f32.mrf.mxu0
      %v2097 = vadd.f32 0.0, %v2096
      %v2098 = vpop.f32.mrf.mxu0
      %v2099 = vpop.f32.mrf.mxu0
      %v2100 = vadd.f32 0.0, %v2099
      %v2101 = vpop.f32.mrf.mxu0
      %2102 = vmatprep.mubr.bf16.mxu0 0
      %2103 = vmatmul.mubr.bf16.gmra.mxu0 %v1948
      %v2104 = vpop.f32.mrf.mxu0
      %v2105 = vadd.f32 0.0, %v2104
      %v2106 = vpop.f32.mrf.mxu0
      %v2107 = vpop.f32.mrf.mxu0
      %v2108 = vadd.f32 0.0, %v2107
      %v2109 = vpop.f32.mrf.mxu0
      %2110 = vmatprep.mubr.bf16.mxu0 0
      %2111 = vmatmul.mubr.bf16.gmra.mxu0 %v1949
      %v2112 = vpop.f32.mrf.mxu0
      %v2113 = vadd.f32 0.0, %v2112
      %v2114 = vpop.f32.mrf.mxu0
      %v2115 = vpop.f32.mrf.mxu0
      %v2116 = vadd.f32 0.0, %v2115
      %v2117 = vpop.f32.mrf.mxu0
      %2118 = vmatprep.mubr.bf16.mxu0 0
      %2119 = vmatmul.mubr.bf16.gmra.mxu0 %v1950
      %v2120 = vpop.f32.mrf.mxu0
      %v2121 = vadd.f32 0.0, %v2120
      %v2122 = vpop.f32.mrf.mxu0
      %v2123 = vpop.f32.mrf.mxu0
      %v2124 = vadd.f32 0.0, %v2123
      %v2125 = vpop.f32.mrf.mxu0
      %2126 = vmatprep.mubr.bf16.mxu0 0
      %2127 = vmatmul.mubr.bf16.gmra.mxu0 %v1951
      %v2128 = vpop.f32.mrf.mxu0
      %v2129 = vadd.f32 0.0, %v2128
      %v2130 = vpop.f32.mrf.mxu0
      %v2131 = vpop.f32.mrf.mxu0
      %v2132 = vadd.f32 0.0, %v2131
      %v2133 = vpop.f32.mrf.mxu0
      %2134 = vmatprep.mubr.bf16.mxu0 0
      %2135 = vmatmul.mubr.bf16.gmra.mxu0 %v1952
      %v2136 = vpop.f32.mrf.mxu0
      %v2137 = vadd.f32 0.0, %v2136
      %v2138 = vpop.f32.mrf.mxu0
      %v2139 = vpop.f32.mrf.mxu0
      %v2140 = vadd.f32 0.0, %v2139
      %v2141 = vpop.f32.mrf.mxu0
      %2142 = vmatprep.mubr.bf16.mxu0 0
      %2143 = vmatmul.mubr.bf16.gmra.mxu0 %v1953
      %v2144 = vpop.f32.mrf.mxu0
      %v2145 = vadd.f32 0.0, %v2144
      %v2146 = vpop.f32.mrf.mxu0
      %v2147 = vpop.f32.mrf.mxu0
      %v2148 = vadd.f32 0.0, %v2147
      %v2149 = vpop.f32.mrf.mxu0
      %2150 = vmatprep.mubr.bf16.mxu0 0
      %2151 = vmatmul.mubr.bf16.gmra.mxu0 %v1954
      %v2152 = vpop.f32.mrf.mxu0
      %v2153 = vadd.f32 0.0, %v2152
      %v2154 = vpop.f32.mrf.mxu0
      %v2155 = vpop.f32.mrf.mxu0
      %v2156 = vadd.f32 0.0, %v2155
      %v2157 = vpop.f32.mrf.mxu0
      %2158 = vmatprep.mubr.bf16.mxu0 0
      %2159 = vmatmul.mubr.bf16.gmra.mxu0 %v1955
      %v2160 = vpop.f32.mrf.mxu0
      %v2161 = vadd.f32 0.0, %v2160
      %v2162 = vpop.f32.mrf.mxu0
      %v2163 = vpop.f32.mrf.mxu0
      %v2164 = vadd.f32 0.0, %v2163
      %v2165 = vpop.f32.mrf.mxu0
      %2166 = vmatprep.mubr.bf16.mxu0 0
      %2167 = vmatmul.mubr.bf16.gmra.mxu0 %v1956
      %v2168 = vpop.f32.mrf.mxu0
      %v2169 = vadd.f32 0.0, %v2168
      %v2170 = vpop.f32.mrf.mxu0
      %v2171 = vpop.f32.mrf.mxu0
      %v2172 = vadd.f32 0.0, %v2171
      %v2173 = vpop.f32.mrf.mxu0
      %2174 = vmatprep.mubr.bf16.mxu0 0
      %2175 = vmatmul.mubr.bf16.gmra.mxu0 %v1957
      %v2176 = vpop.f32.mrf.mxu0
      %v2177 = vadd.f32 0.0, %v2176
      %v2178 = vpop.f32.mrf.mxu0
      %v2179 = vpop.f32.mrf.mxu0
      %v2180 = vadd.f32 0.0, %v2179
      %v2181 = vpop.f32.mrf.mxu0
      %2182 = vdwg.mxu0
      %v2183 = vadd.f32 %v1793, %v2057
      %v2184 = vadd.f32 %v1794, %v2060
      %v2185 = vadd.f32 %v1795, %v2065
      %v2186 = vadd.f32 %v1796, %v2068
      %v2187 = vadd.f32 %v1797, %v2073
      %v2188 = vadd.f32 %v1798, %v2076
      %v2189 = vadd.f32 %v1799, %v2081
      %v2190 = vadd.f32 %v1800, %v2084
      %v2191 = vadd.f32 %v1801, %v2089
      %v2192 = vadd.f32 %v1802, %v2092
      %v2193 = vadd.f32 %v1803, %v2097
      %v2194 = vadd.f32 %v1804, %v2100
      %v2195 = vadd.f32 %v1805, %v2105
      %v2196 = vadd.f32 %v1806, %v2108
      %v2197 = vadd.f32 %v1807, %v2113
      %v2198 = vadd.f32 %v1808, %v2116
      %v2199 = vadd.f32 %v1809, %v2121
      %v2200 = vadd.f32 %v1810, %v2124
      %v2201 = vadd.f32 %v1811, %v2129
      %v2202 = vadd.f32 %v1812, %v2132
      %v2203 = vadd.f32 %v1813, %v2137
      %v2204 = vadd.f32 %v1814, %v2140
      %v2205 = vadd.f32 %v1815, %v2145
      %v2206 = vadd.f32 %v1816, %v2148
      %v2207 = vadd.f32 %v1817, %v2153
      %v2208 = vadd.f32 %v1818, %v2156
      %v2209 = vadd.f32 %v1819, %v2161
      %v2210 = vadd.f32 %v1820, %v2164
      %v2211 = vadd.f32 %v1821, %v2169
      %v2212 = vadd.f32 %v1822, %v2172
      %v2213 = vadd.f32 %v1823, %v2177
      %v2214 = vadd.f32 %v1824, %v2180
      %v2215 = vld [vmem:[%s1828] sm:$0xf]
      %v2216 = vld [vmem:[%s1828 + $0x4] sm:$0xf]
      %v2217 = vld [vmem:[%s1828 + $0x8] sm:$0x1]
      %v2218 = vld [vmem:[%s1828 + $0xc] sm:$0xf]
      %v2219 = vld [vmem:[%s1828 + $0x10] sm:$0xf]
      %v2220 = vld [vmem:[%s1828 + $0x14] sm:$0x1]
      %v2221 = vld [vmem:[%s1828 + $0x18] sm:$0xf]
      %v2222 = vld [vmem:[%s1828 + $0x1c] sm:$0xf]
      %v2223 = vld [vmem:[%s1828 + $0x20] sm:$0x1]
      %v2224 = vld [vmem:[%s1828 + $0x24] sm:$0xf]
      %v2225 = vld [vmem:[%s1828 + $0x28] sm:$0xf]
      %v2226 = vld [vmem:[%s1828 + $0x2c] sm:$0x1]
      %v2227 = vld [vmem:[%s1828 + $0x30] sm:$0xf]
      %v2228 = vld [vmem:[%s1828 + $0x34] sm:$0xf]
      %v2229 = vld [vmem:[%s1828 + $0x38] sm:$0x1]
      %v2230 = vld [vmem:[%s1828 + $0x3c] sm:$0xf]
      %v2231 = vld [vmem:[%s1828 + $0x40] sm:$0xf]
      %v2232 = vld [vmem:[%s1828 + $0x44] sm:$0x1]
      %v2233 = vld [vmem:[%s1828 + $0x48] sm:$0xf]
      %v2234 = vld [vmem:[%s1828 + $0x4c] sm:$0xf]
      %v2235 = vld [vmem:[%s1828 + $0x50] sm:$0x1]
      %v2236 = vld [vmem:[%s1828 + $0x54] sm:$0xf]
      %v2237 = vld [vmem:[%s1828 + $0x58] sm:$0xf]
      %v2238 = vld [vmem:[%s1828 + $0x5c] sm:$0x1]
      %v2239 = vld [vmem:[%s1828 + $0x60] sm:$0xf]
      %v2240 = vld [vmem:[%s1828 + $0x64] sm:$0xf]
      %v2241 = vld [vmem:[%s1828 + $0x68] sm:$0x1]
      %v2242 = vld [vmem:[%s1828 + $0x6c] sm:$0xf]
      %v2243 = vld [vmem:[%s1828 + $0x70] sm:$0xf]
      %v2244 = vld [vmem:[%s1828 + $0x74] sm:$0x1]
      %v2245 = vld [vmem:[%s1828 + $0x78] sm:$0xf]
      %v2246 = vld [vmem:[%s1828 + $0x7c] sm:$0xf]
      %v2247 = vld [vmem:[%s1828 + $0x80] sm:$0x1]
      %v2248 = vld [vmem:[%s1828 + $0x84] sm:$0xf]
      %v2249 = vld [vmem:[%s1828 + $0x88] sm:$0xf]
      %v2250 = vld [vmem:[%s1828 + $0x8c] sm:$0x1]
      %v2251 = vld [vmem:[%s1828 + $0x90] sm:$0xf]
      %v2252 = vld [vmem:[%s1828 + $0x94] sm:$0xf]
      %v2253 = vld [vmem:[%s1828 + $0x98] sm:$0x1]
      %v2254 = vld [vmem:[%s1828 + $0x9c] sm:$0xf]
      %v2255 = vld [vmem:[%s1828 + $0xa0] sm:$0xf]
      %v2256 = vld [vmem:[%s1828 + $0xa4] sm:$0x1]
      %v2257 = vld [vmem:[%s1828 + $0xa8] sm:$0xf]
      %v2258 = vld [vmem:[%s1828 + $0xac] sm:$0xf]
      %v2259 = vld [vmem:[%s1828 + $0xb0] sm:$0x1]
      %v2260 = vld [vmem:[%s1828 + $0xb4] sm:$0xf]
      %v2261 = vld [vmem:[%s1828 + $0xb8] sm:$0xf]
      %v2262 = vld [vmem:[%s1828 + $0xbc] sm:$0x1]
      %v2264 = vshrl.u32 %v2215, 16
      %v2266 = vrot.slane %v2264, 4
      %v2267 = vshll.u32 %v2215, 16
      %v2269 = vrot.slane %v2267, 5
      %v2270 = vor.u32 %v2266, %v2269
      %v2271 = vrot.slane %v2270, 4
      %v2273 = vshll.u32 %v2216, 16
      %v2275 = vrot.slane %v2273, 5
      %v2276 = vsel %vm360, %v2271, %v2275
      %v2277 = vshrl.u32 %v2216, 16
      %v2279 = vrot.slane %v2277, 4
      %v2280 = vor.u32 %v2279, %v2275
      %v2281 = vrot.slane %v2280, 4
      %v2283 = vshll.u32 %v2217, 16
      %v2285 = vrot.slane %v2283, 5
      %v2286 = vsel %vm360, %v2281, %v2285
      %v2288 = vshrl.u32 %v2218, 16
      %v2290 = vrot.slane %v2288, 4
      %v2291 = vshll.u32 %v2218, 16
      %v2293 = vrot.slane %v2291, 5
      %v2294 = vor.u32 %v2290, %v2293
      %v2295 = vrot.slane %v2294, 4
      %v2297 = vshll.u32 %v2219, 16
      %v2299 = vrot.slane %v2297, 5
      %v2300 = vsel %vm360, %v2295, %v2299
      %v2301 = vshrl.u32 %v2219, 16
      %v2303 = vrot.slane %v2301, 4
      %v2304 = vor.u32 %v2303, %v2299
      %v2305 = vrot.slane %v2304, 4
      %v2307 = vshll.u32 %v2220, 16
      %v2309 = vrot.slane %v2307, 5
      %v2310 = vsel %vm360, %v2305, %v2309
      %v2312 = vshrl.u32 %v2221, 16
      %v2314 = vrot.slane %v2312, 4
      %v2315 = vshll.u32 %v2221, 16
      %v2317 = vrot.slane %v2315, 5
      %v2318 = vor.u32 %v2314, %v2317
      %v2319 = vrot.slane %v2318, 4
      %v2321 = vshll.u32 %v2222, 16
      %v2323 = vrot.slane %v2321, 5
      %v2324 = vsel %vm360, %v2319, %v2323
      %v2325 = vshrl.u32 %v2222, 16
      %v2327 = vrot.slane %v2325, 4
      %v2328 = vor.u32 %v2327, %v2323
      %v2329 = vrot.slane %v2328, 4
      %v2331 = vshll.u32 %v2223, 16
      %v2333 = vrot.slane %v2331, 5
      %v2334 = vsel %vm360, %v2329, %v2333
      %v2336 = vshrl.u32 %v2224, 16
      %v2338 = vrot.slane %v2336, 4
      %v2339 = vshll.u32 %v2224, 16
      %v2341 = vrot.slane %v2339, 5
      %v2342 = vor.u32 %v2338, %v2341
      %v2343 = vrot.slane %v2342, 4
      %v2345 = vshll.u32 %v2225, 16
      %v2347 = vrot.slane %v2345, 5
      %v2348 = vsel %vm360, %v2343, %v2347
      %v2349 = vshrl.u32 %v2225, 16
      %v2351 = vrot.slane %v2349, 4
      %v2352 = vor.u32 %v2351, %v2347
      %v2353 = vrot.slane %v2352, 4
      %v2355 = vshll.u32 %v2226, 16
      %v2357 = vrot.slane %v2355, 5
      %v2358 = vsel %vm360, %v2353, %v2357
      %v2360 = vshrl.u32 %v2227, 16
      %v2362 = vrot.slane %v2360, 4
      %v2363 = vshll.u32 %v2227, 16
      %v2365 = vrot.slane %v2363, 5
      %v2366 = vor.u32 %v2362, %v2365
      %v2367 = vrot.slane %v2366, 4
      %v2369 = vshll.u32 %v2228, 16
      %v2371 = vrot.slane %v2369, 5
      %v2372 = vsel %vm360, %v2367, %v2371
      %v2373 = vshrl.u32 %v2228, 16
      %v2375 = vrot.slane %v2373, 4
      %v2376 = vor.u32 %v2375, %v2371
      %v2377 = vrot.slane %v2376, 4
      %v2379 = vshll.u32 %v2229, 16
      %v2381 = vrot.slane %v2379, 5
      %v2382 = vsel %vm360, %v2377, %v2381
      %v2384 = vshrl.u32 %v2230, 16
      %v2386 = vrot.slane %v2384, 4
      %v2387 = vshll.u32 %v2230, 16
      %v2389 = vrot.slane %v2387, 5
      %v2390 = vor.u32 %v2386, %v2389
      %v2391 = vrot.slane %v2390, 4
      %v2393 = vshll.u32 %v2231, 16
      %v2395 = vrot.slane %v2393, 5
      %v2396 = vsel %vm360, %v2391, %v2395
      %v2397 = vshrl.u32 %v2231, 16
      %v2399 = vrot.slane %v2397, 4
      %v2400 = vor.u32 %v2399, %v2395
      %v2401 = vrot.slane %v2400, 4
      %v2403 = vshll.u32 %v2232, 16
      %v2405 = vrot.slane %v2403, 5
      %v2406 = vsel %vm360, %v2401, %v2405
      %v2408 = vshrl.u32 %v2233, 16
      %v2410 = vrot.slane %v2408, 4
      %v2411 = vshll.u32 %v2233, 16
      %v2413 = vrot.slane %v2411, 5
      %v2414 = vor.u32 %v2410, %v2413
      %v2415 = vrot.slane %v2414, 4
      %v2417 = vshll.u32 %v2234, 16
      %v2419 = vrot.slane %v2417, 5
      %v2420 = vsel %vm360, %v2415, %v2419
      %v2421 = vshrl.u32 %v2234, 16
      %v2423 = vrot.slane %v2421, 4
      %v2424 = vor.u32 %v2423, %v2419
      %v2425 = vrot.slane %v2424, 4
      %v2427 = vshll.u32 %v2235, 16
      %v2429 = vrot.slane %v2427, 5
      %v2430 = vsel %vm360, %v2425, %v2429
      %v2432 = vshrl.u32 %v2236, 16
      %v2434 = vrot.slane %v2432, 4
      %v2435 = vshll.u32 %v2236, 16
      %v2437 = vrot.slane %v2435, 5
      %v2438 = vor.u32 %v2434, %v2437
      %v2439 = vrot.slane %v2438, 4
      %v2441 = vshll.u32 %v2237, 16
      %v2443 = vrot.slane %v2441, 5
      %v2444 = vsel %vm360, %v2439, %v2443
      %v2445 = vshrl.u32 %v2237, 16
      %v2447 = vrot.slane %v2445, 4
      %v2448 = vor.u32 %v2447, %v2443
      %v2449 = vrot.slane %v2448, 4
      %v2451 = vshll.u32 %v2238, 16
      %v2453 = vrot.slane %v2451, 5
      %v2454 = vsel %vm360, %v2449, %v2453
      %v2456 = vshrl.u32 %v2239, 16
      %v2458 = vrot.slane %v2456, 4
      %v2459 = vshll.u32 %v2239, 16
      %v2461 = vrot.slane %v2459, 5
      %v2462 = vor.u32 %v2458, %v2461
      %v2463 = vrot.slane %v2462, 4
      %v2465 = vshll.u32 %v2240, 16
      %v2467 = vrot.slane %v2465, 5
      %v2468 = vsel %vm360, %v2463, %v2467
      %v2469 = vshrl.u32 %v2240, 16
      %v2471 = vrot.slane %v2469, 4
      %v2472 = vor.u32 %v2471, %v2467
      %v2473 = vrot.slane %v2472, 4
      %v2475 = vshll.u32 %v2241, 16
      %v2477 = vrot.slane %v2475, 5
      %v2478 = vsel %vm360, %v2473, %v2477
      %v2480 = vshrl.u32 %v2242, 16
      %v2482 = vrot.slane %v2480, 4
      %v2483 = vshll.u32 %v2242, 16
      %v2485 = vrot.slane %v2483, 5
      %v2486 = vor.u32 %v2482, %v2485
      %v2487 = vrot.slane %v2486, 4
      %v2489 = vshll.u32 %v2243, 16
      %v2491 = vrot.slane %v2489, 5
      %v2492 = vsel %vm360, %v2487, %v2491
      %v2493 = vshrl.u32 %v2243, 16
      %v2495 = vrot.slane %v2493, 4
      %v2496 = vor.u32 %v2495, %v2491
      %v2497 = vrot.slane %v2496, 4
      %v2499 = vshll.u32 %v2244, 16
      %v2501 = vrot.slane %v2499, 5
      %v2502 = vsel %vm360, %v2497, %v2501
      %v2504 = vshrl.u32 %v2245, 16
      %v2506 = vrot.slane %v2504, 4
      %v2507 = vshll.u32 %v2245, 16
      %v2509 = vrot.slane %v2507, 5
      %v2510 = vor.u32 %v2506, %v2509
      %v2511 = vrot.slane %v2510, 4
      %v2513 = vshll.u32 %v2246, 16
      %v2515 = vrot.slane %v2513, 5
      %v2516 = vsel %vm360, %v2511, %v2515
      %v2517 = vshrl.u32 %v2246, 16
      %v2519 = vrot.slane %v2517, 4
      %v2520 = vor.u32 %v2519, %v2515
      %v2521 = vrot.slane %v2520, 4
      %v2523 = vshll.u32 %v2247, 16
      %v2525 = vrot.slane %v2523, 5
      %v2526 = vsel %vm360, %v2521, %v2525
      %v2528 = vshrl.u32 %v2248, 16
      %v2530 = vrot.slane %v2528, 4
      %v2531 = vshll.u32 %v2248, 16
      %v2533 = vrot.slane %v2531, 5
      %v2534 = vor.u32 %v2530, %v2533
      %v2535 = vrot.slane %v2534, 4
      %v2537 = vshll.u32 %v2249, 16
      %v2539 = vrot.slane %v2537, 5
      %v2540 = vsel %vm360, %v2535, %v2539
      %v2541 = vshrl.u32 %v2249, 16
      %v2543 = vrot.slane %v2541, 4
      %v2544 = vor.u32 %v2543, %v2539
      %v2545 = vrot.slane %v2544, 4
      %v2547 = vshll.u32 %v2250, 16
      %v2549 = vrot.slane %v2547, 5
      %v2550 = vsel %vm360, %v2545, %v2549
      %v2552 = vshrl.u32 %v2251, 16
      %v2554 = vrot.slane %v2552, 4
      %v2555 = vshll.u32 %v2251, 16
      %v2557 = vrot.slane %v2555, 5
      %v2558 = vor.u32 %v2554, %v2557
      %v2559 = vrot.slane %v2558, 4
      %v2561 = vshll.u32 %v2252, 16
      %v2563 = vrot.slane %v2561, 5
      %v2564 = vsel %vm360, %v2559, %v2563
      %v2565 = vshrl.u32 %v2252, 16
      %v2567 = vrot.slane %v2565, 4
      %v2568 = vor.u32 %v2567, %v2563
      %v2569 = vrot.slane %v2568, 4
      %v2571 = vshll.u32 %v2253, 16
      %v2573 = vrot.slane %v2571, 5
      %v2574 = vsel %vm360, %v2569, %v2573
      %v2576 = vshrl.u32 %v2254, 16
      %v2578 = vrot.slane %v2576, 4
      %v2579 = vshll.u32 %v2254, 16
      %v2581 = vrot.slane %v2579, 5
      %v2582 = vor.u32 %v2578, %v2581
      %v2583 = vrot.slane %v2582, 4
      %v2585 = vshll.u32 %v2255, 16
      %v2587 = vrot.slane %v2585, 5
      %v2588 = vsel %vm360, %v2583, %v2587
      %v2589 = vshrl.u32 %v2255, 16
      %v2591 = vrot.slane %v2589, 4
      %v2592 = vor.u32 %v2591, %v2587
      %v2593 = vrot.slane %v2592, 4
      %v2595 = vshll.u32 %v2256, 16
      %v2597 = vrot.slane %v2595, 5
      %v2598 = vsel %vm360, %v2593, %v2597
      %v2600 = vshrl.u32 %v2257, 16
      %v2602 = vrot.slane %v2600, 4
      %v2603 = vshll.u32 %v2257, 16
      %v2605 = vrot.slane %v2603, 5
      %v2606 = vor.u32 %v2602, %v2605
      %v2607 = vrot.slane %v2606, 4
      %v2609 = vshll.u32 %v2258, 16
      %v2611 = vrot.slane %v2609, 5
      %v2612 = vsel %vm360, %v2607, %v2611
      %v2613 = vshrl.u32 %v2258, 16
      %v2615 = vrot.slane %v2613, 4
      %v2616 = vor.u32 %v2615, %v2611
      %v2617 = vrot.slane %v2616, 4
      %v2619 = vshll.u32 %v2259, 16
      %v2621 = vrot.slane %v2619, 5
      %v2622 = vsel %vm360, %v2617, %v2621
      %v2624 = vshrl.u32 %v2260, 16
      %v2626 = vrot.slane %v2624, 4
      %v2627 = vshll.u32 %v2260, 16
      %v2629 = vrot.slane %v2627, 5
      %v2630 = vor.u32 %v2626, %v2629
      %v2631 = vrot.slane %v2630, 4
      %v2633 = vshll.u32 %v2261, 16
      %v2635 = vrot.slane %v2633, 5
      %v2636 = vsel %vm360, %v2631, %v2635
      %v2637 = vshrl.u32 %v2261, 16
      %v2639 = vrot.slane %v2637, 4
      %v2640 = vor.u32 %v2639, %v2635
      %v2641 = vrot.slane %v2640, 4
      %v2643 = vshll.u32 %v2262, 16
      %v2645 = vrot.slane %v2643, 5
      %v2646 = vsel %vm360, %v2641, %v2645
      %s2647 = scalar_lea.vmem %s1, 256
      %v2648 = vld [vmem:[%s2647] sm:$0xf]
      %v2649 = vld [vmem:[%s2647 + $0x4] sm:$0xf]
      %v2650 = vld [vmem:[%s2647 + $0x8] sm:$0xf]
      %v2651 = vld [vmem:[%s2647 + $0xc] sm:$0xf]
      %v2652 = vld [vmem:[%s2647 + $0x10] sm:$0xf]
      %v2653 = vld [vmem:[%s2647 + $0x14] sm:$0xf]
      %v2654 = vld [vmem:[%s2647 + $0x18] sm:$0xf]
      %v2655 = vld [vmem:[%s2647 + $0x1c] sm:$0xf]
      %v2656 = vld [vmem:[%s2647 + $0x20] sm:$0xf]
      %v2657 = vld [vmem:[%s2647 + $0x24] sm:$0xf]
      %v2658 = vld [vmem:[%s2647 + $0x28] sm:$0xf]
      %v2659 = vld [vmem:[%s2647 + $0x2c] sm:$0xf]
      %v2660 = vld [vmem:[%s2647 + $0x30] sm:$0xf]
      %v2661 = vld [vmem:[%s2647 + $0x34] sm:$0xf]
      %v2662 = vld [vmem:[%s2647 + $0x38] sm:$0xf]
      %v2663 = vld [vmem:[%s2647 + $0x3c] sm:$0xf]
      %v2664 = vunpack.c.l.b16 %v2276
      %v2665 = vunpack.c.l.b16 %v2286
      %v2666 = vunpack.c.l.b16 %v2300
      %v2667 = vunpack.c.l.b16 %v2310
      %v2668 = vunpack.c.l.b16 %v2324
      %v2669 = vunpack.c.l.b16 %v2334
      %v2670 = vunpack.c.l.b16 %v2348
      %v2671 = vunpack.c.l.b16 %v2358
      %v2672 = vunpack.c.l.b16 %v2372
      %v2673 = vunpack.c.l.b16 %v2382
      %v2674 = vunpack.c.l.b16 %v2396
      %v2675 = vunpack.c.l.b16 %v2406
      %v2676 = vunpack.c.l.b16 %v2420
      %v2677 = vunpack.c.l.b16 %v2430
      %v2678 = vunpack.c.l.b16 %v2444
      %v2679 = vunpack.c.l.b16 %v2454
      %v2680 = vunpack.c.l.b16 %v2468
      %v2681 = vunpack.c.l.b16 %v2478
      %v2682 = vunpack.c.l.b16 %v2492
      %v2683 = vunpack.c.l.b16 %v2502
      %v2684 = vunpack.c.l.b16 %v2516
      %v2685 = vunpack.c.l.b16 %v2526
      %v2686 = vunpack.c.l.b16 %v2540
      %v2687 = vunpack.c.l.b16 %v2550
      %v2688 = vunpack.c.l.b16 %v2564
      %v2689 = vunpack.c.l.b16 %v2574
      %v2690 = vunpack.c.l.b16 %v2588
      %v2691 = vunpack.c.l.b16 %v2598
      %v2692 = vunpack.c.l.b16 %v2612
      %v2693 = vunpack.c.l.b16 %v2622
      %v2694 = vunpack.c.l.b16 %v2636
      %v2695 = vunpack.c.l.b16 %v2646
      %v2696 = vpack.c.b16 %v2665, %v2664
      %v2697 = vpack.c.b16 %v2667, %v2666
      %v2698 = vpack.c.b16 %v2669, %v2668
      %v2699 = vpack.c.b16 %v2671, %v2670
      %v2700 = vpack.c.b16 %v2673, %v2672
      %v2701 = vpack.c.b16 %v2675, %v2674
      %v2702 = vpack.c.b16 %v2677, %v2676
      %v2703 = vpack.c.b16 %v2679, %v2678
      %v2704 = vpack.c.b16 %v2681, %v2680
      %v2705 = vpack.c.b16 %v2683, %v2682
      %v2706 = vpack.c.b16 %v2685, %v2684
      %v2707 = vpack.c.b16 %v2687, %v2686
      %v2708 = vpack.c.b16 %v2689, %v2688
      %v2709 = vpack.c.b16 %v2691, %v2690
      %v2710 = vpack.c.b16 %v2693, %v2692
      %v2711 = vpack.c.b16 %v2695, %v2694
      %v2744 = vunpack.c.l.b16 %v2648
      %v2745 = vunpack.c.l.b16 %v2649
      %v2746 = vunpack.c.l.b16 %v2650
      %v2747 = vunpack.c.l.b16 %v2651
      %v2748 = vunpack.c.l.b16 %v2652
      %v2749 = vunpack.c.l.b16 %v2653
      %v2750 = vunpack.c.l.b16 %v2654
      %v2751 = vunpack.c.l.b16 %v2655
      %v2752 = vunpack.c.l.b16 %v2656
      %v2753 = vunpack.c.l.b16 %v2657
      %v2754 = vunpack.c.l.b16 %v2658
      %v2755 = vunpack.c.l.b16 %v2659
      %v2756 = vunpack.c.l.b16 %v2660
      %v2757 = vunpack.c.l.b16 %v2661
      %v2758 = vunpack.c.l.b16 %v2662
      %v2759 = vunpack.c.l.b16 %v2663
      %v2760 = vpack.c.b16 %v2745, %v2744
      %v2761 = vpack.c.b16 %v2747, %v2746
      %v2762 = vpack.c.b16 %v2749, %v2748
      %v2763 = vpack.c.b16 %v2751, %v2750
      %v2764 = vpack.c.b16 %v2753, %v2752
      %v2765 = vpack.c.b16 %v2755, %v2754
      %v2766 = vpack.c.b16 %v2757, %v2756
      %v2767 = vpack.c.b16 %v2759, %v2758
      %2776 = vmatprep.subr.bf16.mxu0 0
      %2777 = vmatpush1.bf16.msra.mxu0 %v2767
      %2778 = vmatprep.subr.bf16.mxu0 0
      %2779 = vmatpush1.bf16.msra.mxu0 %v2766
      %2780 = vmatprep.subr.bf16.mxu0 0
      %2781 = vmatpush1.bf16.msra.mxu0 %v2765
      %2782 = vmatprep.subr.bf16.mxu0 0
      %2783 = vmatpush1.bf16.msra.mxu0 %v2764
      %2784 = vmatprep.subr.bf16.mxu0 0
      %2785 = vmatpush1.bf16.msra.mxu0 %v2763
      %2786 = vmatprep.subr.bf16.mxu0 0
      %2787 = vmatpush1.bf16.msra.mxu0 %v2762
      %2788 = vmatprep.subr.bf16.mxu0 0
      %2789 = vmatpush1.bf16.msra.mxu0 %v2761
      %2790 = vmatprep.subr.bf16.mxu0 0
      %2791 = vmatpush1.bf16.msra.mxu0 %v2760
      %2792 = vmatprep.subr.bf16.mxu0 0
      %2793 = vmatpush2.bf16.msra.mxu0 0
      %2794 = vmatprep.subr.bf16.mxu0 0
      %2795 = vmatpush2.bf16.msra.mxu0 0
      %2796 = vmatprep.subr.bf16.mxu0 0
      %2797 = vmatpush2.bf16.msra.mxu0 0
      %2798 = vmatprep.subr.bf16.mxu0 0
      %2799 = vmatpush2.bf16.msra.mxu0 0
      %2800 = vmatprep.subr.bf16.mxu0 0
      %2801 = vmatpush2.bf16.msra.mxu0 0
      %2802 = vmatprep.subr.bf16.mxu0 0
      %2803 = vmatpush2.bf16.msra.mxu0 0
      %2804 = vmatprep.subr.bf16.mxu0 0
      %2805 = vmatpush2.bf16.msra.mxu0 0
      %2806 = vmatprep.subr.bf16.mxu0 0
      %2807 = vmatpush2.bf16.msra.mxu0 0
      %2808 = vmatprep.mubr.bf16.mxu0 0
      %2809 = vmatmul.mubr.bf16.gmra.mxu0 %v2696
      %v2810 = vpop.f32.mrf.mxu0
      %v2811 = vadd.f32 0.0, %v2810
      %v2812 = vpop.f32.mrf.mxu0
      %v2813 = vpop.f32.mrf.mxu0
      %v2814 = vadd.f32 0.0, %v2813
      %v2815 = vpop.f32.mrf.mxu0
      %2816 = vmatprep.mubr.bf16.mxu0 0
      %2817 = vmatmul.mubr.bf16.gmra.mxu0 %v2697
      %v2818 = vpop.f32.mrf.mxu0
      %v2819 = vadd.f32 0.0, %v2818
      %v2820 = vpop.f32.mrf.mxu0
      %v2821 = vpop.f32.mrf.mxu0
      %v2822 = vadd.f32 0.0, %v2821
      %v2823 = vpop.f32.mrf.mxu0
      %2824 = vmatprep.mubr.bf16.mxu0 0
      %2825 = vmatmul.mubr.bf16.gmra.mxu0 %v2698
      %v2826 = vpop.f32.mrf.mxu0
      %v2827 = vadd.f32 0.0, %v2826
      %v2828 = vpop.f32.mrf.mxu0
      %v2829 = vpop.f32.mrf.mxu0
      %v2830 = vadd.f32 0.0, %v2829
      %v2831 = vpop.f32.mrf.mxu0
      %2832 = vmatprep.mubr.bf16.mxu0 0
      %2833 = vmatmul.mubr.bf16.gmra.mxu0 %v2699
      %v2834 = vpop.f32.mrf.mxu0
      %v2835 = vadd.f32 0.0, %v2834
      %v2836 = vpop.f32.mrf.mxu0
      %v2837 = vpop.f32.mrf.mxu0
      %v2838 = vadd.f32 0.0, %v2837
      %v2839 = vpop.f32.mrf.mxu0
      %2840 = vmatprep.mubr.bf16.mxu0 0
      %2841 = vmatmul.mubr.bf16.gmra.mxu0 %v2700
      %v2842 = vpop.f32.mrf.mxu0
      %v2843 = vadd.f32 0.0, %v2842
      %v2844 = vpop.f32.mrf.mxu0
      %v2845 = vpop.f32.mrf.mxu0
      %v2846 = vadd.f32 0.0, %v2845
      %v2847 = vpop.f32.mrf.mxu0
      %2848 = vmatprep.mubr.bf16.mxu0 0
      %2849 = vmatmul.mubr.bf16.gmra.mxu0 %v2701
      %v2850 = vpop.f32.mrf.mxu0
      %v2851 = vadd.f32 0.0, %v2850
      %v2852 = vpop.f32.mrf.mxu0
      %v2853 = vpop.f32.mrf.mxu0
      %v2854 = vadd.f32 0.0, %v2853
      %v2855 = vpop.f32.mrf.mxu0
      %2856 = vmatprep.mubr.bf16.mxu0 0
      %2857 = vmatmul.mubr.bf16.gmra.mxu0 %v2702
      %v2858 = vpop.f32.mrf.mxu0
      %v2859 = vadd.f32 0.0, %v2858
      %v2860 = vpop.f32.mrf.mxu0
      %v2861 = vpop.f32.mrf.mxu0
      %v2862 = vadd.f32 0.0, %v2861
      %v2863 = vpop.f32.mrf.mxu0
      %2864 = vmatprep.mubr.bf16.mxu0 0
      %2865 = vmatmul.mubr.bf16.gmra.mxu0 %v2703
      %v2866 = vpop.f32.mrf.mxu0
      %v2867 = vadd.f32 0.0, %v2866
      %v2868 = vpop.f32.mrf.mxu0
      %v2869 = vpop.f32.mrf.mxu0
      %v2870 = vadd.f32 0.0, %v2869
      %v2871 = vpop.f32.mrf.mxu0
      %2872 = vmatprep.mubr.bf16.mxu0 0
      %2873 = vmatmul.mubr.bf16.gmra.mxu0 %v2704
      %v2874 = vpop.f32.mrf.mxu0
      %v2875 = vadd.f32 0.0, %v2874
      %v2876 = vpop.f32.mrf.mxu0
      %v2877 = vpop.f32.mrf.mxu0
      %v2878 = vadd.f32 0.0, %v2877
      %v2879 = vpop.f32.mrf.mxu0
      %2880 = vmatprep.mubr.bf16.mxu0 0
      %2881 = vmatmul.mubr.bf16.gmra.mxu0 %v2705
      %v2882 = vpop.f32.mrf.mxu0
      %v2883 = vadd.f32 0.0, %v2882
      %v2884 = vpop.f32.mrf.mxu0
      %v2885 = vpop.f32.mrf.mxu0
      %v2886 = vadd.f32 0.0, %v2885
      %v2887 = vpop.f32.mrf.mxu0
      %2888 = vmatprep.mubr.bf16.mxu0 0
      %2889 = vmatmul.mubr.bf16.gmra.mxu0 %v2706
      %v2890 = vpop.f32.mrf.mxu0
      %v2891 = vadd.f32 0.0, %v2890
      %v2892 = vpop.f32.mrf.mxu0
      %v2893 = vpop.f32.mrf.mxu0
      %v2894 = vadd.f32 0.0, %v2893
      %v2895 = vpop.f32.mrf.mxu0
      %2896 = vmatprep.mubr.bf16.mxu0 0
      %2897 = vmatmul.mubr.bf16.gmra.mxu0 %v2707
      %v2898 = vpop.f32.mrf.mxu0
      %v2899 = vadd.f32 0.0, %v2898
      %v2900 = vpop.f32.mrf.mxu0
      %v2901 = vpop.f32.mrf.mxu0
      %v2902 = vadd.f32 0.0, %v2901
      %v2903 = vpop.f32.mrf.mxu0
      %2904 = vmatprep.mubr.bf16.mxu0 0
      %2905 = vmatmul.mubr.bf16.gmra.mxu0 %v2708
      %v2906 = vpop.f32.mrf.mxu0
      %v2907 = vadd.f32 0.0, %v2906
      %v2908 = vpop.f32.mrf.mxu0
      %v2909 = vpop.f32.mrf.mxu0
      %v2910 = vadd.f32 0.0, %v2909
      %v2911 = vpop.f32.mrf.mxu0
      %2912 = vmatprep.mubr.bf16.mxu0 0
      %2913 = vmatmul.mubr.bf16.gmra.mxu0 %v2709
      %v2914 = vpop.f32.mrf.mxu0
      %v2915 = vadd.f32 0.0, %v2914
      %v2916 = vpop.f32.mrf.mxu0
      %v2917 = vpop.f32.mrf.mxu0
      %v2918 = vadd.f32 0.0, %v2917
      %v2919 = vpop.f32.mrf.mxu0
      %2920 = vmatprep.mubr.bf16.mxu0 0
      %2921 = vmatmul.mubr.bf16.gmra.mxu0 %v2710
      %v2922 = vpop.f32.mrf.mxu0
      %v2923 = vadd.f32 0.0, %v2922
      %v2924 = vpop.f32.mrf.mxu0
      %v2925 = vpop.f32.mrf.mxu0
      %v2926 = vadd.f32 0.0, %v2925
      %v2927 = vpop.f32.mrf.mxu0
      %2928 = vmatprep.mubr.bf16.mxu0 0
      %2929 = vmatmul.mubr.bf16.gmra.mxu0 %v2711
      %v2930 = vpop.f32.mrf.mxu0
      %v2931 = vadd.f32 0.0, %v2930
      %v2932 = vpop.f32.mrf.mxu0
      %v2933 = vpop.f32.mrf.mxu0
      %v2934 = vadd.f32 0.0, %v2933
      %v2935 = vpop.f32.mrf.mxu0
      %2936 = vdwg.mxu0
      %v2937 = vadd.f32 %v2183, %v2811
      %v2938 = vadd.f32 %v2184, %v2814
      %v2939 = vadd.f32 %v2185, %v2819
      %v2940 = vadd.f32 %v2186, %v2822
      %v2941 = vadd.f32 %v2187, %v2827
      %v2942 = vadd.f32 %v2188, %v2830
      %v2943 = vadd.f32 %v2189, %v2835
      %v2944 = vadd.f32 %v2190, %v2838
      %v2945 = vadd.f32 %v2191, %v2843
      %v2946 = vadd.f32 %v2192, %v2846
      %v2947 = vadd.f32 %v2193, %v2851
      %v2948 = vadd.f32 %v2194, %v2854
      %v2949 = vadd.f32 %v2195, %v2859
      %v2950 = vadd.f32 %v2196, %v2862
      %v2951 = vadd.f32 %v2197, %v2867
      %v2952 = vadd.f32 %v2198, %v2870
      %v2953 = vadd.f32 %v2199, %v2875
      %v2954 = vadd.f32 %v2200, %v2878
      %v2955 = vadd.f32 %v2201, %v2883
      %v2956 = vadd.f32 %v2202, %v2886
      %v2957 = vadd.f32 %v2203, %v2891
      %v2958 = vadd.f32 %v2204, %v2894
      %v2959 = vadd.f32 %v2205, %v2899
      %v2960 = vadd.f32 %v2206, %v2902
      %v2961 = vadd.f32 %v2207, %v2907
      %v2962 = vadd.f32 %v2208, %v2910
      %v2963 = vadd.f32 %v2209, %v2915
      %v2964 = vadd.f32 %v2210, %v2918
      %v2965 = vadd.f32 %v2211, %v2923
      %v2966 = vadd.f32 %v2212, %v2926
      %v2967 = vadd.f32 %v2213, %v2931
      %v2968 = vadd.f32 %v2214, %v2934
      %v2969 = vld [vmem:[%s1828] sm:$0xe]
      %v2970 = vld [vmem:[%s1828 + $0xc] sm:$0xe]
      %v2971 = vld [vmem:[%s1828 + $0x18] sm:$0xe]
      %v2972 = vld [vmem:[%s1828 + $0x24] sm:$0xe]
      %v2973 = vld [vmem:[%s1828 + $0x30] sm:$0xe]
      %v2974 = vld [vmem:[%s1828 + $0x3c] sm:$0xe]
      %v2975 = vld [vmem:[%s1828 + $0x48] sm:$0xe]
      %v2976 = vld [vmem:[%s1828 + $0x54] sm:$0xe]
      %v2977 = vld [vmem:[%s1828 + $0x60] sm:$0xe]
      %v2978 = vld [vmem:[%s1828 + $0x6c] sm:$0xe]
      %v2979 = vld [vmem:[%s1828 + $0x78] sm:$0xe]
      %v2980 = vld [vmem:[%s1828 + $0x84] sm:$0xe]
      %v2981 = vld [vmem:[%s1828 + $0x90] sm:$0xe]
      %v2982 = vld [vmem:[%s1828 + $0x9c] sm:$0xe]
      %v2983 = vld [vmem:[%s1828 + $0xa8] sm:$0xe]
      %v2984 = vld [vmem:[%s1828 + $0xb4] sm:$0xe]
      %v3033 = vrot.slane %v2969, 5
      %v3034 = vrot.slane %v3033, 4
      %v3035 = vrot.slane %v2216, 5
      %v3036 = vsel %vm1390, %v3034, %v3035
      %v3037 = vrot.slane %v3035, 4
      %v3038 = vrot.slane %v2217, 5
      %v3039 = vsel %vm1390, %v3037, %v3038
      %v3040 = vrot.slane %v2970, 5
      %v3041 = vrot.slane %v3040, 4
      %v3042 = vrot.slane %v2219, 5
      %v3043 = vsel %vm1390, %v3041, %v3042
      %v3044 = vrot.slane %v3042, 4
      %v3045 = vrot.slane %v2220, 5
      %v3046 = vsel %vm1390, %v3044, %v3045
      %v3047 = vrot.slane %v2971, 5
      %v3048 = vrot.slane %v3047, 4
      %v3049 = vrot.slane %v2222, 5
      %v3050 = vsel %vm1390, %v3048, %v3049
      %v3051 = vrot.slane %v3049, 4
      %v3052 = vrot.slane %v2223, 5
      %v3053 = vsel %vm1390, %v3051, %v3052
      %v3054 = vrot.slane %v2972, 5
      %v3055 = vrot.slane %v3054, 4
      %v3056 = vrot.slane %v2225, 5
      %v3057 = vsel %vm1390, %v3055, %v3056
      %v3058 = vrot.slane %v3056, 4
      %v3059 = vrot.slane %v2226, 5
      %v3060 = vsel %vm1390, %v3058, %v3059
      %v3061 = vrot.slane %v2973, 5
      %v3062 = vrot.slane %v3061, 4
      %v3063 = vrot.slane %v2228, 5
      %v3064 = vsel %vm1390, %v3062, %v3063
      %v3065 = vrot.slane %v3063, 4
      %v3066 = vrot.slane %v2229, 5
      %v3067 = vsel %vm1390, %v3065, %v3066
      %v3068 = vrot.slane %v2974, 5
      %v3069 = vrot.slane %v3068, 4
      %v3070 = vrot.slane %v2231, 5
      %v3071 = vsel %vm1390, %v3069, %v3070
      %v3072 = vrot.slane %v3070, 4
      %v3073 = vrot.slane %v2232, 5
      %v3074 = vsel %vm1390, %v3072, %v3073
      %v3075 = vrot.slane %v2975, 5
      %v3076 = vrot.slane %v3075, 4
      %v3077 = vrot.slane %v2234, 5
      %v3078 = vsel %vm1390, %v3076, %v3077
      %v3079 = vrot.slane %v3077, 4
      %v3080 = vrot.slane %v2235, 5
      %v3081 = vsel %vm1390, %v3079, %v3080
      %v3082 = vrot.slane %v2976, 5
      %v3083 = vrot.slane %v3082, 4
      %v3084 = vrot.slane %v2237, 5
      %v3085 = vsel %vm1390, %v3083, %v3084
      %v3086 = vrot.slane %v3084, 4
      %v3087 = vrot.slane %v2238, 5
      %v3088 = vsel %vm1390, %v3086, %v3087
      %v3089 = vrot.slane %v2977, 5
      %v3090 = vrot.slane %v3089, 4
      %v3091 = vrot.slane %v2240, 5
      %v3092 = vsel %vm1390, %v3090, %v3091
      %v3093 = vrot.slane %v3091, 4
      %v3094 = vrot.slane %v2241, 5
      %v3095 = vsel %vm1390, %v3093, %v3094
      %v3096 = vrot.slane %v2978, 5
      %v3097 = vrot.slane %v3096, 4
      %v3098 = vrot.slane %v2243, 5
      %v3099 = vsel %vm1390, %v3097, %v3098
      %v3100 = vrot.slane %v3098, 4
      %v3101 = vrot.slane %v2244, 5
      %v3102 = vsel %vm1390, %v3100, %v3101
      %v3103 = vrot.slane %v2979, 5
      %v3104 = vrot.slane %v3103, 4
      %v3105 = vrot.slane %v2246, 5
      %v3106 = vsel %vm1390, %v3104, %v3105
      %v3107 = vrot.slane %v3105, 4
      %v3108 = vrot.slane %v2247, 5
      %v3109 = vsel %vm1390, %v3107, %v3108
      %v3110 = vrot.slane %v2980, 5
      %v3111 = vrot.slane %v3110, 4
      %v3112 = vrot.slane %v2249, 5
      %v3113 = vsel %vm1390, %v3111, %v3112
      %v3114 = vrot.slane %v3112, 4
      %v3115 = vrot.slane %v2250, 5
      %v3116 = vsel %vm1390, %v3114, %v3115
      %v3117 = vrot.slane %v2981, 5
      %v3118 = vrot.slane %v3117, 4
      %v3119 = vrot.slane %v2252, 5
      %v3120 = vsel %vm1390, %v3118, %v3119
      %v3121 = vrot.slane %v3119, 4
      %v3122 = vrot.slane %v2253, 5
      %v3123 = vsel %vm1390, %v3121, %v3122
      %v3124 = vrot.slane %v2982, 5
      %v3125 = vrot.slane %v3124, 4
      %v3126 = vrot.slane %v2255, 5
      %v3127 = vsel %vm1390, %v3125, %v3126
      %v3128 = vrot.slane %v3126, 4
      %v3129 = vrot.slane %v2256, 5
      %v3130 = vsel %vm1390, %v3128, %v3129
      %v3131 = vrot.slane %v2983, 5
      %v3132 = vrot.slane %v3131, 4
      %v3133 = vrot.slane %v2258, 5
      %v3134 = vsel %vm1390, %v3132, %v3133
      %v3135 = vrot.slane %v3133, 4
      %v3136 = vrot.slane %v2259, 5
      %v3137 = vsel %vm1390, %v3135, %v3136
      %v3138 = vrot.slane %v2984, 5
      %v3139 = vrot.slane %v3138, 4
      %v3140 = vrot.slane %v2261, 5
      %v3141 = vsel %vm1390, %v3139, %v3140
      %v3142 = vrot.slane %v3140, 4
      %v3143 = vrot.slane %v2262, 5
      %v3144 = vsel %vm1390, %v3142, %v3143
      %s3145 = scalar_lea.vmem %s1, 320
      %v3146 = vld [vmem:[%s3145] sm:$0xf]
      %v3147 = vld [vmem:[%s3145 + $0x4] sm:$0xf]
      %v3148 = vld [vmem:[%s3145 + $0x8] sm:$0xf]
      %v3149 = vld [vmem:[%s3145 + $0xc] sm:$0xf]
      %v3150 = vld [vmem:[%s3145 + $0x10] sm:$0xf]
      %v3151 = vld [vmem:[%s3145 + $0x14] sm:$0xf]
      %v3152 = vld [vmem:[%s3145 + $0x18] sm:$0xf]
      %v3153 = vld [vmem:[%s3145 + $0x1c] sm:$0xf]
      %v3154 = vld [vmem:[%s3145 + $0x20] sm:$0xf]
      %v3155 = vld [vmem:[%s3145 + $0x24] sm:$0xf]
      %v3156 = vld [vmem:[%s3145 + $0x28] sm:$0xf]
      %v3157 = vld [vmem:[%s3145 + $0x2c] sm:$0xf]
      %v3158 = vld [vmem:[%s3145 + $0x30] sm:$0xf]
      %v3159 = vld [vmem:[%s3145 + $0x34] sm:$0xf]
      %v3160 = vld [vmem:[%s3145 + $0x38] sm:$0xf]
      %v3161 = vld [vmem:[%s3145 + $0x3c] sm:$0xf]
      %v3162 = vunpack.c.l.b16 %v3036
      %v3163 = vunpack.c.l.b16 %v3039
      %v3164 = vunpack.c.l.b16 %v3043
      %v3165 = vunpack.c.l.b16 %v3046
      %v3166 = vunpack.c.l.b16 %v3050
      %v3167 = vunpack.c.l.b16 %v3053
      %v3168 = vunpack.c.l.b16 %v3057
      %v3169 = vunpack.c.l.b16 %v3060
      %v3170 = vunpack.c.l.b16 %v3064
      %v3171 = vunpack.c.l.b16 %v3067
      %v3172 = vunpack.c.l.b16 %v3071
      %v3173 = vunpack.c.l.b16 %v3074
      %v3174 = vunpack.c.l.b16 %v3078
      %v3175 = vunpack.c.l.b16 %v3081
      %v3176 = vunpack.c.l.b16 %v3085
      %v3177 = vunpack.c.l.b16 %v3088
      %v3178 = vunpack.c.l.b16 %v3092
      %v3179 = vunpack.c.l.b16 %v3095
      %v3180 = vunpack.c.l.b16 %v3099
      %v3181 = vunpack.c.l.b16 %v3102
      %v3182 = vunpack.c.l.b16 %v3106
      %v3183 = vunpack.c.l.b16 %v3109
      %v3184 = vunpack.c.l.b16 %v3113
      %v3185 = vunpack.c.l.b16 %v3116
      %v3186 = vunpack.c.l.b16 %v3120
      %v3187 = vunpack.c.l.b16 %v3123
      %v3188 = vunpack.c.l.b16 %v3127
      %v3189 = vunpack.c.l.b16 %v3130
      %v3190 = vunpack.c.l.b16 %v3134
      %v3191 = vunpack.c.l.b16 %v3137
      %v3192 = vunpack.c.l.b16 %v3141
      %v3193 = vunpack.c.l.b16 %v3144
      %v3194 = vpack.c.b16 %v3163, %v3162
      %v3195 = vpack.c.b16 %v3165, %v3164
      %v3196 = vpack.c.b16 %v3167, %v3166
      %v3197 = vpack.c.b16 %v3169, %v3168
      %v3198 = vpack.c.b16 %v3171, %v3170
      %v3199 = vpack.c.b16 %v3173, %v3172
      %v3200 = vpack.c.b16 %v3175, %v3174
      %v3201 = vpack.c.b16 %v3177, %v3176
      %v3202 = vpack.c.b16 %v3179, %v3178
      %v3203 = vpack.c.b16 %v3181, %v3180
      %v3204 = vpack.c.b16 %v3183, %v3182
      %v3205 = vpack.c.b16 %v3185, %v3184
      %v3206 = vpack.c.b16 %v3187, %v3186
      %v3207 = vpack.c.b16 %v3189, %v3188
      %v3208 = vpack.c.b16 %v3191, %v3190
      %v3209 = vpack.c.b16 %v3193, %v3192
      %v3242 = vunpack.c.l.b16 %v3146
      %v3243 = vunpack.c.l.b16 %v3147
      %v3244 = vunpack.c.l.b16 %v3148
      %v3245 = vunpack.c.l.b16 %v3149
      %v3246 = vunpack.c.l.b16 %v3150
      %v3247 = vunpack.c.l.b16 %v3151
      %v3248 = vunpack.c.l.b16 %v3152
      %v3249 = vunpack.c.l.b16 %v3153
      %v3250 = vunpack.c.l.b16 %v3154
      %v3251 = vunpack.c.l.b16 %v3155
      %v3252 = vunpack.c.l.b16 %v3156
      %v3253 = vunpack.c.l.b16 %v3157
      %v3254 = vunpack.c.l.b16 %v3158
      %v3255 = vunpack.c.l.b16 %v3159
      %v3256 = vunpack.c.l.b16 %v3160
      %v3257 = vunpack.c.l.b16 %v3161
      %v3258 = vpack.c.b16 %v3243, %v3242
      %v3259 = vpack.c.b16 %v3245, %v3244
      %v3260 = vpack.c.b16 %v3247, %v3246
      %v3261 = vpack.c.b16 %v3249, %v3248
      %v3262 = vpack.c.b16 %v3251, %v3250
      %v3263 = vpack.c.b16 %v3253, %v3252
      %v3264 = vpack.c.b16 %v3255, %v3254
      %v3265 = vpack.c.b16 %v3257, %v3256
      %3274 = vmatprep.subr.bf16.mxu0 0
      %3275 = vmatpush1.bf16.msra.mxu0 %v3265
      %3276 = vmatprep.subr.bf16.mxu0 0
      %3277 = vmatpush1.bf16.msra.mxu0 %v3264
      %3278 = vmatprep.subr.bf16.mxu0 0
      %3279 = vmatpush1.bf16.msra.mxu0 %v3263
      %3280 = vmatprep.subr.bf16.mxu0 0
      %3281 = vmatpush1.bf16.msra.mxu0 %v3262
      %3282 = vmatprep.subr.bf16.mxu0 0
      %3283 = vmatpush1.bf16.msra.mxu0 %v3261
      %3284 = vmatprep.subr.bf16.mxu0 0
      %3285 = vmatpush1.bf16.msra.mxu0 %v3260
      %3286 = vmatprep.subr.bf16.mxu0 0
      %3287 = vmatpush1.bf16.msra.mxu0 %v3259
      %3288 = vmatprep.subr.bf16.mxu0 0
      %3289 = vmatpush1.bf16.msra.mxu0 %v3258
      %3290 = vmatprep.subr.bf16.mxu0 0
      %3291 = vmatpush2.bf16.msra.mxu0 0
      %3292 = vmatprep.subr.bf16.mxu0 0
      %3293 = vmatpush2.bf16.msra.mxu0 0
      %3294 = vmatprep.subr.bf16.mxu0 0
      %3295 = vmatpush2.bf16.msra.mxu0 0
      %3296 = vmatprep.subr.bf16.mxu0 0
      %3297 = vmatpush2.bf16.msra.mxu0 0
      %3298 = vmatprep.subr.bf16.mxu0 0
      %3299 = vmatpush2.bf16.msra.mxu0 0
      %3300 = vmatprep.subr.bf16.mxu0 0
      %3301 = vmatpush2.bf16.msra.mxu0 0
      %3302 = vmatprep.subr.bf16.mxu0 0
      %3303 = vmatpush2.bf16.msra.mxu0 0
      %3304 = vmatprep.subr.bf16.mxu0 0
      %3305 = vmatpush2.bf16.msra.mxu0 0
      %3306 = vmatprep.mubr.bf16.mxu0 0
      %3307 = vmatmul.mubr.bf16.gmra.mxu0 %v3194
      %v3308 = vpop.f32.mrf.mxu0
      %v3309 = vadd.f32 0.0, %v3308
      %v3310 = vpop.f32.mrf.mxu0
      %v3311 = vpop.f32.mrf.mxu0
      %v3312 = vadd.f32 0.0, %v3311
      %v3313 = vpop.f32.mrf.mxu0
      %3314 = vmatprep.mubr.bf16.mxu0 0
      %3315 = vmatmul.mubr.bf16.gmra.mxu0 %v3195
      %v3316 = vpop.f32.mrf.mxu0
      %v3317 = vadd.f32 0.0, %v3316
      %v3318 = vpop.f32.mrf.mxu0
      %v3319 = vpop.f32.mrf.mxu0
      %v3320 = vadd.f32 0.0, %v3319
      %v3321 = vpop.f32.mrf.mxu0
      %3322 = vmatprep.mubr.bf16.mxu0 0
      %3323 = vmatmul.mubr.bf16.gmra.mxu0 %v3196
      %v3324 = vpop.f32.mrf.mxu0
      %v3325 = vadd.f32 0.0, %v3324
      %v3326 = vpop.f32.mrf.mxu0
      %v3327 = vpop.f32.mrf.mxu0
      %v3328 = vadd.f32 0.0, %v3327
      %v3329 = vpop.f32.mrf.mxu0
      %3330 = vmatprep.mubr.bf16.mxu0 0
      %3331 = vmatmul.mubr.bf16.gmra.mxu0 %v3197
      %v3332 = vpop.f32.mrf.mxu0
      %v3333 = vadd.f32 0.0, %v3332
      %v3334 = vpop.f32.mrf.mxu0
      %v3335 = vpop.f32.mrf.mxu0
      %v3336 = vadd.f32 0.0, %v3335
      %v3337 = vpop.f32.mrf.mxu0
      %3338 = vmatprep.mubr.bf16.mxu0 0
      %3339 = vmatmul.mubr.bf16.gmra.mxu0 %v3198
      %v3340 = vpop.f32.mrf.mxu0
      %v3341 = vadd.f32 0.0, %v3340
      %v3342 = vpop.f32.mrf.mxu0
      %v3343 = vpop.f32.mrf.mxu0
      %v3344 = vadd.f32 0.0, %v3343
      %v3345 = vpop.f32.mrf.mxu0
      %3346 = vmatprep.mubr.bf16.mxu0 0
      %3347 = vmatmul.mubr.bf16.gmra.mxu0 %v3199
      %v3348 = vpop.f32.mrf.mxu0
      %v3349 = vadd.f32 0.0, %v3348
      %v3350 = vpop.f32.mrf.mxu0
      %v3351 = vpop.f32.mrf.mxu0
      %v3352 = vadd.f32 0.0, %v3351
      %v3353 = vpop.f32.mrf.mxu0
      %3354 = vmatprep.mubr.bf16.mxu0 0
      %3355 = vmatmul.mubr.bf16.gmra.mxu0 %v3200
      %v3356 = vpop.f32.mrf.mxu0
      %v3357 = vadd.f32 0.0, %v3356
      %v3358 = vpop.f32.mrf.mxu0
      %v3359 = vpop.f32.mrf.mxu0
      %v3360 = vadd.f32 0.0, %v3359
      %v3361 = vpop.f32.mrf.mxu0
      %3362 = vmatprep.mubr.bf16.mxu0 0
      %3363 = vmatmul.mubr.bf16.gmra.mxu0 %v3201
      %v3364 = vpop.f32.mrf.mxu0
      %v3365 = vadd.f32 0.0, %v3364
      %v3366 = vpop.f32.mrf.mxu0
      %v3367 = vpop.f32.mrf.mxu0
      %v3368 = vadd.f32 0.0, %v3367
      %v3369 = vpop.f32.mrf.mxu0
      %3370 = vmatprep.mubr.bf16.mxu0 0
      %3371 = vmatmul.mubr.bf16.gmra.mxu0 %v3202
      %v3372 = vpop.f32.mrf.mxu0
      %v3373 = vadd.f32 0.0, %v3372
      %v3374 = vpop.f32.mrf.mxu0
      %v3375 = vpop.f32.mrf.mxu0
      %v3376 = vadd.f32 0.0, %v3375
      %v3377 = vpop.f32.mrf.mxu0
      %3378 = vmatprep.mubr.bf16.mxu0 0
      %3379 = vmatmul.mubr.bf16.gmra.mxu0 %v3203
      %v3380 = vpop.f32.mrf.mxu0
      %v3381 = vadd.f32 0.0, %v3380
      %v3382 = vpop.f32.mrf.mxu0
      %v3383 = vpop.f32.mrf.mxu0
      %v3384 = vadd.f32 0.0, %v3383
      %v3385 = vpop.f32.mrf.mxu0
      %3386 = vmatprep.mubr.bf16.mxu0 0
      %3387 = vmatmul.mubr.bf16.gmra.mxu0 %v3204
      %v3388 = vpop.f32.mrf.mxu0
      %v3389 = vadd.f32 0.0, %v3388
      %v3390 = vpop.f32.mrf.mxu0
      %v3391 = vpop.f32.mrf.mxu0
      %v3392 = vadd.f32 0.0, %v3391
      %v3393 = vpop.f32.mrf.mxu0
      %3394 = vmatprep.mubr.bf16.mxu0 0
      %3395 = vmatmul.mubr.bf16.gmra.mxu0 %v3205
      %v3396 = vpop.f32.mrf.mxu0
      %v3397 = vadd.f32 0.0, %v3396
      %v3398 = vpop.f32.mrf.mxu0
      %v3399 = vpop.f32.mrf.mxu0
      %v3400 = vadd.f32 0.0, %v3399
      %v3401 = vpop.f32.mrf.mxu0
      %3402 = vmatprep.mubr.bf16.mxu0 0
      %3403 = vmatmul.mubr.bf16.gmra.mxu0 %v3206
      %v3404 = vpop.f32.mrf.mxu0
      %v3405 = vadd.f32 0.0, %v3404
      %v3406 = vpop.f32.mrf.mxu0
      %v3407 = vpop.f32.mrf.mxu0
      %v3408 = vadd.f32 0.0, %v3407
      %v3409 = vpop.f32.mrf.mxu0
      %3410 = vmatprep.mubr.bf16.mxu0 0
      %3411 = vmatmul.mubr.bf16.gmra.mxu0 %v3207
      %v3412 = vpop.f32.mrf.mxu0
      %v3413 = vadd.f32 0.0, %v3412
      %v3414 = vpop.f32.mrf.mxu0
      %v3415 = vpop.f32.mrf.mxu0
      %v3416 = vadd.f32 0.0, %v3415
      %v3417 = vpop.f32.mrf.mxu0
      %3418 = vmatprep.mubr.bf16.mxu0 0
      %3419 = vmatmul.mubr.bf16.gmra.mxu0 %v3208
      %v3420 = vpop.f32.mrf.mxu0
      %v3421 = vadd.f32 0.0, %v3420
      %v3422 = vpop.f32.mrf.mxu0
      %v3423 = vpop.f32.mrf.mxu0
      %v3424 = vadd.f32 0.0, %v3423
      %v3425 = vpop.f32.mrf.mxu0
      %3426 = vmatprep.mubr.bf16.mxu0 0
      %3427 = vmatmul.mubr.bf16.gmra.mxu0 %v3209
      %v3428 = vpop.f32.mrf.mxu0
      %v3429 = vadd.f32 0.0, %v3428
      %v3430 = vpop.f32.mrf.mxu0
      %v3431 = vpop.f32.mrf.mxu0
      %v3432 = vadd.f32 0.0, %v3431
      %v3433 = vpop.f32.mrf.mxu0
      %3434 = vdwg.mxu0
      %v3435 = vadd.f32 %v2937, %v3309
      %v3436 = vadd.f32 %v2938, %v3312
      %v3437 = vadd.f32 %v2939, %v3317
      %v3438 = vadd.f32 %v2940, %v3320
      %v3439 = vadd.f32 %v2941, %v3325
      %v3440 = vadd.f32 %v2942, %v3328
      %v3441 = vadd.f32 %v2943, %v3333
      %v3442 = vadd.f32 %v2944, %v3336
      %v3443 = vadd.f32 %v2945, %v3341
      %v3444 = vadd.f32 %v2946, %v3344
      %v3445 = vadd.f32 %v2947, %v3349
      %v3446 = vadd.f32 %v2948, %v3352
      %v3447 = vadd.f32 %v2949, %v3357
      %v3448 = vadd.f32 %v2950, %v3360
      %v3449 = vadd.f32 %v2951, %v3365
      %v3450 = vadd.f32 %v2952, %v3368
      %v3451 = vadd.f32 %v2953, %v3373
      %v3452 = vadd.f32 %v2954, %v3376
      %v3453 = vadd.f32 %v2955, %v3381
      %v3454 = vadd.f32 %v2956, %v3384
      %v3455 = vadd.f32 %v2957, %v3389
      %v3456 = vadd.f32 %v2958, %v3392
      %v3457 = vadd.f32 %v2959, %v3397
      %v3458 = vadd.f32 %v2960, %v3400
      %v3459 = vadd.f32 %v2961, %v3405
      %v3460 = vadd.f32 %v2962, %v3408
      %v3461 = vadd.f32 %v2963, %v3413
      %v3462 = vadd.f32 %v2964, %v3416
      %v3463 = vadd.f32 %v2965, %v3421
      %v3464 = vadd.f32 %v2966, %v3424
      %v3465 = vadd.f32 %v2967, %v3429
      %v3466 = vadd.f32 %v2968, %v3432
      %s3467 = sadd.s32 %s290, 2
      %s3468 = smul.u32 %s3467, 3
      %s3469 = smul.addr %s3468, 4
      %s3470 = scalar_lea.vmem %s266, %s3469
      %v3471 = vld [vmem:[%s3470] sm:$0xf]
      %v3472 = vld [vmem:[%s3470 + $0x4] sm:$0xf]
      %v3473 = vld [vmem:[%s3470 + $0xc] sm:$0xf]
      %v3474 = vld [vmem:[%s3470 + $0x10] sm:$0xf]
      %v3475 = vld [vmem:[%s3470 + $0x18] sm:$0xf]
      %v3476 = vld [vmem:[%s3470 + $0x1c] sm:$0xf]
      %v3477 = vld [vmem:[%s3470 + $0x24] sm:$0xf]
      %v3478 = vld [vmem:[%s3470 + $0x28] sm:$0xf]
      %v3479 = vld [vmem:[%s3470 + $0x30] sm:$0xf]
      %v3480 = vld [vmem:[%s3470 + $0x34] sm:$0xf]
      %v3481 = vld [vmem:[%s3470 + $0x3c] sm:$0xf]
      %v3482 = vld [vmem:[%s3470 + $0x40] sm:$0xf]
      %v3483 = vld [vmem:[%s3470 + $0x48] sm:$0xf]
      %v3484 = vld [vmem:[%s3470 + $0x4c] sm:$0xf]
      %v3485 = vld [vmem:[%s3470 + $0x54] sm:$0xf]
      %v3486 = vld [vmem:[%s3470 + $0x58] sm:$0xf]
      %v3487 = vld [vmem:[%s3470 + $0x60] sm:$0xf]
      %v3488 = vld [vmem:[%s3470 + $0x64] sm:$0xf]
      %v3489 = vld [vmem:[%s3470 + $0x6c] sm:$0xf]
      %v3490 = vld [vmem:[%s3470 + $0x70] sm:$0xf]
      %v3491 = vld [vmem:[%s3470 + $0x78] sm:$0xf]
      %v3492 = vld [vmem:[%s3470 + $0x7c] sm:$0xf]
      %v3493 = vld [vmem:[%s3470 + $0x84] sm:$0xf]
      %v3494 = vld [vmem:[%s3470 + $0x88] sm:$0xf]
      %v3495 = vld [vmem:[%s3470 + $0x90] sm:$0xf]
      %v3496 = vld [vmem:[%s3470 + $0x94] sm:$0xf]
      %v3497 = vld [vmem:[%s3470 + $0x9c] sm:$0xf]
      %v3498 = vld [vmem:[%s3470 + $0xa0] sm:$0xf]
      %v3499 = vld [vmem:[%s3470 + $0xa8] sm:$0xf]
      %v3500 = vld [vmem:[%s3470 + $0xac] sm:$0xf]
      %v3501 = vld [vmem:[%s3470 + $0xb4] sm:$0xf]
      %v3502 = vld [vmem:[%s3470 + $0xb8] sm:$0xf]
      %s3503 = scalar_lea.vmem %s1, 384
      %v3504 = vld [vmem:[%s3503] sm:$0xf]
      %v3505 = vld [vmem:[%s3503 + $0x4] sm:$0xf]
      %v3506 = vld [vmem:[%s3503 + $0x8] sm:$0xf]
      %v3507 = vld [vmem:[%s3503 + $0xc] sm:$0xf]
      %v3508 = vld [vmem:[%s3503 + $0x10] sm:$0xf]
      %v3509 = vld [vmem:[%s3503 + $0x14] sm:$0xf]
      %v3510 = vld [vmem:[%s3503 + $0x18] sm:$0xf]
      %v3511 = vld [vmem:[%s3503 + $0x1c] sm:$0xf]
      %v3512 = vld [vmem:[%s3503 + $0x20] sm:$0xf]
      %v3513 = vld [vmem:[%s3503 + $0x24] sm:$0xf]
      %v3514 = vld [vmem:[%s3503 + $0x28] sm:$0xf]
      %v3515 = vld [vmem:[%s3503 + $0x2c] sm:$0xf]
      %v3516 = vld [vmem:[%s3503 + $0x30] sm:$0xf]
      %v3517 = vld [vmem:[%s3503 + $0x34] sm:$0xf]
      %v3518 = vld [vmem:[%s3503 + $0x38] sm:$0xf]
      %v3519 = vld [vmem:[%s3503 + $0x3c] sm:$0xf]
      %v3552 = vunpack.c.l.b16 %v3471
      %v3553 = vunpack.c.l.b16 %v3472
      %v3554 = vunpack.c.l.b16 %v3473
      %v3555 = vunpack.c.l.b16 %v3474
      %v3556 = vunpack.c.l.b16 %v3475
      %v3557 = vunpack.c.l.b16 %v3476
      %v3558 = vunpack.c.l.b16 %v3477
      %v3559 = vunpack.c.l.b16 %v3478
      %v3560 = vunpack.c.l.b16 %v3479
      %v3561 = vunpack.c.l.b16 %v3480
      %v3562 = vunpack.c.l.b16 %v3481
      %v3563 = vunpack.c.l.b16 %v3482
      %v3564 = vunpack.c.l.b16 %v3483
      %v3565 = vunpack.c.l.b16 %v3484
      %v3566 = vunpack.c.l.b16 %v3485
      %v3567 = vunpack.c.l.b16 %v3486
      %v3568 = vunpack.c.l.b16 %v3487
      %v3569 = vunpack.c.l.b16 %v3488
      %v3570 = vunpack.c.l.b16 %v3489
      %v3571 = vunpack.c.l.b16 %v3490
      %v3572 = vunpack.c.l.b16 %v3491
      %v3573 = vunpack.c.l.b16 %v3492
      %v3574 = vunpack.c.l.b16 %v3493
      %v3575 = vunpack.c.l.b16 %v3494
      %v3576 = vunpack.c.l.b16 %v3495
      %v3577 = vunpack.c.l.b16 %v3496
      %v3578 = vunpack.c.l.b16 %v3497
      %v3579 = vunpack.c.l.b16 %v3498
      %v3580 = vunpack.c.l.b16 %v3499
      %v3581 = vunpack.c.l.b16 %v3500
      %v3582 = vunpack.c.l.b16 %v3501
      %v3583 = vunpack.c.l.b16 %v3502
      %v3584 = vpack.c.b16 %v3553, %v3552
      %v3585 = vpack.c.b16 %v3555, %v3554
      %v3586 = vpack.c.b16 %v3557, %v3556
      %v3587 = vpack.c.b16 %v3559, %v3558
      %v3588 = vpack.c.b16 %v3561, %v3560
      %v3589 = vpack.c.b16 %v3563, %v3562
      %v3590 = vpack.c.b16 %v3565, %v3564
      %v3591 = vpack.c.b16 %v3567, %v3566
      %v3592 = vpack.c.b16 %v3569, %v3568
      %v3593 = vpack.c.b16 %v3571, %v3570
      %v3594 = vpack.c.b16 %v3573, %v3572
      %v3595 = vpack.c.b16 %v3575, %v3574
      %v3596 = vpack.c.b16 %v3577, %v3576
      %v3597 = vpack.c.b16 %v3579, %v3578
      %v3598 = vpack.c.b16 %v3581, %v3580
      %v3599 = vpack.c.b16 %v3583, %v3582
      %v3632 = vunpack.c.l.b16 %v3504
      %v3633 = vunpack.c.l.b16 %v3505
      %v3634 = vunpack.c.l.b16 %v3506
      %v3635 = vunpack.c.l.b16 %v3507
      %v3636 = vunpack.c.l.b16 %v3508
      %v3637 = vunpack.c.l.b16 %v3509
      %v3638 = vunpack.c.l.b16 %v3510
      %v3639 = vunpack.c.l.b16 %v3511
      %v3640 = vunpack.c.l.b16 %v3512
      %v3641 = vunpack.c.l.b16 %v3513
      %v3642 = vunpack.c.l.b16 %v3514
      %v3643 = vunpack.c.l.b16 %v3515
      %v3644 = vunpack.c.l.b16 %v3516
      %v3645 = vunpack.c.l.b16 %v3517
      %v3646 = vunpack.c.l.b16 %v3518
      %v3647 = vunpack.c.l.b16 %v3519
      %v3648 = vpack.c.b16 %v3633, %v3632
      %v3649 = vpack.c.b16 %v3635, %v3634
      %v3650 = vpack.c.b16 %v3637, %v3636
      %v3651 = vpack.c.b16 %v3639, %v3638
      %v3652 = vpack.c.b16 %v3641, %v3640
      %v3653 = vpack.c.b16 %v3643, %v3642
      %v3654 = vpack.c.b16 %v3645, %v3644
      %v3655 = vpack.c.b16 %v3647, %v3646
      %3664 = vmatprep.subr.bf16.mxu0 0
      %3665 = vmatpush1.bf16.msra.mxu0 %v3655
      %3666 = vmatprep.subr.bf16.mxu0 0
      %3667 = vmatpush1.bf16.msra.mxu0 %v3654
      %3668 = vmatprep.subr.bf16.mxu0 0
      %3669 = vmatpush1.bf16.msra.mxu0 %v3653
      %3670 = vmatprep.subr.bf16.mxu0 0
      %3671 = vmatpush1.bf16.msra.mxu0 %v3652
      %3672 = vmatprep.subr.bf16.mxu0 0
      %3673 = vmatpush1.bf16.msra.mxu0 %v3651
      %3674 = vmatprep.subr.bf16.mxu0 0
      %3675 = vmatpush1.bf16.msra.mxu0 %v3650
      %3676 = vmatprep.subr.bf16.mxu0 0
      %3677 = vmatpush1.bf16.msra.mxu0 %v3649
      %3678 = vmatprep.subr.bf16.mxu0 0
      %3679 = vmatpush1.bf16.msra.mxu0 %v3648
      %3680 = vmatprep.subr.bf16.mxu0 0
      %3681 = vmatpush2.bf16.msra.mxu0 0
      %3682 = vmatprep.subr.bf16.mxu0 0
      %3683 = vmatpush2.bf16.msra.mxu0 0
      %3684 = vmatprep.subr.bf16.mxu0 0
      %3685 = vmatpush2.bf16.msra.mxu0 0
      %3686 = vmatprep.subr.bf16.mxu0 0
      %3687 = vmatpush2.bf16.msra.mxu0 0
      %3688 = vmatprep.subr.bf16.mxu0 0
      %3689 = vmatpush2.bf16.msra.mxu0 0
      %3690 = vmatprep.subr.bf16.mxu0 0
      %3691 = vmatpush2.bf16.msra.mxu0 0
      %3692 = vmatprep.subr.bf16.mxu0 0
      %3693 = vmatpush2.bf16.msra.mxu0 0
      %3694 = vmatprep.subr.bf16.mxu0 0
      %3695 = vmatpush2.bf16.msra.mxu0 0
      %3696 = vmatprep.mubr.bf16.mxu0 0
      %3697 = vmatmul.mubr.bf16.gmra.mxu0 %v3584
      %v3698 = vpop.f32.mrf.mxu0
      %v3699 = vadd.f32 0.0, %v3698
      %v3700 = vpop.f32.mrf.mxu0
      %v3701 = vpop.f32.mrf.mxu0
      %v3702 = vadd.f32 0.0, %v3701
      %v3703 = vpop.f32.mrf.mxu0
      %3704 = vmatprep.mubr.bf16.mxu0 0
      %3705 = vmatmul.mubr.bf16.gmra.mxu0 %v3585
      %v3706 = vpop.f32.mrf.mxu0
      %v3707 = vadd.f32 0.0, %v3706
      %v3708 = vpop.f32.mrf.mxu0
      %v3709 = vpop.f32.mrf.mxu0
      %v3710 = vadd.f32 0.0, %v3709
      %v3711 = vpop.f32.mrf.mxu0
      %3712 = vmatprep.mubr.bf16.mxu0 0
      %3713 = vmatmul.mubr.bf16.gmra.mxu0 %v3586
      %v3714 = vpop.f32.mrf.mxu0
      %v3715 = vadd.f32 0.0, %v3714
      %v3716 = vpop.f32.mrf.mxu0
      %v3717 = vpop.f32.mrf.mxu0
      %v3718 = vadd.f32 0.0, %v3717
      %v3719 = vpop.f32.mrf.mxu0
      %3720 = vmatprep.mubr.bf16.mxu0 0
      %3721 = vmatmul.mubr.bf16.gmra.mxu0 %v3587
      %v3722 = vpop.f32.mrf.mxu0
      %v3723 = vadd.f32 0.0, %v3722
      %v3724 = vpop.f32.mrf.mxu0
      %v3725 = vpop.f32.mrf.mxu0
      %v3726 = vadd.f32 0.0, %v3725
      %v3727 = vpop.f32.mrf.mxu0
      %3728 = vmatprep.mubr.bf16.mxu0 0
      %3729 = vmatmul.mubr.bf16.gmra.mxu0 %v3588
      %v3730 = vpop.f32.mrf.mxu0
      %v3731 = vadd.f32 0.0, %v3730
      %v3732 = vpop.f32.mrf.mxu0
      %v3733 = vpop.f32.mrf.mxu0
      %v3734 = vadd.f32 0.0, %v3733
      %v3735 = vpop.f32.mrf.mxu0
      %3736 = vmatprep.mubr.bf16.mxu0 0
      %3737 = vmatmul.mubr.bf16.gmra.mxu0 %v3589
      %v3738 = vpop.f32.mrf.mxu0
      %v3739 = vadd.f32 0.0, %v3738
      %v3740 = vpop.f32.mrf.mxu0
      %v3741 = vpop.f32.mrf.mxu0
      %v3742 = vadd.f32 0.0, %v3741
      %v3743 = vpop.f32.mrf.mxu0
      %3744 = vmatprep.mubr.bf16.mxu0 0
      %3745 = vmatmul.mubr.bf16.gmra.mxu0 %v3590
      %v3746 = vpop.f32.mrf.mxu0
      %v3747 = vadd.f32 0.0, %v3746
      %v3748 = vpop.f32.mrf.mxu0
      %v3749 = vpop.f32.mrf.mxu0
      %v3750 = vadd.f32 0.0, %v3749
      %v3751 = vpop.f32.mrf.mxu0
      %3752 = vmatprep.mubr.bf16.mxu0 0
      %3753 = vmatmul.mubr.bf16.gmra.mxu0 %v3591
      %v3754 = vpop.f32.mrf.mxu0
      %v3755 = vadd.f32 0.0, %v3754
      %v3756 = vpop.f32.mrf.mxu0
      %v3757 = vpop.f32.mrf.mxu0
      %v3758 = vadd.f32 0.0, %v3757
      %v3759 = vpop.f32.mrf.mxu0
      %3760 = vmatprep.mubr.bf16.mxu0 0
      %3761 = vmatmul.mubr.bf16.gmra.mxu0 %v3592
      %v3762 = vpop.f32.mrf.mxu0
      %v3763 = vadd.f32 0.0, %v3762
      %v3764 = vpop.f32.mrf.mxu0
      %v3765 = vpop.f32.mrf.mxu0
      %v3766 = vadd.f32 0.0, %v3765
      %v3767 = vpop.f32.mrf.mxu0
      %3768 = vmatprep.mubr.bf16.mxu0 0
      %3769 = vmatmul.mubr.bf16.gmra.mxu0 %v3593
      %v3770 = vpop.f32.mrf.mxu0
      %v3771 = vadd.f32 0.0, %v3770
      %v3772 = vpop.f32.mrf.mxu0
      %v3773 = vpop.f32.mrf.mxu0
      %v3774 = vadd.f32 0.0, %v3773
      %v3775 = vpop.f32.mrf.mxu0
      %3776 = vmatprep.mubr.bf16.mxu0 0
      %3777 = vmatmul.mubr.bf16.gmra.mxu0 %v3594
      %v3778 = vpop.f32.mrf.mxu0
      %v3779 = vadd.f32 0.0, %v3778
      %v3780 = vpop.f32.mrf.mxu0
      %v3781 = vpop.f32.mrf.mxu0
      %v3782 = vadd.f32 0.0, %v3781
      %v3783 = vpop.f32.mrf.mxu0
      %3784 = vmatprep.mubr.bf16.mxu0 0
      %3785 = vmatmul.mubr.bf16.gmra.mxu0 %v3595
      %v3786 = vpop.f32.mrf.mxu0
      %v3787 = vadd.f32 0.0, %v3786
      %v3788 = vpop.f32.mrf.mxu0
      %v3789 = vpop.f32.mrf.mxu0
      %v3790 = vadd.f32 0.0, %v3789
      %v3791 = vpop.f32.mrf.mxu0
      %3792 = vmatprep.mubr.bf16.mxu0 0
      %3793 = vmatmul.mubr.bf16.gmra.mxu0 %v3596
      %v3794 = vpop.f32.mrf.mxu0
      %v3795 = vadd.f32 0.0, %v3794
      %v3796 = vpop.f32.mrf.mxu0
      %v3797 = vpop.f32.mrf.mxu0
      %v3798 = vadd.f32 0.0, %v3797
      %v3799 = vpop.f32.mrf.mxu0
      %3800 = vmatprep.mubr.bf16.mxu0 0
      %3801 = vmatmul.mubr.bf16.gmra.mxu0 %v3597
      %v3802 = vpop.f32.mrf.mxu0
      %v3803 = vadd.f32 0.0, %v3802
      %v3804 = vpop.f32.mrf.mxu0
      %v3805 = vpop.f32.mrf.mxu0
      %v3806 = vadd.f32 0.0, %v3805
      %v3807 = vpop.f32.mrf.mxu0
      %3808 = vmatprep.mubr.bf16.mxu0 0
      %3809 = vmatmul.mubr.bf16.gmra.mxu0 %v3598
      %v3810 = vpop.f32.mrf.mxu0
      %v3811 = vadd.f32 0.0, %v3810
      %v3812 = vpop.f32.mrf.mxu0
      %v3813 = vpop.f32.mrf.mxu0
      %v3814 = vadd.f32 0.0, %v3813
      %v3815 = vpop.f32.mrf.mxu0
      %3816 = vmatprep.mubr.bf16.mxu0 0
      %3817 = vmatmul.mubr.bf16.gmra.mxu0 %v3599
      %v3818 = vpop.f32.mrf.mxu0
      %v3819 = vadd.f32 0.0, %v3818
      %v3820 = vpop.f32.mrf.mxu0
      %v3821 = vpop.f32.mrf.mxu0
      %v3822 = vadd.f32 0.0, %v3821
      %v3823 = vpop.f32.mrf.mxu0
      %3824 = vdwg.mxu0
      %v3825 = vadd.f32 %v3435, %v3699
      %v3826 = vadd.f32 %v3436, %v3702
      %v3827 = vadd.f32 %v3437, %v3707
      %v3828 = vadd.f32 %v3438, %v3710
      %v3829 = vadd.f32 %v3439, %v3715
      %v3830 = vadd.f32 %v3440, %v3718
      %v3831 = vadd.f32 %v3441, %v3723
      %v3832 = vadd.f32 %v3442, %v3726
      %v3833 = vadd.f32 %v3443, %v3731
      %v3834 = vadd.f32 %v3444, %v3734
      %v3835 = vadd.f32 %v3445, %v3739
      %v3836 = vadd.f32 %v3446, %v3742
      %v3837 = vadd.f32 %v3447, %v3747
      %v3838 = vadd.f32 %v3448, %v3750
      %v3839 = vadd.f32 %v3449, %v3755
      %v3840 = vadd.f32 %v3450, %v3758
      %v3841 = vadd.f32 %v3451, %v3763
      %v3842 = vadd.f32 %v3452, %v3766
      %v3843 = vadd.f32 %v3453, %v3771
      %v3844 = vadd.f32 %v3454, %v3774
      %v3845 = vadd.f32 %v3455, %v3779
      %v3846 = vadd.f32 %v3456, %v3782
      %v3847 = vadd.f32 %v3457, %v3787
      %v3848 = vadd.f32 %v3458, %v3790
      %v3849 = vadd.f32 %v3459, %v3795
      %v3850 = vadd.f32 %v3460, %v3798
      %v3851 = vadd.f32 %v3461, %v3803
      %v3852 = vadd.f32 %v3462, %v3806
      %v3853 = vadd.f32 %v3463, %v3811
      %v3854 = vadd.f32 %v3464, %v3814
      %v3855 = vadd.f32 %v3465, %v3819
      %v3856 = vadd.f32 %v3466, %v3822
      %v3857 = vld [vmem:[%s3470] sm:$0xf]
      %v3858 = vld [vmem:[%s3470 + $0x4] sm:$0xf]
      %v3859 = vld [vmem:[%s3470 + $0x8] sm:$0x1]
      %v3860 = vld [vmem:[%s3470 + $0xc] sm:$0xf]
      %v3861 = vld [vmem:[%s3470 + $0x10] sm:$0xf]
      %v3862 = vld [vmem:[%s3470 + $0x14] sm:$0x1]
      %v3863 = vld [vmem:[%s3470 + $0x18] sm:$0xf]
      %v3864 = vld [vmem:[%s3470 + $0x1c] sm:$0xf]
      %v3865 = vld [vmem:[%s3470 + $0x20] sm:$0x1]
      %v3866 = vld [vmem:[%s3470 + $0x24] sm:$0xf]
      %v3867 = vld [vmem:[%s3470 + $0x28] sm:$0xf]
      %v3868 = vld [vmem:[%s3470 + $0x2c] sm:$0x1]
      %v3869 = vld [vmem:[%s3470 + $0x30] sm:$0xf]
      %v3870 = vld [vmem:[%s3470 + $0x34] sm:$0xf]
      %v3871 = vld [vmem:[%s3470 + $0x38] sm:$0x1]
      %v3872 = vld [vmem:[%s3470 + $0x3c] sm:$0xf]
      %v3873 = vld [vmem:[%s3470 + $0x40] sm:$0xf]
      %v3874 = vld [vmem:[%s3470 + $0x44] sm:$0x1]
      %v3875 = vld [vmem:[%s3470 + $0x48] sm:$0xf]
      %v3876 = vld [vmem:[%s3470 + $0x4c] sm:$0xf]
      %v3877 = vld [vmem:[%s3470 + $0x50] sm:$0x1]
      %v3878 = vld [vmem:[%s3470 + $0x54] sm:$0xf]
      %v3879 = vld [vmem:[%s3470 + $0x58] sm:$0xf]
      %v3880 = vld [vmem:[%s3470 + $0x5c] sm:$0x1]
      %v3881 = vld [vmem:[%s3470 + $0x60] sm:$0xf]
      %v3882 = vld [vmem:[%s3470 + $0x64] sm:$0xf]
      %v3883 = vld [vmem:[%s3470 + $0x68] sm:$0x1]
      %v3884 = vld [vmem:[%s3470 + $0x6c] sm:$0xf]
      %v3885 = vld [vmem:[%s3470 + $0x70] sm:$0xf]
      %v3886 = vld [vmem:[%s3470 + $0x74] sm:$0x1]
      %v3887 = vld [vmem:[%s3470 + $0x78] sm:$0xf]
      %v3888 = vld [vmem:[%s3470 + $0x7c] sm:$0xf]
      %v3889 = vld [vmem:[%s3470 + $0x80] sm:$0x1]
      %v3890 = vld [vmem:[%s3470 + $0x84] sm:$0xf]
      %v3891 = vld [vmem:[%s3470 + $0x88] sm:$0xf]
      %v3892 = vld [vmem:[%s3470 + $0x8c] sm:$0x1]
      %v3893 = vld [vmem:[%s3470 + $0x90] sm:$0xf]
      %v3894 = vld [vmem:[%s3470 + $0x94] sm:$0xf]
      %v3895 = vld [vmem:[%s3470 + $0x98] sm:$0x1]
      %v3896 = vld [vmem:[%s3470 + $0x9c] sm:$0xf]
      %v3897 = vld [vmem:[%s3470 + $0xa0] sm:$0xf]
      %v3898 = vld [vmem:[%s3470 + $0xa4] sm:$0x1]
      %v3899 = vld [vmem:[%s3470 + $0xa8] sm:$0xf]
      %v3900 = vld [vmem:[%s3470 + $0xac] sm:$0xf]
      %v3901 = vld [vmem:[%s3470 + $0xb0] sm:$0x1]
      %v3902 = vld [vmem:[%s3470 + $0xb4] sm:$0xf]
      %v3903 = vld [vmem:[%s3470 + $0xb8] sm:$0xf]
      %v3904 = vld [vmem:[%s3470 + $0xbc] sm:$0x1]
      %v3906 = vshrl.u32 %v3857, 16
      %v3908 = vrot.slane %v3906, 4
      %v3909 = vshll.u32 %v3857, 16
      %v3911 = vrot.slane %v3909, 5
      %v3912 = vor.u32 %v3908, %v3911
      %v3913 = vrot.slane %v3912, 4
      %v3915 = vshll.u32 %v3858, 16
      %v3917 = vrot.slane %v3915, 5
      %v3918 = vsel %vm360, %v3913, %v3917
      %v3919 = vshrl.u32 %v3858, 16
      %v3921 = vrot.slane %v3919, 4
      %v3922 = vor.u32 %v3921, %v3917
      %v3923 = vrot.slane %v3922, 4
      %v3925 = vshll.u32 %v3859, 16
      %v3927 = vrot.slane %v3925, 5
      %v3928 = vsel %vm360, %v3923, %v3927
      %v3930 = vshrl.u32 %v3860, 16
      %v3932 = vrot.slane %v3930, 4
      %v3933 = vshll.u32 %v3860, 16
      %v3935 = vrot.slane %v3933, 5
      %v3936 = vor.u32 %v3932, %v3935
      %v3937 = vrot.slane %v3936, 4
      %v3939 = vshll.u32 %v3861, 16
      %v3941 = vrot.slane %v3939, 5
      %v3942 = vsel %vm360, %v3937, %v3941
      %v3943 = vshrl.u32 %v3861, 16
      %v3945 = vrot.slane %v3943, 4
      %v3946 = vor.u32 %v3945, %v3941
      %v3947 = vrot.slane %v3946, 4
      %v3949 = vshll.u32 %v3862, 16
      %v3951 = vrot.slane %v3949, 5
      %v3952 = vsel %vm360, %v3947, %v3951
      %v3954 = vshrl.u32 %v3863, 16
      %v3956 = vrot.slane %v3954, 4
      %v3957 = vshll.u32 %v3863, 16
      %v3959 = vrot.slane %v3957, 5
      %v3960 = vor.u32 %v3956, %v3959
      %v3961 = vrot.slane %v3960, 4
      %v3963 = vshll.u32 %v3864, 16
      %v3965 = vrot.slane %v3963, 5
      %v3966 = vsel %vm360, %v3961, %v3965
      %v3967 = vshrl.u32 %v3864, 16
      %v3969 = vrot.slane %v3967, 4
      %v3970 = vor.u32 %v3969, %v3965
      %v3971 = vrot.slane %v3970, 4
      %v3973 = vshll.u32 %v3865, 16
      %v3975 = vrot.slane %v3973, 5
      %v3976 = vsel %vm360, %v3971, %v3975
      %v3978 = vshrl.u32 %v3866, 16
      %v3980 = vrot.slane %v3978, 4
      %v3981 = vshll.u32 %v3866, 16
      %v3983 = vrot.slane %v3981, 5
      %v3984 = vor.u32 %v3980, %v3983
      %v3985 = vrot.slane %v3984, 4
      %v3987 = vshll.u32 %v3867, 16
      %v3989 = vrot.slane %v3987, 5
      %v3990 = vsel %vm360, %v3985, %v3989
      %v3991 = vshrl.u32 %v3867, 16
      %v3993 = vrot.slane %v3991, 4
      %v3994 = vor.u32 %v3993, %v3989
      %v3995 = vrot.slane %v3994, 4
      %v3997 = vshll.u32 %v3868, 16
      %v3999 = vrot.slane %v3997, 5
      %v4000 = vsel %vm360, %v3995, %v3999
      %v4002 = vshrl.u32 %v3869, 16
      %v4004 = vrot.slane %v4002, 4
      %v4005 = vshll.u32 %v3869, 16
      %v4007 = vrot.slane %v4005, 5
      %v4008 = vor.u32 %v4004, %v4007
      %v4009 = vrot.slane %v4008, 4
      %v4011 = vshll.u32 %v3870, 16
      %v4013 = vrot.slane %v4011, 5
      %v4014 = vsel %vm360, %v4009, %v4013
      %v4015 = vshrl.u32 %v3870, 16
      %v4017 = vrot.slane %v4015, 4
      %v4018 = vor.u32 %v4017, %v4013
      %v4019 = vrot.slane %v4018, 4
      %v4021 = vshll.u32 %v3871, 16
      %v4023 = vrot.slane %v4021, 5
      %v4024 = vsel %vm360, %v4019, %v4023
      %v4026 = vshrl.u32 %v3872, 16
      %v4028 = vrot.slane %v4026, 4
      %v4029 = vshll.u32 %v3872, 16
      %v4031 = vrot.slane %v4029, 5
      %v4032 = vor.u32 %v4028, %v4031
      %v4033 = vrot.slane %v4032, 4
      %v4035 = vshll.u32 %v3873, 16
      %v4037 = vrot.slane %v4035, 5
      %v4038 = vsel %vm360, %v4033, %v4037
      %v4039 = vshrl.u32 %v3873, 16
      %v4041 = vrot.slane %v4039, 4
      %v4042 = vor.u32 %v4041, %v4037
      %v4043 = vrot.slane %v4042, 4
      %v4045 = vshll.u32 %v3874, 16
      %v4047 = vrot.slane %v4045, 5
      %v4048 = vsel %vm360, %v4043, %v4047
      %v4050 = vshrl.u32 %v3875, 16
      %v4052 = vrot.slane %v4050, 4
      %v4053 = vshll.u32 %v3875, 16
      %v4055 = vrot.slane %v4053, 5
      %v4056 = vor.u32 %v4052, %v4055
      %v4057 = vrot.slane %v4056, 4
      %v4059 = vshll.u32 %v3876, 16
      %v4061 = vrot.slane %v4059, 5
      %v4062 = vsel %vm360, %v4057, %v4061
      %v4063 = vshrl.u32 %v3876, 16
      %v4065 = vrot.slane %v4063, 4
      %v4066 = vor.u32 %v4065, %v4061
      %v4067 = vrot.slane %v4066, 4
      %v4069 = vshll.u32 %v3877, 16
      %v4071 = vrot.slane %v4069, 5
      %v4072 = vsel %vm360, %v4067, %v4071
      %v4074 = vshrl.u32 %v3878, 16
      %v4076 = vrot.slane %v4074, 4
      %v4077 = vshll.u32 %v3878, 16
      %v4079 = vrot.slane %v4077, 5
      %v4080 = vor.u32 %v4076, %v4079
      %v4081 = vrot.slane %v4080, 4
      %v4083 = vshll.u32 %v3879, 16
      %v4085 = vrot.slane %v4083, 5
      %v4086 = vsel %vm360, %v4081, %v4085
      %v4087 = vshrl.u32 %v3879, 16
      %v4089 = vrot.slane %v4087, 4
      %v4090 = vor.u32 %v4089, %v4085
      %v4091 = vrot.slane %v4090, 4
      %v4093 = vshll.u32 %v3880, 16
      %v4095 = vrot.slane %v4093, 5
      %v4096 = vsel %vm360, %v4091, %v4095
      %v4098 = vshrl.u32 %v3881, 16
      %v4100 = vrot.slane %v4098, 4
      %v4101 = vshll.u32 %v3881, 16
      %v4103 = vrot.slane %v4101, 5
      %v4104 = vor.u32 %v4100, %v4103
      %v4105 = vrot.slane %v4104, 4
      %v4107 = vshll.u32 %v3882, 16
      %v4109 = vrot.slane %v4107, 5
      %v4110 = vsel %vm360, %v4105, %v4109
      %v4111 = vshrl.u32 %v3882, 16
      %v4113 = vrot.slane %v4111, 4
      %v4114 = vor.u32 %v4113, %v4109
      %v4115 = vrot.slane %v4114, 4
      %v4117 = vshll.u32 %v3883, 16
      %v4119 = vrot.slane %v4117, 5
      %v4120 = vsel %vm360, %v4115, %v4119
      %v4122 = vshrl.u32 %v3884, 16
      %v4124 = vrot.slane %v4122, 4
      %v4125 = vshll.u32 %v3884, 16
      %v4127 = vrot.slane %v4125, 5
      %v4128 = vor.u32 %v4124, %v4127
      %v4129 = vrot.slane %v4128, 4
      %v4131 = vshll.u32 %v3885, 16
      %v4133 = vrot.slane %v4131, 5
      %v4134 = vsel %vm360, %v4129, %v4133
      %v4135 = vshrl.u32 %v3885, 16
      %v4137 = vrot.slane %v4135, 4
      %v4138 = vor.u32 %v4137, %v4133
      %v4139 = vrot.slane %v4138, 4
      %v4141 = vshll.u32 %v3886, 16
      %v4143 = vrot.slane %v4141, 5
      %v4144 = vsel %vm360, %v4139, %v4143
      %v4146 = vshrl.u32 %v3887, 16
      %v4148 = vrot.slane %v4146, 4
      %v4149 = vshll.u32 %v3887, 16
      %v4151 = vrot.slane %v4149, 5
      %v4152 = vor.u32 %v4148, %v4151
      %v4153 = vrot.slane %v4152, 4
      %v4155 = vshll.u32 %v3888, 16
      %v4157 = vrot.slane %v4155, 5
      %v4158 = vsel %vm360, %v4153, %v4157
      %v4159 = vshrl.u32 %v3888, 16
      %v4161 = vrot.slane %v4159, 4
      %v4162 = vor.u32 %v4161, %v4157
      %v4163 = vrot.slane %v4162, 4
      %v4165 = vshll.u32 %v3889, 16
      %v4167 = vrot.slane %v4165, 5
      %v4168 = vsel %vm360, %v4163, %v4167
      %v4170 = vshrl.u32 %v3890, 16
      %v4172 = vrot.slane %v4170, 4
      %v4173 = vshll.u32 %v3890, 16
      %v4175 = vrot.slane %v4173, 5
      %v4176 = vor.u32 %v4172, %v4175
      %v4177 = vrot.slane %v4176, 4
      %v4179 = vshll.u32 %v3891, 16
      %v4181 = vrot.slane %v4179, 5
      %v4182 = vsel %vm360, %v4177, %v4181
      %v4183 = vshrl.u32 %v3891, 16
      %v4185 = vrot.slane %v4183, 4
      %v4186 = vor.u32 %v4185, %v4181
      %v4187 = vrot.slane %v4186, 4
      %v4189 = vshll.u32 %v3892, 16
      %v4191 = vrot.slane %v4189, 5
      %v4192 = vsel %vm360, %v4187, %v4191
      %v4194 = vshrl.u32 %v3893, 16
      %v4196 = vrot.slane %v4194, 4
      %v4197 = vshll.u32 %v3893, 16
      %v4199 = vrot.slane %v4197, 5
      %v4200 = vor.u32 %v4196, %v4199
      %v4201 = vrot.slane %v4200, 4
      %v4203 = vshll.u32 %v3894, 16
      %v4205 = vrot.slane %v4203, 5
      %v4206 = vsel %vm360, %v4201, %v4205
      %v4207 = vshrl.u32 %v3894, 16
      %v4209 = vrot.slane %v4207, 4
      %v4210 = vor.u32 %v4209, %v4205
      %v4211 = vrot.slane %v4210, 4
      %v4213 = vshll.u32 %v3895, 16
      %v4215 = vrot.slane %v4213, 5
      %v4216 = vsel %vm360, %v4211, %v4215
      %v4218 = vshrl.u32 %v3896, 16
      %v4220 = vrot.slane %v4218, 4
      %v4221 = vshll.u32 %v3896, 16
      %v4223 = vrot.slane %v4221, 5
      %v4224 = vor.u32 %v4220, %v4223
      %v4225 = vrot.slane %v4224, 4
      %v4227 = vshll.u32 %v3897, 16
      %v4229 = vrot.slane %v4227, 5
      %v4230 = vsel %vm360, %v4225, %v4229
      %v4231 = vshrl.u32 %v3897, 16
      %v4233 = vrot.slane %v4231, 4
      %v4234 = vor.u32 %v4233, %v4229
      %v4235 = vrot.slane %v4234, 4
      %v4237 = vshll.u32 %v3898, 16
      %v4239 = vrot.slane %v4237, 5
      %v4240 = vsel %vm360, %v4235, %v4239
      %v4242 = vshrl.u32 %v3899, 16
      %v4244 = vrot.slane %v4242, 4
      %v4245 = vshll.u32 %v3899, 16
      %v4247 = vrot.slane %v4245, 5
      %v4248 = vor.u32 %v4244, %v4247
      %v4249 = vrot.slane %v4248, 4
      %v4251 = vshll.u32 %v3900, 16
      %v4253 = vrot.slane %v4251, 5
      %v4254 = vsel %vm360, %v4249, %v4253
      %v4255 = vshrl.u32 %v3900, 16
      %v4257 = vrot.slane %v4255, 4
      %v4258 = vor.u32 %v4257, %v4253
      %v4259 = vrot.slane %v4258, 4
      %v4261 = vshll.u32 %v3901, 16
      %v4263 = vrot.slane %v4261, 5
      %v4264 = vsel %vm360, %v4259, %v4263
      %v4266 = vshrl.u32 %v3902, 16
      %v4268 = vrot.slane %v4266, 4
      %v4269 = vshll.u32 %v3902, 16
      %v4271 = vrot.slane %v4269, 5
      %v4272 = vor.u32 %v4268, %v4271
      %v4273 = vrot.slane %v4272, 4
      %v4275 = vshll.u32 %v3903, 16
      %v4277 = vrot.slane %v4275, 5
      %v4278 = vsel %vm360, %v4273, %v4277
      %v4279 = vshrl.u32 %v3903, 16
      %v4281 = vrot.slane %v4279, 4
      %v4282 = vor.u32 %v4281, %v4277
      %v4283 = vrot.slane %v4282, 4
      %v4285 = vshll.u32 %v3904, 16
      %v4287 = vrot.slane %v4285, 5
      %v4288 = vsel %vm360, %v4283, %v4287
      %s4289 = scalar_lea.vmem %s1, 448
      %v4290 = vld [vmem:[%s4289] sm:$0xf]
      %v4291 = vld [vmem:[%s4289 + $0x4] sm:$0xf]
      %v4292 = vld [vmem:[%s4289 + $0x8] sm:$0xf]
      %v4293 = vld [vmem:[%s4289 + $0xc] sm:$0xf]
      %v4294 = vld [vmem:[%s4289 + $0x10] sm:$0xf]
      %v4295 = vld [vmem:[%s4289 + $0x14] sm:$0xf]
      %v4296 = vld [vmem:[%s4289 + $0x18] sm:$0xf]
      %v4297 = vld [vmem:[%s4289 + $0x1c] sm:$0xf]
      %v4298 = vld [vmem:[%s4289 + $0x20] sm:$0xf]
      %v4299 = vld [vmem:[%s4289 + $0x24] sm:$0xf]
      %v4300 = vld [vmem:[%s4289 + $0x28] sm:$0xf]
      %v4301 = vld [vmem:[%s4289 + $0x2c] sm:$0xf]
      %v4302 = vld [vmem:[%s4289 + $0x30] sm:$0xf]
      %v4303 = vld [vmem:[%s4289 + $0x34] sm:$0xf]
      %v4304 = vld [vmem:[%s4289 + $0x38] sm:$0xf]
      %v4305 = vld [vmem:[%s4289 + $0x3c] sm:$0xf]
      %v4306 = vunpack.c.l.b16 %v3918
      %v4307 = vunpack.c.l.b16 %v3928
      %v4308 = vunpack.c.l.b16 %v3942
      %v4309 = vunpack.c.l.b16 %v3952
      %v4310 = vunpack.c.l.b16 %v3966
      %v4311 = vunpack.c.l.b16 %v3976
      %v4312 = vunpack.c.l.b16 %v3990
      %v4313 = vunpack.c.l.b16 %v4000
      %v4314 = vunpack.c.l.b16 %v4014
      %v4315 = vunpack.c.l.b16 %v4024
      %v4316 = vunpack.c.l.b16 %v4038
      %v4317 = vunpack.c.l.b16 %v4048
      %v4318 = vunpack.c.l.b16 %v4062
      %v4319 = vunpack.c.l.b16 %v4072
      %v4320 = vunpack.c.l.b16 %v4086
      %v4321 = vunpack.c.l.b16 %v4096
      %v4322 = vunpack.c.l.b16 %v4110
      %v4323 = vunpack.c.l.b16 %v4120
      %v4324 = vunpack.c.l.b16 %v4134
      %v4325 = vunpack.c.l.b16 %v4144
      %v4326 = vunpack.c.l.b16 %v4158
      %v4327 = vunpack.c.l.b16 %v4168
      %v4328 = vunpack.c.l.b16 %v4182
      %v4329 = vunpack.c.l.b16 %v4192
      %v4330 = vunpack.c.l.b16 %v4206
      %v4331 = vunpack.c.l.b16 %v4216
      %v4332 = vunpack.c.l.b16 %v4230
      %v4333 = vunpack.c.l.b16 %v4240
      %v4334 = vunpack.c.l.b16 %v4254
      %v4335 = vunpack.c.l.b16 %v4264
      %v4336 = vunpack.c.l.b16 %v4278
      %v4337 = vunpack.c.l.b16 %v4288
      %v4338 = vpack.c.b16 %v4307, %v4306
      %v4339 = vpack.c.b16 %v4309, %v4308
      %v4340 = vpack.c.b16 %v4311, %v4310
      %v4341 = vpack.c.b16 %v4313, %v4312
      %v4342 = vpack.c.b16 %v4315, %v4314
      %v4343 = vpack.c.b16 %v4317, %v4316
      %v4344 = vpack.c.b16 %v4319, %v4318
      %v4345 = vpack.c.b16 %v4321, %v4320
      %v4346 = vpack.c.b16 %v4323, %v4322
      %v4347 = vpack.c.b16 %v4325, %v4324
      %v4348 = vpack.c.b16 %v4327, %v4326
      %v4349 = vpack.c.b16 %v4329, %v4328
      %v4350 = vpack.c.b16 %v4331, %v4330
      %v4351 = vpack.c.b16 %v4333, %v4332
      %v4352 = vpack.c.b16 %v4335, %v4334
      %v4353 = vpack.c.b16 %v4337, %v4336
      %v4386 = vunpack.c.l.b16 %v4290
      %v4387 = vunpack.c.l.b16 %v4291
      %v4388 = vunpack.c.l.b16 %v4292
      %v4389 = vunpack.c.l.b16 %v4293
      %v4390 = vunpack.c.l.b16 %v4294
      %v4391 = vunpack.c.l.b16 %v4295
      %v4392 = vunpack.c.l.b16 %v4296
      %v4393 = vunpack.c.l.b16 %v4297
      %v4394 = vunpack.c.l.b16 %v4298
      %v4395 = vunpack.c.l.b16 %v4299
      %v4396 = vunpack.c.l.b16 %v4300
      %v4397 = vunpack.c.l.b16 %v4301
      %v4398 = vunpack.c.l.b16 %v4302
      %v4399 = vunpack.c.l.b16 %v4303
      %v4400 = vunpack.c.l.b16 %v4304
      %v4401 = vunpack.c.l.b16 %v4305
      %v4402 = vpack.c.b16 %v4387, %v4386
      %v4403 = vpack.c.b16 %v4389, %v4388
      %v4404 = vpack.c.b16 %v4391, %v4390
      %v4405 = vpack.c.b16 %v4393, %v4392
      %v4406 = vpack.c.b16 %v4395, %v4394
      %v4407 = vpack.c.b16 %v4397, %v4396
      %v4408 = vpack.c.b16 %v4399, %v4398
      %v4409 = vpack.c.b16 %v4401, %v4400
      %4418 = vmatprep.subr.bf16.mxu0 0
      %4419 = vmatpush1.bf16.msra.mxu0 %v4409
      %4420 = vmatprep.subr.bf16.mxu0 0
      %4421 = vmatpush1.bf16.msra.mxu0 %v4408
      %4422 = vmatprep.subr.bf16.mxu0 0
      %4423 = vmatpush1.bf16.msra.mxu0 %v4407
      %4424 = vmatprep.subr.bf16.mxu0 0
      %4425 = vmatpush1.bf16.msra.mxu0 %v4406
      %4426 = vmatprep.subr.bf16.mxu0 0
      %4427 = vmatpush1.bf16.msra.mxu0 %v4405
      %4428 = vmatprep.subr.bf16.mxu0 0
      %4429 = vmatpush1.bf16.msra.mxu0 %v4404
      %4430 = vmatprep.subr.bf16.mxu0 0
      %4431 = vmatpush1.bf16.msra.mxu0 %v4403
      %4432 = vmatprep.subr.bf16.mxu0 0
      %4433 = vmatpush1.bf16.msra.mxu0 %v4402
      %4434 = vmatprep.subr.bf16.mxu0 0
      %4435 = vmatpush2.bf16.msra.mxu0 0
      %4436 = vmatprep.subr.bf16.mxu0 0
      %4437 = vmatpush2.bf16.msra.mxu0 0
      %4438 = vmatprep.subr.bf16.mxu0 0
      %4439 = vmatpush2.bf16.msra.mxu0 0
      %4440 = vmatprep.subr.bf16.mxu0 0
      %4441 = vmatpush2.bf16.msra.mxu0 0
      %4442 = vmatprep.subr.bf16.mxu0 0
      %4443 = vmatpush2.bf16.msra.mxu0 0
      %4444 = vmatprep.subr.bf16.mxu0 0
      %4445 = vmatpush2.bf16.msra.mxu0 0
      %4446 = vmatprep.subr.bf16.mxu0 0
      %4447 = vmatpush2.bf16.msra.mxu0 0
      %4448 = vmatprep.subr.bf16.mxu0 0
      %4449 = vmatpush2.bf16.msra.mxu0 0
      %4450 = vmatprep.mubr.bf16.mxu0 0
      %4451 = vmatmul.mubr.bf16.gmra.mxu0 %v4338
      %v4452 = vpop.f32.mrf.mxu0
      %v4453 = vadd.f32 0.0, %v4452
      %v4454 = vpop.f32.mrf.mxu0
      %v4455 = vpop.f32.mrf.mxu0
      %v4456 = vadd.f32 0.0, %v4455
      %v4457 = vpop.f32.mrf.mxu0
      %4458 = vmatprep.mubr.bf16.mxu0 0
      %4459 = vmatmul.mubr.bf16.gmra.mxu0 %v4339
      %v4460 = vpop.f32.mrf.mxu0
      %v4461 = vadd.f32 0.0, %v4460
      %v4462 = vpop.f32.mrf.mxu0
      %v4463 = vpop.f32.mrf.mxu0
      %v4464 = vadd.f32 0.0, %v4463
      %v4465 = vpop.f32.mrf.mxu0
      %4466 = vmatprep.mubr.bf16.mxu0 0
      %4467 = vmatmul.mubr.bf16.gmra.mxu0 %v4340
      %v4468 = vpop.f32.mrf.mxu0
      %v4469 = vadd.f32 0.0, %v4468
      %v4470 = vpop.f32.mrf.mxu0
      %v4471 = vpop.f32.mrf.mxu0
      %v4472 = vadd.f32 0.0, %v4471
      %v4473 = vpop.f32.mrf.mxu0
      %4474 = vmatprep.mubr.bf16.mxu0 0
      %4475 = vmatmul.mubr.bf16.gmra.mxu0 %v4341
      %v4476 = vpop.f32.mrf.mxu0
      %v4477 = vadd.f32 0.0, %v4476
      %v4478 = vpop.f32.mrf.mxu0
      %v4479 = vpop.f32.mrf.mxu0
      %v4480 = vadd.f32 0.0, %v4479
      %v4481 = vpop.f32.mrf.mxu0
      %4482 = vmatprep.mubr.bf16.mxu0 0
      %4483 = vmatmul.mubr.bf16.gmra.mxu0 %v4342
      %v4484 = vpop.f32.mrf.mxu0
      %v4485 = vadd.f32 0.0, %v4484
      %v4486 = vpop.f32.mrf.mxu0
      %v4487 = vpop.f32.mrf.mxu0
      %v4488 = vadd.f32 0.0, %v4487
      %v4489 = vpop.f32.mrf.mxu0
      %4490 = vmatprep.mubr.bf16.mxu0 0
      %4491 = vmatmul.mubr.bf16.gmra.mxu0 %v4343
      %v4492 = vpop.f32.mrf.mxu0
      %v4493 = vadd.f32 0.0, %v4492
      %v4494 = vpop.f32.mrf.mxu0
      %v4495 = vpop.f32.mrf.mxu0
      %v4496 = vadd.f32 0.0, %v4495
      %v4497 = vpop.f32.mrf.mxu0
      %4498 = vmatprep.mubr.bf16.mxu0 0
      %4499 = vmatmul.mubr.bf16.gmra.mxu0 %v4344
      %v4500 = vpop.f32.mrf.mxu0
      %v4501 = vadd.f32 0.0, %v4500
      %v4502 = vpop.f32.mrf.mxu0
      %v4503 = vpop.f32.mrf.mxu0
      %v4504 = vadd.f32 0.0, %v4503
      %v4505 = vpop.f32.mrf.mxu0
      %4506 = vmatprep.mubr.bf16.mxu0 0
      %4507 = vmatmul.mubr.bf16.gmra.mxu0 %v4345
      %v4508 = vpop.f32.mrf.mxu0
      %v4509 = vadd.f32 0.0, %v4508
      %v4510 = vpop.f32.mrf.mxu0
      %v4511 = vpop.f32.mrf.mxu0
      %v4512 = vadd.f32 0.0, %v4511
      %v4513 = vpop.f32.mrf.mxu0
      %4514 = vmatprep.mubr.bf16.mxu0 0
      %4515 = vmatmul.mubr.bf16.gmra.mxu0 %v4346
      %v4516 = vpop.f32.mrf.mxu0
      %v4517 = vadd.f32 0.0, %v4516
      %v4518 = vpop.f32.mrf.mxu0
      %v4519 = vpop.f32.mrf.mxu0
      %v4520 = vadd.f32 0.0, %v4519
      %v4521 = vpop.f32.mrf.mxu0
      %4522 = vmatprep.mubr.bf16.mxu0 0
      %4523 = vmatmul.mubr.bf16.gmra.mxu0 %v4347
      %v4524 = vpop.f32.mrf.mxu0
      %v4525 = vadd.f32 0.0, %v4524
      %v4526 = vpop.f32.mrf.mxu0
      %v4527 = vpop.f32.mrf.mxu0
      %v4528 = vadd.f32 0.0, %v4527
      %v4529 = vpop.f32.mrf.mxu0
      %4530 = vmatprep.mubr.bf16.mxu0 0
      %4531 = vmatmul.mubr.bf16.gmra.mxu0 %v4348
      %v4532 = vpop.f32.mrf.mxu0
      %v4533 = vadd.f32 0.0, %v4532
      %v4534 = vpop.f32.mrf.mxu0
      %v4535 = vpop.f32.mrf.mxu0
      %v4536 = vadd.f32 0.0, %v4535
      %v4537 = vpop.f32.mrf.mxu0
      %4538 = vmatprep.mubr.bf16.mxu0 0
      %4539 = vmatmul.mubr.bf16.gmra.mxu0 %v4349
      %v4540 = vpop.f32.mrf.mxu0
      %v4541 = vadd.f32 0.0, %v4540
      %v4542 = vpop.f32.mrf.mxu0
      %v4543 = vpop.f32.mrf.mxu0
      %v4544 = vadd.f32 0.0, %v4543
      %v4545 = vpop.f32.mrf.mxu0
      %4546 = vmatprep.mubr.bf16.mxu0 0
      %4547 = vmatmul.mubr.bf16.gmra.mxu0 %v4350
      %v4548 = vpop.f32.mrf.mxu0
      %v4549 = vadd.f32 0.0, %v4548
      %v4550 = vpop.f32.mrf.mxu0
      %v4551 = vpop.f32.mrf.mxu0
      %v4552 = vadd.f32 0.0, %v4551
      %v4553 = vpop.f32.mrf.mxu0
      %4554 = vmatprep.mubr.bf16.mxu0 0
      %4555 = vmatmul.mubr.bf16.gmra.mxu0 %v4351
      %v4556 = vpop.f32.mrf.mxu0
      %v4557 = vadd.f32 0.0, %v4556
      %v4558 = vpop.f32.mrf.mxu0
      %v4559 = vpop.f32.mrf.mxu0
      %v4560 = vadd.f32 0.0, %v4559
      %v4561 = vpop.f32.mrf.mxu0
      %4562 = vmatprep.mubr.bf16.mxu0 0
      %4563 = vmatmul.mubr.bf16.gmra.mxu0 %v4352
      %v4564 = vpop.f32.mrf.mxu0
      %v4565 = vadd.f32 0.0, %v4564
      %v4566 = vpop.f32.mrf.mxu0
      %v4567 = vpop.f32.mrf.mxu0
      %v4568 = vadd.f32 0.0, %v4567
      %v4569 = vpop.f32.mrf.mxu0
      %4570 = vmatprep.mubr.bf16.mxu0 0
      %4571 = vmatmul.mubr.bf16.gmra.mxu0 %v4353
      %v4572 = vpop.f32.mrf.mxu0
      %v4573 = vadd.f32 0.0, %v4572
      %v4574 = vpop.f32.mrf.mxu0
      %v4575 = vpop.f32.mrf.mxu0
      %v4576 = vadd.f32 0.0, %v4575
      %v4577 = vpop.f32.mrf.mxu0
      %4578 = vdwg.mxu0
      %v4579 = vadd.f32 %v3825, %v4453
      %v4580 = vadd.f32 %v3826, %v4456
      %v4581 = vadd.f32 %v3827, %v4461
      %v4582 = vadd.f32 %v3828, %v4464
      %v4583 = vadd.f32 %v3829, %v4469
      %v4584 = vadd.f32 %v3830, %v4472
      %v4585 = vadd.f32 %v3831, %v4477
      %v4586 = vadd.f32 %v3832, %v4480
      %v4587 = vadd.f32 %v3833, %v4485
      %v4588 = vadd.f32 %v3834, %v4488
      %v4589 = vadd.f32 %v3835, %v4493
      %v4590 = vadd.f32 %v3836, %v4496
      %v4591 = vadd.f32 %v3837, %v4501
      %v4592 = vadd.f32 %v3838, %v4504
      %v4593 = vadd.f32 %v3839, %v4509
      %v4594 = vadd.f32 %v3840, %v4512
      %v4595 = vadd.f32 %v3841, %v4517
      %v4596 = vadd.f32 %v3842, %v4520
      %v4597 = vadd.f32 %v3843, %v4525
      %v4598 = vadd.f32 %v3844, %v4528
      %v4599 = vadd.f32 %v3845, %v4533
      %v4600 = vadd.f32 %v3846, %v4536
      %v4601 = vadd.f32 %v3847, %v4541
      %v4602 = vadd.f32 %v3848, %v4544
      %v4603 = vadd.f32 %v3849, %v4549
      %v4604 = vadd.f32 %v3850, %v4552
      %v4605 = vadd.f32 %v3851, %v4557
      %v4606 = vadd.f32 %v3852, %v4560
      %v4607 = vadd.f32 %v3853, %v4565
      %v4608 = vadd.f32 %v3854, %v4568
      %v4609 = vadd.f32 %v3855, %v4573
      %v4610 = vadd.f32 %v3856, %v4576
      %v4611 = vld [vmem:[%s3470] sm:$0xe]
      %v4612 = vld [vmem:[%s3470 + $0xc] sm:$0xe]
      %v4613 = vld [vmem:[%s3470 + $0x18] sm:$0xe]
      %v4614 = vld [vmem:[%s3470 + $0x24] sm:$0xe]
      %v4615 = vld [vmem:[%s3470 + $0x30] sm:$0xe]
      %v4616 = vld [vmem:[%s3470 + $0x3c] sm:$0xe]
      %v4617 = vld [vmem:[%s3470 + $0x48] sm:$0xe]
      %v4618 = vld [vmem:[%s3470 + $0x54] sm:$0xe]
      %v4619 = vld [vmem:[%s3470 + $0x60] sm:$0xe]
      %v4620 = vld [vmem:[%s3470 + $0x6c] sm:$0xe]
      %v4621 = vld [vmem:[%s3470 + $0x78] sm:$0xe]
      %v4622 = vld [vmem:[%s3470 + $0x84] sm:$0xe]
      %v4623 = vld [vmem:[%s3470 + $0x90] sm:$0xe]
      %v4624 = vld [vmem:[%s3470 + $0x9c] sm:$0xe]
      %v4625 = vld [vmem:[%s3470 + $0xa8] sm:$0xe]
      %v4626 = vld [vmem:[%s3470 + $0xb4] sm:$0xe]
      %v4675 = vrot.slane %v4611, 5
      %v4676 = vrot.slane %v4675, 4
      %v4677 = vrot.slane %v3858, 5
      %v4678 = vsel %vm1390, %v4676, %v4677
      %v4679 = vrot.slane %v4677, 4
      %v4680 = vrot.slane %v3859, 5
      %v4681 = vsel %vm1390, %v4679, %v4680
      %v4682 = vrot.slane %v4612, 5
      %v4683 = vrot.slane %v4682, 4
      %v4684 = vrot.slane %v3861, 5
      %v4685 = vsel %vm1390, %v4683, %v4684
      %v4686 = vrot.slane %v4684, 4
      %v4687 = vrot.slane %v3862, 5
      %v4688 = vsel %vm1390, %v4686, %v4687
      %v4689 = vrot.slane %v4613, 5
      %v4690 = vrot.slane %v4689, 4
      %v4691 = vrot.slane %v3864, 5
      %v4692 = vsel %vm1390, %v4690, %v4691
      %v4693 = vrot.slane %v4691, 4
      %v4694 = vrot.slane %v3865, 5
      %v4695 = vsel %vm1390, %v4693, %v4694
      %v4696 = vrot.slane %v4614, 5
      %v4697 = vrot.slane %v4696, 4
      %v4698 = vrot.slane %v3867, 5
      %v4699 = vsel %vm1390, %v4697, %v4698
      %v4700 = vrot.slane %v4698, 4
      %v4701 = vrot.slane %v3868, 5
      %v4702 = vsel %vm1390, %v4700, %v4701
      %v4703 = vrot.slane %v4615, 5
      %v4704 = vrot.slane %v4703, 4
      %v4705 = vrot.slane %v3870, 5
      %v4706 = vsel %vm1390, %v4704, %v4705
      %v4707 = vrot.slane %v4705, 4
      %v4708 = vrot.slane %v3871, 5
      %v4709 = vsel %vm1390, %v4707, %v4708
      %v4710 = vrot.slane %v4616, 5
      %v4711 = vrot.slane %v4710, 4
      %v4712 = vrot.slane %v3873, 5
      %v4713 = vsel %vm1390, %v4711, %v4712
      %v4714 = vrot.slane %v4712, 4
      %v4715 = vrot.slane %v3874, 5
      %v4716 = vsel %vm1390, %v4714, %v4715
      %v4717 = vrot.slane %v4617, 5
      %v4718 = vrot.slane %v4717, 4
      %v4719 = vrot.slane %v3876, 5
      %v4720 = vsel %vm1390, %v4718, %v4719
      %v4721 = vrot.slane %v4719, 4
      %v4722 = vrot.slane %v3877, 5
      %v4723 = vsel %vm1390, %v4721, %v4722
      %v4724 = vrot.slane %v4618, 5
      %v4725 = vrot.slane %v4724, 4
      %v4726 = vrot.slane %v3879, 5
      %v4727 = vsel %vm1390, %v4725, %v4726
      %v4728 = vrot.slane %v4726, 4
      %v4729 = vrot.slane %v3880, 5
      %v4730 = vsel %vm1390, %v4728, %v4729
      %v4731 = vrot.slane %v4619, 5
      %v4732 = vrot.slane %v4731, 4
      %v4733 = vrot.slane %v3882, 5
      %v4734 = vsel %vm1390, %v4732, %v4733
      %v4735 = vrot.slane %v4733, 4
      %v4736 = vrot.slane %v3883, 5
      %v4737 = vsel %vm1390, %v4735, %v4736
      %v4738 = vrot.slane %v4620, 5
      %v4739 = vrot.slane %v4738, 4
      %v4740 = vrot.slane %v3885, 5
      %v4741 = vsel %vm1390, %v4739, %v4740
      %v4742 = vrot.slane %v4740, 4
      %v4743 = vrot.slane %v3886, 5
      %v4744 = vsel %vm1390, %v4742, %v4743
      %v4745 = vrot.slane %v4621, 5
      %v4746 = vrot.slane %v4745, 4
      %v4747 = vrot.slane %v3888, 5
      %v4748 = vsel %vm1390, %v4746, %v4747
      %v4749 = vrot.slane %v4747, 4
      %v4750 = vrot.slane %v3889, 5
      %v4751 = vsel %vm1390, %v4749, %v4750
      %v4752 = vrot.slane %v4622, 5
      %v4753 = vrot.slane %v4752, 4
      %v4754 = vrot.slane %v3891, 5
      %v4755 = vsel %vm1390, %v4753, %v4754
      %v4756 = vrot.slane %v4754, 4
      %v4757 = vrot.slane %v3892, 5
      %v4758 = vsel %vm1390, %v4756, %v4757
      %v4759 = vrot.slane %v4623, 5
      %v4760 = vrot.slane %v4759, 4
      %v4761 = vrot.slane %v3894, 5
      %v4762 = vsel %vm1390, %v4760, %v4761
      %v4763 = vrot.slane %v4761, 4
      %v4764 = vrot.slane %v3895, 5
      %v4765 = vsel %vm1390, %v4763, %v4764
      %v4766 = vrot.slane %v4624, 5
      %v4767 = vrot.slane %v4766, 4
      %v4768 = vrot.slane %v3897, 5
      %v4769 = vsel %vm1390, %v4767, %v4768
      %v4770 = vrot.slane %v4768, 4
      %v4771 = vrot.slane %v3898, 5
      %v4772 = vsel %vm1390, %v4770, %v4771
      %v4773 = vrot.slane %v4625, 5
      %v4774 = vrot.slane %v4773, 4
      %v4775 = vrot.slane %v3900, 5
      %v4776 = vsel %vm1390, %v4774, %v4775
      %v4777 = vrot.slane %v4775, 4
      %v4778 = vrot.slane %v3901, 5
      %v4779 = vsel %vm1390, %v4777, %v4778
      %v4780 = vrot.slane %v4626, 5
      %v4781 = vrot.slane %v4780, 4
      %v4782 = vrot.slane %v3903, 5
      %v4783 = vsel %vm1390, %v4781, %v4782
      %v4784 = vrot.slane %v4782, 4
      %v4785 = vrot.slane %v3904, 5
      %v4786 = vsel %vm1390, %v4784, %v4785
      %s4787 = scalar_lea.vmem %s1, 512
      %v4788 = vld [vmem:[%s4787] sm:$0xf]
      %v4789 = vld [vmem:[%s4787 + $0x4] sm:$0xf]
      %v4790 = vld [vmem:[%s4787 + $0x8] sm:$0xf]
      %v4791 = vld [vmem:[%s4787 + $0xc] sm:$0xf]
      %v4792 = vld [vmem:[%s4787 + $0x10] sm:$0xf]
      %v4793 = vld [vmem:[%s4787 + $0x14] sm:$0xf]
      %v4794 = vld [vmem:[%s4787 + $0x18] sm:$0xf]
      %v4795 = vld [vmem:[%s4787 + $0x1c] sm:$0xf]
      %v4796 = vld [vmem:[%s4787 + $0x20] sm:$0xf]
      %v4797 = vld [vmem:[%s4787 + $0x24] sm:$0xf]
      %v4798 = vld [vmem:[%s4787 + $0x28] sm:$0xf]
      %v4799 = vld [vmem:[%s4787 + $0x2c] sm:$0xf]
      %v4800 = vld [vmem:[%s4787 + $0x30] sm:$0xf]
      %v4801 = vld [vmem:[%s4787 + $0x34] sm:$0xf]
      %v4802 = vld [vmem:[%s4787 + $0x38] sm:$0xf]
      %v4803 = vld [vmem:[%s4787 + $0x3c] sm:$0xf]
      %v4804 = vunpack.c.l.b16 %v4678
      %v4805 = vunpack.c.l.b16 %v4681
      %v4806 = vunpack.c.l.b16 %v4685
      %v4807 = vunpack.c.l.b16 %v4688
      %v4808 = vunpack.c.l.b16 %v4692
      %v4809 = vunpack.c.l.b16 %v4695
      %v4810 = vunpack.c.l.b16 %v4699
      %v4811 = vunpack.c.l.b16 %v4702
      %v4812 = vunpack.c.l.b16 %v4706
      %v4813 = vunpack.c.l.b16 %v4709
      %v4814 = vunpack.c.l.b16 %v4713
      %v4815 = vunpack.c.l.b16 %v4716
      %v4816 = vunpack.c.l.b16 %v4720
      %v4817 = vunpack.c.l.b16 %v4723
      %v4818 = vunpack.c.l.b16 %v4727
      %v4819 = vunpack.c.l.b16 %v4730
      %v4820 = vunpack.c.l.b16 %v4734
      %v4821 = vunpack.c.l.b16 %v4737
      %v4822 = vunpack.c.l.b16 %v4741
      %v4823 = vunpack.c.l.b16 %v4744
      %v4824 = vunpack.c.l.b16 %v4748
      %v4825 = vunpack.c.l.b16 %v4751
      %v4826 = vunpack.c.l.b16 %v4755
      %v4827 = vunpack.c.l.b16 %v4758
      %v4828 = vunpack.c.l.b16 %v4762
      %v4829 = vunpack.c.l.b16 %v4765
      %v4830 = vunpack.c.l.b16 %v4769
      %v4831 = vunpack.c.l.b16 %v4772
      %v4832 = vunpack.c.l.b16 %v4776
      %v4833 = vunpack.c.l.b16 %v4779
      %v4834 = vunpack.c.l.b16 %v4783
      %v4835 = vunpack.c.l.b16 %v4786
      %v4836 = vpack.c.b16 %v4805, %v4804
      %v4837 = vpack.c.b16 %v4807, %v4806
      %v4838 = vpack.c.b16 %v4809, %v4808
      %v4839 = vpack.c.b16 %v4811, %v4810
      %v4840 = vpack.c.b16 %v4813, %v4812
      %v4841 = vpack.c.b16 %v4815, %v4814
      %v4842 = vpack.c.b16 %v4817, %v4816
      %v4843 = vpack.c.b16 %v4819, %v4818
      %v4844 = vpack.c.b16 %v4821, %v4820
      %v4845 = vpack.c.b16 %v4823, %v4822
      %v4846 = vpack.c.b16 %v4825, %v4824
      %v4847 = vpack.c.b16 %v4827, %v4826
      %v4848 = vpack.c.b16 %v4829, %v4828
      %v4849 = vpack.c.b16 %v4831, %v4830
      %v4850 = vpack.c.b16 %v4833, %v4832
      %v4851 = vpack.c.b16 %v4835, %v4834
      %v4884 = vunpack.c.l.b16 %v4788
      %v4885 = vunpack.c.l.b16 %v4789
      %v4886 = vunpack.c.l.b16 %v4790
      %v4887 = vunpack.c.l.b16 %v4791
      %v4888 = vunpack.c.l.b16 %v4792
      %v4889 = vunpack.c.l.b16 %v4793
      %v4890 = vunpack.c.l.b16 %v4794
      %v4891 = vunpack.c.l.b16 %v4795
      %v4892 = vunpack.c.l.b16 %v4796
      %v4893 = vunpack.c.l.b16 %v4797
      %v4894 = vunpack.c.l.b16 %v4798
      %v4895 = vunpack.c.l.b16 %v4799
      %v4896 = vunpack.c.l.b16 %v4800
      %v4897 = vunpack.c.l.b16 %v4801
      %v4898 = vunpack.c.l.b16 %v4802
      %v4899 = vunpack.c.l.b16 %v4803
      %v4900 = vpack.c.b16 %v4885, %v4884
      %v4901 = vpack.c.b16 %v4887, %v4886
      %v4902 = vpack.c.b16 %v4889, %v4888
      %v4903 = vpack.c.b16 %v4891, %v4890
      %v4904 = vpack.c.b16 %v4893, %v4892
      %v4905 = vpack.c.b16 %v4895, %v4894
      %v4906 = vpack.c.b16 %v4897, %v4896
      %v4907 = vpack.c.b16 %v4899, %v4898
      %4916 = vmatprep.subr.bf16.mxu0 0
      %4917 = vmatpush1.bf16.msra.mxu0 %v4907
      %4918 = vmatprep.subr.bf16.mxu0 0
      %4919 = vmatpush1.bf16.msra.mxu0 %v4906
      %4920 = vmatprep.subr.bf16.mxu0 0
      %4921 = vmatpush1.bf16.msra.mxu0 %v4905
      %4922 = vmatprep.subr.bf16.mxu0 0
      %4923 = vmatpush1.bf16.msra.mxu0 %v4904
      %4924 = vmatprep.subr.bf16.mxu0 0
      %4925 = vmatpush1.bf16.msra.mxu0 %v4903
      %4926 = vmatprep.subr.bf16.mxu0 0
      %4927 = vmatpush1.bf16.msra.mxu0 %v4902
      %4928 = vmatprep.subr.bf16.mxu0 0
      %4929 = vmatpush1.bf16.msra.mxu0 %v4901
      %4930 = vmatprep.subr.bf16.mxu0 0
      %4931 = vmatpush1.bf16.msra.mxu0 %v4900
      %4932 = vmatprep.subr.bf16.mxu0 0
      %4933 = vmatpush2.bf16.msra.mxu0 0
      %4934 = vmatprep.subr.bf16.mxu0 0
      %4935 = vmatpush2.bf16.msra.mxu0 0
      %4936 = vmatprep.subr.bf16.mxu0 0
      %4937 = vmatpush2.bf16.msra.mxu0 0
      %4938 = vmatprep.subr.bf16.mxu0 0
      %4939 = vmatpush2.bf16.msra.mxu0 0
      %4940 = vmatprep.subr.bf16.mxu0 0
      %4941 = vmatpush2.bf16.msra.mxu0 0
      %4942 = vmatprep.subr.bf16.mxu0 0
      %4943 = vmatpush2.bf16.msra.mxu0 0
      %4944 = vmatprep.subr.bf16.mxu0 0
      %4945 = vmatpush2.bf16.msra.mxu0 0
      %4946 = vmatprep.subr.bf16.mxu0 0
      %4947 = vmatpush2.bf16.msra.mxu0 0
      %4948 = vmatprep.mubr.bf16.mxu0 0
      %4949 = vmatmul.mubr.bf16.gmra.mxu0 %v4836
      %v4950 = vpop.f32.mrf.mxu0
      %v4951 = vadd.f32 0.0, %v4950
      %v4952 = vpop.f32.mrf.mxu0
      %v4953 = vpop.f32.mrf.mxu0
      %v4954 = vadd.f32 0.0, %v4953
      %v4955 = vpop.f32.mrf.mxu0
      %4956 = vmatprep.mubr.bf16.mxu0 0
      %4957 = vmatmul.mubr.bf16.gmra.mxu0 %v4837
      %v4958 = vpop.f32.mrf.mxu0
      %v4959 = vadd.f32 0.0, %v4958
      %v4960 = vpop.f32.mrf.mxu0
      %v4961 = vpop.f32.mrf.mxu0
      %v4962 = vadd.f32 0.0, %v4961
      %v4963 = vpop.f32.mrf.mxu0
      %4964 = vmatprep.mubr.bf16.mxu0 0
      %4965 = vmatmul.mubr.bf16.gmra.mxu0 %v4838
      %v4966 = vpop.f32.mrf.mxu0
      %v4967 = vadd.f32 0.0, %v4966
      %v4968 = vpop.f32.mrf.mxu0
      %v4969 = vpop.f32.mrf.mxu0
      %v4970 = vadd.f32 0.0, %v4969
      %v4971 = vpop.f32.mrf.mxu0
      %4972 = vmatprep.mubr.bf16.mxu0 0
      %4973 = vmatmul.mubr.bf16.gmra.mxu0 %v4839
      %v4974 = vpop.f32.mrf.mxu0
      %v4975 = vadd.f32 0.0, %v4974
      %v4976 = vpop.f32.mrf.mxu0
      %v4977 = vpop.f32.mrf.mxu0
      %v4978 = vadd.f32 0.0, %v4977
      %v4979 = vpop.f32.mrf.mxu0
      %4980 = vmatprep.mubr.bf16.mxu0 0
      %4981 = vmatmul.mubr.bf16.gmra.mxu0 %v4840
      %v4982 = vpop.f32.mrf.mxu0
      %v4983 = vadd.f32 0.0, %v4982
      %v4984 = vpop.f32.mrf.mxu0
      %v4985 = vpop.f32.mrf.mxu0
      %v4986 = vadd.f32 0.0, %v4985
      %v4987 = vpop.f32.mrf.mxu0
      %4988 = vmatprep.mubr.bf16.mxu0 0
      %4989 = vmatmul.mubr.bf16.gmra.mxu0 %v4841
      %v4990 = vpop.f32.mrf.mxu0
      %v4991 = vadd.f32 0.0, %v4990
      %v4992 = vpop.f32.mrf.mxu0
      %v4993 = vpop.f32.mrf.mxu0
      %v4994 = vadd.f32 0.0, %v4993
      %v4995 = vpop.f32.mrf.mxu0
      %4996 = vmatprep.mubr.bf16.mxu0 0
      %4997 = vmatmul.mubr.bf16.gmra.mxu0 %v4842
      %v4998 = vpop.f32.mrf.mxu0
      %v4999 = vadd.f32 0.0, %v4998
      %v5000 = vpop.f32.mrf.mxu0
      %v5001 = vpop.f32.mrf.mxu0
      %v5002 = vadd.f32 0.0, %v5001
      %v5003 = vpop.f32.mrf.mxu0
      %5004 = vmatprep.mubr.bf16.mxu0 0
      %5005 = vmatmul.mubr.bf16.gmra.mxu0 %v4843
      %v5006 = vpop.f32.mrf.mxu0
      %v5007 = vadd.f32 0.0, %v5006
      %v5008 = vpop.f32.mrf.mxu0
      %v5009 = vpop.f32.mrf.mxu0
      %v5010 = vadd.f32 0.0, %v5009
      %v5011 = vpop.f32.mrf.mxu0
      %5012 = vmatprep.mubr.bf16.mxu0 0
      %5013 = vmatmul.mubr.bf16.gmra.mxu0 %v4844
      %v5014 = vpop.f32.mrf.mxu0
      %v5015 = vadd.f32 0.0, %v5014
      %v5016 = vpop.f32.mrf.mxu0
      %v5017 = vpop.f32.mrf.mxu0
      %v5018 = vadd.f32 0.0, %v5017
      %v5019 = vpop.f32.mrf.mxu0
      %5020 = vmatprep.mubr.bf16.mxu0 0
      %5021 = vmatmul.mubr.bf16.gmra.mxu0 %v4845
      %v5022 = vpop.f32.mrf.mxu0
      %v5023 = vadd.f32 0.0, %v5022
      %v5024 = vpop.f32.mrf.mxu0
      %v5025 = vpop.f32.mrf.mxu0
      %v5026 = vadd.f32 0.0, %v5025
      %v5027 = vpop.f32.mrf.mxu0
      %5028 = vmatprep.mubr.bf16.mxu0 0
      %5029 = vmatmul.mubr.bf16.gmra.mxu0 %v4846
      %v5030 = vpop.f32.mrf.mxu0
      %v5031 = vadd.f32 0.0, %v5030
      %v5032 = vpop.f32.mrf.mxu0
      %v5033 = vpop.f32.mrf.mxu0
      %v5034 = vadd.f32 0.0, %v5033
      %v5035 = vpop.f32.mrf.mxu0
      %5036 = vmatprep.mubr.bf16.mxu0 0
      %5037 = vmatmul.mubr.bf16.gmra.mxu0 %v4847
      %v5038 = vpop.f32.mrf.mxu0
      %v5039 = vadd.f32 0.0, %v5038
      %v5040 = vpop.f32.mrf.mxu0
      %v5041 = vpop.f32.mrf.mxu0
      %v5042 = vadd.f32 0.0, %v5041
      %v5043 = vpop.f32.mrf.mxu0
      %5044 = vmatprep.mubr.bf16.mxu0 0
      %5045 = vmatmul.mubr.bf16.gmra.mxu0 %v4848
      %v5046 = vpop.f32.mrf.mxu0
      %v5047 = vadd.f32 0.0, %v5046
      %v5048 = vpop.f32.mrf.mxu0
      %v5049 = vpop.f32.mrf.mxu0
      %v5050 = vadd.f32 0.0, %v5049
      %v5051 = vpop.f32.mrf.mxu0
      %5052 = vmatprep.mubr.bf16.mxu0 0
      %5053 = vmatmul.mubr.bf16.gmra.mxu0 %v4849
      %v5054 = vpop.f32.mrf.mxu0
      %v5055 = vadd.f32 0.0, %v5054
      %v5056 = vpop.f32.mrf.mxu0
      %v5057 = vpop.f32.mrf.mxu0
      %v5058 = vadd.f32 0.0, %v5057
      %v5059 = vpop.f32.mrf.mxu0
      %5060 = vmatprep.mubr.bf16.mxu0 0
      %5061 = vmatmul.mubr.bf16.gmra.mxu0 %v4850
      %v5062 = vpop.f32.mrf.mxu0
      %v5063 = vadd.f32 0.0, %v5062
      %v5064 = vpop.f32.mrf.mxu0
      %v5065 = vpop.f32.mrf.mxu0
      %v5066 = vadd.f32 0.0, %v5065
      %v5067 = vpop.f32.mrf.mxu0
      %5068 = vmatprep.mubr.bf16.mxu0 0
      %5069 = vmatmul.mubr.bf16.gmra.mxu0 %v4851
      %v5070 = vpop.f32.mrf.mxu0
      %v5071 = vadd.f32 0.0, %v5070
      %v5072 = vpop.f32.mrf.mxu0
      %v5073 = vpop.f32.mrf.mxu0
      %v5074 = vadd.f32 0.0, %v5073
      %v5075 = vpop.f32.mrf.mxu0
      %5076 = vdwg.mxu0
      %v5077 = vadd.f32 %v4579, %v4951
      %v5078 = vadd.f32 %v4580, %v4954
      %v5079 = vadd.f32 %v4581, %v4959
      %v5080 = vadd.f32 %v4582, %v4962
      %v5081 = vadd.f32 %v4583, %v4967
      %v5082 = vadd.f32 %v4584, %v4970
      %v5083 = vadd.f32 %v4585, %v4975
      %v5084 = vadd.f32 %v4586, %v4978
      %v5085 = vadd.f32 %v4587, %v4983
      %v5086 = vadd.f32 %v4588, %v4986
      %v5087 = vadd.f32 %v4589, %v4991
      %v5088 = vadd.f32 %v4590, %v4994
      %v5089 = vadd.f32 %v4591, %v4999
      %v5090 = vadd.f32 %v4592, %v5002
      %v5091 = vadd.f32 %v4593, %v5007
      %v5092 = vadd.f32 %v4594, %v5010
      %v5093 = vadd.f32 %v4595, %v5015
      %v5094 = vadd.f32 %v4596, %v5018
      %v5095 = vadd.f32 %v4597, %v5023
      %v5096 = vadd.f32 %v4598, %v5026
      %v5097 = vadd.f32 %v4599, %v5031
      %v5098 = vadd.f32 %v4600, %v5034
      %v5099 = vadd.f32 %v4601, %v5039
      %v5100 = vadd.f32 %v4602, %v5042
      %v5101 = vadd.f32 %v4603, %v5047
      %v5102 = vadd.f32 %v4604, %v5050
      %v5103 = vadd.f32 %v4605, %v5055
      %v5104 = vadd.f32 %v4606, %v5058
      %v5105 = vadd.f32 %v4607, %v5063
      %v5106 = vadd.f32 %v4608, %v5066
      %v5107 = vadd.f32 %v4609, %v5071
      %v5108 = vadd.f32 %v4610, %v5074
      %v5109 = vld [vmem:[%s2] sm:$0x1]
      %v5111 = vlaneseq
      %v5112 = vshrl.u32 %v5111, 7
      %v5113 = vsub.s32 0, %v5112
      %v5114 = vrot.slane %v5109, %v5113
      %v5116 = vmul.f32 %v5077, %v5114
      %v5117 = vmul.f32 %v5078, %v5114
      %v5118 = vmul.f32 %v5079, %v5114
      %v5119 = vmul.f32 %v5080, %v5114
      %v5120 = vmul.f32 %v5081, %v5114
      %v5121 = vmul.f32 %v5082, %v5114
      %v5122 = vmul.f32 %v5083, %v5114
      %v5123 = vmul.f32 %v5084, %v5114
      %v5124 = vmul.f32 %v5085, %v5114
      %v5125 = vmul.f32 %v5086, %v5114
      %v5126 = vmul.f32 %v5087, %v5114
      %v5127 = vmul.f32 %v5088, %v5114
      %v5128 = vmul.f32 %v5089, %v5114
      %v5129 = vmul.f32 %v5090, %v5114
      %v5130 = vmul.f32 %v5091, %v5114
      %v5131 = vmul.f32 %v5092, %v5114
      %v5132 = vmul.f32 %v5093, %v5114
      %v5133 = vmul.f32 %v5094, %v5114
      %v5134 = vmul.f32 %v5095, %v5114
      %v5135 = vmul.f32 %v5096, %v5114
      %v5136 = vmul.f32 %v5097, %v5114
      %v5137 = vmul.f32 %v5098, %v5114
      %v5138 = vmul.f32 %v5099, %v5114
      %v5139 = vmul.f32 %v5100, %v5114
      %v5140 = vmul.f32 %v5101, %v5114
      %v5141 = vmul.f32 %v5102, %v5114
      %v5142 = vmul.f32 %v5103, %v5114
      %v5143 = vmul.f32 %v5104, %v5114
      %v5144 = vmul.f32 %v5105, %v5114
      %v5145 = vmul.f32 %v5106, %v5114
      %v5146 = vmul.f32 %v5107, %v5114
      %v5147 = vmul.f32 %v5108, %v5114
      %v5148 = vld [vmem:[%s3] sm:$0x1]
      %v5150 = vlaneseq
      %v5151 = vshrl.u32 %v5150, 7
      %v5152 = vsub.s32 0, %v5151
      %v5153 = vrot.slane %v5148, %v5152
      %v5155 = vadd.f32 %v5116, %v5153
      %v5156 = vadd.f32 %v5117, %v5153
      %v5157 = vadd.f32 %v5118, %v5153
      %v5158 = vadd.f32 %v5119, %v5153
      %v5159 = vadd.f32 %v5120, %v5153
      %v5160 = vadd.f32 %v5121, %v5153
      %v5161 = vadd.f32 %v5122, %v5153
      %v5162 = vadd.f32 %v5123, %v5153
      %v5163 = vadd.f32 %v5124, %v5153
      %v5164 = vadd.f32 %v5125, %v5153
      %v5165 = vadd.f32 %v5126, %v5153
      %v5166 = vadd.f32 %v5127, %v5153
      %v5167 = vadd.f32 %v5128, %v5153
      %v5168 = vadd.f32 %v5129, %v5153
      %v5169 = vadd.f32 %v5130, %v5153
      %v5170 = vadd.f32 %v5131, %v5153
      %v5171 = vadd.f32 %v5132, %v5153
      %v5172 = vadd.f32 %v5133, %v5153
      %v5173 = vadd.f32 %v5134, %v5153
      %v5174 = vadd.f32 %v5135, %v5153
      %v5175 = vadd.f32 %v5136, %v5153
      %v5176 = vadd.f32 %v5137, %v5153
      %v5177 = vadd.f32 %v5138, %v5153
      %v5178 = vadd.f32 %v5139, %v5153
      %v5179 = vadd.f32 %v5140, %v5153
      %v5180 = vadd.f32 %v5141, %v5153
      %v5181 = vadd.f32 %v5142, %v5153
      %v5182 = vadd.f32 %v5143, %v5153
      %v5183 = vadd.f32 %v5144, %v5153
      %v5184 = vadd.f32 %v5145, %v5153
      %v5185 = vadd.f32 %v5146, %v5153
      %v5186 = vadd.f32 %v5147, %v5153
      %v5187 = vld [vmem:[%s276] sm:$0xf]
      %v5188 = vld [vmem:[%s276 + $0x4] sm:$0xf]
      %v5189 = vld [vmem:[%s276 + $0x8] sm:$0xf]
      %v5190 = vld [vmem:[%s276 + $0xc] sm:$0xf]
      %v5191 = vld [vmem:[%s276 + $0x10] sm:$0xf]
      %v5192 = vld [vmem:[%s276 + $0x14] sm:$0xf]
      %v5193 = vld [vmem:[%s276 + $0x18] sm:$0xf]
      %v5194 = vld [vmem:[%s276 + $0x1c] sm:$0xf]
      %v5195 = vld [vmem:[%s276 + $0x20] sm:$0xf]
      %v5196 = vld [vmem:[%s276 + $0x24] sm:$0xf]
      %v5197 = vld [vmem:[%s276 + $0x28] sm:$0xf]
      %v5198 = vld [vmem:[%s276 + $0x2c] sm:$0xf]
      %v5199 = vld [vmem:[%s276 + $0x30] sm:$0xf]
      %v5200 = vld [vmem:[%s276 + $0x34] sm:$0xf]
      %v5201 = vld [vmem:[%s276 + $0x38] sm:$0xf]
      %v5202 = vld [vmem:[%s276 + $0x3c] sm:$0xf]
      %v5203 = vld [vmem:[%s276 + $0x40] sm:$0xf]
      %v5204 = vld [vmem:[%s276 + $0x44] sm:$0xf]
      %v5205 = vld [vmem:[%s276 + $0x48] sm:$0xf]
      %v5206 = vld [vmem:[%s276 + $0x4c] sm:$0xf]
      %v5207 = vld [vmem:[%s276 + $0x50] sm:$0xf]
      %v5208 = vld [vmem:[%s276 + $0x54] sm:$0xf]
      %v5209 = vld [vmem:[%s276 + $0x58] sm:$0xf]
      %v5210 = vld [vmem:[%s276 + $0x5c] sm:$0xf]
      %v5211 = vld [vmem:[%s276 + $0x60] sm:$0xf]
      %v5212 = vld [vmem:[%s276 + $0x64] sm:$0xf]
      %v5213 = vld [vmem:[%s276 + $0x68] sm:$0xf]
      %v5214 = vld [vmem:[%s276 + $0x6c] sm:$0xf]
      %v5215 = vld [vmem:[%s276 + $0x70] sm:$0xf]
      %v5216 = vld [vmem:[%s276 + $0x74] sm:$0xf]
      %v5217 = vld [vmem:[%s276 + $0x78] sm:$0xf]
      %v5218 = vld [vmem:[%s276 + $0x7c] sm:$0xf]
      %v5219 = vunpack.c.l.bf16 %v5187
      %v5220 = vunpack.c.l.bf16 %v5188
      %v5221 = vunpack.c.l.bf16 %v5189
      %v5222 = vunpack.c.l.bf16 %v5190
      %v5223 = vunpack.c.l.bf16 %v5191
      %v5224 = vunpack.c.l.bf16 %v5192
      %v5225 = vunpack.c.l.bf16 %v5193
      %v5226 = vunpack.c.l.bf16 %v5194
      %v5227 = vunpack.c.l.bf16 %v5195
      %v5228 = vunpack.c.l.bf16 %v5196
      %v5229 = vunpack.c.l.bf16 %v5197
      %v5230 = vunpack.c.l.bf16 %v5198
      %v5231 = vunpack.c.l.bf16 %v5199
      %v5232 = vunpack.c.l.bf16 %v5200
      %v5233 = vunpack.c.l.bf16 %v5201
      %v5234 = vunpack.c.l.bf16 %v5202
      %v5235 = vunpack.c.l.bf16 %v5203
      %v5236 = vunpack.c.l.bf16 %v5204
      %v5237 = vunpack.c.l.bf16 %v5205
      %v5238 = vunpack.c.l.bf16 %v5206
      %v5239 = vunpack.c.l.bf16 %v5207
      %v5240 = vunpack.c.l.bf16 %v5208
      %v5241 = vunpack.c.l.bf16 %v5209
      %v5242 = vunpack.c.l.bf16 %v5210
      %v5243 = vunpack.c.l.bf16 %v5211
      %v5244 = vunpack.c.l.bf16 %v5212
      %v5245 = vunpack.c.l.bf16 %v5213
      %v5246 = vunpack.c.l.bf16 %v5214
      %v5247 = vunpack.c.l.bf16 %v5215
      %v5248 = vunpack.c.l.bf16 %v5216
      %v5249 = vunpack.c.l.bf16 %v5217
      %v5250 = vunpack.c.l.bf16 %v5218
      %v5251 = vadd.f32 %v5155, %v5219
      %v5252 = vadd.f32 %v5156, %v5220
      %v5253 = vadd.f32 %v5157, %v5221
      %v5254 = vadd.f32 %v5158, %v5222
      %v5255 = vadd.f32 %v5159, %v5223
      %v5256 = vadd.f32 %v5160, %v5224
      %v5257 = vadd.f32 %v5161, %v5225
      %v5258 = vadd.f32 %v5162, %v5226
      %v5259 = vadd.f32 %v5163, %v5227
      %v5260 = vadd.f32 %v5164, %v5228
      %v5261 = vadd.f32 %v5165, %v5229
      %v5262 = vadd.f32 %v5166, %v5230
      %v5263 = vadd.f32 %v5167, %v5231
      %v5264 = vadd.f32 %v5168, %v5232
      %v5265 = vadd.f32 %v5169, %v5233
      %v5266 = vadd.f32 %v5170, %v5234
      %v5267 = vadd.f32 %v5171, %v5235
      %v5268 = vadd.f32 %v5172, %v5236
      %v5269 = vadd.f32 %v5173, %v5237
      %v5270 = vadd.f32 %v5174, %v5238
      %v5271 = vadd.f32 %v5175, %v5239
      %v5272 = vadd.f32 %v5176, %v5240
      %v5273 = vadd.f32 %v5177, %v5241
      %v5274 = vadd.f32 %v5178, %v5242
      %v5275 = vadd.f32 %v5179, %v5243
      %v5276 = vadd.f32 %v5180, %v5244
      %v5277 = vadd.f32 %v5181, %v5245
      %v5278 = vadd.f32 %v5182, %v5246
      %v5279 = vadd.f32 %v5183, %v5247
      %v5280 = vadd.f32 %v5184, %v5248
      %v5281 = vadd.f32 %v5185, %v5249
      %v5282 = vadd.f32 %v5186, %v5250
      %v5283 = vmax.f32 %v5251, 0.0
      %v5284 = vmax.f32 %v5252, 0.0
      %v5285 = vmax.f32 %v5253, 0.0
      %v5286 = vmax.f32 %v5254, 0.0
      %v5287 = vmax.f32 %v5255, 0.0
      %v5288 = vmax.f32 %v5256, 0.0
      %v5289 = vmax.f32 %v5257, 0.0
      %v5290 = vmax.f32 %v5258, 0.0
      %v5291 = vmax.f32 %v5259, 0.0
      %v5292 = vmax.f32 %v5260, 0.0
      %v5293 = vmax.f32 %v5261, 0.0
      %v5294 = vmax.f32 %v5262, 0.0
      %v5295 = vmax.f32 %v5263, 0.0
      %v5296 = vmax.f32 %v5264, 0.0
      %v5297 = vmax.f32 %v5265, 0.0
      %v5298 = vmax.f32 %v5266, 0.0
      %v5299 = vmax.f32 %v5267, 0.0
      %v5300 = vmax.f32 %v5268, 0.0
      %v5301 = vmax.f32 %v5269, 0.0
      %v5302 = vmax.f32 %v5270, 0.0
      %v5303 = vmax.f32 %v5271, 0.0
      %v5304 = vmax.f32 %v5272, 0.0
      %v5305 = vmax.f32 %v5273, 0.0
      %v5306 = vmax.f32 %v5274, 0.0
      %v5307 = vmax.f32 %v5275, 0.0
      %v5308 = vmax.f32 %v5276, 0.0
      %v5309 = vmax.f32 %v5277, 0.0
      %v5310 = vmax.f32 %v5278, 0.0
      %v5311 = vmax.f32 %v5279, 0.0
      %v5312 = vmax.f32 %v5280, 0.0
      %v5313 = vmax.f32 %v5281, 0.0
      %v5314 = vmax.f32 %v5282, 0.0
      %5315 = vst [vmem:[%s287] sm:$0xff] %v5283
      %5316 = vst [vmem:[%s287 + $0x8] sm:$0xff] %v5284
      %5317 = vst [vmem:[%s287 + $0x10] sm:$0xff] %v5285
      %5318 = vst [vmem:[%s287 + $0x18] sm:$0xff] %v5286
      %5319 = vst [vmem:[%s287 + $0x20] sm:$0xff] %v5287
      %5320 = vst [vmem:[%s287 + $0x28] sm:$0xff] %v5288
      %5321 = vst [vmem:[%s287 + $0x30] sm:$0xff] %v5289
      %5322 = vst [vmem:[%s287 + $0x38] sm:$0xff] %v5290
      %5323 = vst [vmem:[%s287 + $0x40] sm:$0xff] %v5291
      %5324 = vst [vmem:[%s287 + $0x48] sm:$0xff] %v5292
      %5325 = vst [vmem:[%s287 + $0x50] sm:$0xff] %v5293
      %5326 = vst [vmem:[%s287 + $0x58] sm:$0xff] %v5294
      %5327 = vst [vmem:[%s287 + $0x60] sm:$0xff] %v5295
      %5328 = vst [vmem:[%s287 + $0x68] sm:$0xff] %v5296
      %5329 = vst [vmem:[%s287 + $0x70] sm:$0xff] %v5297
      %5330 = vst [vmem:[%s287 + $0x78] sm:$0xff] %v5298
      %5331 = vst [vmem:[%s287 + $0x80] sm:$0xff] %v5299
      %5332 = vst [vmem:[%s287 + $0x88] sm:$0xff] %v5300
      %5333 = vst [vmem:[%s287 + $0x90] sm:$0xff] %v5301
      %5334 = vst [vmem:[%s287 + $0x98] sm:$0xff] %v5302
      %5335 = vst [vmem:[%s287 + $0xa0] sm:$0xff] %v5303
      %5336 = vst [vmem:[%s287 + $0xa8] sm:$0xff] %v5304
      %5337 = vst [vmem:[%s287 + $0xb0] sm:$0xff] %v5305
      %5338 = vst [vmem:[%s287 + $0xb8] sm:$0xff] %v5306
      %5339 = vst [vmem:[%s287 + $0xc0] sm:$0xff] %v5307
      %5340 = vst [vmem:[%s287 + $0xc8] sm:$0xff] %v5308
      %5341 = vst [vmem:[%s287 + $0xd0] sm:$0xff] %v5309
      %5342 = vst [vmem:[%s287 + $0xd8] sm:$0xff] %v5310
      %5343 = vst [vmem:[%s287 + $0xe0] sm:$0xff] %v5311
      %5344 = vst [vmem:[%s287 + $0xe8] sm:$0xff] %v5312
      %5345 = vst [vmem:[%s287 + $0xf0] sm:$0xff] %v5313
      %5346 = vst [vmem:[%s287 + $0xf8] sm:$0xff] %v5314
      %s5347 = smul.u32 16, %s21
      %p5348 = scmp.lt.s32.totalorder %s20, 1
      %s5349 = scalar_select %p5348, %s20, 1
      %p5350 = scmp.lt.s32.totalorder %s5347, 15
      %s5351 = scalar_select %p5350, %s5347, 15
      %s5352 = smul.addr %s5351, 2
      %s5353 = smul.addr %s5349, 32
      %s5354 = sadd.s32 %s5352, %s5353
      %s5355 = smul.addr %s5354, 8
      %s5356 = scalar_lea.vmem %s5, %s5355
      // Predicated region
      $region41: #{residual_module_forward.3} parent=39 // pred_check
        %p5357 = pneg %p165
      $region42: #{residual_module_forward.3} parent=39 // pred_check_branch
        %5359 = sbr.rel (%p5357) target = $region44
      $region43: #{residual_module_forward.3} parent=39 // pred_region
        %s5360 = smul.u32 16, %s21
      $region44: #{residual_module_forward.3} parent=39 // pred_fallthru
        _
    $region40: #{residual_module_forward.3} parent=5 // pred_fallthru
      _
    %p5361 = scmp.le.s32.totalorder 2, %s11
    // Predicated region
    $region45: #{residual_module_forward.3} parent=5 // pred_check
      %p5362 = pneg %p5361
    $region46: #{residual_module_forward.3} parent=5 // pred_check_branch
      %5364 = sbr.rel (%p5362) target = $region48
    $region47: #{residual_module_forward.3} parent=5 // pred_region
      %s5365 = ssub.s32 %s11, 2
      // Predicated region
      $region49: #{residual_module_forward.3} parent=47 // pred_check
        %p5366 = pneg %p171
      $region50: #{residual_module_forward.3} parent=47 // pred_check_branch
        %5368 = sbr.rel (%p5366) target = $region52
      $region51: #{residual_module_forward.3} parent=47 // pred_region
        %s5369 = smul.u32 16, %s23
        %p5370 = scmp.lt.s32.totalorder %s22, 1
        %s5371 = scalar_select %p5370, %s22, 1
        %p5372 = scmp.lt.s32.totalorder %s5369, 15
        %s5373 = scalar_select %p5372, %s5369, 15
        %s5374 = smul.addr %s5373, 2
        %s5375 = smul.addr %s5371, 32
        %s5376 = sadd.s32 %s5374, %s5375
        %s5377 = smul.addr %s5376, 8
        %s5378 = scalar_lea.vmem %s5, %s5377
      $region52: #{residual_module_forward.3} parent=47 // pred_fallthru
        _
    $region48: #{residual_module_forward.3} parent=5 // pred_fallthru
      _
  $region6: #{residual_module_forward.3} parent=0 // loop_footer
    %s15 = sadd.s32 1, %s11
  $region7: #{residual_module_forward.3} parent=0 // loop_footer_branch
    %10 = sbr.rel target = $region3
  $region8: #{residual_module_forward.3} parent=0 // loop_exit
    _

</llo_original>
